<compile_context>
chip_gen: v7x
topology: tpu7x:2x2x1
jax: 0.10.0
libtpu: 0.0.40
codegen_flags: <defaults>
</compile_context>

<pallas_src>
import jax
import jax.numpy as jnp
from jax.experimental import pallas as pl
from jax.experimental.pallas import tpu as pltpu

H = W = 8
HW = H * W                      # 64
CIN = 256
CPOL = 128
POL_IN = HW * CPOL              # 8192
POL_OUT = HW * 73               # 4672
POL_PAD = 38 * 128              # 4864: lane-dense stores + clean 2-way column split
BN_EPS = 1e-5

TK = 1024                       # K tile for the policy FC (8192 % 1024 == 0)
TN = POL_PAD // 2               # 2432 = 19 * 128 -> two "parallel" column tiles


# ----------------------------------------------------------------------------
# Kernel 1: fused heads prologue
#   value:  1x1 conv 256->1 (BN folded) + ReLU + fc1 + ReLU + fc2 + tanh
#   policy: 1x1 conv 256->128 (BN folded) + ReLU, cast to bf16 for the big FC
# ----------------------------------------------------------------------------
def fused_heads_kernel(x_ref, wcv_ref, bv_ref, w1_ref, b1_ref, w2_ref, b2_ref,
                       wcp_ref, bp_ref, p_ref, v_ref):
    x = x_ref[...]                                              # (n, 64, 256) f32

    # ---- value head (all elementwise / transcendental math kept in f32) ----
    v = jnp.sum(x * wcv_ref[...], axis=-1) + bv_ref[...]        # (n, 64)
    v = jnp.maximum(v, 0.0)
    hdn = jnp.dot(v, w1_ref[...], preferred_element_type=jnp.float32) + b1_ref[...]
    hdn = jnp.maximum(hdn, 0.0)
    out = jnp.dot(hdn, w2_ref[...], preferred_element_type=jnp.float32) + b2_ref[...]
    v_ref[...] = jnp.tanh(out)                                  # (n, 1)

    # ---- policy conv ----
    # TODO(synk): static unroll over the (small) batch; tile with a grid if batch grows.
    for b in range(x_ref.shape[0]):
        pb = jnp.dot(x[b], wcp_ref[...], preferred_element_type=jnp.float32)  # (64,128)
        p_ref[b] = jnp.maximum(pb + bp_ref[...], 0.0).astype(jnp.bfloat16)


def fused_heads(x3, prm):
    n = x3.shape[0]
    return pl.pallas_call(
        fused_heads_kernel,
        out_shape=(jax.ShapeDtypeStruct((n, HW, CPOL), jnp.bfloat16),
                   jax.ShapeDtypeStruct((n, 1), jnp.float32)),
    )(x3, prm["wcv"], prm["bv"], prm["w1_t"], prm["b1"],
      prm["w2_t"], prm["b2"], prm["wcp"], prm["bp"])


# ----------------------------------------------------------------------------
# Kernel 2: policy fc (8192 -> 4864 padded), bf16 weight stream, f32 accumulation
#   grid = (column tiles "parallel", K tiles "arbitrary"); accumulate directly
#   into the resident output block (bias is applied in the softmax kernel).
# ----------------------------------------------------------------------------
def policy_fc_kernel(p_ref, w_ref, o_ref):
    @pl.when(pl.program_id(1) == 0)
    def _():
        o_ref[...] = jnp.zeros_like(o_ref)

    o_ref[...] += jnp.dot(p_ref[...], w_ref[...], preferred_element_type=jnp.float32)


def policy_fc(p_flat, wf_bf16, *, tk=TK, tn=TN):
    n, k_total = p_flat.shape
    cols = wf_bf16.shape[1]
    assert k_total % tk == 0 and cols % tn == 0 and tn % 128 == 0
    return pl.pallas_call(
        policy_fc_kernel,
        out_shape=jax.ShapeDtypeStruct((n, cols), jnp.float32),
        grid_spec=pltpu.PrefetchScalarGridSpec(
            num_scalar_prefetch=0,
            grid=(cols // tn, k_total // tk),
            in_specs=[
                pl.BlockSpec((n, tk), lambda j, k: (0, k)),
                pl.BlockSpec((tk, tn), lambda j, k: (k, j)),
            ],
            out_specs=pl.BlockSpec((n, tn), lambda j, k: (0, j)),
        ),
        compiler_params=pltpu.CompilerParams(
            dimension_semantics=("parallel", "arbitrary"),
            vmem_limit_bytes=48 << 20,        # safe on v7x (64 MiB physical VMEM)
        ),
    )(p_flat, wf_bf16)


# ----------------------------------------------------------------------------
# Kernel 3: bias + softmax over the padded row (padded bias = -1e30 -> exp == 0)
#           (torch does logsoftmax(x).exp() == softmax(x))
# ----------------------------------------------------------------------------
def bias_softmax_kernel(z_ref, b_ref, o_ref):
    z = z_ref[...] + b_ref[...]
    m = jnp.max(z, axis=-1, keepdims=True)
    e = jnp.exp(z - m)
    o_ref[...] = e / jnp.sum(e, axis=-1, keepdims=True)


def bias_softmax(logits, bias):
    return pl.pallas_call(
        bias_softmax_kernel,
        out_shape=jax.ShapeDtypeStruct(logits.shape, jnp.float32),
    )(logits, bias)


# ----------------------------------------------------------------------------
# Parameter init (deterministic, PyTorch-default-like uniform(-1/sqrt(fan_in), ..))
# ----------------------------------------------------------------------------
def _linear_init(kw, kb, fan_in, fan_out):
    bound = 1.0 / float(fan_in) ** 0.5
    w = jax.random.uniform(kw, (fan_out, fan_in), jnp.float32, -bound, bound)
    b = jax.random.uniform(kb, (fan_out,), jnp.float32, -bound, bound)
    return w, b


def init_params(key):
    ks = jax.random.split(key, 10)
    wc, bc = _linear_init(ks[0], ks[1], CIN, 1)           # conv  256 -> 1
    wc1, bc1 = _linear_init(ks[2], ks[3], CIN, CPOL)      # conv1 256 -> 128
    w1, b1 = _linear_init(ks[4], ks[5], HW, 64)           # fc1   64  -> 64
    w2, b2 = _linear_init(ks[6], ks[7], 64, 1)            # fc2   64  -> 1
    wf, bf = _linear_init(ks[8], ks[9], POL_IN, POL_OUT)  # fc  8192  -> 4672

    # Inference-mode BatchNorm fold (defaults: gamma=1, beta=0, mean=0, var=1).
    # TODO(synk): training-mode BN (batch statistics) is not implemented.
    def bn_fold(conv_w_t, conv_b, c):
        gamma = jnp.ones((c,), jnp.float32); beta = jnp.zeros((c,), jnp.float32)
        mean = jnp.zeros((c,), jnp.float32); var = jnp.ones((c,), jnp.float32)
        scale = gamma / jnp.sqrt(var + BN_EPS)
        return conv_w_t * scale[None, :], (conv_b - mean) * scale + beta

    wcv, bv = bn_fold(wc.T, bc, 1)         # (256, 1), (1,)
    wcp, bp = bn_fold(wc1.T, bc1, CPOL)    # (256, 128), (128,)

    # Policy FC weight: permute rows so it consumes the conv activation in
    # (hw, c) order (torch .view flattens NCHW as c*64 + hw)  -> no runtime
    # transpose of the activation.  Cast to bf16 (halves the dominant HBM
    # weight stream) and pad columns 4672 -> 4864 (zeros; bias padding -1e30).
    hw_idx = jnp.arange(HW)
    c_idx = jnp.arange(CPOL)
    row_perm = (c_idx[None, :] * HW + hw_idx[:, None]).reshape(-1)   # (8192,)
    wf_t = wf.T[row_perm].astype(jnp.bfloat16)                       # (8192, 4672)
    wf_pad = jnp.pad(wf_t, ((0, 0), (0, POL_PAD - POL_OUT)))
    bf_pad = jnp.pad(bf, (0, POL_PAD - POL_OUT), constant_values=-1e30)

    return dict(
        wcv=wcv[:, 0].reshape(1, 1, CIN),    # broadcast against (n, 64, 256)
        bv=bv.reshape(1, 1),
        w1_t=w1.T, b1=b1.reshape(1, 64),
        w2_t=w2.T, b2=b2.reshape(1, 1),
        wcp=wcp, bp=bp.reshape(1, CPOL),
        wf=wf_pad,                           # (8192, 4864) bf16
        bf=bf_pad.reshape(1, POL_PAD),       # (1, 4864) f32
    )


# ----------------------------------------------------------------------------
# Forward pass (glue reshapes in plain JAX, compute in Pallas kernels)
# ----------------------------------------------------------------------------
def outblock_forward(s, prm):
    n = s.shape[0]
    x3 = jnp.transpose(s, (0, 2, 3, 1)).reshape(n, HW, CIN)     # (n, 64, 256)

    p_act, v = fused_heads(x3, prm)        # (n, 64, 128) bf16, (n, 1) f32
    p_flat = p_act.reshape(n, POL_IN)      # contiguous flatten, free

    logits = policy_fc(p_flat, prm["wf"])      # (n, 4864) f32
    probs = bias_softmax(logits, prm["bf"])    # (n, 4864) f32, padded cols == 0
    return probs[:, :POL_OUT], v


if __name__ == "__main__":
    key = jax.random.PRNGKey(0)
    k_in, k_par = jax.random.split(key)

    batch = 2
    s = jax.random.normal(k_in, (batch, CIN, H, W), jnp.float32)
    params = init_params(k_par)

    p, v = jax.jit(outblock_forward)(s, params)
    jax.block_until_ready((p, v))

    assert p.shape == (batch, POL_OUT)
    assert v.shape == (batch, 1)
    assert bool(jnp.all(jnp.isfinite(p))) and bool(jnp.all(jnp.isfinite(v)))
    # softmax rows sum to ~1, tanh output bounded
    assert bool(jnp.allclose(jnp.sum(p, axis=-1), 1.0, atol=1e-3))
    assert bool(jnp.all(jnp.abs(v) <= 1.0))

    print("KERNEL_OK")
</pallas_src>

<mosaic_0001>
module attributes {stable_mosaic.version = 11 : i64} {
  func.func @fused_heads_kernel(%arg0: memref<2x64x256xf32, #tpu.memory_space<vmem>>, %arg1: memref<1x1x256xf32, #tpu.memory_space<vmem>>, %arg2: memref<1x1xf32, #tpu.memory_space<vmem>>, %arg3: memref<64x64xf32, #tpu.memory_space<vmem>>, %arg4: memref<1x64xf32, #tpu.memory_space<vmem>>, %arg5: memref<64x1xf32, #tpu.memory_space<vmem>>, %arg6: memref<1x1xf32, #tpu.memory_space<vmem>>, %arg7: memref<256x128xf32, #tpu.memory_space<vmem>>, %arg8: memref<1x128xf32, #tpu.memory_space<vmem>>, %arg9: memref<2x64x128xbf16, #tpu.memory_space<vmem>>, %arg10: memref<2x1xf32, #tpu.memory_space<vmem>>) attributes {dimension_semantics = [], scalar_prefetch = 0 : i64, scratch_operands = 0 : i64, tpu.core_type = #tpu.core_type<tc>} {
    %c0 = arith.constant 0 : index
    %c0_0 = arith.constant 0 : index
    %c0_1 = arith.constant 0 : index
    %0 = vector.load %arg0[%c0, %c0_0, %c0_1] : memref<2x64x256xf32, #tpu.memory_space<vmem>>, vector<2x64x256xf32>
    %c0_2 = arith.constant 0 : index
    %c0_3 = arith.constant 0 : index
    %c0_4 = arith.constant 0 : index
    %1 = vector.load %arg1[%c0_2, %c0_3, %c0_4] : memref<1x1x256xf32, #tpu.memory_space<vmem>>, vector<1x1x256xf32>
    %2 = vector.broadcast %1 : vector<1x1x256xf32> to vector<2x64x256xf32>
    %3 = arith.mulf %0, %2 : vector<2x64x256xf32>
    %cst = arith.constant dense<0.000000e+00> : vector<2x64xf32>
    %4 = vector.multi_reduction <add>, %3, %cst [2] : vector<2x64x256xf32> to vector<2x64xf32>
    %c0_5 = arith.constant 0 : index
    %c0_6 = arith.constant 0 : index
    %5 = vector.load %arg2[%c0_5, %c0_6] : memref<1x1xf32, #tpu.memory_space<vmem>>, vector<1x1xf32>
    %6 = vector.broadcast %5 : vector<1x1xf32> to vector<2x64xf32>
    %7 = arith.addf %4, %6 : vector<2x64xf32>
    %cst_7 = arith.constant 0.000000e+00 : f32
    %8 = vector.broadcast %cst_7 : f32 to vector<2x64xf32>
    %9 = arith.maximumf %7, %8 : vector<2x64xf32>
    %c0_8 = arith.constant 0 : index
    %c0_9 = arith.constant 0 : index
    %10 = vector.load %arg3[%c0_8, %c0_9] : memref<64x64xf32, #tpu.memory_space<vmem>>, vector<64x64xf32>
    %cst_10 = arith.constant dense<0.000000e+00> : vector<2x64xf32>
    %11 = tpu.matmul %9, %10, %cst_10 {dimension_numbers = #tpu.dot_dimension_numbers<[1], [0], [0], [1], [0, 0, 1, 1], [], []>} : vector<2x64xf32>, vector<64x64xf32>, vector<2x64xf32> -> vector<2x64xf32>
    %c0_11 = arith.constant 0 : index
    %c0_12 = arith.constant 0 : index
    %12 = vector.load %arg4[%c0_11, %c0_12] : memref<1x64xf32, #tpu.memory_space<vmem>>, vector<1x64xf32>
    %13 = vector.broadcast %12 : vector<1x64xf32> to vector<2x64xf32>
    %14 = arith.addf %11, %13 : vector<2x64xf32>
    %cst_13 = arith.constant 0.000000e+00 : f32
    %15 = vector.broadcast %cst_13 : f32 to vector<2x64xf32>
    %16 = arith.maximumf %14, %15 : vector<2x64xf32>
    %c0_14 = arith.constant 0 : index
    %c0_15 = arith.constant 0 : index
    %17 = vector.load %arg5[%c0_14, %c0_15] : memref<64x1xf32, #tpu.memory_space<vmem>>, vector<64x1xf32>
    %cst_16 = arith.constant dense<0.000000e+00> : vector<2x1xf32>
    %18 = tpu.matmul %16, %17, %cst_16 {dimension_numbers = #tpu.dot_dimension_numbers<[1], [0], [0], [1], [0, 0, 1, 1], [], []>} : vector<2x64xf32>, vector<64x1xf32>, vector<2x1xf32> -> vector<2x1xf32>
    %c0_17 = arith.constant 0 : index
    %c0_18 = arith.constant 0 : index
    %19 = vector.load %arg6[%c0_17, %c0_18] : memref<1x1xf32, #tpu.memory_space<vmem>>, vector<1x1xf32>
    %20 = vector.broadcast %19 : vector<1x1xf32> to vector<2x1xf32>
    %21 = arith.addf %18, %20 : vector<2x1xf32>
    %22 = math.tanh %21 : vector<2x1xf32>
    %c0_19 = arith.constant 0 : index
    %c0_20 = arith.constant 0 : index
    %23 = vector.load %arg10[%c0_19, %c0_20] : memref<2x1xf32, #tpu.memory_space<vmem>>, vector<2x1xf32>
    tpu.vector_store %arg10[%c0_19, %c0_20], %22 {strides = array<i32>} : memref<2x1xf32, #tpu.memory_space<vmem>>, vector<2x1xf32>,
    %24 = vector.extract_strided_slice %0 {offsets = [0, 0, 0], sizes = [1, 64, 256], strides = [1, 1, 1]} : vector<2x64x256xf32> to vector<1x64x256xf32>
    %25 = vector.shape_cast %24 : vector<1x64x256xf32> to vector<64x256xf32>
    %c0_21 = arith.constant 0 : index
    %c0_22 = arith.constant 0 : index
    %26 = vector.load %arg7[%c0_21, %c0_22] : memref<256x128xf32, #tpu.memory_space<vmem>>, vector<256x128xf32>
    %cst_23 = arith.constant dense<0.000000e+00> : vector<64x128xf32>
    %27 = tpu.matmul %25, %26, %cst_23 {dimension_numbers = #tpu.dot_dimension_numbers<[1], [0], [0], [1], [0, 0, 1, 1], [], []>} : vector<64x256xf32>, vector<256x128xf32>, vector<64x128xf32> -> vector<64x128xf32>
    %c0_24 = arith.constant 0 : index
    %c0_25 = arith.constant 0 : index
    %28 = vector.load %arg8[%c0_24, %c0_25] : memref<1x128xf32, #tpu.memory_space<vmem>>, vector<1x128xf32>
    %29 = vector.broadcast %28 : vector<1x128xf32> to vector<64x128xf32>
    %30 = arith.addf %27, %29 : vector<64x128xf32>
    %cst_26 = arith.constant 0.000000e+00 : f32
    %31 = vector.broadcast %cst_26 : f32 to vector<64x128xf32>
    %32 = arith.maximumf %30, %31 : vector<64x128xf32>
    %33 = arith.truncf %32 : vector<64x128xf32> to vector<64x128xbf16>
    %c0_27 = arith.constant 0 : index
    %c0_28 = arith.constant 0 : index
    %c0_29 = arith.constant 0 : index
    %34 = vector.load %arg9[%c0_27, %c0_28, %c0_29] : memref<2x64x128xbf16, #tpu.memory_space<vmem>>, vector<1x64x128xbf16>
    %35 = vector.shape_cast %34 : vector<1x64x128xbf16> to vector<64x128xbf16>
    %36 = vector.shape_cast %33 : vector<64x128xbf16> to vector<1x64x128xbf16>
    tpu.vector_store %arg9[%c0_27, %c0_28, %c0_29], %36 {strides = array<i32>} : memref<2x64x128xbf16, #tpu.memory_space<vmem>>, vector<1x64x128xbf16>,
    %37 = vector.extract_strided_slice %0 {offsets = [1, 0, 0], sizes = [1, 64, 256], strides = [1, 1, 1]} : vector<2x64x256xf32> to vector<1x64x256xf32>
    %38 = vector.shape_cast %37 : vector<1x64x256xf32> to vector<64x256xf32>
    %c0_30 = arith.constant 0 : index
    %c0_31 = arith.constant 0 : index
    %39 = vector.load %arg7[%c0_30, %c0_31] : memref<256x128xf32, #tpu.memory_space<vmem>>, vector<256x128xf32>
    %cst_32 = arith.constant dense<0.000000e+00> : vector<64x128xf32>
    %40 = tpu.matmul %38, %39, %cst_32 {dimension_numbers = #tpu.dot_dimension_numbers<[1], [0], [0], [1], [0, 0, 1, 1], [], []>} : vector<64x256xf32>, vector<256x128xf32>, vector<64x128xf32> -> vector<64x128xf32>
    %c0_33 = arith.constant 0 : index
    %c0_34 = arith.constant 0 : index
    %41 = vector.load %arg8[%c0_33, %c0_34] : memref<1x128xf32, #tpu.memory_space<vmem>>, vector<1x128xf32>
    %42 = vector.broadcast %41 : vector<1x128xf32> to vector<64x128xf32>
    %43 = arith.addf %40, %42 : vector<64x128xf32>
    %cst_35 = arith.constant 0.000000e+00 : f32
    %44 = vector.broadcast %cst_35 : f32 to vector<64x128xf32>
    %45 = arith.maximumf %43, %44 : vector<64x128xf32>
    %46 = arith.truncf %45 : vector<64x128xf32> to vector<64x128xbf16>
    %c1 = arith.constant 1 : index
    %c0_36 = arith.constant 0 : index
    %c0_37 = arith.constant 0 : index
    %47 = vector.load %arg9[%c1, %c0_36, %c0_37] : memref<2x64x128xbf16, #tpu.memory_space<vmem>>, vector<1x64x128xbf16>
    %48 = vector.shape_cast %47 : vector<1x64x128xbf16> to vector<64x128xbf16>
    %49 = vector.shape_cast %46 : vector<64x128xbf16> to vector<1x64x128xbf16>
    tpu.vector_store %arg9[%c1, %c0_36, %c0_37], %49 {strides = array<i32>} : memref<2x64x128xbf16, #tpu.memory_space<vmem>>, vector<1x64x128xbf16>,
    return
  }
}

module attributes {stable_mosaic.version = 11 : i64} {
  func.func @bias_softmax_kernel(%arg0: memref<2x4864xf32, #tpu.memory_space<vmem>>, %arg1: memref<1x4864xf32, #tpu.memory_space<vmem>>, %arg2: memref<2x4864xf32, #tpu.memory_space<vmem>>) attributes {dimension_semantics = [], scalar_prefetch = 0 : i64, scratch_operands = 0 : i64, tpu.core_type = #tpu.core_type<tc>} {
    %c0 = arith.constant 0 : index
    %c0_0 = arith.constant 0 : index
    %0 = vector.load %arg0[%c0, %c0_0] : memref<2x4864xf32, #tpu.memory_space<vmem>>, vector<2x4864xf32>
    %c0_1 = arith.constant 0 : index
    %c0_2 = arith.constant 0 : index
    %1 = vector.load %arg1[%c0_1, %c0_2] : memref<1x4864xf32, #tpu.memory_space<vmem>>, vector<1x4864xf32>
    %2 = vector.broadcast %1 : vector<1x4864xf32> to vector<2x4864xf32>
    %3 = arith.addf %0, %2 : vector<2x4864xf32>
    %cst = arith.constant dense<0xFF800000> : vector<2xf32>
    %4 = vector.multi_reduction <maximumf>, %3, %cst [1] : vector<2x4864xf32> to vector<2xf32>
    %5 = vector.shape_cast %4 : vector<2xf32> to vector<2x1xf32>
    %6 = vector.broadcast %5 : vector<2x1xf32> to vector<2x4864xf32>
    %7 = arith.subf %3, %6 : vector<2x4864xf32>
    %8 = math.exp %7 : vector<2x4864xf32>
    %cst_3 = arith.constant dense<0.000000e+00> : vector<2xf32>
    %9 = vector.multi_reduction <add>, %8, %cst_3 [1] : vector<2x4864xf32> to vector<2xf32>
    %10 = vector.shape_cast %9 : vector<2xf32> to vector<2x1xf32>
    %11 = vector.broadcast %10 : vector<2x1xf32> to vector<2x4864xf32>
    %12 = arith.divf %8, %11 : vector<2x4864xf32>
    %c0_4 = arith.constant 0 : index
    %c0_5 = arith.constant 0 : index
    %13 = vector.load %arg2[%c0_4, %c0_5] : memref<2x4864xf32, #tpu.memory_space<vmem>>, vector<2x4864xf32>
    tpu.vector_store %arg2[%c0_4, %c0_5], %12 {strides = array<i32>} : memref<2x4864xf32, #tpu.memory_space<vmem>>, vector<2x4864xf32>,
    return
  }
}

module attributes {stable_mosaic.version = 11 : i64} {
  func.func @policy_fc_kernel(%arg0: i32, %arg1: i32, %arg2: memref<2x1024xbf16, #tpu.memory_space<vmem>>, %arg3: memref<1024x2432xbf16, #tpu.memory_space<vmem>>, %arg4: memref<2x2432xf32, #tpu.memory_space<vmem>>) attributes {dimension_semantics = [#tpu.dimension_semantics<parallel>, #tpu.dimension_semantics<arbitrary>], iteration_bounds = array<i64: 2, 8>, scalar_prefetch = 0 : i64, scratch_operands = 0 : i64, tpu.core_type = #tpu.core_type<tc>, window_params = [{transform_indices = @transform_0, window_bounds = array<i64: 2, 1024>}, {transform_indices = @transform_1, window_bounds = array<i64: 1024, 2432>}, {transform_indices = @transform_2, window_bounds = array<i64: 2, 2432>}]} {
    %c0_i32 = arith.constant 0 : i32
    %0 = arith.cmpi eq, %arg1, %c0_i32 : i32
    %1 = arith.extui %0 : i1 to i32
    %c0_i32_0 = arith.constant 0 : i32
    %2 = arith.cmpi ne, %1, %c0_i32_0 : i32
    scf.if %2 {
      %cst_8 = arith.constant 0.000000e+00 : f32
      %9 = vector.broadcast %cst_8 : f32 to vector<2x2432xf32>
      %c0_9 = arith.constant 0 : index
      %c0_10 = arith.constant 0 : index
      %10 = vector.load %arg4[%c0_9, %c0_10] : memref<2x2432xf32, #tpu.memory_space<vmem>>, vector<2x2432xf32>
      tpu.vector_store %arg4[%c0_9, %c0_10], %9 {strides = array<i32>} : memref<2x2432xf32, #tpu.memory_space<vmem>>, vector<2x2432xf32>,
    } else {
    }
    %c0 = arith.constant 0 : index
    %c0_1 = arith.constant 0 : index
    %3 = vector.load %arg4[%c0, %c0_1] : memref<2x2432xf32, #tpu.memory_space<vmem>>, vector<2x2432xf32>
    %c0_2 = arith.constant 0 : index
    %c0_3 = arith.constant 0 : index
    %4 = vector.load %arg2[%c0_2, %c0_3] : memref<2x1024xbf16, #tpu.memory_space<vmem>>, vector<2x1024xbf16>
    %c0_4 = arith.constant 0 : index
    %c0_5 = arith.constant 0 : index
    %5 = vector.load %arg3[%c0_4, %c0_5] : memref<1024x2432xbf16, #tpu.memory_space<vmem>>, vector<1024x2432xbf16>
    %cst = arith.constant dense<0.000000e+00> : vector<2x2432xf32>
    %6 = tpu.matmul %4, %5, %cst {dimension_numbers = #tpu.dot_dimension_numbers<[1], [0], [0], [1], [0, 0, 1, 1], [], []>} : vector<2x1024xbf16>, vector<1024x2432xbf16>, vector<2x2432xf32> -> vector<2x2432xf32>
    %7 = arith.addf %3, %6 : vector<2x2432xf32>
    %c0_6 = arith.constant 0 : index
    %c0_7 = arith.constant 0 : index
    %8 = vector.load %arg4[%c0_6, %c0_7] : memref<2x2432xf32, #tpu.memory_space<vmem>>, vector<2x2432xf32>
    tpu.vector_store %arg4[%c0_6, %c0_7], %7 {strides = array<i32>} : memref<2x2432xf32, #tpu.memory_space<vmem>>, vector<2x2432xf32>,
    return
  }
  func.func @transform_0(%arg0: i32, %arg1: i32) -> (i32, i32) {
    %c0_i32 = arith.constant 0 : i32
    %c0_i32_0 = arith.constant 0 : i32
    return %c0_i32, %arg1 : i32, i32
  }
  func.func @transform_1(%arg0: i32, %arg1: i32) -> (i32, i32) {
    %c0_i32 = arith.constant 0 : i32
    return %arg1, %arg0 : i32, i32
  }
  func.func @transform_2(%arg0: i32, %arg1: i32) -> (i32, i32) {
    %c0_i32 = arith.constant 0 : i32
    %c0_i32_0 = arith.constant 0 : i32
    return %c0_i32, %arg0 : i32, i32
  }
}

</mosaic_0001>

<llo_original>
// kernel: outblock_forward.5
$region0: #{outblock_forward.5}
  #allocation0 [shape = 'u32[]', space=smem, size = 0x4, offset = 0x4, fixed_abs, tag = 'smem constant byte address 0x4 - core index']
  #allocation1 [shape = 'u32[144,128]{1,0:T(1,128)}', space=vmem, size = 0x12000, scoped, tag = 'internal scratch']
  %s0 = inlined_call_operand.vmem [shape: f32[2,4864], index: 0, kind: input, shape index: {}]
  %s1 = inlined_call_operand.vmem [shape: f32[1,4864], index: 1, kind: input, shape index: {}]
  %s2 = inlined_call_operand.vmem [shape: f32[2,4864], index: 2, kind: output, shape index: {}]
  %s3 = sld [smem:[#allocation0]]
  $region18: #{outblock_forward.5} parent=0
    _
  %s5 = ssub.s32 1, %s3
  %s6 = scalar_select 0, %s5, %s3
  // Predicated region
  $region2: #{outblock_forward.5} parent=0 // pred_check
    _
  $region3: #{outblock_forward.5} parent=0 // pred_check_branch
    %8 = sbr.rel (0) target = $region5
  $region4: #{outblock_forward.5} parent=0 // pred_region
    _
  $region5: #{outblock_forward.5} parent=0 // pred_fallthru
    _
  // Predicated region
  $region6: #{outblock_forward.5} parent=0 // pred_check
    _
  $region7: #{outblock_forward.5} parent=0 // pred_check_branch
    %10 = sbr.rel (0) target = $region9
  $region8: #{outblock_forward.5} parent=0 // pred_region
    _
  $region9: #{outblock_forward.5} parent=0 // pred_fallthru
    _
  %v11 = vld [vmem:[%s0] sm:$0xff]
  %v12 = vld [vmem:[%s0 + $0x8] sm:$0xff]
  %v13 = vld [vmem:[%s0 + $0x10] sm:$0xff]
  %v14 = vld [vmem:[%s0 + $0x18] sm:$0xff]
  %v15 = vld [vmem:[%s0 + $0x20] sm:$0xff]
  %v16 = vld [vmem:[%s0 + $0x28] sm:$0xff]
  %v17 = vld [vmem:[%s0 + $0x30] sm:$0xff]
  %v18 = vld [vmem:[%s0 + $0x38] sm:$0xff]
  %v19 = vld [vmem:[%s0 + $0x40] sm:$0xff]
  %v20 = vld [vmem:[%s0 + $0x48] sm:$0xf]
  %v21 = vld [vmem:[%s1] sm:$0xff]
  %v22 = vld [vmem:[%s1 + $0x8] sm:$0xff]
  %v23 = vld [vmem:[%s1 + $0x10] sm:$0xff]
  %v24 = vld [vmem:[%s1 + $0x18] sm:$0xff]
  %v25 = vld [vmem:[%s1 + $0x20] sm:$0x3f]
  %v31 = vlaneseq
  %v32 = vshrl.u32 %v31, 7
  %v33 = vsub.s32 0, %v32
  %v34 = vrot.slane %v21, %v33
  %v35 = vlaneseq
  %v36 = vshrl.u32 %v35, 7
  %v37 = vsub.s32 1, %v36
  %v38 = vrot.slane %v21, %v37
  %v39 = vlaneseq
  %v40 = vshrl.u32 %v39, 7
  %v41 = vsub.s32 2, %v40
  %v42 = vrot.slane %v21, %v41
  %v43 = vlaneseq
  %v44 = vshrl.u32 %v43, 7
  %v45 = vsub.s32 3, %v44
  %v46 = vrot.slane %v21, %v45
  %v47 = vlaneseq
  %v48 = vshrl.u32 %v47, 7
  %v49 = vsub.s32 4, %v48
  %v50 = vrot.slane %v21, %v49
  %v51 = vlaneseq
  %v52 = vshrl.u32 %v51, 7
  %v53 = vsub.s32 5, %v52
  %v54 = vrot.slane %v21, %v53
  %v55 = vlaneseq
  %v56 = vshrl.u32 %v55, 7
  %v57 = vsub.s32 6, %v56
  %v58 = vrot.slane %v21, %v57
  %v59 = vlaneseq
  %v60 = vshrl.u32 %v59, 7
  %v61 = vsub.s32 7, %v60
  %v62 = vrot.slane %v21, %v61
  %v63 = vlaneseq
  %v64 = vshrl.u32 %v63, 7
  %v65 = vsub.s32 0, %v64
  %v66 = vrot.slane %v22, %v65
  %v67 = vlaneseq
  %v68 = vshrl.u32 %v67, 7
  %v69 = vsub.s32 1, %v68
  %v70 = vrot.slane %v22, %v69
  %v71 = vlaneseq
  %v72 = vshrl.u32 %v71, 7
  %v73 = vsub.s32 2, %v72
  %v74 = vrot.slane %v22, %v73
  %v75 = vlaneseq
  %v76 = vshrl.u32 %v75, 7
  %v77 = vsub.s32 3, %v76
  %v78 = vrot.slane %v22, %v77
  %v79 = vlaneseq
  %v80 = vshrl.u32 %v79, 7
  %v81 = vsub.s32 4, %v80
  %v82 = vrot.slane %v22, %v81
  %v83 = vlaneseq
  %v84 = vshrl.u32 %v83, 7
  %v85 = vsub.s32 5, %v84
  %v86 = vrot.slane %v22, %v85
  %v87 = vlaneseq
  %v88 = vshrl.u32 %v87, 7
  %v89 = vsub.s32 6, %v88
  %v90 = vrot.slane %v22, %v89
  %v91 = vlaneseq
  %v92 = vshrl.u32 %v91, 7
  %v93 = vsub.s32 7, %v92
  %v94 = vrot.slane %v22, %v93
  %v95 = vlaneseq
  %v96 = vshrl.u32 %v95, 7
  %v97 = vsub.s32 0, %v96
  %v98 = vrot.slane %v23, %v97
  %v99 = vlaneseq
  %v100 = vshrl.u32 %v99, 7
  %v101 = vsub.s32 1, %v100
  %v102 = vrot.slane %v23, %v101
  %v103 = vlaneseq
  %v104 = vshrl.u32 %v103, 7
  %v105 = vsub.s32 2, %v104
  %v106 = vrot.slane %v23, %v105
  %v107 = vlaneseq
  %v108 = vshrl.u32 %v107, 7
  %v109 = vsub.s32 3, %v108
  %v110 = vrot.slane %v23, %v109
  %v111 = vlaneseq
  %v112 = vshrl.u32 %v111, 7
  %v113 = vsub.s32 4, %v112
  %v114 = vrot.slane %v23, %v113
  %v115 = vlaneseq
  %v116 = vshrl.u32 %v115, 7
  %v117 = vsub.s32 5, %v116
  %v118 = vrot.slane %v23, %v117
  %v119 = vlaneseq
  %v120 = vshrl.u32 %v119, 7
  %v121 = vsub.s32 6, %v120
  %v122 = vrot.slane %v23, %v121
  %v123 = vlaneseq
  %v124 = vshrl.u32 %v123, 7
  %v125 = vsub.s32 7, %v124
  %v126 = vrot.slane %v23, %v125
  %v127 = vlaneseq
  %v128 = vshrl.u32 %v127, 7
  %v129 = vsub.s32 0, %v128
  %v130 = vrot.slane %v24, %v129
  %v131 = vlaneseq
  %v132 = vshrl.u32 %v131, 7
  %v133 = vsub.s32 1, %v132
  %v134 = vrot.slane %v24, %v133
  %v135 = vlaneseq
  %v136 = vshrl.u32 %v135, 7
  %v137 = vsub.s32 2, %v136
  %v138 = vrot.slane %v24, %v137
  %v139 = vlaneseq
  %v140 = vshrl.u32 %v139, 7
  %v141 = vsub.s32 3, %v140
  %v142 = vrot.slane %v24, %v141
  %v143 = vlaneseq
  %v144 = vshrl.u32 %v143, 7
  %v145 = vsub.s32 4, %v144
  %v146 = vrot.slane %v24, %v145
  %v147 = vlaneseq
  %v148 = vshrl.u32 %v147, 7
  %v149 = vsub.s32 5, %v148
  %v150 = vrot.slane %v24, %v149
  %v151 = vlaneseq
  %v152 = vshrl.u32 %v151, 7
  %v153 = vsub.s32 6, %v152
  %v154 = vrot.slane %v24, %v153
  %v155 = vlaneseq
  %v156 = vshrl.u32 %v155, 7
  %v157 = vsub.s32 7, %v156
  %v158 = vrot.slane %v24, %v157
  %v159 = vlaneseq
  %v160 = vshrl.u32 %v159, 7
  %v161 = vsub.s32 0, %v160
  %v162 = vrot.slane %v25, %v161
  %v163 = vlaneseq
  %v164 = vshrl.u32 %v163, 7
  %v165 = vsub.s32 1, %v164
  %v166 = vrot.slane %v25, %v165
  %v167 = vlaneseq
  %v168 = vshrl.u32 %v167, 7
  %v169 = vsub.s32 2, %v168
  %v170 = vrot.slane %v25, %v169
  %v171 = vlaneseq
  %v172 = vshrl.u32 %v171, 7
  %v173 = vsub.s32 3, %v172
  %v174 = vrot.slane %v25, %v173
  %v175 = vlaneseq
  %v176 = vshrl.u32 %v175, 7
  %v177 = vsub.s32 4, %v176
  %v178 = vrot.slane %v25, %v177
  %v179 = vlaneseq
  %v180 = vshrl.u32 %v179, 7
  %v181 = vsub.s32 5, %v180
  %v182 = vrot.slane %v25, %v181
  %v183 = vcombine.low %v34, %v38
  %v184 = vcombine.low %v42, %v46
  %v186 = vunpack.c.l.s4 1983009808
  %v187 = vunpack.c.0.s8 %v186
  %v188 = vlaneseq
  %v189 = vshrl.u32 %v188, 7
  %v190 = vsub.s32 %v187, %v189
  %v191 = vrot.slane %v183, %v190
  %v193 = vunpack.c.l.s4 1983009808
  %v194 = vunpack.c.0.s8 %v193
  %v195 = vlaneseq
  %v196 = vshrl.u32 %v195, 7
  %v197 = vsub.s32 %v194, %v196
  %v198 = vrot.slane %v184, %v197
  %v199 = vcombine.low %v191, %v198
  %v200 = vcombine.low %v50, %v54
  %v201 = vcombine.low %v58, %v62
  %v203 = vunpack.c.l.s4 1983009808
  %v204 = vunpack.c.0.s8 %v203
  %v205 = vlaneseq
  %v206 = vshrl.u32 %v205, 7
  %v207 = vsub.s32 %v204, %v206
  %v208 = vrot.slane %v200, %v207
  %v210 = vunpack.c.l.s4 1983009808
  %v211 = vunpack.c.0.s8 %v210
  %v212 = vlaneseq
  %v213 = vshrl.u32 %v212, 7
  %v214 = vsub.s32 %v211, %v213
  %v215 = vrot.slane %v201, %v214
  %v216 = vcombine.low %v208, %v215
  %v217 = vcombine.low %v66, %v70
  %v218 = vcombine.low %v74, %v78
  %v220 = vunpack.c.l.s4 1983009808
  %v221 = vunpack.c.0.s8 %v220
  %v222 = vlaneseq
  %v223 = vshrl.u32 %v222, 7
  %v224 = vsub.s32 %v221, %v223
  %v225 = vrot.slane %v217, %v224
  %v227 = vunpack.c.l.s4 1983009808
  %v228 = vunpack.c.0.s8 %v227
  %v229 = vlaneseq
  %v230 = vshrl.u32 %v229, 7
  %v231 = vsub.s32 %v228, %v230
  %v232 = vrot.slane %v218, %v231
  %v233 = vcombine.low %v225, %v232
  %v234 = vcombine.low %v82, %v86
  %v235 = vcombine.low %v90, %v94
  %v237 = vunpack.c.l.s4 1983009808
  %v238 = vunpack.c.0.s8 %v237
  %v239 = vlaneseq
  %v240 = vshrl.u32 %v239, 7
  %v241 = vsub.s32 %v238, %v240
  %v242 = vrot.slane %v234, %v241
  %v244 = vunpack.c.l.s4 1983009808
  %v245 = vunpack.c.0.s8 %v244
  %v246 = vlaneseq
  %v247 = vshrl.u32 %v246, 7
  %v248 = vsub.s32 %v245, %v247
  %v249 = vrot.slane %v235, %v248
  %v250 = vcombine.low %v242, %v249
  %v251 = vcombine.low %v98, %v102
  %v252 = vcombine.low %v106, %v110
  %v254 = vunpack.c.l.s4 1983009808
  %v255 = vunpack.c.0.s8 %v254
  %v256 = vlaneseq
  %v257 = vshrl.u32 %v256, 7
  %v258 = vsub.s32 %v255, %v257
  %v259 = vrot.slane %v251, %v258
  %v261 = vunpack.c.l.s4 1983009808
  %v262 = vunpack.c.0.s8 %v261
  %v263 = vlaneseq
  %v264 = vshrl.u32 %v263, 7
  %v265 = vsub.s32 %v262, %v264
  %v266 = vrot.slane %v252, %v265
  %v267 = vcombine.low %v259, %v266
  %v268 = vcombine.low %v114, %v118
  %v269 = vcombine.low %v122, %v126
  %v271 = vunpack.c.l.s4 1983009808
  %v272 = vunpack.c.0.s8 %v271
  %v273 = vlaneseq
  %v274 = vshrl.u32 %v273, 7
  %v275 = vsub.s32 %v272, %v274
  %v276 = vrot.slane %v268, %v275
  %v278 = vunpack.c.l.s4 1983009808
  %v279 = vunpack.c.0.s8 %v278
  %v280 = vlaneseq
  %v281 = vshrl.u32 %v280, 7
  %v282 = vsub.s32 %v279, %v281
  %v283 = vrot.slane %v269, %v282
  %v284 = vcombine.low %v276, %v283
  %v285 = vcombine.low %v130, %v134
  %v286 = vcombine.low %v138, %v142
  %v288 = vunpack.c.l.s4 1983009808
  %v289 = vunpack.c.0.s8 %v288
  %v290 = vlaneseq
  %v291 = vshrl.u32 %v290, 7
  %v292 = vsub.s32 %v289, %v291
  %v293 = vrot.slane %v285, %v292
  %v295 = vunpack.c.l.s4 1983009808
  %v296 = vunpack.c.0.s8 %v295
  %v297 = vlaneseq
  %v298 = vshrl.u32 %v297, 7
  %v299 = vsub.s32 %v296, %v298
  %v300 = vrot.slane %v286, %v299
  %v301 = vcombine.low %v293, %v300
  %v302 = vcombine.low %v146, %v150
  %v303 = vcombine.low %v154, %v158
  %v305 = vunpack.c.l.s4 1983009808
  %v306 = vunpack.c.0.s8 %v305
  %v307 = vlaneseq
  %v308 = vshrl.u32 %v307, 7
  %v309 = vsub.s32 %v306, %v308
  %v310 = vrot.slane %v302, %v309
  %v312 = vunpack.c.l.s4 1983009808
  %v313 = vunpack.c.0.s8 %v312
  %v314 = vlaneseq
  %v315 = vshrl.u32 %v314, 7
  %v316 = vsub.s32 %v313, %v315
  %v317 = vrot.slane %v303, %v316
  %v318 = vcombine.low %v310, %v317
  %v319 = vcombine.low %v162, %v166
  %v320 = vcombine.low %v170, %v174
  %v322 = vunpack.c.l.s4 1983009808
  %v323 = vunpack.c.0.s8 %v322
  %v324 = vlaneseq
  %v325 = vshrl.u32 %v324, 7
  %v326 = vsub.s32 %v323, %v325
  %v327 = vrot.slane %v319, %v326
  %v329 = vunpack.c.l.s4 1983009808
  %v330 = vunpack.c.0.s8 %v329
  %v331 = vlaneseq
  %v332 = vshrl.u32 %v331, 7
  %v333 = vsub.s32 %v330, %v332
  %v334 = vrot.slane %v320, %v333
  %v335 = vcombine.low %v327, %v334
  %v336 = vcombine.low %v178, %v182
  %v338 = vunpack.c.l.s4 1983009808
  %v339 = vunpack.c.0.s8 %v338
  %v340 = vlaneseq
  %v341 = vshrl.u32 %v340, 7
  %v342 = vsub.s32 %v339, %v341
  %v343 = vrot.slane %v336, %v342
  %v354 = vadd.f32 %v11, %v199
  %v355 = vadd.f32 %v12, %v216
  %v356 = vadd.f32 %v13, %v233
  %v357 = vadd.f32 %v14, %v250
  %v358 = vadd.f32 %v15, %v267
  %v359 = vadd.f32 %v16, %v284
  %v360 = vadd.f32 %v17, %v301
  %v361 = vadd.f32 %v18, %v318
  %v362 = vadd.f32 %v19, %v335
  %v363 = vadd.f32 %v20, %v343
  %v374 = vcombine.high %v354, %v354
  %v376 = vunpack.c.l.s4 1983009808
  %v377 = vunpack.c.0.s8 %v376
  %v378 = vlaneseq
  %v379 = vshrl.u32 %v378, 7
  %v380 = vsub.s32 %v377, %v379
  %v381 = vrot.slane %v354, %v380
  %v383 = vunpack.c.l.s4 1983009808
  %v384 = vunpack.c.0.s8 %v383
  %v385 = vlaneseq
  %v386 = vshrl.u32 %v385, 7
  %v387 = vsub.s32 %v384, %v386
  %v388 = vrot.slane %v374, %v387
  %v389 = vcombine.high %v381, %v381
  %v390 = vcombine.high %v388, %v388
  %v391 = vcombine.high %v355, %v355
  %v393 = vunpack.c.l.s4 1983009808
  %v394 = vunpack.c.0.s8 %v393
  %v395 = vlaneseq
  %v396 = vshrl.u32 %v395, 7
  %v397 = vsub.s32 %v394, %v396
  %v398 = vrot.slane %v355, %v397
  %v400 = vunpack.c.l.s4 1983009808
  %v401 = vunpack.c.0.s8 %v400
  %v402 = vlaneseq
  %v403 = vshrl.u32 %v402, 7
  %v404 = vsub.s32 %v401, %v403
  %v405 = vrot.slane %v391, %v404
  %v406 = vcombine.high %v398, %v398
  %v407 = vcombine.high %v405, %v405
  %v408 = vcombine.high %v356, %v356
  %v410 = vunpack.c.l.s4 1983009808
  %v411 = vunpack.c.0.s8 %v410
  %v412 = vlaneseq
  %v413 = vshrl.u32 %v412, 7
  %v414 = vsub.s32 %v411, %v413
  %v415 = vrot.slane %v356, %v414
  %v417 = vunpack.c.l.s4 1983009808
  %v418 = vunpack.c.0.s8 %v417
  %v419 = vlaneseq
  %v420 = vshrl.u32 %v419, 7
  %v421 = vsub.s32 %v418, %v420
  %v422 = vrot.slane %v408, %v421
  %v423 = vcombine.high %v415, %v415
  %v424 = vcombine.high %v422, %v422
  %v425 = vcombine.high %v357, %v357
  %v427 = vunpack.c.l.s4 1983009808
  %v428 = vunpack.c.0.s8 %v427
  %v429 = vlaneseq
  %v430 = vshrl.u32 %v429, 7
  %v431 = vsub.s32 %v428, %v430
  %v432 = vrot.slane %v357, %v431
  %v434 = vunpack.c.l.s4 1983009808
  %v435 = vunpack.c.0.s8 %v434
  %v436 = vlaneseq
  %v437 = vshrl.u32 %v436, 7
  %v438 = vsub.s32 %v435, %v437
  %v439 = vrot.slane %v425, %v438
  %v440 = vcombine.high %v432, %v432
  %v441 = vcombine.high %v439, %v439
  %v442 = vcombine.high %v358, %v358
  %v444 = vunpack.c.l.s4 1983009808
  %v445 = vunpack.c.0.s8 %v444
  %v446 = vlaneseq
  %v447 = vshrl.u32 %v446, 7
  %v448 = vsub.s32 %v445, %v447
  %v449 = vrot.slane %v358, %v448
  %v451 = vunpack.c.l.s4 1983009808
  %v452 = vunpack.c.0.s8 %v451
  %v453 = vlaneseq
  %v454 = vshrl.u32 %v453, 7
  %v455 = vsub.s32 %v452, %v454
  %v456 = vrot.slane %v442, %v455
  %v457 = vcombine.high %v449, %v449
  %v458 = vcombine.high %v456, %v456
  %v459 = vcombine.high %v359, %v359
  %v461 = vunpack.c.l.s4 1983009808
  %v462 = vunpack.c.0.s8 %v461
  %v463 = vlaneseq
  %v464 = vshrl.u32 %v463, 7
  %v465 = vsub.s32 %v462, %v464
  %v466 = vrot.slane %v359, %v465
  %v468 = vunpack.c.l.s4 1983009808
  %v469 = vunpack.c.0.s8 %v468
  %v470 = vlaneseq
  %v471 = vshrl.u32 %v470, 7
  %v472 = vsub.s32 %v469, %v471
  %v473 = vrot.slane %v459, %v472
  %v474 = vcombine.high %v466, %v466
  %v475 = vcombine.high %v473, %v473
  %v476 = vcombine.high %v360, %v360
  %v478 = vunpack.c.l.s4 1983009808
  %v479 = vunpack.c.0.s8 %v478
  %v480 = vlaneseq
  %v481 = vshrl.u32 %v480, 7
  %v482 = vsub.s32 %v479, %v481
  %v483 = vrot.slane %v360, %v482
  %v485 = vunpack.c.l.s4 1983009808
  %v486 = vunpack.c.0.s8 %v485
  %v487 = vlaneseq
  %v488 = vshrl.u32 %v487, 7
  %v489 = vsub.s32 %v486, %v488
  %v490 = vrot.slane %v476, %v489
  %v491 = vcombine.high %v483, %v483
  %v492 = vcombine.high %v490, %v490
  %v493 = vcombine.high %v361, %v361
  %v495 = vunpack.c.l.s4 1983009808
  %v496 = vunpack.c.0.s8 %v495
  %v497 = vlaneseq
  %v498 = vshrl.u32 %v497, 7
  %v499 = vsub.s32 %v496, %v498
  %v500 = vrot.slane %v361, %v499
  %v502 = vunpack.c.l.s4 1983009808
  %v503 = vunpack.c.0.s8 %v502
  %v504 = vlaneseq
  %v505 = vshrl.u32 %v504, 7
  %v506 = vsub.s32 %v503, %v505
  %v507 = vrot.slane %v493, %v506
  %v508 = vcombine.high %v500, %v500
  %v509 = vcombine.high %v507, %v507
  %v510 = vcombine.high %v362, %v362
  %v512 = vunpack.c.l.s4 1983009808
  %v513 = vunpack.c.0.s8 %v512
  %v514 = vlaneseq
  %v515 = vshrl.u32 %v514, 7
  %v516 = vsub.s32 %v513, %v515
  %v517 = vrot.slane %v362, %v516
  %v519 = vunpack.c.l.s4 1983009808
  %v520 = vunpack.c.0.s8 %v519
  %v521 = vlaneseq
  %v522 = vshrl.u32 %v521, 7
  %v523 = vsub.s32 %v520, %v522
  %v524 = vrot.slane %v510, %v523
  %v525 = vcombine.high %v517, %v517
  %v526 = vcombine.high %v524, %v524
  %v528 = vunpack.c.l.s4 1983009808
  %v529 = vunpack.c.0.s8 %v528
  %v530 = vlaneseq
  %v531 = vshrl.u32 %v530, 7
  %v532 = vsub.s32 %v529, %v531
  %v533 = vrot.slane %v363, %v532
  %v534 = vcombine.high %v533, %v533
  %vm573 = vcmask 1041408
  %v574 = vsel %vm573, %v381, -inf
  %v575 = vsel %vm573, %v389, -inf
  %v576 = vsel %vm573, %v388, -inf
  %v577 = vsel %vm573, %v390, -inf
  %v578 = vsel %vm573, %v398, -inf
  %v579 = vmax.f32 %v574, %v578
  %v580 = vsel %vm573, %v406, -inf
  %v581 = vmax.f32 %v575, %v580
  %v582 = vsel %vm573, %v405, -inf
  %v583 = vmax.f32 %v576, %v582
  %v584 = vsel %vm573, %v407, -inf
  %v585 = vmax.f32 %v577, %v584
  %v586 = vsel %vm573, %v415, -inf
  %v587 = vmax.f32 %v579, %v586
  %v588 = vsel %vm573, %v423, -inf
  %v589 = vmax.f32 %v581, %v588
  %v590 = vsel %vm573, %v422, -inf
  %v591 = vmax.f32 %v583, %v590
  %v592 = vsel %vm573, %v424, -inf
  %v593 = vmax.f32 %v585, %v592
  %v594 = vsel %vm573, %v432, -inf
  %v595 = vmax.f32 %v587, %v594
  %v596 = vsel %vm573, %v440, -inf
  %v597 = vmax.f32 %v589, %v596
  %v598 = vsel %vm573, %v439, -inf
  %v599 = vmax.f32 %v591, %v598
  %v600 = vsel %vm573, %v441, -inf
  %v601 = vmax.f32 %v593, %v600
  %v602 = vsel %vm573, %v449, -inf
  %v603 = vmax.f32 %v595, %v602
  %v604 = vsel %vm573, %v457, -inf
  %v605 = vmax.f32 %v597, %v604
  %v606 = vsel %vm573, %v456, -inf
  %v607 = vmax.f32 %v599, %v606
  %v608 = vsel %vm573, %v458, -inf
  %v609 = vmax.f32 %v601, %v608
  %v610 = vsel %vm573, %v466, -inf
  %v611 = vmax.f32 %v603, %v610
  %v612 = vsel %vm573, %v474, -inf
  %v613 = vmax.f32 %v605, %v612
  %v614 = vsel %vm573, %v473, -inf
  %v615 = vmax.f32 %v607, %v614
  %v616 = vsel %vm573, %v475, -inf
  %v617 = vmax.f32 %v609, %v616
  %v618 = vsel %vm573, %v483, -inf
  %v619 = vmax.f32 %v611, %v618
  %v620 = vsel %vm573, %v491, -inf
  %v621 = vmax.f32 %v613, %v620
  %v622 = vsel %vm573, %v490, -inf
  %v623 = vmax.f32 %v615, %v622
  %v624 = vsel %vm573, %v492, -inf
  %v625 = vmax.f32 %v617, %v624
  %v626 = vsel %vm573, %v500, -inf
  %v627 = vmax.f32 %v619, %v626
  %v628 = vsel %vm573, %v508, -inf
  %v629 = vmax.f32 %v621, %v628
  %v630 = vsel %vm573, %v507, -inf
  %v631 = vmax.f32 %v623, %v630
  %v632 = vsel %vm573, %v509, -inf
  %v633 = vmax.f32 %v625, %v632
  %v634 = vsel %vm573, %v517, -inf
  %v635 = vmax.f32 %v627, %v634
  %v636 = vsel %vm573, %v525, -inf
  %v637 = vmax.f32 %v629, %v636
  %v638 = vsel %vm573, %v524, -inf
  %v639 = vmax.f32 %v631, %v638
  %v640 = vsel %vm573, %v526, -inf
  %v641 = vmax.f32 %v633, %v640
  %v642 = vsel %vm573, %v533, -inf
  %v643 = vmax.f32 %v635, %v642
  %v644 = vsel %vm573, %v534, -inf
  %v645 = vmax.f32 %v637, %v644
  %v646 = vmax.f32 %v643, %v645
  %v647 = vmax.f32 %v639, %v641
  %v648 = vmax.f32 %v646, %v647
  %649 = vmax.xlane.f32.xlu0 %v648
  %v650 = vpop.xlane.xlu0 %649
  %v653 = vunpack.c.l.s4 269488144
  %v654 = vunpack.c.0.s8 %v653
  %v655 = vlaneseq
  %v656 = vshrl.u32 %v655, 7
  %v657 = vsub.s32 %v654, %v656
  %v658 = vrot.slane %v650, %v657
  %v660 = vsub.f32 %v354, %v658
  %v661 = vsub.f32 %v355, %v658
  %v662 = vsub.f32 %v356, %v658
  %v663 = vsub.f32 %v357, %v658
  %v664 = vsub.f32 %v358, %v658
  %v665 = vsub.f32 %v359, %v658
  %v666 = vsub.f32 %v360, %v658
  %v667 = vsub.f32 %v361, %v658
  %v668 = vsub.f32 %v362, %v658
  %v669 = vsub.f32 %v363, %v658
  %v670 = vmul.f32 %v660, 1.442695
  %v671 = vpow.pop %v670
  %v672 = vmul.f32 %v661, 1.442695
  %v673 = vpow.pop %v672
  %v674 = vmul.f32 %v662, 1.442695
  %v675 = vpow.pop %v674
  %v676 = vmul.f32 %v663, 1.442695
  %v677 = vpow.pop %v676
  %v678 = vmul.f32 %v664, 1.442695
  %v679 = vpow.pop %v678
  %v680 = vmul.f32 %v665, 1.442695
  %v681 = vpow.pop %v680
  %v682 = vmul.f32 %v666, 1.442695
  %v683 = vpow.pop %v682
  %v684 = vmul.f32 %v667, 1.442695
  %v685 = vpow.pop %v684
  %v686 = vmul.f32 %v668, 1.442695
  %v687 = vpow.pop %v686
  %v688 = vmul.f32 %v669, 1.442695
  %v689 = vpow.pop %v688
  %v700 = vcombine.high %v671, %v671
  %v702 = vunpack.c.l.s4 1983009808
  %v703 = vunpack.c.0.s8 %v702
  %v704 = vlaneseq
  %v705 = vshrl.u32 %v704, 7
  %v706 = vsub.s32 %v703, %v705
  %v707 = vrot.slane %v671, %v706
  %v709 = vunpack.c.l.s4 1983009808
  %v710 = vunpack.c.0.s8 %v709
  %v711 = vlaneseq
  %v712 = vshrl.u32 %v711, 7
  %v713 = vsub.s32 %v710, %v712
  %v714 = vrot.slane %v700, %v713
  %v715 = vcombine.high %v707, %v707
  %v716 = vcombine.high %v714, %v714
  %v717 = vcombine.high %v673, %v673
  %v719 = vunpack.c.l.s4 1983009808
  %v720 = vunpack.c.0.s8 %v719
  %v721 = vlaneseq
  %v722 = vshrl.u32 %v721, 7
  %v723 = vsub.s32 %v720, %v722
  %v724 = vrot.slane %v673, %v723
  %v726 = vunpack.c.l.s4 1983009808
  %v727 = vunpack.c.0.s8 %v726
  %v728 = vlaneseq
  %v729 = vshrl.u32 %v728, 7
  %v730 = vsub.s32 %v727, %v729
  %v731 = vrot.slane %v717, %v730
  %v732 = vcombine.high %v724, %v724
  %v733 = vcombine.high %v731, %v731
  %v734 = vcombine.high %v675, %v675
  %v736 = vunpack.c.l.s4 1983009808
  %v737 = vunpack.c.0.s8 %v736
  %v738 = vlaneseq
  %v739 = vshrl.u32 %v738, 7
  %v740 = vsub.s32 %v737, %v739
  %v741 = vrot.slane %v675, %v740
  %v743 = vunpack.c.l.s4 1983009808
  %v744 = vunpack.c.0.s8 %v743
  %v745 = vlaneseq
  %v746 = vshrl.u32 %v745, 7
  %v747 = vsub.s32 %v744, %v746
  %v748 = vrot.slane %v734, %v747
  %v749 = vcombine.high %v741, %v741
  %v750 = vcombine.high %v748, %v748
  %v751 = vcombine.high %v677, %v677
  %v753 = vunpack.c.l.s4 1983009808
  %v754 = vunpack.c.0.s8 %v753
  %v755 = vlaneseq
  %v756 = vshrl.u32 %v755, 7
  %v757 = vsub.s32 %v754, %v756
  %v758 = vrot.slane %v677, %v757
  %v760 = vunpack.c.l.s4 1983009808
  %v761 = vunpack.c.0.s8 %v760
  %v762 = vlaneseq
  %v763 = vshrl.u32 %v762, 7
  %v764 = vsub.s32 %v761, %v763
  %v765 = vrot.slane %v751, %v764
  %v766 = vcombine.high %v758, %v758
  %v767 = vcombine.high %v765, %v765
  %v768 = vcombine.high %v679, %v679
  %v770 = vunpack.c.l.s4 1983009808
  %v771 = vunpack.c.0.s8 %v770
  %v772 = vlaneseq
  %v773 = vshrl.u32 %v772, 7
  %v774 = vsub.s32 %v771, %v773
  %v775 = vrot.slane %v679, %v774
  %v777 = vunpack.c.l.s4 1983009808
  %v778 = vunpack.c.0.s8 %v777
  %v779 = vlaneseq
  %v780 = vshrl.u32 %v779, 7
  %v781 = vsub.s32 %v778, %v780
  %v782 = vrot.slane %v768, %v781
  %v783 = vcombine.high %v775, %v775
  %v784 = vcombine.high %v782, %v782
  %v785 = vcombine.high %v681, %v681
  %v787 = vunpack.c.l.s4 1983009808
  %v788 = vunpack.c.0.s8 %v787
  %v789 = vlaneseq
  %v790 = vshrl.u32 %v789, 7
  %v791 = vsub.s32 %v788, %v790
  %v792 = vrot.slane %v681, %v791
  %v794 = vunpack.c.l.s4 1983009808
  %v795 = vunpack.c.0.s8 %v794
  %v796 = vlaneseq
  %v797 = vshrl.u32 %v796, 7
  %v798 = vsub.s32 %v795, %v797
  %v799 = vrot.slane %v785, %v798
  %v800 = vcombine.high %v792, %v792
  %v801 = vcombine.high %v799, %v799
  %v802 = vcombine.high %v683, %v683
  %v804 = vunpack.c.l.s4 1983009808
  %v805 = vunpack.c.0.s8 %v804
  %v806 = vlaneseq
  %v807 = vshrl.u32 %v806, 7
  %v808 = vsub.s32 %v805, %v807
  %v809 = vrot.slane %v683, %v808
  %v811 = vunpack.c.l.s4 1983009808
  %v812 = vunpack.c.0.s8 %v811
  %v813 = vlaneseq
  %v814 = vshrl.u32 %v813, 7
  %v815 = vsub.s32 %v812, %v814
  %v816 = vrot.slane %v802, %v815
  %v817 = vcombine.high %v809, %v809
  %v818 = vcombine.high %v816, %v816
  %v819 = vcombine.high %v685, %v685
  %v821 = vunpack.c.l.s4 1983009808
  %v822 = vunpack.c.0.s8 %v821
  %v823 = vlaneseq
  %v824 = vshrl.u32 %v823, 7
  %v825 = vsub.s32 %v822, %v824
  %v826 = vrot.slane %v685, %v825
  %v828 = vunpack.c.l.s4 1983009808
  %v829 = vunpack.c.0.s8 %v828
  %v830 = vlaneseq
  %v831 = vshrl.u32 %v830, 7
  %v832 = vsub.s32 %v829, %v831
  %v833 = vrot.slane %v819, %v832
  %v834 = vcombine.high %v826, %v826
  %v835 = vcombine.high %v833, %v833
  %v836 = vcombine.high %v687, %v687
  %v838 = vunpack.c.l.s4 1983009808
  %v839 = vunpack.c.0.s8 %v838
  %v840 = vlaneseq
  %v841 = vshrl.u32 %v840, 7
  %v842 = vsub.s32 %v839, %v841
  %v843 = vrot.slane %v687, %v842
  %v845 = vunpack.c.l.s4 1983009808
  %v846 = vunpack.c.0.s8 %v845
  %v847 = vlaneseq
  %v848 = vshrl.u32 %v847, 7
  %v849 = vsub.s32 %v846, %v848
  %v850 = vrot.slane %v836, %v849
  %v851 = vcombine.high %v843, %v843
  %v852 = vcombine.high %v850, %v850
  %v854 = vunpack.c.l.s4 1983009808
  %v855 = vunpack.c.0.s8 %v854
  %v856 = vlaneseq
  %v857 = vshrl.u32 %v856, 7
  %v858 = vsub.s32 %v855, %v857
  %v859 = vrot.slane %v689, %v858
  %v860 = vcombine.high %v859, %v859
  %v899 = vsel %vm573, %v707, 0.0
  %v900 = vsel %vm573, %v715, 0.0
  %v901 = vadd.f32 %v899, %v900
  %v902 = vsel %vm573, %v714, 0.0
  %v903 = vadd.f32 %v901, %v902
  %v904 = vsel %vm573, %v716, 0.0
  %v905 = vadd.f32 %v903, %v904
  %v906 = vsel %vm573, %v724, 0.0
  %v907 = vadd.f32 %v905, %v906
  %v908 = vsel %vm573, %v732, 0.0
  %v909 = vadd.f32 %v907, %v908
  %v910 = vsel %vm573, %v731, 0.0
  %v911 = vadd.f32 %v909, %v910
  %v912 = vsel %vm573, %v733, 0.0
  %v913 = vadd.f32 %v911, %v912
  %v914 = vsel %vm573, %v741, 0.0
  %v915 = vadd.f32 %v913, %v914
  %v916 = vsel %vm573, %v749, 0.0
  %v917 = vadd.f32 %v915, %v916
  %v918 = vsel %vm573, %v748, 0.0
  %v919 = vadd.f32 %v917, %v918
  %v920 = vsel %vm573, %v750, 0.0
  %v921 = vadd.f32 %v919, %v920
  %v922 = vsel %vm573, %v758, 0.0
  %v923 = vadd.f32 %v921, %v922
  %v924 = vsel %vm573, %v766, 0.0
  %v925 = vadd.f32 %v923, %v924
  %v926 = vsel %vm573, %v765, 0.0
  %v927 = vadd.f32 %v925, %v926
  %v928 = vsel %vm573, %v767, 0.0
  %v929 = vadd.f32 %v927, %v928
  %v930 = vsel %vm573, %v775, 0.0
  %v931 = vadd.f32 %v929, %v930
  %v932 = vsel %vm573, %v783, 0.0
  %v933 = vadd.f32 %v931, %v932
  %v934 = vsel %vm573, %v782, 0.0
  %v935 = vadd.f32 %v933, %v934
  %v936 = vsel %vm573, %v784, 0.0
  %v937 = vadd.f32 %v935, %v936
  %v938 = vsel %vm573, %v792, 0.0
  %v939 = vadd.f32 %v937, %v938
  %v940 = vsel %vm573, %v800, 0.0
  %v941 = vadd.f32 %v939, %v940
  %v942 = vsel %vm573, %v799, 0.0
  %v943 = vadd.f32 %v941, %v942
  %v944 = vsel %vm573, %v801, 0.0
  %v945 = vadd.f32 %v943, %v944
  %v946 = vsel %vm573, %v809, 0.0
  %v947 = vadd.f32 %v945, %v946
  %v948 = vsel %vm573, %v817, 0.0
  %v949 = vadd.f32 %v947, %v948
  %v950 = vsel %vm573, %v816, 0.0
  %v951 = vadd.f32 %v949, %v950
  %v952 = vsel %vm573, %v818, 0.0
  %v953 = vadd.f32 %v951, %v952
  %v954 = vsel %vm573, %v826, 0.0
  %v955 = vadd.f32 %v953, %v954
  %v956 = vsel %vm573, %v834, 0.0
  %v957 = vadd.f32 %v955, %v956
  %v958 = vsel %vm573, %v833, 0.0
  %v959 = vadd.f32 %v957, %v958
  %v960 = vsel %vm573, %v835, 0.0
  %v961 = vadd.f32 %v959, %v960
  %v962 = vsel %vm573, %v843, 0.0
  %v963 = vadd.f32 %v961, %v962
  %v964 = vsel %vm573, %v851, 0.0
  %v965 = vadd.f32 %v963, %v964
  %v966 = vsel %vm573, %v850, 0.0
  %v967 = vadd.f32 %v965, %v966
  %v968 = vsel %vm573, %v852, 0.0
  %v969 = vadd.f32 %v967, %v968
  %v970 = vsel %vm573, %v859, 0.0
  %v971 = vadd.f32 %v969, %v970
  %v972 = vsel %vm573, %v860, 0.0
  %v973 = vadd.f32 %v971, %v972
  %974 = vadd.xlane.f32.xlu0 %v973
  %v975 = vpop.xlane.xlu0 %974
  %v978 = vunpack.c.l.s4 269488144
  %v979 = vunpack.c.0.s8 %v978
  %v980 = vlaneseq
  %v981 = vshrl.u32 %v980, 7
  %v982 = vsub.s32 %v979, %v981
  %v983 = vrot.slane %v975, %v982
  %v985 = vrcp.pop %v983
  %v986 = vmul.f32 %v671, %v985
  %v987 = vmul.f32 %v673, %v985
  %v988 = vmul.f32 %v675, %v985
  %v989 = vmul.f32 %v677, %v985
  %v990 = vmul.f32 %v679, %v985
  %v991 = vmul.f32 %v681, %v985
  %v992 = vmul.f32 %v683, %v985
  %v993 = vmul.f32 %v685, %v985
  %v994 = vmul.f32 %v687, %v985
  %v995 = vmul.f32 %v689, %v985
  %996 = vst [vmem:[%s2] sm:$0xff] %v986
  %997 = vst [vmem:[%s2 + $0x8] sm:$0xff] %v987
  %998 = vst [vmem:[%s2 + $0x10] sm:$0xff] %v988
  %999 = vst [vmem:[%s2 + $0x18] sm:$0xff] %v989
  %1000 = vst [vmem:[%s2 + $0x20] sm:$0xff] %v990
  %1001 = vst [vmem:[%s2 + $0x28] sm:$0xff] %v991
  %1002 = vst [vmem:[%s2 + $0x30] sm:$0xff] %v992
  %1003 = vst [vmem:[%s2 + $0x38] sm:$0xff] %v993
  %1004 = vst [vmem:[%s2 + $0x40] sm:$0xff] %v994
  %1005 = vst [vmem:[%s2 + $0x48] sm:$0xf] %v995
  // Predicated region
  $region10: #{outblock_forward.5} parent=0 // pred_check
    _
  $region11: #{outblock_forward.5} parent=0 // pred_check_branch
    %1007 = sbr.rel (0) target = $region13
  $region12: #{outblock_forward.5} parent=0 // pred_region
    _
  $region13: #{outblock_forward.5} parent=0 // pred_fallthru
    _
  // Predicated region
  $region14: #{outblock_forward.5} parent=0 // pred_check
    _
  $region15: #{outblock_forward.5} parent=0 // pred_check_branch
    %1009 = sbr.rel (0) target = $region17
  $region16: #{outblock_forward.5} parent=0 // pred_region
    _
  $region17: #{outblock_forward.5} parent=0 // pred_fallthru
    _

// kernel: outblock_forward.3
$region0: #{outblock_forward.3}
  #allocation0 [shape = 'u32[]', space=smem, size = 0x4, offset = 0x4, fixed_abs, tag = 'smem constant byte address 0x4 - core index']
  #allocation1 [shape = 'u32[144,128]{1,0:T(1,128)}', space=vmem, size = 0x12000, scoped, tag = 'internal scratch']
  #allocation2 [shape = 'f32[1,1]{1,0:T(1,128)S(1)}', space=vmem, size = 0x200, scoped, tag = 'scoped memory for outblock_forward.3']
  #allocation3 [shape = 'f32[1,1]{1,0:T(1,128)S(1)}', space=vmem, size = 0x200, scoped, tag = 'scoped memory for outblock_forward.3']
  %s0 = inlined_call_operand.hbm [shape: f32[2,64,256], index: 0, kind: input, shape index: {}]
  %s1 = inlined_call_operand.hbm [shape: f32[1,1,256], index: 1, kind: input, shape index: {}]
  %s2 = inlined_call_operand.<no memory space> [shape: f32[1,1], index: 2, kind: input, shape index: {}]
  %s3 = inlined_call_operand.hbm [shape: f32[64,64], index: 3, kind: input, shape index: {}]
  %s4 = inlined_call_operand.hbm [shape: f32[1,64], index: 4, kind: input, shape index: {}]
  %s5 = inlined_call_operand.vmem [shape: f32[64,1], index: 5, kind: input, shape index: {}]
  %s6 = inlined_call_operand.<no memory space> [shape: f32[1,1], index: 6, kind: input, shape index: {}]
  %s7 = inlined_call_operand.hbm [shape: f32[256,128], index: 7, kind: input, shape index: {}]
  %s8 = inlined_call_operand.hbm [shape: f32[1,128], index: 8, kind: input, shape index: {}]
  %s9 = inlined_call_operand.vmem [shape: bf16[2,64,128], index: 9, kind: output, shape index: {0}]
  %s10 = inlined_call_operand.vmem [shape: f32[2,1], index: 10, kind: output, shape index: {1}]
  %11 = xla_tuple %s9, %s10
  %s12 = sld [smem:[#allocation0]]
  $region78: #{outblock_forward.3} parent=0
    _
  %s14 = ssub.s32 1, %s12
  %s15 = scalar_select 0, %s14, %s12
  %v16 = vstv %s2
  %17 = vst [vmem:[#allocation2] sm:$0x1] %v16
  %v18 = vstv %s6
  %19 = vst [vmem:[#allocation3] sm:$0x1] %v18
  $region1: #{outblock_forward.3} parent=0
    #allocation4 [shape = 'u8[131072]{0}', space=vmem, size = 0x20000, scoped, tag = 'input window, operand 0, single buffered']
    #allocation5 [shape = 's32[1]{0}', space=sflag, size = 0x4, scoped, tag = 'scoped memory for outblock_forward.3']
    #allocation6 [shape = 'u8[1024]{0}', space=vmem, size = 0x400, scoped, tag = 'input window, operand 1, single buffered']
    #allocation7 [shape = 's32[1]{0}', space=sflag, size = 0x4, scoped, tag = 'scoped memory for outblock_forward.3']
    #allocation8 [shape = 'u8[32768]{0}', space=vmem, size = 0x8000, scoped, tag = 'input window, operand 3, single buffered']
    #allocation9 [shape = 'u8[512]{0}', space=vmem, size = 0x400, scoped, tag = 'input window, operand 4, single buffered']
    #allocation10 [shape = 's32[1]{0}', space=sflag, size = 0x4, scoped, tag = 'scoped memory for outblock_forward.3']
    #allocation11 [shape = 'u8[131072]{0}', space=vmem, size = 0x20000, scoped, tag = 'input window, operand 7, single buffered']
    #allocation12 [shape = 'u8[512]{0}', space=vmem, size = 0x400, scoped, tag = 'input window, operand 8, single buffered']
    #allocation13 [shape = 's32[1]{0}', space=sflag, size = 0x4, scoped, tag = 'scoped memory for outblock_forward.3']
    %20 = vsyncpa [#allocation5], 0
    %21 = vsyncpa [#allocation7], 0
    %22 = vsyncpa [#allocation10], 0
    %23 = vsyncpa [#allocation13], 0
    // Predicated region
    $region2: #{outblock_forward.3} parent=1 // pred_check
      _
    $region3: #{outblock_forward.3} parent=1 // pred_check_branch
      %25 = sbr.rel (0) target = $region5
    $region4: #{outblock_forward.3} parent=1 // pred_region
      %s27 = ssub.s32 4096, 4096
      %28 = vsyncadd [#allocation5], %s27
      %s29 = sshll.u32 [#allocation4], 4
      %s30 = int_to_ptr.vmem [resolvable:$true] %s29
      %35 = dma.hbm_to_vmem [thread:$0]  %s0, 4096, %s30, [#allocation5], 256, 256, 16
    $region5: #{outblock_forward.3} parent=1 // pred_fallthru
      _
    // Predicated region
    $region6: #{outblock_forward.3} parent=1 // pred_check
      _
    $region7: #{outblock_forward.3} parent=1 // pred_check_branch
      %37 = sbr.rel (0) target = $region9
    $region8: #{outblock_forward.3} parent=1 // pred_region
      %s39 = ssub.s32 32, 32
      %40 = vsyncadd [#allocation7], %s39
      %s42 = sshll.u32 [#allocation6], 4
      %s43 = int_to_ptr.vmem [resolvable:$true] %s42
      %45 = dma.hbm_to_vmem [thread:$0]  %s1, 32, %s43, [#allocation7]
    $region9: #{outblock_forward.3} parent=1 // pred_fallthru
      _
    // Predicated region
    $region10: #{outblock_forward.3} parent=1 // pred_check
      _
    $region11: #{outblock_forward.3} parent=1 // pred_check_branch
      %47 = sbr.rel (0) target = $region13
    $region12: #{outblock_forward.3} parent=1 // pred_region
      _
    $region13: #{outblock_forward.3} parent=1 // pred_fallthru
      _
    // Predicated region
    $region14: #{outblock_forward.3} parent=1 // pred_check
      _
    $region15: #{outblock_forward.3} parent=1 // pred_check_branch
      %49 = sbr.rel (0) target = $region17
    $region16: #{outblock_forward.3} parent=1 // pred_region
      %s51 = ssub.s32 1024, 1024
      %52 = vsyncadd [#allocation7], %s51
      %s53 = sshll.u32 [#allocation8], 4
      %s54 = int_to_ptr.vmem [resolvable:$true] %s53
      %59 = dma.hbm_to_vmem [thread:$0]  %s3, 1024, %s54, [#allocation7], 128, 128, 8
    $region17: #{outblock_forward.3} parent=1 // pred_fallthru
      _
    // Predicated region
    $region18: #{outblock_forward.3} parent=1 // pred_check
      _
    $region19: #{outblock_forward.3} parent=1 // pred_check_branch
      %61 = sbr.rel (0) target = $region21
    $region20: #{outblock_forward.3} parent=1 // pred_region
      %s63 = ssub.s32 16, 16
      %64 = vsyncadd [#allocation10], %s63
      %s66 = sshll.u32 [#allocation9], 4
      %s67 = int_to_ptr.vmem [resolvable:$true] %s66
      %69 = dma.hbm_to_vmem [thread:$0]  %s4, 16, %s67, [#allocation10]
    $region21: #{outblock_forward.3} parent=1 // pred_fallthru
      _
    // Predicated region
    $region22: #{outblock_forward.3} parent=1 // pred_check
      _
    $region23: #{outblock_forward.3} parent=1 // pred_check_branch
      %71 = sbr.rel (0) target = $region25
    $region24: #{outblock_forward.3} parent=1 // pred_region
      _
    $region25: #{outblock_forward.3} parent=1 // pred_fallthru
      _
    // Predicated region
    $region26: #{outblock_forward.3} parent=1 // pred_check
      _
    $region27: #{outblock_forward.3} parent=1 // pred_check_branch
      %73 = sbr.rel (0) target = $region29
    $region28: #{outblock_forward.3} parent=1 // pred_region
      _
    $region29: #{outblock_forward.3} parent=1 // pred_fallthru
      _
    // Predicated region
    $region30: #{outblock_forward.3} parent=1 // pred_check
      _
    $region31: #{outblock_forward.3} parent=1 // pred_check_branch
      %75 = sbr.rel (0) target = $region33
    $region32: #{outblock_forward.3} parent=1 // pred_region
      %s77 = ssub.s32 4096, 4096
      %78 = vsyncadd [#allocation10], %s77
      %s79 = sshll.u32 [#allocation11], 4
      %s80 = int_to_ptr.vmem [resolvable:$true] %s79
      %85 = dma.hbm_to_vmem [thread:$0]  %s7, 4096, %s80, [#allocation10], 128, 128, 8
    $region33: #{outblock_forward.3} parent=1 // pred_fallthru
      _
    // Predicated region
    $region34: #{outblock_forward.3} parent=1 // pred_check
      _
    $region35: #{outblock_forward.3} parent=1 // pred_check_branch
      %87 = sbr.rel (0) target = $region37
    $region36: #{outblock_forward.3} parent=1 // pred_region
      %s89 = ssub.s32 16, 16
      %90 = vsyncadd [#allocation13], %s89
      %s92 = sshll.u32 [#allocation12], 4
      %s93 = int_to_ptr.vmem [resolvable:$true] %s92
      %95 = dma.hbm_to_vmem [thread:$0]  %s8, 16, %s93, [#allocation13]
    $region37: #{outblock_forward.3} parent=1 // pred_fallthru
      _
    // Predicated region
    $region38: #{outblock_forward.3} parent=1 // pred_check
      _
    $region39: #{outblock_forward.3} parent=1 // pred_check_branch
      %97 = sbr.rel (0) target = $region41
    $region40: #{outblock_forward.3} parent=1 // pred_region
      %98 = dma.done [#allocation5], 4096
    $region41: #{outblock_forward.3} parent=1 // pred_fallthru
      _
    // Predicated region
    $region42: #{outblock_forward.3} parent=1 // pred_check
      _
    $region43: #{outblock_forward.3} parent=1 // pred_check_branch
      %100 = sbr.rel (0) target = $region45
    $region44: #{outblock_forward.3} parent=1 // pred_region
      %101 = dma.done [#allocation7], 32
    $region45: #{outblock_forward.3} parent=1 // pred_fallthru
      _
    // Predicated region
    $region46: #{outblock_forward.3} parent=1 // pred_check
      _
    $region47: #{outblock_forward.3} parent=1 // pred_check_branch
      %103 = sbr.rel (0) target = $region49
    $region48: #{outblock_forward.3} parent=1 // pred_region
      %104 = dma.done [#allocation7], 1024
    $region49: #{outblock_forward.3} parent=1 // pred_fallthru
      _
    // Predicated region
    $region50: #{outblock_forward.3} parent=1 // pred_check
      _
    $region51: #{outblock_forward.3} parent=1 // pred_check_branch
      %106 = sbr.rel (0) target = $region53
    $region52: #{outblock_forward.3} parent=1 // pred_region
      %107 = dma.done [#allocation10], 16
    $region53: #{outblock_forward.3} parent=1 // pred_fallthru
      _
    // Predicated region
    $region54: #{outblock_forward.3} parent=1 // pred_check
      _
    $region55: #{outblock_forward.3} parent=1 // pred_check_branch
      %109 = sbr.rel (0) target = $region57
    $region56: #{outblock_forward.3} parent=1 // pred_region
      %110 = dma.done [#allocation10], 4096
    $region57: #{outblock_forward.3} parent=1 // pred_fallthru
      _
    // Predicated region
    $region58: #{outblock_forward.3} parent=1 // pred_check
      _
    $region59: #{outblock_forward.3} parent=1 // pred_check_branch
      %112 = sbr.rel (0) target = $region61
    $region60: #{outblock_forward.3} parent=1 // pred_region
      %113 = dma.done [#allocation13], 16
    $region61: #{outblock_forward.3} parent=1 // pred_fallthru
      _
    %v114 = vld [vmem:[#allocation4] sm:$0xff]
    %v115 = vld [vmem:[#allocation4 + $0x8] sm:$0xff]
    %v116 = vld [vmem:[#allocation4 + $0x10] sm:$0xff]
    %v117 = vld [vmem:[#allocation4 + $0x18] sm:$0xff]
    %v118 = vld [vmem:[#allocation4 + $0x20] sm:$0xff]
    %v119 = vld [vmem:[#allocation4 + $0x28] sm:$0xff]
    %v120 = vld [vmem:[#allocation4 + $0x30] sm:$0xff]
    %v121 = vld [vmem:[#allocation4 + $0x38] sm:$0xff]
    %v122 = vld [vmem:[#allocation4 + $0x40] sm:$0xff]
    %v123 = vld [vmem:[#allocation4 + $0x48] sm:$0xff]
    %v124 = vld [vmem:[#allocation4 + $0x50] sm:$0xff]
    %v125 = vld [vmem:[#allocation4 + $0x58] sm:$0xff]
    %v126 = vld [vmem:[#allocation4 + $0x60] sm:$0xff]
    %v127 = vld [vmem:[#allocation4 + $0x68] sm:$0xff]
    %v128 = vld [vmem:[#allocation4 + $0x70] sm:$0xff]
    %v129 = vld [vmem:[#allocation4 + $0x78] sm:$0xff]
    %v130 = vld [vmem:[#allocation4 + $0x80] sm:$0xff]
    %v131 = vld [vmem:[#allocation4 + $0x88] sm:$0xff]
    %v132 = vld [vmem:[#allocation4 + $0x90] sm:$0xff]
    %v133 = vld [vmem:[#allocation4 + $0x98] sm:$0xff]
    %v134 = vld [vmem:[#allocation4 + $0xa0] sm:$0xff]
    %v135 = vld [vmem:[#allocation4 + $0xa8] sm:$0xff]
    %v136 = vld [vmem:[#allocation4 + $0xb0] sm:$0xff]
    %v137 = vld [vmem:[#allocation4 + $0xb8] sm:$0xff]
    %v138 = vld [vmem:[#allocation4 + $0xc0] sm:$0xff]
    %v139 = vld [vmem:[#allocation4 + $0xc8] sm:$0xff]
    %v140 = vld [vmem:[#allocation4 + $0xd0] sm:$0xff]
    %v141 = vld [vmem:[#allocation4 + $0xd8] sm:$0xff]
    %v142 = vld [vmem:[#allocation4 + $0xe0] sm:$0xff]
    %v143 = vld [vmem:[#allocation4 + $0xe8] sm:$0xff]
    %v144 = vld [vmem:[#allocation4 + $0xf0] sm:$0xff]
    %v145 = vld [vmem:[#allocation4 + $0xf8] sm:$0xff]
    %v146 = vld [vmem:[#allocation6] sm:$0x3]
    %v148 = vlaneseq
    %v149 = vshrl.u32 %v148, 7
    %v150 = vsub.s32 0, %v149
    %v151 = vrot.slane %v146, %v150
    %v152 = vlaneseq
    %v153 = vshrl.u32 %v152, 7
    %v154 = vsub.s32 1, %v153
    %v155 = vrot.slane %v146, %v154
    %v158 = vmul.f32 %v114, %v151
    %v159 = vmul.f32 %v115, %v155
    %v160 = vmul.f32 %v116, %v151
    %v161 = vmul.f32 %v117, %v155
    %v162 = vmul.f32 %v118, %v151
    %v163 = vmul.f32 %v119, %v155
    %v164 = vmul.f32 %v120, %v151
    %v165 = vmul.f32 %v121, %v155
    %v166 = vmul.f32 %v122, %v151
    %v167 = vmul.f32 %v123, %v155
    %v168 = vmul.f32 %v124, %v151
    %v169 = vmul.f32 %v125, %v155
    %v170 = vmul.f32 %v126, %v151
    %v171 = vmul.f32 %v127, %v155
    %v172 = vmul.f32 %v128, %v151
    %v173 = vmul.f32 %v129, %v155
    %v174 = vmul.f32 %v130, %v151
    %v175 = vmul.f32 %v131, %v155
    %v176 = vmul.f32 %v132, %v151
    %v177 = vmul.f32 %v133, %v155
    %v178 = vmul.f32 %v134, %v151
    %v179 = vmul.f32 %v135, %v155
    %v180 = vmul.f32 %v136, %v151
    %v181 = vmul.f32 %v137, %v155
    %v182 = vmul.f32 %v138, %v151
    %v183 = vmul.f32 %v139, %v155
    %v184 = vmul.f32 %v140, %v151
    %v185 = vmul.f32 %v141, %v155
    %v186 = vmul.f32 %v142, %v151
    %v187 = vmul.f32 %v143, %v155
    %v188 = vmul.f32 %v144, %v151
    %v189 = vmul.f32 %v145, %v155
    %v190 = vadd.f32 %v158, %v159
    %191 = vadd.xlane.f32.xlu0 %v190
    %v192 = vpop.xlane.xlu0 %191
    %v193 = vadd.f32 %v160, %v161
    %194 = vadd.xlane.f32.xlu0 %v193
    %v195 = vpop.xlane.xlu0 %194
    %v196 = vadd.f32 %v162, %v163
    %197 = vadd.xlane.f32.xlu0 %v196
    %v198 = vpop.xlane.xlu0 %197
    %v199 = vadd.f32 %v164, %v165
    %200 = vadd.xlane.f32.xlu0 %v199
    %v201 = vpop.xlane.xlu0 %200
    %v202 = vadd.f32 %v166, %v167
    %203 = vadd.xlane.f32.xlu0 %v202
    %v204 = vpop.xlane.xlu0 %203
    %v205 = vadd.f32 %v168, %v169
    %206 = vadd.xlane.f32.xlu0 %v205
    %v207 = vpop.xlane.xlu0 %206
    %v208 = vadd.f32 %v170, %v171
    %209 = vadd.xlane.f32.xlu0 %v208
    %v210 = vpop.xlane.xlu0 %209
    %v211 = vadd.f32 %v172, %v173
    %212 = vadd.xlane.f32.xlu0 %v211
    %v213 = vpop.xlane.xlu0 %212
    %v214 = vadd.f32 %v174, %v175
    %215 = vadd.xlane.f32.xlu0 %v214
    %v216 = vpop.xlane.xlu0 %215
    %v217 = vadd.f32 %v176, %v177
    %218 = vadd.xlane.f32.xlu0 %v217
    %v219 = vpop.xlane.xlu0 %218
    %v220 = vadd.f32 %v178, %v179
    %221 = vadd.xlane.f32.xlu0 %v220
    %v222 = vpop.xlane.xlu0 %221
    %v223 = vadd.f32 %v180, %v181
    %224 = vadd.xlane.f32.xlu0 %v223
    %v225 = vpop.xlane.xlu0 %224
    %v226 = vadd.f32 %v182, %v183
    %227 = vadd.xlane.f32.xlu0 %v226
    %v228 = vpop.xlane.xlu0 %227
    %v229 = vadd.f32 %v184, %v185
    %230 = vadd.xlane.f32.xlu0 %v229
    %v231 = vpop.xlane.xlu0 %230
    %v232 = vadd.f32 %v186, %v187
    %233 = vadd.xlane.f32.xlu0 %v232
    %v234 = vpop.xlane.xlu0 %233
    %v235 = vadd.f32 %v188, %v189
    %236 = vadd.xlane.f32.xlu0 %v235
    %v237 = vpop.xlane.xlu0 %236
    %v238 = vld [vmem:[#allocation2] sm:$0x1]
    %v240 = vlaneseq
    %v241 = vshrl.u32 %v240, 7
    %v242 = vsub.s32 0, %v241
    %v243 = vrot.slane %v238, %v242
    %244 = vset.pattern.permute.xlu0 0
    %245 = vperm.xlu0 %244, %v243
    %v246 = vpop.permute.xlu0 %245
    %v248 = vadd.f32 %v192, %v246
    %v249 = vadd.f32 %v195, %v246
    %v250 = vadd.f32 %v198, %v246
    %v251 = vadd.f32 %v201, %v246
    %v252 = vadd.f32 %v204, %v246
    %v253 = vadd.f32 %v207, %v246
    %v254 = vadd.f32 %v210, %v246
    %v255 = vadd.f32 %v213, %v246
    %v256 = vadd.f32 %v216, %v246
    %v257 = vadd.f32 %v219, %v246
    %v258 = vadd.f32 %v222, %v246
    %v259 = vadd.f32 %v225, %v246
    %v260 = vadd.f32 %v228, %v246
    %v261 = vadd.f32 %v231, %v246
    %v262 = vadd.f32 %v234, %v246
    %v263 = vadd.f32 %v237, %v246
    %v264 = vmax.f32 %v248, 0.0
    %v265 = vmax.f32 %v249, 0.0
    %v266 = vmax.f32 %v250, 0.0
    %v267 = vmax.f32 %v251, 0.0
    %v268 = vmax.f32 %v252, 0.0
    %v269 = vmax.f32 %v253, 0.0
    %v270 = vmax.f32 %v254, 0.0
    %v271 = vmax.f32 %v255, 0.0
    %v272 = vmax.f32 %v256, 0.0
    %v273 = vmax.f32 %v257, 0.0
    %v274 = vmax.f32 %v258, 0.0
    %v275 = vmax.f32 %v259, 0.0
    %v276 = vmax.f32 %v260, 0.0
    %v277 = vmax.f32 %v261, 0.0
    %v278 = vmax.f32 %v262, 0.0
    %v279 = vmax.f32 %v263, 0.0
    %v280 = vld [vmem:[#allocation8] sm:$0xff]
    %v281 = vld [vmem:[#allocation8 + $0x8] sm:$0xff]
    %v282 = vld [vmem:[#allocation8 + $0x10] sm:$0xff]
    %v283 = vld [vmem:[#allocation8 + $0x18] sm:$0xff]
    %v284 = vld [vmem:[#allocation8 + $0x20] sm:$0xff]
    %v285 = vld [vmem:[#allocation8 + $0x28] sm:$0xff]
    %v286 = vld [vmem:[#allocation8 + $0x30] sm:$0xff]
    %v287 = vld [vmem:[#allocation8 + $0x38] sm:$0xff]
    %v288 = vld [vmem:[#allocation9] sm:$0x1]
    %v290 = vlaneseq
    %v291 = vshrl.u32 %v290, 7
    %v292 = vsub.s32 0, %v291
    %v293 = vrot.slane %v288, %v292
    %v311 = vlaneseq
    %v312 = vand.u32 %v311, 127
    %v313 = vlaneseq
    %v314 = vshrl.u32 %v313, 7
    %v315 = vsub.s32 %v312, %v314
    %v316 = vrot.slane %v264, %v315
    %v317 = vadd.s32 %v312, 4294967288
    %v318 = vlaneseq
    %v319 = vshrl.u32 %v318, 7
    %v320 = vsub.s32 %v317, %v319
    %v321 = vrot.slane %v265, %v320
    %vm322 = vcmask 130112
    %v323 = vsel %vm322, %v321, %v316
    %v324 = vadd.s32 %v312, 4294967280
    %v325 = vlaneseq
    %v326 = vshrl.u32 %v325, 7
    %v327 = vsub.s32 %v324, %v326
    %v328 = vrot.slane %v266, %v327
    %vm329 = vcmask 195712
    %v330 = vsel %vm329, %v328, %v323
    %v331 = vadd.s32 %v312, 4294967272
    %v332 = vlaneseq
    %v333 = vshrl.u32 %v332, 7
    %v334 = vsub.s32 %v331, %v333
    %v335 = vrot.slane %v267, %v334
    %vm336 = vcmask 261312
    %v337 = vsel %vm336, %v335, %v330
    %v338 = vadd.s32 %v312, 4294967264
    %v339 = vlaneseq
    %v340 = vshrl.u32 %v339, 7
    %v341 = vsub.s32 %v338, %v340
    %v342 = vrot.slane %v268, %v341
    %vm343 = vcmask 326912
    %v344 = vsel %vm343, %v342, %v337
    %v345 = vadd.s32 %v312, 4294967256
    %v346 = vlaneseq
    %v347 = vshrl.u32 %v346, 7
    %v348 = vsub.s32 %v345, %v347
    %v349 = vrot.slane %v269, %v348
    %vm350 = vcmask 392512
    %v351 = vsel %vm350, %v349, %v344
    %v352 = vadd.s32 %v312, 4294967248
    %v353 = vlaneseq
    %v354 = vshrl.u32 %v353, 7
    %v355 = vsub.s32 %v352, %v354
    %v356 = vrot.slane %v270, %v355
    %vm357 = vcmask 458112
    %v358 = vsel %vm357, %v356, %v351
    %v359 = vadd.s32 %v312, 4294967240
    %v360 = vlaneseq
    %v361 = vshrl.u32 %v360, 7
    %v362 = vsub.s32 %v359, %v361
    %v363 = vrot.slane %v271, %v362
    %vm364 = vcmask 523712
    %v365 = vsel %vm364, %v363, %v358
    %v366 = vlaneseq
    %v367 = vshrl.u32 %v366, 7
    %v368 = vsub.s32 %v312, %v367
    %v369 = vrot.slane %v272, %v368
    %v370 = vlaneseq
    %v371 = vshrl.u32 %v370, 7
    %v372 = vsub.s32 %v317, %v371
    %v373 = vrot.slane %v273, %v372
    %v374 = vsel %vm322, %v373, %v369
    %v375 = vlaneseq
    %v376 = vshrl.u32 %v375, 7
    %v377 = vsub.s32 %v324, %v376
    %v378 = vrot.slane %v274, %v377
    %v379 = vsel %vm329, %v378, %v374
    %v380 = vlaneseq
    %v381 = vshrl.u32 %v380, 7
    %v382 = vsub.s32 %v331, %v381
    %v383 = vrot.slane %v275, %v382
    %v384 = vsel %vm336, %v383, %v379
    %v385 = vlaneseq
    %v386 = vshrl.u32 %v385, 7
    %v387 = vsub.s32 %v338, %v386
    %v388 = vrot.slane %v276, %v387
    %v389 = vsel %vm343, %v388, %v384
    %v390 = vlaneseq
    %v391 = vshrl.u32 %v390, 7
    %v392 = vsub.s32 %v345, %v391
    %v393 = vrot.slane %v277, %v392
    %v394 = vsel %vm350, %v393, %v389
    %v395 = vlaneseq
    %v396 = vshrl.u32 %v395, 7
    %v397 = vsub.s32 %v352, %v396
    %v398 = vrot.slane %v278, %v397
    %v399 = vsel %vm357, %v398, %v394
    %v400 = vlaneseq
    %v401 = vshrl.u32 %v400, 7
    %v402 = vsub.s32 %v359, %v401
    %v403 = vrot.slane %v279, %v402
    %v404 = vsel %vm364, %v403, %v399
    %vm405 = vcmask 1041409
    %v406 = vsel %vm405, %v404, %v365
    %vm407 = vcmask 523264
    %v408 = vsel %vm407, %v406, 0
    %410 = vmatprep.subr.mxu0 0.0
    %411 = vmatpush1.msra.mxu0 %v280
    %412 = vmatprep.subr.mxu0 0.0
    %413 = vmatpush1.msra.mxu0 %v281
    %414 = vmatprep.subr.mxu0 0.0
    %415 = vmatpush1.msra.mxu0 %v282
    %416 = vmatprep.subr.mxu0 0.0
    %417 = vmatpush1.msra.mxu0 %v283
    %418 = vmatprep.subr.mxu0 0.0
    %419 = vmatpush1.msra.mxu0 %v284
    %420 = vmatprep.subr.mxu0 0.0
    %421 = vmatpush1.msra.mxu0 %v285
    %422 = vmatprep.subr.mxu0 0.0
    %423 = vmatpush1.msra.mxu0 %v286
    %424 = vmatprep.subr.mxu0 0.0
    %425 = vmatpush1.msra.mxu0 %v287
    %426 = vmatprep.subr.mxu0 0.0
    %427 = vmatpush1.msra.mxu0 0.0
    %428 = vmatprep.subr.mxu0 0.0
    %429 = vmatpush1.msra.mxu0 0.0
    %430 = vmatprep.subr.mxu0 0.0
    %431 = vmatpush1.msra.mxu0 0.0
    %432 = vmatprep.subr.mxu0 0.0
    %433 = vmatpush1.msra.mxu0 0.0
    %434 = vmatprep.subr.mxu0 0.0
    %435 = vmatpush1.msra.mxu0 0.0
    %436 = vmatprep.subr.mxu0 0.0
    %437 = vmatpush1.msra.mxu0 0.0
    %438 = vmatprep.subr.mxu0 0.0
    %439 = vmatpush1.msra.mxu0 0.0
    %440 = vmatprep.subr.mxu0 0.0
    %441 = vmatpush1.msra.mxu0 0.0
    %442 = vmatprep.subr.mxu0 0.0
    %443 = vmatpush1.msra.mxu0 0.0
    %444 = vmatprep.subr.mxu0 0.0
    %445 = vmatpush1.msra.mxu0 0.0
    %446 = vmatprep.subr.mxu0 0.0
    %447 = vmatpush1.msra.mxu0 0.0
    %448 = vmatprep.subr.mxu0 0.0
    %449 = vmatpush1.msra.mxu0 0.0
    %450 = vmatprep.subr.mxu0 0.0
    %451 = vmatpush1.msra.mxu0 0.0
    %452 = vmatprep.subr.mxu0 0.0
    %453 = vmatpush1.msra.mxu0 0.0
    %454 = vmatprep.subr.mxu0 0.0
    %455 = vmatpush1.msra.mxu0 0.0
    %456 = vmatprep.subr.mxu0 0.0
    %457 = vmatpush1.msra.mxu0 0.0
    %458 = vmatprep.subr.mxu0 0.0
    %459 = vmatpush1.msra.mxu0 0.0
    %460 = vmatprep.subr.mxu0 0.0
    %461 = vmatpush1.msra.mxu0 0.0
    %462 = vmatprep.subr.mxu0 0.0
    %463 = vmatpush1.msra.mxu0 0.0
    %464 = vmatprep.subr.mxu0 0.0
    %465 = vmatpush1.msra.mxu0 0.0
    %466 = vmatprep.subr.mxu0 0.0
    %467 = vmatpush1.msra.mxu0 0.0
    %468 = vmatprep.subr.mxu0 0.0
    %469 = vmatpush1.msra.mxu0 0.0
    %470 = vmatprep.subr.mxu0 0.0
    %471 = vmatpush1.msra.mxu0 0.0
    %472 = vmatprep.subr.mxu0 0.0
    %473 = vmatpush1.msra.mxu0 0.0
    %474 = vmatprep.mubr.f32.mxu0 0.0
    %475 = vmatmul.mubr.f32.gmra.mrb[0].mxu0 %v408
    %v476 = vpop.f32.mrb[0].mxu0
    %v477 = vadd.f32 %v293, %v476
    %v478 = vpop.f32.mrb[0].mxu0
    %479 = vdwg.mxu0
    %v480 = vmax.f32 %v477, 0.0
    %v481 = vld [vmem:[%s5] sm:$0xff]
    %v482 = vld [vmem:[%s5 + $0x8] sm:$0xff]
    %v483 = vld [vmem:[%s5 + $0x10] sm:$0xff]
    %v484 = vld [vmem:[%s5 + $0x18] sm:$0xff]
    %v485 = vld [vmem:[%s5 + $0x20] sm:$0xff]
    %v486 = vld [vmem:[%s5 + $0x28] sm:$0xff]
    %v487 = vld [vmem:[%s5 + $0x30] sm:$0xff]
    %v488 = vld [vmem:[%s5 + $0x38] sm:$0xff]
    %v489 = vld [vmem:[#allocation3] sm:$0x1]
    %v491 = vlaneseq
    %v492 = vshrl.u32 %v491, 7
    %v493 = vsub.s32 0, %v492
    %v494 = vrot.slane %v489, %v493
    %v497 = vsel %vm407, %v480, 0
    %499 = vmatprep.subr.mxu0 0.0
    %500 = vmatpush1.msra.mxu0 %v481
    %501 = vmatprep.subr.mxu0 0.0
    %502 = vmatpush1.msra.mxu0 %v482
    %503 = vmatprep.subr.mxu0 0.0
    %504 = vmatpush1.msra.mxu0 %v483
    %505 = vmatprep.subr.mxu0 0.0
    %506 = vmatpush1.msra.mxu0 %v484
    %507 = vmatprep.subr.mxu0 0.0
    %508 = vmatpush1.msra.mxu0 %v485
    %509 = vmatprep.subr.mxu0 0.0
    %510 = vmatpush1.msra.mxu0 %v486
    %511 = vmatprep.subr.mxu0 0.0
    %512 = vmatpush1.msra.mxu0 %v487
    %513 = vmatprep.subr.mxu0 0.0
    %514 = vmatpush1.msra.mxu0 %v488
    %515 = vmatprep.subr.mxu0 0.0
    %516 = vmatpush1.msra.mxu0 0.0
    %517 = vmatprep.subr.mxu0 0.0
    %518 = vmatpush1.msra.mxu0 0.0
    %519 = vmatprep.subr.mxu0 0.0
    %520 = vmatpush1.msra.mxu0 0.0
    %521 = vmatprep.subr.mxu0 0.0
    %522 = vmatpush1.msra.mxu0 0.0
    %523 = vmatprep.subr.mxu0 0.0
    %524 = vmatpush1.msra.mxu0 0.0
    %525 = vmatprep.subr.mxu0 0.0
    %526 = vmatpush1.msra.mxu0 0.0
    %527 = vmatprep.subr.mxu0 0.0
    %528 = vmatpush1.msra.mxu0 0.0
    %529 = vmatprep.subr.mxu0 0.0
    %530 = vmatpush1.msra.mxu0 0.0
    %531 = vmatprep.subr.mxu0 0.0
    %532 = vmatpush1.msra.mxu0 0.0
    %533 = vmatprep.subr.mxu0 0.0
    %534 = vmatpush1.msra.mxu0 0.0
    %535 = vmatprep.subr.mxu0 0.0
    %536 = vmatpush1.msra.mxu0 0.0
    %537 = vmatprep.subr.mxu0 0.0
    %538 = vmatpush1.msra.mxu0 0.0
    %539 = vmatprep.subr.mxu0 0.0
    %540 = vmatpush1.msra.mxu0 0.0
    %541 = vmatprep.subr.mxu0 0.0
    %542 = vmatpush1.msra.mxu0 0.0
    %543 = vmatprep.subr.mxu0 0.0
    %544 = vmatpush1.msra.mxu0 0.0
    %545 = vmatprep.subr.mxu0 0.0
    %546 = vmatpush1.msra.mxu0 0.0
    %547 = vmatprep.subr.mxu0 0.0
    %548 = vmatpush1.msra.mxu0 0.0
    %549 = vmatprep.subr.mxu0 0.0
    %550 = vmatpush1.msra.mxu0 0.0
    %551 = vmatprep.subr.mxu0 0.0
    %552 = vmatpush1.msra.mxu0 0.0
    %553 = vmatprep.subr.mxu0 0.0
    %554 = vmatpush1.msra.mxu0 0.0
    %555 = vmatprep.subr.mxu0 0.0
    %556 = vmatpush1.msra.mxu0 0.0
    %557 = vmatprep.subr.mxu0 0.0
    %558 = vmatpush1.msra.mxu0 0.0
    %559 = vmatprep.subr.mxu0 0.0
    %560 = vmatpush1.msra.mxu0 0.0
    %561 = vmatprep.subr.mxu0 0.0
    %562 = vmatpush1.msra.mxu0 0.0
    %563 = vmatprep.mubr.f32.mxu0 0.0
    %564 = vmatmul.mubr.f32.gmra.mrb[0].mxu0 %v497
    %v565 = vpop.f32.mrb[0].mxu0
    %v566 = vadd.f32 %v494, %v565
    %v567 = vpop.f32.mrb[0].mxu0
    %568 = vdwg.mxu0
    %v569 = vtanh.pop %v566
    %vm570 = vcmask 1024
    %571 = vst.msk [vmem:[%s10] sm:$0x3] %vm570, %v569
    %v572 = vld [vmem:[#allocation11] sm:$0xff]
    %v573 = vld [vmem:[#allocation11 + $0x8] sm:$0xff]
    %v574 = vld [vmem:[#allocation11 + $0x10] sm:$0xff]
    %v575 = vld [vmem:[#allocation11 + $0x18] sm:$0xff]
    %v576 = vld [vmem:[#allocation11 + $0x20] sm:$0xff]
    %v577 = vld [vmem:[#allocation11 + $0x28] sm:$0xff]
    %v578 = vld [vmem:[#allocation11 + $0x30] sm:$0xff]
    %v579 = vld [vmem:[#allocation11 + $0x38] sm:$0xff]
    %v580 = vld [vmem:[#allocation11 + $0x40] sm:$0xff]
    %v581 = vld [vmem:[#allocation11 + $0x48] sm:$0xff]
    %v582 = vld [vmem:[#allocation11 + $0x50] sm:$0xff]
    %v583 = vld [vmem:[#allocation11 + $0x58] sm:$0xff]
    %v584 = vld [vmem:[#allocation11 + $0x60] sm:$0xff]
    %v585 = vld [vmem:[#allocation11 + $0x68] sm:$0xff]
    %v586 = vld [vmem:[#allocation11 + $0x70] sm:$0xff]
    %v587 = vld [vmem:[#allocation11 + $0x78] sm:$0xff]
    %v588 = vld [vmem:[#allocation11 + $0x80] sm:$0xff]
    %v589 = vld [vmem:[#allocation11 + $0x88] sm:$0xff]
    %v590 = vld [vmem:[#allocation11 + $0x90] sm:$0xff]
    %v591 = vld [vmem:[#allocation11 + $0x98] sm:$0xff]
    %v592 = vld [vmem:[#allocation11 + $0xa0] sm:$0xff]
    %v593 = vld [vmem:[#allocation11 + $0xa8] sm:$0xff]
    %v594 = vld [vmem:[#allocation11 + $0xb0] sm:$0xff]
    %v595 = vld [vmem:[#allocation11 + $0xb8] sm:$0xff]
    %v596 = vld [vmem:[#allocation11 + $0xc0] sm:$0xff]
    %v597 = vld [vmem:[#allocation11 + $0xc8] sm:$0xff]
    %v598 = vld [vmem:[#allocation11 + $0xd0] sm:$0xff]
    %v599 = vld [vmem:[#allocation11 + $0xd8] sm:$0xff]
    %v600 = vld [vmem:[#allocation11 + $0xe0] sm:$0xff]
    %v601 = vld [vmem:[#allocation11 + $0xe8] sm:$0xff]
    %v602 = vld [vmem:[#allocation11 + $0xf0] sm:$0xff]
    %v603 = vld [vmem:[#allocation11 + $0xf8] sm:$0xff]
    %v604 = vld [vmem:[#allocation12] sm:$0x1]
    %v606 = vlaneseq
    %v607 = vshrl.u32 %v606, 7
    %v608 = vsub.s32 0, %v607
    %v609 = vrot.slane %v604, %v608
    %611 = vmatprep.subr.mxu0 0.0
    %612 = vmatpush1.msra.mxu0 %v572
    %613 = vmatprep.subr.mxu0 0.0
    %614 = vmatpush1.msra.mxu0 %v573
    %615 = vmatprep.subr.mxu0 0.0
    %616 = vmatpush1.msra.mxu0 %v574
    %617 = vmatprep.subr.mxu0 0.0
    %618 = vmatpush1.msra.mxu0 %v575
    %619 = vmatprep.subr.mxu0 0.0
    %620 = vmatpush1.msra.mxu0 %v576
    %621 = vmatprep.subr.mxu0 0.0
    %622 = vmatpush1.msra.mxu0 %v577
    %623 = vmatprep.subr.mxu0 0.0
    %624 = vmatpush1.msra.mxu0 %v578
    %625 = vmatprep.subr.mxu0 0.0
    %626 = vmatpush1.msra.mxu0 %v579
    %627 = vmatprep.subr.mxu0 0.0
    %628 = vmatpush1.msra.mxu0 %v580
    %629 = vmatprep.subr.mxu0 0.0
    %630 = vmatpush1.msra.mxu0 %v581
    %631 = vmatprep.subr.mxu0 0.0
    %632 = vmatpush1.msra.mxu0 %v582
    %633 = vmatprep.subr.mxu0 0.0
    %634 = vmatpush1.msra.mxu0 %v583
    %635 = vmatprep.subr.mxu0 0.0
    %636 = vmatpush1.msra.mxu0 %v584
    %637 = vmatprep.subr.mxu0 0.0
    %638 = vmatpush1.msra.mxu0 %v585
    %639 = vmatprep.subr.mxu0 0.0
    %640 = vmatpush1.msra.mxu0 %v586
    %641 = vmatprep.subr.mxu0 0.0
    %642 = vmatpush1.msra.mxu0 %v587
    %643 = vmatprep.subr.mxu0 0.0
    %644 = vmatpush1.msra.mxu0 %v588
    %645 = vmatprep.subr.mxu0 0.0
    %646 = vmatpush1.msra.mxu0 %v589
    %647 = vmatprep.subr.mxu0 0.0
    %648 = vmatpush1.msra.mxu0 %v590
    %649 = vmatprep.subr.mxu0 0.0
    %650 = vmatpush1.msra.mxu0 %v591
    %651 = vmatprep.subr.mxu0 0.0
    %652 = vmatpush1.msra.mxu0 %v592
    %653 = vmatprep.subr.mxu0 0.0
    %654 = vmatpush1.msra.mxu0 %v593
    %655 = vmatprep.subr.mxu0 0.0
    %656 = vmatpush1.msra.mxu0 %v594
    %657 = vmatprep.subr.mxu0 0.0
    %658 = vmatpush1.msra.mxu0 %v595
    %659 = vmatprep.subr.mxu0 0.0
    %660 = vmatpush1.msra.mxu0 %v596
    %661 = vmatprep.subr.mxu0 0.0
    %662 = vmatpush1.msra.mxu0 %v597
    %663 = vmatprep.subr.mxu0 0.0
    %664 = vmatpush1.msra.mxu0 %v598
    %665 = vmatprep.subr.mxu0 0.0
    %666 = vmatpush1.msra.mxu0 %v599
    %667 = vmatprep.subr.mxu0 0.0
    %668 = vmatpush1.msra.mxu0 %v600
    %669 = vmatprep.subr.mxu0 0.0
    %670 = vmatpush1.msra.mxu0 %v601
    %671 = vmatprep.subr.mxu0 0.0
    %672 = vmatpush1.msra.mxu0 %v602
    %673 = vmatprep.subr.mxu0 0.0
    %674 = vmatpush1.msra.mxu0 %v603
    %675 = vmatprep.mubr.f32.mxu0 %v115
    %676 = vmatmul.mubr.f32.gmra.mrb[0].mxu0 %v114
    %v677 = vpop.f32.mrb[0].mxu0
    %v678 = vadd.f32 %v609, %v677
    %v679 = vpop.f32.mrb[0].mxu0
    %680 = vmatprep.mubr.f32.mxu0 %v117
    %681 = vmatmul.mubr.f32.gmra.mrb[0].mxu0 %v116
    %v682 = vpop.f32.mrb[0].mxu0
    %v683 = vadd.f32 %v609, %v682
    %v684 = vpop.f32.mrb[0].mxu0
    %685 = vmatprep.mubr.f32.mxu0 %v119
    %686 = vmatmul.mubr.f32.gmra.mrb[0].mxu0 %v118
    %v687 = vpop.f32.mrb[0].mxu0
    %v688 = vadd.f32 %v609, %v687
    %v689 = vpop.f32.mrb[0].mxu0
    %690 = vmatprep.mubr.f32.mxu0 %v121
    %691 = vmatmul.mubr.f32.gmra.mrb[0].mxu0 %v120
    %v692 = vpop.f32.mrb[0].mxu0
    %v693 = vadd.f32 %v609, %v692
    %v694 = vpop.f32.mrb[0].mxu0
    %695 = vmatprep.mubr.f32.mxu0 %v123
    %696 = vmatmul.mubr.f32.gmra.mrb[0].mxu0 %v122
    %v697 = vpop.f32.mrb[0].mxu0
    %v698 = vadd.f32 %v609, %v697
    %v699 = vpop.f32.mrb[0].mxu0
    %700 = vmatprep.mubr.f32.mxu0 %v125
    %701 = vmatmul.mubr.f32.gmra.mrb[0].mxu0 %v124
    %v702 = vpop.f32.mrb[0].mxu0
    %v703 = vadd.f32 %v609, %v702
    %v704 = vpop.f32.mrb[0].mxu0
    %705 = vmatprep.mubr.f32.mxu0 %v127
    %706 = vmatmul.mubr.f32.gmra.mrb[0].mxu0 %v126
    %v707 = vpop.f32.mrb[0].mxu0
    %v708 = vadd.f32 %v609, %v707
    %v709 = vpop.f32.mrb[0].mxu0
    %710 = vmatprep.mubr.f32.mxu0 %v129
    %711 = vmatmul.mubr.f32.gmra.mrb[0].mxu0 %v128
    %v712 = vpop.f32.mrb[0].mxu0
    %v713 = vadd.f32 %v609, %v712
    %v714 = vpop.f32.mrb[0].mxu0
    %715 = vdwg.mxu0
    %v716 = vmax.f32 %v678, 0.0
    %v717 = vmax.f32 %v683, 0.0
    %v718 = vmax.f32 %v688, 0.0
    %v719 = vmax.f32 %v693, 0.0
    %v720 = vmax.f32 %v698, 0.0
    %v721 = vmax.f32 %v703, 0.0
    %v722 = vmax.f32 %v708, 0.0
    %v723 = vmax.f32 %v713, 0.0
    %v724 = vpack.c.bf16 %v717, %v716
    %v725 = vpack.c.bf16 %v719, %v718
    %v726 = vpack.c.bf16 %v721, %v720
    %v727 = vpack.c.bf16 %v723, %v722
    %v732 = vunpack.c.l.b16 %v724
    %v733 = vunpack.c.h.b16 %v724
    %v734 = vunpack.c.l.b16 %v725
    %v735 = vunpack.c.h.b16 %v725
    %v736 = vunpack.c.l.b16 %v726
    %v737 = vunpack.c.h.b16 %v726
    %v738 = vunpack.c.l.b16 %v727
    %v739 = vunpack.c.h.b16 %v727
    %v740 = vpack.c.b16 %v732, %v732
    %v741 = vpack.c.b16 %v733, %v733
    %v742 = vpack.c.b16 %v734, %v734
    %v743 = vpack.c.b16 %v735, %v735
    %v744 = vpack.c.b16 %v736, %v736
    %v745 = vpack.c.b16 %v737, %v737
    %v746 = vpack.c.b16 %v738, %v738
    %v747 = vpack.c.b16 %v739, %v739
    %756 = vst [vmem:[%s9] sm:$0xf] %v740
    %757 = vst [vmem:[%s9 + $0x4] sm:$0xf] %v741
    %758 = vst [vmem:[%s9 + $0x8] sm:$0xf] %v742
    %759 = vst [vmem:[%s9 + $0xc] sm:$0xf] %v743
    %760 = vst [vmem:[%s9 + $0x10] sm:$0xf] %v744
    %761 = vst [vmem:[%s9 + $0x14] sm:$0xf] %v745
    %762 = vst [vmem:[%s9 + $0x18] sm:$0xf] %v746
    %763 = vst [vmem:[%s9 + $0x1c] sm:$0xf] %v747
    %v764 = vld [vmem:[#allocation11] sm:$0xff]
    %v765 = vld [vmem:[#allocation11 + $0x8] sm:$0xff]
    %v766 = vld [vmem:[#allocation11 + $0x10] sm:$0xff]
    %v767 = vld [vmem:[#allocation11 + $0x18] sm:$0xff]
    %v768 = vld [vmem:[#allocation11 + $0x20] sm:$0xff]
    %v769 = vld [vmem:[#allocation11 + $0x28] sm:$0xff]
    %v770 = vld [vmem:[#allocation11 + $0x30] sm:$0xff]
    %v771 = vld [vmem:[#allocation11 + $0x38] sm:$0xff]
    %v772 = vld [vmem:[#allocation11 + $0x40] sm:$0xff]
    %v773 = vld [vmem:[#allocation11 + $0x48] sm:$0xff]
    %v774 = vld [vmem:[#allocation11 + $0x50] sm:$0xff]
    %v775 = vld [vmem:[#allocation11 + $0x58] sm:$0xff]
    %v776 = vld [vmem:[#allocation11 + $0x60] sm:$0xff]
    %v777 = vld [vmem:[#allocation11 + $0x68] sm:$0xff]
    %v778 = vld [vmem:[#allocation11 + $0x70] sm:$0xff]
    %v779 = vld [vmem:[#allocation11 + $0x78] sm:$0xff]
    %v780 = vld [vmem:[#allocation11 + $0x80] sm:$0xff]
    %v781 = vld [vmem:[#allocation11 + $0x88] sm:$0xff]
    %v782 = vld [vmem:[#allocation11 + $0x90] sm:$0xff]
    %v783 = vld [vmem:[#allocation11 + $0x98] sm:$0xff]
    %v784 = vld [vmem:[#allocation11 + $0xa0] sm:$0xff]
    %v785 = vld [vmem:[#allocation11 + $0xa8] sm:$0xff]
    %v786 = vld [vmem:[#allocation11 + $0xb0] sm:$0xff]
    %v787 = vld [vmem:[#allocation11 + $0xb8] sm:$0xff]
    %v788 = vld [vmem:[#allocation11 + $0xc0] sm:$0xff]
    %v789 = vld [vmem:[#allocation11 + $0xc8] sm:$0xff]
    %v790 = vld [vmem:[#allocation11 + $0xd0] sm:$0xff]
    %v791 = vld [vmem:[#allocation11 + $0xd8] sm:$0xff]
    %v792 = vld [vmem:[#allocation11 + $0xe0] sm:$0xff]
    %v793 = vld [vmem:[#allocation11 + $0xe8] sm:$0xff]
    %v794 = vld [vmem:[#allocation11 + $0xf0] sm:$0xff]
    %v795 = vld [vmem:[#allocation11 + $0xf8] sm:$0xff]
    %v796 = vld [vmem:[#allocation12] sm:$0x1]
    %v798 = vlaneseq
    %v799 = vshrl.u32 %v798, 7
    %v800 = vsub.s32 0, %v799
    %v801 = vrot.slane %v796, %v800
    %803 = vmatprep.subr.mxu0 0.0
    %804 = vmatpush1.msra.mxu0 %v764
    %805 = vmatprep.subr.mxu0 0.0
    %806 = vmatpush1.msra.mxu0 %v765
    %807 = vmatprep.subr.mxu0 0.0
    %808 = vmatpush1.msra.mxu0 %v766
    %809 = vmatprep.subr.mxu0 0.0
    %810 = vmatpush1.msra.mxu0 %v767
    %811 = vmatprep.subr.mxu0 0.0
    %812 = vmatpush1.msra.mxu0 %v768
    %813 = vmatprep.subr.mxu0 0.0
    %814 = vmatpush1.msra.mxu0 %v769
    %815 = vmatprep.subr.mxu0 0.0
    %816 = vmatpush1.msra.mxu0 %v770
    %817 = vmatprep.subr.mxu0 0.0
    %818 = vmatpush1.msra.mxu0 %v771
    %819 = vmatprep.subr.mxu0 0.0
    %820 = vmatpush1.msra.mxu0 %v772
    %821 = vmatprep.subr.mxu0 0.0
    %822 = vmatpush1.msra.mxu0 %v773
    %823 = vmatprep.subr.mxu0 0.0
    %824 = vmatpush1.msra.mxu0 %v774
    %825 = vmatprep.subr.mxu0 0.0
    %826 = vmatpush1.msra.mxu0 %v775
    %827 = vmatprep.subr.mxu0 0.0
    %828 = vmatpush1.msra.mxu0 %v776
    %829 = vmatprep.subr.mxu0 0.0
    %830 = vmatpush1.msra.mxu0 %v777
    %831 = vmatprep.subr.mxu0 0.0
    %832 = vmatpush1.msra.mxu0 %v778
    %833 = vmatprep.subr.mxu0 0.0
    %834 = vmatpush1.msra.mxu0 %v779
    %835 = vmatprep.subr.mxu0 0.0
    %836 = vmatpush1.msra.mxu0 %v780
    %837 = vmatprep.subr.mxu0 0.0
    %838 = vmatpush1.msra.mxu0 %v781
    %839 = vmatprep.subr.mxu0 0.0
    %840 = vmatpush1.msra.mxu0 %v782
    %841 = vmatprep.subr.mxu0 0.0
    %842 = vmatpush1.msra.mxu0 %v783
    %843 = vmatprep.subr.mxu0 0.0
    %844 = vmatpush1.msra.mxu0 %v784
    %845 = vmatprep.subr.mxu0 0.0
    %846 = vmatpush1.msra.mxu0 %v785
    %847 = vmatprep.subr.mxu0 0.0
    %848 = vmatpush1.msra.mxu0 %v786
    %849 = vmatprep.subr.mxu0 0.0
    %850 = vmatpush1.msra.mxu0 %v787
    %851 = vmatprep.subr.mxu0 0.0
    %852 = vmatpush1.msra.mxu0 %v788
    %853 = vmatprep.subr.mxu0 0.0
    %854 = vmatpush1.msra.mxu0 %v789
    %855 = vmatprep.subr.mxu0 0.0
    %856 = vmatpush1.msra.mxu0 %v790
    %857 = vmatprep.subr.mxu0 0.0
    %858 = vmatpush1.msra.mxu0 %v791
    %859 = vmatprep.subr.mxu0 0.0
    %860 = vmatpush1.msra.mxu0 %v792
    %861 = vmatprep.subr.mxu0 0.0
    %862 = vmatpush1.msra.mxu0 %v793
    %863 = vmatprep.subr.mxu0 0.0
    %864 = vmatpush1.msra.mxu0 %v794
    %865 = vmatprep.subr.mxu0 0.0
    %866 = vmatpush1.msra.mxu0 %v795
    %867 = vmatprep.mubr.f32.mxu0 %v131
    %868 = vmatmul.mubr.f32.gmra.mrb[0].mxu0 %v130
    %v869 = vpop.f32.mrb[0].mxu0
    %v870 = vadd.f32 %v801, %v869
    %v871 = vpop.f32.mrb[0].mxu0
    %872 = vmatprep.mubr.f32.mxu0 %v133
    %873 = vmatmul.mubr.f32.gmra.mrb[0].mxu0 %v132
    %v874 = vpop.f32.mrb[0].mxu0
    %v875 = vadd.f32 %v801, %v874
    %v876 = vpop.f32.mrb[0].mxu0
    %877 = vmatprep.mubr.f32.mxu0 %v135
    %878 = vmatmul.mubr.f32.gmra.mrb[0].mxu0 %v134
    %v879 = vpop.f32.mrb[0].mxu0
    %v880 = vadd.f32 %v801, %v879
    %v881 = vpop.f32.mrb[0].mxu0
    %882 = vmatprep.mubr.f32.mxu0 %v137
    %883 = vmatmul.mubr.f32.gmra.mrb[0].mxu0 %v136
    %v884 = vpop.f32.mrb[0].mxu0
    %v885 = vadd.f32 %v801, %v884
    %v886 = vpop.f32.mrb[0].mxu0
    %887 = vmatprep.mubr.f32.mxu0 %v139
    %888 = vmatmul.mubr.f32.gmra.mrb[0].mxu0 %v138
    %v889 = vpop.f32.mrb[0].mxu0
    %v890 = vadd.f32 %v801, %v889
    %v891 = vpop.f32.mrb[0].mxu0
    %892 = vmatprep.mubr.f32.mxu0 %v141
    %893 = vmatmul.mubr.f32.gmra.mrb[0].mxu0 %v140
    %v894 = vpop.f32.mrb[0].mxu0
    %v895 = vadd.f32 %v801, %v894
    %v896 = vpop.f32.mrb[0].mxu0
    %897 = vmatprep.mubr.f32.mxu0 %v143
    %898 = vmatmul.mubr.f32.gmra.mrb[0].mxu0 %v142
    %v899 = vpop.f32.mrb[0].mxu0
    %v900 = vadd.f32 %v801, %v899
    %v901 = vpop.f32.mrb[0].mxu0
    %902 = vmatprep.mubr.f32.mxu0 %v145
    %903 = vmatmul.mubr.f32.gmra.mrb[0].mxu0 %v144
    %v904 = vpop.f32.mrb[0].mxu0
    %v905 = vadd.f32 %v801, %v904
    %v906 = vpop.f32.mrb[0].mxu0
    %907 = vdwg.mxu0
    %v908 = vmax.f32 %v870, 0.0
    %v909 = vmax.f32 %v875, 0.0
    %v910 = vmax.f32 %v880, 0.0
    %v911 = vmax.f32 %v885, 0.0
    %v912 = vmax.f32 %v890, 0.0
    %v913 = vmax.f32 %v895, 0.0
    %v914 = vmax.f32 %v900, 0.0
    %v915 = vmax.f32 %v905, 0.0
    %v916 = vpack.c.bf16 %v909, %v908
    %v917 = vpack.c.bf16 %v911, %v910
    %v918 = vpack.c.bf16 %v913, %v912
    %v919 = vpack.c.bf16 %v915, %v914
    %v924 = vunpack.c.l.b16 %v916
    %v925 = vunpack.c.h.b16 %v916
    %v926 = vunpack.c.l.b16 %v917
    %v927 = vunpack.c.h.b16 %v917
    %v928 = vunpack.c.l.b16 %v918
    %v929 = vunpack.c.h.b16 %v918
    %v930 = vunpack.c.l.b16 %v919
    %v931 = vunpack.c.h.b16 %v919
    %v932 = vpack.c.b16 %v924, %v924
    %v933 = vpack.c.b16 %v925, %v925
    %v934 = vpack.c.b16 %v926, %v926
    %v935 = vpack.c.b16 %v927, %v927
    %v936 = vpack.c.b16 %v928, %v928
    %v937 = vpack.c.b16 %v929, %v929
    %v938 = vpack.c.b16 %v930, %v930
    %v939 = vpack.c.b16 %v931, %v931
    %s948 = scalar_lea.vmem %s9, 32
    %949 = vst [vmem:[%s948] sm:$0xf] %v932
    %950 = vst [vmem:[%s948 + $0x4] sm:$0xf] %v933
    %951 = vst [vmem:[%s948 + $0x8] sm:$0xf] %v934
    %952 = vst [vmem:[%s948 + $0xc] sm:$0xf] %v935
    %953 = vst [vmem:[%s948 + $0x10] sm:$0xf] %v936
    %954 = vst [vmem:[%s948 + $0x14] sm:$0xf] %v937
    %955 = vst [vmem:[%s948 + $0x18] sm:$0xf] %v938
    %956 = vst [vmem:[%s948 + $0x1c] sm:$0xf] %v939
    // Predicated region
    $region62: #{outblock_forward.3} parent=1 // pred_check
      _
    $region63: #{outblock_forward.3} parent=1 // pred_check_branch
      %958 = sbr.rel (0) target = $region65
    $region64: #{outblock_forward.3} parent=1 // pred_region
      _
    $region65: #{outblock_forward.3} parent=1 // pred_fallthru
      _
    // Predicated region
    $region66: #{outblock_forward.3} parent=1 // pred_check
      _
    $region67: #{outblock_forward.3} parent=1 // pred_check_branch
      %960 = sbr.rel (0) target = $region69
    $region68: #{outblock_forward.3} parent=1 // pred_region
      _
    $region69: #{outblock_forward.3} parent=1 // pred_fallthru
      _
    // Predicated region
    $region70: #{outblock_forward.3} parent=1 // pred_check
      _
    $region71: #{outblock_forward.3} parent=1 // pred_check_branch
      %962 = sbr.rel (0) target = $region73
    $region72: #{outblock_forward.3} parent=1 // pred_region
      _
    $region73: #{outblock_forward.3} parent=1 // pred_fallthru
      _
    // Predicated region
    $region74: #{outblock_forward.3} parent=1 // pred_check
      _
    $region75: #{outblock_forward.3} parent=1 // pred_check_branch
      %964 = sbr.rel (0) target = $region77
    $region76: #{outblock_forward.3} parent=1 // pred_region
      _
    $region77: #{outblock_forward.3} parent=1 // pred_fallthru
      _
    %965 = vsyncpa [#allocation5], 1
    %966 = vsyncpa [#allocation7], 1
    %967 = vsyncpa [#allocation10], 1
    %968 = vsyncpa [#allocation13], 1

// kernel: outblock_forward.4
$region0: #{outblock_forward.4}
  #allocation0 [shape = 'u32[]', space=smem, size = 0x4, offset = 0x4, fixed_abs, tag = 'smem constant byte address 0x4 - core index']
  #allocation1 [shape = 'u32[144,128]{1,0:T(1,128)}', space=vmem, size = 0x12000, scoped, tag = 'internal scratch']
  %s0 = inlined_call_operand.vmem [shape: bf16[2,8192], index: 0, kind: input, shape index: {}]
  %s1 = inlined_call_operand.hbm [shape: bf16[8192,4864], index: 1, kind: input, shape index: {}]
  %s2 = inlined_call_operand.vmem [shape: f32[2,4864], index: 2, kind: output, shape index: {}]
  %s3 = sld [smem:[#allocation0]]
  $region49: #{outblock_forward.4} parent=0
    _
  %s5 = ssub.s32 1, %s3
  %s6 = scalar_select 0, %s5, %s3
  $region1: #{outblock_forward.4} parent=0
    #allocation2 [shape = 'u8[9961472]{0}', space=vmem, size = 0x980000, scoped, tag = 'input window, operand 1']
    #allocation3 [shape = 's32[2]{0}', space=sflag, size = 0x8, scoped, tag = 'scoped memory for outblock_forward.4']
    %7 = vsyncpa [#allocation3], 0
    %s8 = scalar_lea.sflag [#allocation3], 1
    %9 = vsyncpa %s8, 0
    loop: start=0, step=1, limit=18
    $region2: #{outblock_forward.4} parent=1 // loop_pre_header
      _
    $region3: #{outblock_forward.4} parent=1 // loop_header
      %s11 = sphi 0, %s15
      %p12 = scmp.ge.s32.totalorder %s11, 18
      %s18 = sphi 0, %s30
      %s19 = sphi 0, %s26
      %s20 = sphi 0, %s18
      %s21 = sphi 0, %s19
      %s22 = sphi 0, %s20
      %s23 = sphi 0, %s21
      %s33 = sphi 0, %s35
      %s36 = sphi 0, %s33
      %s37 = sphi 0, %s36
      %s53 = sphi 0, %s37
      %s61 = sphi 0, %s63
      %s64 = sphi 0, %s61
      %s65 = sphi 0, %s64
      %s81 = sphi 0, %s65
      %s87 = sphi 0, %s89
      %s90 = sphi 0, %s87
      %s91 = sphi 0, %s90
      %s107 = sphi 0, %s91
    $region4: #{outblock_forward.4} parent=1 // loop_header_branch
      %14 = sbr.rel (%p12) target = $region8
    $region5: #{outblock_forward.4} parent=1 // loop_body
      %s16 = ssub.s32 %s11, 1
      %s17 = ssub.s32 %s11, 2
      %s24 = sadd.s32 1, %s19
      %p25 = scmp.ge.s32.totalorder %s24, 8
      %s26 = scalar_select %p25, 0, %s24
      %s27 = sadd.s32 1, %s18
      %s28 = scalar_select %p25, %s27, %s18
      %p29 = scmp.ge.s32.totalorder %s28, 2
      %s30 = scalar_select %p29, 0, %s28
      %s31 = ssub.s32 %s19, %s26
      %p32 = scmp.eq.s32.totalorder %s31, 0
      %s34 = sadd.s32 %s33, 1
      %s35 = scalar_select %p32, %s33, %s34
      %p38 = pneg %p32
      %p39 = scmp.eq.s32.totalorder %s11, 15
      %p40 = por %p38, %p39
      %p41 = scmp.ne.s32.totalorder %s33, %s36
      %p42 = scmp.eq.s32.totalorder %s11, 0
      %p43 = por %p41, %p42
      %p44 = scmp.ne.s32.totalorder %s33, %s36
      %p45 = scmp.eq.s32.totalorder %s16, 15
      %p46 = por %p44, %p45
      %p47 = scmp.ne.s32.totalorder %s36, %s37
      %p48 = scmp.eq.s32.totalorder %s16, 0
      %p49 = por %p47, %p48
      %p50 = scmp.ne.s32.totalorder %s36, %s37
      %p51 = scmp.eq.s32.totalorder %s17, 15
      %p52 = por %p50, %p51
      %p54 = scmp.ne.s32.totalorder %s37, %s53
      %p55 = scmp.eq.s32.totalorder %s17, 0
      %p56 = por %p54, %p55
      %s57 = ssub.s32 %s19, %s26
      %s58 = ssub.s32 %s18, %s30
      %s59 = sor.u32 %s57, %s58
      %p60 = scmp.eq.s32.totalorder %s59, 0
      %s62 = sadd.s32 %s61, 1
      %s63 = scalar_select %p60, %s61, %s62
      %p66 = pneg %p60
      %p67 = scmp.eq.s32.totalorder %s11, 15
      %p68 = por %p66, %p67
      %p69 = scmp.ne.s32.totalorder %s61, %s64
      %p70 = scmp.eq.s32.totalorder %s11, 0
      %p71 = por %p69, %p70
      %p72 = scmp.ne.s32.totalorder %s61, %s64
      %p73 = scmp.eq.s32.totalorder %s16, 15
      %p74 = por %p72, %p73
      %p75 = scmp.ne.s32.totalorder %s64, %s65
      %p76 = scmp.eq.s32.totalorder %s16, 0
      %p77 = por %p75, %p76
      %p78 = scmp.ne.s32.totalorder %s64, %s65
      %p79 = scmp.eq.s32.totalorder %s17, 15
      %p80 = por %p78, %p79
      %p82 = scmp.ne.s32.totalorder %s65, %s81
      %p83 = scmp.eq.s32.totalorder %s17, 0
      %p84 = por %p82, %p83
      %s85 = ssub.s32 %s18, %s30
      %p86 = scmp.eq.s32.totalorder %s85, 0
      %s88 = sadd.s32 %s87, 1
      %s89 = scalar_select %p86, %s87, %s88
      %p92 = pneg %p86
      %p93 = scmp.eq.s32.totalorder %s11, 15
      %p94 = por %p92, %p93
      %p95 = scmp.ne.s32.totalorder %s87, %s90
      %p96 = scmp.eq.s32.totalorder %s11, 0
      %p97 = por %p95, %p96
      %p98 = scmp.ne.s32.totalorder %s87, %s90
      %p99 = scmp.eq.s32.totalorder %s16, 15
      %p100 = por %p98, %p99
      %p101 = scmp.ne.s32.totalorder %s90, %s91
      %p102 = scmp.eq.s32.totalorder %s16, 0
      %p103 = por %p101, %p102
      %p104 = scmp.ne.s32.totalorder %s90, %s91
      %p105 = scmp.eq.s32.totalorder %s17, 15
      %p106 = por %p104, %p105
      %p108 = scmp.ne.s32.totalorder %s91, %s107
      %p109 = scmp.eq.s32.totalorder %s17, 0
      %p110 = por %p108, %p109
      %p111 = scmp.le.s32.totalorder 1, %s11
      %p112 = scmp.lt.s32.totalorder %s11, 17
      %p113 = pnand %p111, %p112
      %p114 = pneg %p113
      // Predicated region
      $region9: #{outblock_forward.4} parent=5 // pred_check
        _
      $region10: #{outblock_forward.4} parent=5 // pred_check_branch
        %116 = sbr.rel (%p113) target = $region12
      $region11: #{outblock_forward.4} parent=5 // pred_region
        %s117 = ssub.s32 %s11, 1
      $region12: #{outblock_forward.4} parent=5 // pred_fallthru
        _
      %p118 = scmp.lt.s32.totalorder %s11, 16
      // Predicated region
      $region13: #{outblock_forward.4} parent=5 // pred_check
        %p119 = pneg %p118
      $region14: #{outblock_forward.4} parent=5 // pred_check_branch
        %121 = sbr.rel (%p119) target = $region16
      $region15: #{outblock_forward.4} parent=5 // pred_region
        // Predicated region
        $region17: #{outblock_forward.4} parent=15 // pred_check
          %p122 = pneg %p43
        $region18: #{outblock_forward.4} parent=15 // pred_check_branch
          %124 = sbr.rel (%p122) target = $region20
        $region19: #{outblock_forward.4} parent=15 // pred_region
          %s125 = smul.u32 8, %s19
          %p126 = scmp.lt.s32.totalorder %s125, 63
          %s127 = scalar_select %p126, %s125, 63
          %s128 = scalar_lea.vmem %s0, %s127
          %s129 = smul.u32 8, %s19
        $region20: #{outblock_forward.4} parent=15 // pred_fallthru
          _
        // Predicated region
        $region21: #{outblock_forward.4} parent=15 // pred_check
          %p130 = pneg %p71
        $region22: #{outblock_forward.4} parent=15 // pred_check_branch
          %132 = sbr.rel (%p130) target = $region24
        $region23: #{outblock_forward.4} parent=15 // pred_region
          %s133 = sand.u32 %s61, 1
          %s134 = scalar_lea.sflag [#allocation3], %s133
          %s135 = sand.u32 %s61, 1
          %s136 = smul.addr %s135, 9728
          %s137 = scalar_lea.vmem [#allocation2], %s136
          %s138 = smul.u32 128, %s19
          %s139 = smul.u32 19, %s18
          %s141 = ssub.s32 155648, 155648
          %142 = vsyncadd %s134, %s141
          %s143 = smul.addr %s138, 38
          %s144 = sadd.s32 %s139, %s143
          %s145 = smul.addr %s144, 64
          %s146 = scalar_lea.hbm %s1, %s145
          %s147 = sshll.u32 %s137, 4
          %s148 = int_to_ptr.vmem [resolvable:$true] %s147
          %153 = dma.hbm_to_vmem [thread:$0]  %s146, 155648, %s148, %s134, 2432, 1216, 76
        $region24: #{outblock_forward.4} parent=15 // pred_fallthru
          _
      $region16: #{outblock_forward.4} parent=5 // pred_fallthru
        _
      %p154 = scmp.le.s32.totalorder 1, %s11
      %p155 = scmp.lt.s32.totalorder %s11, 17
      %p156 = pnand %p154, %p155
      %p157 = pneg %p156
      // Predicated region
      $region25: #{outblock_forward.4} parent=5 // pred_check
        _
      $region26: #{outblock_forward.4} parent=5 // pred_check_branch
        %159 = sbr.rel (%p156) target = $region28
      $region27: #{outblock_forward.4} parent=5 // pred_region
        %s160 = ssub.s32 %s11, 1
        %s161 = sand.u32 %s64, 1
        %s162 = scalar_lea.sflag [#allocation3], %s161
        %s163 = sand.u32 %s64, 1
        %s164 = smul.addr %s163, 9728
        %s165 = scalar_lea.vmem [#allocation2], %s164
        // Predicated region
        $region29: #{outblock_forward.4} parent=27 // pred_check
          %p166 = pneg %p77
        $region30: #{outblock_forward.4} parent=27 // pred_check_branch
          %168 = sbr.rel (%p166) target = $region32
        $region31: #{outblock_forward.4} parent=27 // pred_region
          %169 = dma.done %s162, 155648
        $region32: #{outblock_forward.4} parent=27 // pred_fallthru
          _
        %s170 = smul.u32 8, %s21
        %p171 = scmp.lt.s32.totalorder %s170, 63
        %s172 = scalar_select %p171, %s170, 63
        %s173 = scalar_lea.vmem %s0, %s172
        %p174 = pneg %p49
        %p175 = pneg %p46
        %s176 = sand.u32 %s64, 1
        %s177 = scalar_lea.sflag [#allocation3], %s176
        %s178 = sand.u32 %s64, 1
        %s179 = smul.addr %s178, 9728
        %s180 = scalar_lea.vmem [#allocation2], %s179
        %p181 = pneg %p77
        %p182 = pneg %p74
        %p183 = pneg %p103
        %p184 = pneg %p100
        %s185 = smul.u32 19, %s20
        %p186 = scmp.lt.s32.totalorder %s185, 37
        %s187 = scalar_select %p186, %s185, 37
        %s188 = smul.addr %s187, 2
        %s189 = scalar_lea.vmem %s2, %s188
        %s190 = smul.u32 8, %s21
        %p191 = scmp.lt.s32.totalorder %s190, 63
        %s192 = scalar_select %p191, %s190, 63
        %s193 = scalar_lea.vmem %s0, %s192
        %s194 = smul.u32 8, %s21
        %s195 = smul.u32 128, %s21
        %s196 = smul.u32 19, %s20
        %s197 = smul.u32 19, %s20
        %p198 = scmp.lt.s32.totalorder %s197, 37
        %s199 = scalar_select %p198, %s197, 37
        %s200 = smul.addr %s199, 2
        %s201 = scalar_lea.vmem %s2, %s200
        %s202 = smul.u32 19, %s20
        %p204 = scmp.eq.s32.totalorder %s21, 0
        // Predicated region
        $region33: #{outblock_forward.4} parent=27 // pred_check
          %p205 = pneg %p204
        $region34: #{outblock_forward.4} parent=27 // pred_check_branch
          %207 = sbr.rel (%p205) target = $region36
        $region35: #{outblock_forward.4} parent=27 // pred_region
          %208 = vst [vmem:[%s201] sm:$0xff] 0.0
          %209 = vst [vmem:[%s201 + $0x8] sm:$0xff] 0.0
          %210 = vst [vmem:[%s201 + $0x10] sm:$0xff] 0.0
          %211 = vst [vmem:[%s201 + $0x18] sm:$0xff] 0.0
          %212 = vst [vmem:[%s201 + $0x20] sm:$0x3f] 0.0
        $region36: #{outblock_forward.4} parent=27 // pred_fallthru
          _
        %v213 = vld [vmem:[%s201] sm:$0xff]
        %v214 = vld [vmem:[%s201 + $0x8] sm:$0xff]
        %v215 = vld [vmem:[%s201 + $0x10] sm:$0xff]
        %v216 = vld [vmem:[%s201 + $0x18] sm:$0xff]
        %v217 = vld [vmem:[%s201 + $0x20] sm:$0x3f]
        %v218 = vld [vmem:[%s193] sm:$0xff]
        %v219 = vld [vmem:[%s165] sm:$0xff]
        %v220 = vld [vmem:[%s165 + $0x8] sm:$0xff]
        %v221 = vld [vmem:[%s165 + $0x10] sm:$0xff]
        %v222 = vld [vmem:[%s165 + $0x18] sm:$0xff]
        %v223 = vld [vmem:[%s165 + $0x20] sm:$0xff]
        %v224 = vld [vmem:[%s165 + $0x28] sm:$0xff]
        %v225 = vld [vmem:[%s165 + $0x30] sm:$0xff]
        %v226 = vld [vmem:[%s165 + $0x38] sm:$0xff]
        %v227 = vld [vmem:[%s165 + $0x40] sm:$0xff]
        %v228 = vld [vmem:[%s165 + $0x48] sm:$0xf]
        %v229 = vld [vmem:[%s165 + $0x4c] sm:$0xff]
        %v230 = vld [vmem:[%s165 + $0x54] sm:$0xff]
        %v231 = vld [vmem:[%s165 + $0x5c] sm:$0xff]
        %v232 = vld [vmem:[%s165 + $0x64] sm:$0xff]
        %v233 = vld [vmem:[%s165 + $0x6c] sm:$0xff]
        %v234 = vld [vmem:[%s165 + $0x74] sm:$0xff]
        %v235 = vld [vmem:[%s165 + $0x7c] sm:$0xff]
        %v236 = vld [vmem:[%s165 + $0x84] sm:$0xff]
        %v237 = vld [vmem:[%s165 + $0x8c] sm:$0xff]
        %v238 = vld [vmem:[%s165 + $0x94] sm:$0xf]
        %v239 = vld [vmem:[%s165 + $0x98] sm:$0xff]
        %v240 = vld [vmem:[%s165 + $0xa0] sm:$0xff]
        %v241 = vld [vmem:[%s165 + $0xa8] sm:$0xff]
        %v242 = vld [vmem:[%s165 + $0xb0] sm:$0xff]
        %v243 = vld [vmem:[%s165 + $0xb8] sm:$0xff]
        %v244 = vld [vmem:[%s165 + $0xc0] sm:$0xff]
        %v245 = vld [vmem:[%s165 + $0xc8] sm:$0xff]
        %v246 = vld [vmem:[%s165 + $0xd0] sm:$0xff]
        %v247 = vld [vmem:[%s165 + $0xd8] sm:$0xff]
        %v248 = vld [vmem:[%s165 + $0xe0] sm:$0xf]
        %v249 = vld [vmem:[%s165 + $0xe4] sm:$0xff]
        %v250 = vld [vmem:[%s165 + $0xec] sm:$0xff]
        %v251 = vld [vmem:[%s165 + $0xf4] sm:$0xff]
        %v252 = vld [vmem:[%s165 + $0xfc] sm:$0xff]
        %v253 = vld [vmem:[%s165 + $0x104] sm:$0xff]
        %v254 = vld [vmem:[%s165 + $0x10c] sm:$0xff]
        %v255 = vld [vmem:[%s165 + $0x114] sm:$0xff]
        %v256 = vld [vmem:[%s165 + $0x11c] sm:$0xff]
        %v257 = vld [vmem:[%s165 + $0x124] sm:$0xff]
        %v258 = vld [vmem:[%s165 + $0x12c] sm:$0xf]
        %v259 = vld [vmem:[%s165 + $0x130] sm:$0xff]
        %v260 = vld [vmem:[%s165 + $0x138] sm:$0xff]
        %v261 = vld [vmem:[%s165 + $0x140] sm:$0xff]
        %v262 = vld [vmem:[%s165 + $0x148] sm:$0xff]
        %v263 = vld [vmem:[%s165 + $0x150] sm:$0xff]
        %v264 = vld [vmem:[%s165 + $0x158] sm:$0xff]
        %v265 = vld [vmem:[%s165 + $0x160] sm:$0xff]
        %v266 = vld [vmem:[%s165 + $0x168] sm:$0xff]
        %v267 = vld [vmem:[%s165 + $0x170] sm:$0xff]
        %v268 = vld [vmem:[%s165 + $0x178] sm:$0xf]
        %v269 = vld [vmem:[%s165 + $0x17c] sm:$0xff]
        %v270 = vld [vmem:[%s165 + $0x184] sm:$0xff]
        %v271 = vld [vmem:[%s165 + $0x18c] sm:$0xff]
        %v272 = vld [vmem:[%s165 + $0x194] sm:$0xff]
        %v273 = vld [vmem:[%s165 + $0x19c] sm:$0xff]
        %v274 = vld [vmem:[%s165 + $0x1a4] sm:$0xff]
        %v275 = vld [vmem:[%s165 + $0x1ac] sm:$0xff]
        %v276 = vld [vmem:[%s165 + $0x1b4] sm:$0xff]
        %v277 = vld [vmem:[%s165 + $0x1bc] sm:$0xff]
        %v278 = vld [vmem:[%s165 + $0x1c4] sm:$0xf]
        %v279 = vld [vmem:[%s165 + $0x1c8] sm:$0xff]
        %v280 = vld [vmem:[%s165 + $0x1d0] sm:$0xff]
        %v281 = vld [vmem:[%s165 + $0x1d8] sm:$0xff]
        %v282 = vld [vmem:[%s165 + $0x1e0] sm:$0xff]
        %v283 = vld [vmem:[%s165 + $0x1e8] sm:$0xff]
        %v284 = vld [vmem:[%s165 + $0x1f0] sm:$0xff]
        %v285 = vld [vmem:[%s165 + $0x1f8] sm:$0xff]
        %v286 = vld [vmem:[%s165 + $0x200] sm:$0xff]
        %v287 = vld [vmem:[%s165 + $0x208] sm:$0xff]
        %v288 = vld [vmem:[%s165 + $0x210] sm:$0xf]
        %v289 = vld [vmem:[%s165 + $0x214] sm:$0xff]
        %v290 = vld [vmem:[%s165 + $0x21c] sm:$0xff]
        %v291 = vld [vmem:[%s165 + $0x224] sm:$0xff]
        %v292 = vld [vmem:[%s165 + $0x22c] sm:$0xff]
        %v293 = vld [vmem:[%s165 + $0x234] sm:$0xff]
        %v294 = vld [vmem:[%s165 + $0x23c] sm:$0xff]
        %v295 = vld [vmem:[%s165 + $0x244] sm:$0xff]
        %v296 = vld [vmem:[%s165 + $0x24c] sm:$0xff]
        %v297 = vld [vmem:[%s165 + $0x254] sm:$0xff]
        %v298 = vld [vmem:[%s165 + $0x25c] sm:$0xf]
        %v299 = vld [vmem:[%s165 + $0x260] sm:$0xff]
        %v300 = vld [vmem:[%s165 + $0x268] sm:$0xff]
        %v301 = vld [vmem:[%s165 + $0x270] sm:$0xff]
        %v302 = vld [vmem:[%s165 + $0x278] sm:$0xff]
        %v303 = vld [vmem:[%s165 + $0x280] sm:$0xff]
        %v304 = vld [vmem:[%s165 + $0x288] sm:$0xff]
        %v305 = vld [vmem:[%s165 + $0x290] sm:$0xff]
        %v306 = vld [vmem:[%s165 + $0x298] sm:$0xff]
        %v307 = vld [vmem:[%s165 + $0x2a0] sm:$0xff]
        %v308 = vld [vmem:[%s165 + $0x2a8] sm:$0xf]
        %v309 = vld [vmem:[%s165 + $0x2ac] sm:$0xff]
        %v310 = vld [vmem:[%s165 + $0x2b4] sm:$0xff]
        %v311 = vld [vmem:[%s165 + $0x2bc] sm:$0xff]
        %v312 = vld [vmem:[%s165 + $0x2c4] sm:$0xff]
        %v313 = vld [vmem:[%s165 + $0x2cc] sm:$0xff]
        %v314 = vld [vmem:[%s165 + $0x2d4] sm:$0xff]
        %v315 = vld [vmem:[%s165 + $0x2dc] sm:$0xff]
        %v316 = vld [vmem:[%s165 + $0x2e4] sm:$0xff]
        %v317 = vld [vmem:[%s165 + $0x2ec] sm:$0xff]
        %v318 = vld [vmem:[%s165 + $0x2f4] sm:$0xf]
        %v319 = vld [vmem:[%s165 + $0x2f8] sm:$0xff]
        %v320 = vld [vmem:[%s165 + $0x300] sm:$0xff]
        %v321 = vld [vmem:[%s165 + $0x308] sm:$0xff]
        %v322 = vld [vmem:[%s165 + $0x310] sm:$0xff]
        %v323 = vld [vmem:[%s165 + $0x318] sm:$0xff]
        %v324 = vld [vmem:[%s165 + $0x320] sm:$0xff]
        %v325 = vld [vmem:[%s165 + $0x328] sm:$0xff]
        %v326 = vld [vmem:[%s165 + $0x330] sm:$0xff]
        %v327 = vld [vmem:[%s165 + $0x338] sm:$0xff]
        %v328 = vld [vmem:[%s165 + $0x340] sm:$0xf]
        %v329 = vld [vmem:[%s165 + $0x344] sm:$0xff]
        %v330 = vld [vmem:[%s165 + $0x34c] sm:$0xff]
        %v331 = vld [vmem:[%s165 + $0x354] sm:$0xff]
        %v332 = vld [vmem:[%s165 + $0x35c] sm:$0xff]
        %v333 = vld [vmem:[%s165 + $0x364] sm:$0xff]
        %v334 = vld [vmem:[%s165 + $0x36c] sm:$0xff]
        %v335 = vld [vmem:[%s165 + $0x374] sm:$0xff]
        %v336 = vld [vmem:[%s165 + $0x37c] sm:$0xff]
        %v337 = vld [vmem:[%s165 + $0x384] sm:$0xff]
        %v338 = vld [vmem:[%s165 + $0x38c] sm:$0xf]
        %v339 = vld [vmem:[%s165 + $0x390] sm:$0xff]
        %v340 = vld [vmem:[%s165 + $0x398] sm:$0xff]
        %v341 = vld [vmem:[%s165 + $0x3a0] sm:$0xff]
        %v342 = vld [vmem:[%s165 + $0x3a8] sm:$0xff]
        %v343 = vld [vmem:[%s165 + $0x3b0] sm:$0xff]
        %v344 = vld [vmem:[%s165 + $0x3b8] sm:$0xff]
        %v345 = vld [vmem:[%s165 + $0x3c0] sm:$0xff]
        %v346 = vld [vmem:[%s165 + $0x3c8] sm:$0xff]
        %v347 = vld [vmem:[%s165 + $0x3d0] sm:$0xff]
        %v348 = vld [vmem:[%s165 + $0x3d8] sm:$0xf]
        %v349 = vld [vmem:[%s165 + $0x3dc] sm:$0xff]
        %v350 = vld [vmem:[%s165 + $0x3e4] sm:$0xff]
        %v351 = vld [vmem:[%s165 + $0x3ec] sm:$0xff]
        %v352 = vld [vmem:[%s165 + $0x3f4] sm:$0xff]
        %v353 = vld [vmem:[%s165 + $0x3fc] sm:$0xff]
        %v354 = vld [vmem:[%s165 + $0x404] sm:$0xff]
        %v355 = vld [vmem:[%s165 + $0x40c] sm:$0xff]
        %v356 = vld [vmem:[%s165 + $0x414] sm:$0xff]
        %v357 = vld [vmem:[%s165 + $0x41c] sm:$0xff]
        %v358 = vld [vmem:[%s165 + $0x424] sm:$0xf]
        %v359 = vld [vmem:[%s165 + $0x428] sm:$0xff]
        %v360 = vld [vmem:[%s165 + $0x430] sm:$0xff]
        %v361 = vld [vmem:[%s165 + $0x438] sm:$0xff]
        %v362 = vld [vmem:[%s165 + $0x440] sm:$0xff]
        %v363 = vld [vmem:[%s165 + $0x448] sm:$0xff]
        %v364 = vld [vmem:[%s165 + $0x450] sm:$0xff]
        %v365 = vld [vmem:[%s165 + $0x458] sm:$0xff]
        %v366 = vld [vmem:[%s165 + $0x460] sm:$0xff]
        %v367 = vld [vmem:[%s165 + $0x468] sm:$0xff]
        %v368 = vld [vmem:[%s165 + $0x470] sm:$0xf]
        %v369 = vld [vmem:[%s165 + $0x474] sm:$0xff]
        %v370 = vld [vmem:[%s165 + $0x47c] sm:$0xff]
        %v371 = vld [vmem:[%s165 + $0x484] sm:$0xff]
        %v372 = vld [vmem:[%s165 + $0x48c] sm:$0xff]
        %v373 = vld [vmem:[%s165 + $0x494] sm:$0xff]
        %v374 = vld [vmem:[%s165 + $0x49c] sm:$0xff]
        %v375 = vld [vmem:[%s165 + $0x4a4] sm:$0xff]
        %v376 = vld [vmem:[%s165 + $0x4ac] sm:$0xff]
        %v377 = vld [vmem:[%s165 + $0x4b4] sm:$0xff]
        %v378 = vld [vmem:[%s165 + $0x4bc] sm:$0xf]
        %v379 = vld [vmem:[%s165 + $0x4c0] sm:$0xff]
        %v380 = vld [vmem:[%s165 + $0x4c8] sm:$0xff]
        %v381 = vld [vmem:[%s165 + $0x4d0] sm:$0xff]
        %v382 = vld [vmem:[%s165 + $0x4d8] sm:$0xff]
        %v383 = vld [vmem:[%s165 + $0x4e0] sm:$0xff]
        %v384 = vld [vmem:[%s165 + $0x4e8] sm:$0xff]
        %v385 = vld [vmem:[%s165 + $0x4f0] sm:$0xff]
        %v386 = vld [vmem:[%s165 + $0x4f8] sm:$0xff]
        %v387 = vld [vmem:[%s165 + $0x500] sm:$0xff]
        %v388 = vld [vmem:[%s165 + $0x508] sm:$0xf]
        %v389 = vld [vmem:[%s165 + $0x50c] sm:$0xff]
        %v390 = vld [vmem:[%s165 + $0x514] sm:$0xff]
        %v391 = vld [vmem:[%s165 + $0x51c] sm:$0xff]
        %v392 = vld [vmem:[%s165 + $0x524] sm:$0xff]
        %v393 = vld [vmem:[%s165 + $0x52c] sm:$0xff]
        %v394 = vld [vmem:[%s165 + $0x534] sm:$0xff]
        %v395 = vld [vmem:[%s165 + $0x53c] sm:$0xff]
        %v396 = vld [vmem:[%s165 + $0x544] sm:$0xff]
        %v397 = vld [vmem:[%s165 + $0x54c] sm:$0xff]
        %v398 = vld [vmem:[%s165 + $0x554] sm:$0xf]
        %v399 = vld [vmem:[%s165 + $0x558] sm:$0xff]
        %v400 = vld [vmem:[%s165 + $0x560] sm:$0xff]
        %v401 = vld [vmem:[%s165 + $0x568] sm:$0xff]
        %v402 = vld [vmem:[%s165 + $0x570] sm:$0xff]
        %v403 = vld [vmem:[%s165 + $0x578] sm:$0xff]
        %v404 = vld [vmem:[%s165 + $0x580] sm:$0xff]
        %v405 = vld [vmem:[%s165 + $0x588] sm:$0xff]
        %v406 = vld [vmem:[%s165 + $0x590] sm:$0xff]
        %v407 = vld [vmem:[%s165 + $0x598] sm:$0xff]
        %v408 = vld [vmem:[%s165 + $0x5a0] sm:$0xf]
        %v409 = vld [vmem:[%s165 + $0x5a4] sm:$0xff]
        %v410 = vld [vmem:[%s165 + $0x5ac] sm:$0xff]
        %v411 = vld [vmem:[%s165 + $0x5b4] sm:$0xff]
        %v412 = vld [vmem:[%s165 + $0x5bc] sm:$0xff]
        %v413 = vld [vmem:[%s165 + $0x5c4] sm:$0xff]
        %v414 = vld [vmem:[%s165 + $0x5cc] sm:$0xff]
        %v415 = vld [vmem:[%s165 + $0x5d4] sm:$0xff]
        %v416 = vld [vmem:[%s165 + $0x5dc] sm:$0xff]
        %v417 = vld [vmem:[%s165 + $0x5e4] sm:$0xff]
        %v418 = vld [vmem:[%s165 + $0x5ec] sm:$0xf]
        %v419 = vld [vmem:[%s165 + $0x5f0] sm:$0xff]
        %v420 = vld [vmem:[%s165 + $0x5f8] sm:$0xff]
        %v421 = vld [vmem:[%s165 + $0x600] sm:$0xff]
        %v422 = vld [vmem:[%s165 + $0x608] sm:$0xff]
        %v423 = vld [vmem:[%s165 + $0x610] sm:$0xff]
        %v424 = vld [vmem:[%s165 + $0x618] sm:$0xff]
        %v425 = vld [vmem:[%s165 + $0x620] sm:$0xff]
        %v426 = vld [vmem:[%s165 + $0x628] sm:$0xff]
        %v427 = vld [vmem:[%s165 + $0x630] sm:$0xff]
        %v428 = vld [vmem:[%s165 + $0x638] sm:$0xf]
        %v429 = vld [vmem:[%s165 + $0x63c] sm:$0xff]
        %v430 = vld [vmem:[%s165 + $0x644] sm:$0xff]
        %v431 = vld [vmem:[%s165 + $0x64c] sm:$0xff]
        %v432 = vld [vmem:[%s165 + $0x654] sm:$0xff]
        %v433 = vld [vmem:[%s165 + $0x65c] sm:$0xff]
        %v434 = vld [vmem:[%s165 + $0x664] sm:$0xff]
        %v435 = vld [vmem:[%s165 + $0x66c] sm:$0xff]
        %v436 = vld [vmem:[%s165 + $0x674] sm:$0xff]
        %v437 = vld [vmem:[%s165 + $0x67c] sm:$0xff]
        %v438 = vld [vmem:[%s165 + $0x684] sm:$0xf]
        %v439 = vld [vmem:[%s165 + $0x688] sm:$0xff]
        %v440 = vld [vmem:[%s165 + $0x690] sm:$0xff]
        %v441 = vld [vmem:[%s165 + $0x698] sm:$0xff]
        %v442 = vld [vmem:[%s165 + $0x6a0] sm:$0xff]
        %v443 = vld [vmem:[%s165 + $0x6a8] sm:$0xff]
        %v444 = vld [vmem:[%s165 + $0x6b0] sm:$0xff]
        %v445 = vld [vmem:[%s165 + $0x6b8] sm:$0xff]
        %v446 = vld [vmem:[%s165 + $0x6c0] sm:$0xff]
        %v447 = vld [vmem:[%s165 + $0x6c8] sm:$0xff]
        %v448 = vld [vmem:[%s165 + $0x6d0] sm:$0xf]
        %v449 = vld [vmem:[%s165 + $0x6d4] sm:$0xff]
        %v450 = vld [vmem:[%s165 + $0x6dc] sm:$0xff]
        %v451 = vld [vmem:[%s165 + $0x6e4] sm:$0xff]
        %v452 = vld [vmem:[%s165 + $0x6ec] sm:$0xff]
        %v453 = vld [vmem:[%s165 + $0x6f4] sm:$0xff]
        %v454 = vld [vmem:[%s165 + $0x6fc] sm:$0xff]
        %v455 = vld [vmem:[%s165 + $0x704] sm:$0xff]
        %v456 = vld [vmem:[%s165 + $0x70c] sm:$0xff]
        %v457 = vld [vmem:[%s165 + $0x714] sm:$0xff]
        %v458 = vld [vmem:[%s165 + $0x71c] sm:$0xf]
        %v459 = vld [vmem:[%s165 + $0x720] sm:$0xff]
        %v460 = vld [vmem:[%s165 + $0x728] sm:$0xff]
        %v461 = vld [vmem:[%s165 + $0x730] sm:$0xff]
        %v462 = vld [vmem:[%s165 + $0x738] sm:$0xff]
        %v463 = vld [vmem:[%s165 + $0x740] sm:$0xff]
        %v464 = vld [vmem:[%s165 + $0x748] sm:$0xff]
        %v465 = vld [vmem:[%s165 + $0x750] sm:$0xff]
        %v466 = vld [vmem:[%s165 + $0x758] sm:$0xff]
        %v467 = vld [vmem:[%s165 + $0x760] sm:$0xff]
        %v468 = vld [vmem:[%s165 + $0x768] sm:$0xf]
        %v469 = vld [vmem:[%s165 + $0x76c] sm:$0xff]
        %v470 = vld [vmem:[%s165 + $0x774] sm:$0xff]
        %v471 = vld [vmem:[%s165 + $0x77c] sm:$0xff]
        %v472 = vld [vmem:[%s165 + $0x784] sm:$0xff]
        %v473 = vld [vmem:[%s165 + $0x78c] sm:$0xff]
        %v474 = vld [vmem:[%s165 + $0x794] sm:$0xff]
        %v475 = vld [vmem:[%s165 + $0x79c] sm:$0xff]
        %v476 = vld [vmem:[%s165 + $0x7a4] sm:$0xff]
        %v477 = vld [vmem:[%s165 + $0x7ac] sm:$0xff]
        %v478 = vld [vmem:[%s165 + $0x7b4] sm:$0xf]
        %v479 = vld [vmem:[%s165 + $0x7b8] sm:$0xff]
        %v480 = vld [vmem:[%s165 + $0x7c0] sm:$0xff]
        %v481 = vld [vmem:[%s165 + $0x7c8] sm:$0xff]
        %v482 = vld [vmem:[%s165 + $0x7d0] sm:$0xff]
        %v483 = vld [vmem:[%s165 + $0x7d8] sm:$0xff]
        %v484 = vld [vmem:[%s165 + $0x7e0] sm:$0xff]
        %v485 = vld [vmem:[%s165 + $0x7e8] sm:$0xff]
        %v486 = vld [vmem:[%s165 + $0x7f0] sm:$0xff]
        %v487 = vld [vmem:[%s165 + $0x7f8] sm:$0xff]
        %v488 = vld [vmem:[%s165 + $0x800] sm:$0xf]
        %v489 = vld [vmem:[%s165 + $0x804] sm:$0xff]
        %v490 = vld [vmem:[%s165 + $0x80c] sm:$0xff]
        %v491 = vld [vmem:[%s165 + $0x814] sm:$0xff]
        %v492 = vld [vmem:[%s165 + $0x81c] sm:$0xff]
        %v493 = vld [vmem:[%s165 + $0x824] sm:$0xff]
        %v494 = vld [vmem:[%s165 + $0x82c] sm:$0xff]
        %v495 = vld [vmem:[%s165 + $0x834] sm:$0xff]
        %v496 = vld [vmem:[%s165 + $0x83c] sm:$0xff]
        %v497 = vld [vmem:[%s165 + $0x844] sm:$0xff]
        %v498 = vld [vmem:[%s165 + $0x84c] sm:$0xf]
        %v499 = vld [vmem:[%s165 + $0x850] sm:$0xff]
        %v500 = vld [vmem:[%s165 + $0x858] sm:$0xff]
        %v501 = vld [vmem:[%s165 + $0x860] sm:$0xff]
        %v502 = vld [vmem:[%s165 + $0x868] sm:$0xff]
        %v503 = vld [vmem:[%s165 + $0x870] sm:$0xff]
        %v504 = vld [vmem:[%s165 + $0x878] sm:$0xff]
        %v505 = vld [vmem:[%s165 + $0x880] sm:$0xff]
        %v506 = vld [vmem:[%s165 + $0x888] sm:$0xff]
        %v507 = vld [vmem:[%s165 + $0x890] sm:$0xff]
        %v508 = vld [vmem:[%s165 + $0x898] sm:$0xf]
        %v509 = vld [vmem:[%s165 + $0x89c] sm:$0xff]
        %v510 = vld [vmem:[%s165 + $0x8a4] sm:$0xff]
        %v511 = vld [vmem:[%s165 + $0x8ac] sm:$0xff]
        %v512 = vld [vmem:[%s165 + $0x8b4] sm:$0xff]
        %v513 = vld [vmem:[%s165 + $0x8bc] sm:$0xff]
        %v514 = vld [vmem:[%s165 + $0x8c4] sm:$0xff]
        %v515 = vld [vmem:[%s165 + $0x8cc] sm:$0xff]
        %v516 = vld [vmem:[%s165 + $0x8d4] sm:$0xff]
        %v517 = vld [vmem:[%s165 + $0x8dc] sm:$0xff]
        %v518 = vld [vmem:[%s165 + $0x8e4] sm:$0xf]
        %v519 = vld [vmem:[%s165 + $0x8e8] sm:$0xff]
        %v520 = vld [vmem:[%s165 + $0x8f0] sm:$0xff]
        %v521 = vld [vmem:[%s165 + $0x8f8] sm:$0xff]
        %v522 = vld [vmem:[%s165 + $0x900] sm:$0xff]
        %v523 = vld [vmem:[%s165 + $0x908] sm:$0xff]
        %v524 = vld [vmem:[%s165 + $0x910] sm:$0xff]
        %v525 = vld [vmem:[%s165 + $0x918] sm:$0xff]
        %v526 = vld [vmem:[%s165 + $0x920] sm:$0xff]
        %v527 = vld [vmem:[%s165 + $0x928] sm:$0xff]
        %v528 = vld [vmem:[%s165 + $0x930] sm:$0xf]
        %v529 = vld [vmem:[%s165 + $0x934] sm:$0xff]
        %v530 = vld [vmem:[%s165 + $0x93c] sm:$0xff]
        %v531 = vld [vmem:[%s165 + $0x944] sm:$0xff]
        %v532 = vld [vmem:[%s165 + $0x94c] sm:$0xff]
        %v533 = vld [vmem:[%s165 + $0x954] sm:$0xff]
        %v534 = vld [vmem:[%s165 + $0x95c] sm:$0xff]
        %v535 = vld [vmem:[%s165 + $0x964] sm:$0xff]
        %v536 = vld [vmem:[%s165 + $0x96c] sm:$0xff]
        %v537 = vld [vmem:[%s165 + $0x974] sm:$0xff]
        %v538 = vld [vmem:[%s165 + $0x97c] sm:$0xf]
        %v539 = vld [vmem:[%s165 + $0x980] sm:$0xff]
        %v540 = vld [vmem:[%s165 + $0x988] sm:$0xff]
        %v541 = vld [vmem:[%s165 + $0x990] sm:$0xff]
        %v542 = vld [vmem:[%s165 + $0x998] sm:$0xff]
        %v543 = vld [vmem:[%s165 + $0x9a0] sm:$0xff]
        %v544 = vld [vmem:[%s165 + $0x9a8] sm:$0xff]
        %v545 = vld [vmem:[%s165 + $0x9b0] sm:$0xff]
        %v546 = vld [vmem:[%s165 + $0x9b8] sm:$0xff]
        %v547 = vld [vmem:[%s165 + $0x9c0] sm:$0xff]
        %v548 = vld [vmem:[%s165 + $0x9c8] sm:$0xf]
        %v549 = vld [vmem:[%s165 + $0x9cc] sm:$0xff]
        %v550 = vld [vmem:[%s165 + $0x9d4] sm:$0xff]
        %v551 = vld [vmem:[%s165 + $0x9dc] sm:$0xff]
        %v552 = vld [vmem:[%s165 + $0x9e4] sm:$0xff]
        %v553 = vld [vmem:[%s165 + $0x9ec] sm:$0xff]
        %v554 = vld [vmem:[%s165 + $0x9f4] sm:$0xff]
        %v555 = vld [vmem:[%s165 + $0x9fc] sm:$0xff]
        %v556 = vld [vmem:[%s165 + $0xa04] sm:$0xff]
        %v557 = vld [vmem:[%s165 + $0xa0c] sm:$0xff]
        %v558 = vld [vmem:[%s165 + $0xa14] sm:$0xf]
        %v559 = vld [vmem:[%s165 + $0xa18] sm:$0xff]
        %v560 = vld [vmem:[%s165 + $0xa20] sm:$0xff]
        %v561 = vld [vmem:[%s165 + $0xa28] sm:$0xff]
        %v562 = vld [vmem:[%s165 + $0xa30] sm:$0xff]
        %v563 = vld [vmem:[%s165 + $0xa38] sm:$0xff]
        %v564 = vld [vmem:[%s165 + $0xa40] sm:$0xff]
        %v565 = vld [vmem:[%s165 + $0xa48] sm:$0xff]
        %v566 = vld [vmem:[%s165 + $0xa50] sm:$0xff]
        %v567 = vld [vmem:[%s165 + $0xa58] sm:$0xff]
        %v568 = vld [vmem:[%s165 + $0xa60] sm:$0xf]
        %v569 = vld [vmem:[%s165 + $0xa64] sm:$0xff]
        %v570 = vld [vmem:[%s165 + $0xa6c] sm:$0xff]
        %v571 = vld [vmem:[%s165 + $0xa74] sm:$0xff]
        %v572 = vld [vmem:[%s165 + $0xa7c] sm:$0xff]
        %v573 = vld [vmem:[%s165 + $0xa84] sm:$0xff]
        %v574 = vld [vmem:[%s165 + $0xa8c] sm:$0xff]
        %v575 = vld [vmem:[%s165 + $0xa94] sm:$0xff]
        %v576 = vld [vmem:[%s165 + $0xa9c] sm:$0xff]
        %v577 = vld [vmem:[%s165 + $0xaa4] sm:$0xff]
        %v578 = vld [vmem:[%s165 + $0xaac] sm:$0xf]
        %v579 = vld [vmem:[%s165 + $0xab0] sm:$0xff]
        %v580 = vld [vmem:[%s165 + $0xab8] sm:$0xff]
        %v581 = vld [vmem:[%s165 + $0xac0] sm:$0xff]
        %v582 = vld [vmem:[%s165 + $0xac8] sm:$0xff]
        %v583 = vld [vmem:[%s165 + $0xad0] sm:$0xff]
        %v584 = vld [vmem:[%s165 + $0xad8] sm:$0xff]
        %v585 = vld [vmem:[%s165 + $0xae0] sm:$0xff]
        %v586 = vld [vmem:[%s165 + $0xae8] sm:$0xff]
        %v587 = vld [vmem:[%s165 + $0xaf0] sm:$0xff]
        %v588 = vld [vmem:[%s165 + $0xaf8] sm:$0xf]
        %v589 = vld [vmem:[%s165 + $0xafc] sm:$0xff]
        %v590 = vld [vmem:[%s165 + $0xb04] sm:$0xff]
        %v591 = vld [vmem:[%s165 + $0xb0c] sm:$0xff]
        %v592 = vld [vmem:[%s165 + $0xb14] sm:$0xff]
        %v593 = vld [vmem:[%s165 + $0xb1c] sm:$0xff]
        %v594 = vld [vmem:[%s165 + $0xb24] sm:$0xff]
        %v595 = vld [vmem:[%s165 + $0xb2c] sm:$0xff]
        %v596 = vld [vmem:[%s165 + $0xb34] sm:$0xff]
        %v597 = vld [vmem:[%s165 + $0xb3c] sm:$0xff]
        %v598 = vld [vmem:[%s165 + $0xb44] sm:$0xf]
        %v599 = vld [vmem:[%s165 + $0xb48] sm:$0xff]
        %v600 = vld [vmem:[%s165 + $0xb50] sm:$0xff]
        %v601 = vld [vmem:[%s165 + $0xb58] sm:$0xff]
        %v602 = vld [vmem:[%s165 + $0xb60] sm:$0xff]
        %v603 = vld [vmem:[%s165 + $0xb68] sm:$0xff]
        %v604 = vld [vmem:[%s165 + $0xb70] sm:$0xff]
        %v605 = vld [vmem:[%s165 + $0xb78] sm:$0xff]
        %v606 = vld [vmem:[%s165 + $0xb80] sm:$0xff]
        %v607 = vld [vmem:[%s165 + $0xb88] sm:$0xff]
        %v608 = vld [vmem:[%s165 + $0xb90] sm:$0xf]
        %v609 = vld [vmem:[%s165 + $0xb94] sm:$0xff]
        %v610 = vld [vmem:[%s165 + $0xb9c] sm:$0xff]
        %v611 = vld [vmem:[%s165 + $0xba4] sm:$0xff]
        %v612 = vld [vmem:[%s165 + $0xbac] sm:$0xff]
        %v613 = vld [vmem:[%s165 + $0xbb4] sm:$0xff]
        %v614 = vld [vmem:[%s165 + $0xbbc] sm:$0xff]
        %v615 = vld [vmem:[%s165 + $0xbc4] sm:$0xff]
        %v616 = vld [vmem:[%s165 + $0xbcc] sm:$0xff]
        %v617 = vld [vmem:[%s165 + $0xbd4] sm:$0xff]
        %v618 = vld [vmem:[%s165 + $0xbdc] sm:$0xf]
        %v619 = vld [vmem:[%s165 + $0xbe0] sm:$0xff]
        %v620 = vld [vmem:[%s165 + $0xbe8] sm:$0xff]
        %v621 = vld [vmem:[%s165 + $0xbf0] sm:$0xff]
        %v622 = vld [vmem:[%s165 + $0xbf8] sm:$0xff]
        %v623 = vld [vmem:[%s165 + $0xc00] sm:$0xff]
        %v624 = vld [vmem:[%s165 + $0xc08] sm:$0xff]
        %v625 = vld [vmem:[%s165 + $0xc10] sm:$0xff]
        %v626 = vld [vmem:[%s165 + $0xc18] sm:$0xff]
        %v627 = vld [vmem:[%s165 + $0xc20] sm:$0xff]
        %v628 = vld [vmem:[%s165 + $0xc28] sm:$0xf]
        %v629 = vld [vmem:[%s165 + $0xc2c] sm:$0xff]
        %v630 = vld [vmem:[%s165 + $0xc34] sm:$0xff]
        %v631 = vld [vmem:[%s165 + $0xc3c] sm:$0xff]
        %v632 = vld [vmem:[%s165 + $0xc44] sm:$0xff]
        %v633 = vld [vmem:[%s165 + $0xc4c] sm:$0xff]
        %v634 = vld [vmem:[%s165 + $0xc54] sm:$0xff]
        %v635 = vld [vmem:[%s165 + $0xc5c] sm:$0xff]
        %v636 = vld [vmem:[%s165 + $0xc64] sm:$0xff]
        %v637 = vld [vmem:[%s165 + $0xc6c] sm:$0xff]
        %v638 = vld [vmem:[%s165 + $0xc74] sm:$0xf]
        %v639 = vld [vmem:[%s165 + $0xc78] sm:$0xff]
        %v640 = vld [vmem:[%s165 + $0xc80] sm:$0xff]
        %v641 = vld [vmem:[%s165 + $0xc88] sm:$0xff]
        %v642 = vld [vmem:[%s165 + $0xc90] sm:$0xff]
        %v643 = vld [vmem:[%s165 + $0xc98] sm:$0xff]
        %v644 = vld [vmem:[%s165 + $0xca0] sm:$0xff]
        %v645 = vld [vmem:[%s165 + $0xca8] sm:$0xff]
        %v646 = vld [vmem:[%s165 + $0xcb0] sm:$0xff]
        %v647 = vld [vmem:[%s165 + $0xcb8] sm:$0xff]
        %v648 = vld [vmem:[%s165 + $0xcc0] sm:$0xf]
        %v649 = vld [vmem:[%s165 + $0xcc4] sm:$0xff]
        %v650 = vld [vmem:[%s165 + $0xccc] sm:$0xff]
        %v651 = vld [vmem:[%s165 + $0xcd4] sm:$0xff]
        %v652 = vld [vmem:[%s165 + $0xcdc] sm:$0xff]
        %v653 = vld [vmem:[%s165 + $0xce4] sm:$0xff]
        %v654 = vld [vmem:[%s165 + $0xcec] sm:$0xff]
        %v655 = vld [vmem:[%s165 + $0xcf4] sm:$0xff]
        %v656 = vld [vmem:[%s165 + $0xcfc] sm:$0xff]
        %v657 = vld [vmem:[%s165 + $0xd04] sm:$0xff]
        %v658 = vld [vmem:[%s165 + $0xd0c] sm:$0xf]
        %v659 = vld [vmem:[%s165 + $0xd10] sm:$0xff]
        %v660 = vld [vmem:[%s165 + $0xd18] sm:$0xff]
        %v661 = vld [vmem:[%s165 + $0xd20] sm:$0xff]
        %v662 = vld [vmem:[%s165 + $0xd28] sm:$0xff]
        %v663 = vld [vmem:[%s165 + $0xd30] sm:$0xff]
        %v664 = vld [vmem:[%s165 + $0xd38] sm:$0xff]
        %v665 = vld [vmem:[%s165 + $0xd40] sm:$0xff]
        %v666 = vld [vmem:[%s165 + $0xd48] sm:$0xff]
        %v667 = vld [vmem:[%s165 + $0xd50] sm:$0xff]
        %v668 = vld [vmem:[%s165 + $0xd58] sm:$0xf]
        %v669 = vld [vmem:[%s165 + $0xd5c] sm:$0xff]
        %v670 = vld [vmem:[%s165 + $0xd64] sm:$0xff]
        %v671 = vld [vmem:[%s165 + $0xd6c] sm:$0xff]
        %v672 = vld [vmem:[%s165 + $0xd74] sm:$0xff]
        %v673 = vld [vmem:[%s165 + $0xd7c] sm:$0xff]
        %v674 = vld [vmem:[%s165 + $0xd84] sm:$0xff]
        %v675 = vld [vmem:[%s165 + $0xd8c] sm:$0xff]
        %v676 = vld [vmem:[%s165 + $0xd94] sm:$0xff]
        %v677 = vld [vmem:[%s165 + $0xd9c] sm:$0xff]
        %v678 = vld [vmem:[%s165 + $0xda4] sm:$0xf]
        %v679 = vld [vmem:[%s165 + $0xda8] sm:$0xff]
        %v680 = vld [vmem:[%s165 + $0xdb0] sm:$0xff]
        %v681 = vld [vmem:[%s165 + $0xdb8] sm:$0xff]
        %v682 = vld [vmem:[%s165 + $0xdc0] sm:$0xff]
        %v683 = vld [vmem:[%s165 + $0xdc8] sm:$0xff]
        %v684 = vld [vmem:[%s165 + $0xdd0] sm:$0xff]
        %v685 = vld [vmem:[%s165 + $0xdd8] sm:$0xff]
        %v686 = vld [vmem:[%s165 + $0xde0] sm:$0xff]
        %v687 = vld [vmem:[%s165 + $0xde8] sm:$0xff]
        %v688 = vld [vmem:[%s165 + $0xdf0] sm:$0xf]
        %v689 = vld [vmem:[%s165 + $0xdf4] sm:$0xff]
        %v690 = vld [vmem:[%s165 + $0xdfc] sm:$0xff]
        %v691 = vld [vmem:[%s165 + $0xe04] sm:$0xff]
        %v692 = vld [vmem:[%s165 + $0xe0c] sm:$0xff]
        %v693 = vld [vmem:[%s165 + $0xe14] sm:$0xff]
        %v694 = vld [vmem:[%s165 + $0xe1c] sm:$0xff]
        %v695 = vld [vmem:[%s165 + $0xe24] sm:$0xff]
        %v696 = vld [vmem:[%s165 + $0xe2c] sm:$0xff]
        %v697 = vld [vmem:[%s165 + $0xe34] sm:$0xff]
        %v698 = vld [vmem:[%s165 + $0xe3c] sm:$0xf]
        %v699 = vld [vmem:[%s165 + $0xe40] sm:$0xff]
        %v700 = vld [vmem:[%s165 + $0xe48] sm:$0xff]
        %v701 = vld [vmem:[%s165 + $0xe50] sm:$0xff]
        %v702 = vld [vmem:[%s165 + $0xe58] sm:$0xff]
        %v703 = vld [vmem:[%s165 + $0xe60] sm:$0xff]
        %v704 = vld [vmem:[%s165 + $0xe68] sm:$0xff]
        %v705 = vld [vmem:[%s165 + $0xe70] sm:$0xff]
        %v706 = vld [vmem:[%s165 + $0xe78] sm:$0xff]
        %v707 = vld [vmem:[%s165 + $0xe80] sm:$0xff]
        %v708 = vld [vmem:[%s165 + $0xe88] sm:$0xf]
        %v709 = vld [vmem:[%s165 + $0xe8c] sm:$0xff]
        %v710 = vld [vmem:[%s165 + $0xe94] sm:$0xff]
        %v711 = vld [vmem:[%s165 + $0xe9c] sm:$0xff]
        %v712 = vld [vmem:[%s165 + $0xea4] sm:$0xff]
        %v713 = vld [vmem:[%s165 + $0xeac] sm:$0xff]
        %v714 = vld [vmem:[%s165 + $0xeb4] sm:$0xff]
        %v715 = vld [vmem:[%s165 + $0xebc] sm:$0xff]
        %v716 = vld [vmem:[%s165 + $0xec4] sm:$0xff]
        %v717 = vld [vmem:[%s165 + $0xecc] sm:$0xff]
        %v718 = vld [vmem:[%s165 + $0xed4] sm:$0xf]
        %v719 = vld [vmem:[%s165 + $0xed8] sm:$0xff]
        %v720 = vld [vmem:[%s165 + $0xee0] sm:$0xff]
        %v721 = vld [vmem:[%s165 + $0xee8] sm:$0xff]
        %v722 = vld [vmem:[%s165 + $0xef0] sm:$0xff]
        %v723 = vld [vmem:[%s165 + $0xef8] sm:$0xff]
        %v724 = vld [vmem:[%s165 + $0xf00] sm:$0xff]
        %v725 = vld [vmem:[%s165 + $0xf08] sm:$0xff]
        %v726 = vld [vmem:[%s165 + $0xf10] sm:$0xff]
        %v727 = vld [vmem:[%s165 + $0xf18] sm:$0xff]
        %v728 = vld [vmem:[%s165 + $0xf20] sm:$0xf]
        %v729 = vld [vmem:[%s165 + $0xf24] sm:$0xff]
        %v730 = vld [vmem:[%s165 + $0xf2c] sm:$0xff]
        %v731 = vld [vmem:[%s165 + $0xf34] sm:$0xff]
        %v732 = vld [vmem:[%s165 + $0xf3c] sm:$0xff]
        %v733 = vld [vmem:[%s165 + $0xf44] sm:$0xff]
        %v734 = vld [vmem:[%s165 + $0xf4c] sm:$0xff]
        %v735 = vld [vmem:[%s165 + $0xf54] sm:$0xff]
        %v736 = vld [vmem:[%s165 + $0xf5c] sm:$0xff]
        %v737 = vld [vmem:[%s165 + $0xf64] sm:$0xff]
        %v738 = vld [vmem:[%s165 + $0xf6c] sm:$0xf]
        %v739 = vld [vmem:[%s165 + $0xf70] sm:$0xff]
        %v740 = vld [vmem:[%s165 + $0xf78] sm:$0xff]
        %v741 = vld [vmem:[%s165 + $0xf80] sm:$0xff]
        %v742 = vld [vmem:[%s165 + $0xf88] sm:$0xff]
        %v743 = vld [vmem:[%s165 + $0xf90] sm:$0xff]
        %v744 = vld [vmem:[%s165 + $0xf98] sm:$0xff]
        %v745 = vld [vmem:[%s165 + $0xfa0] sm:$0xff]
        %v746 = vld [vmem:[%s165 + $0xfa8] sm:$0xff]
        %v747 = vld [vmem:[%s165 + $0xfb0] sm:$0xff]
        %v748 = vld [vmem:[%s165 + $0xfb8] sm:$0xf]
        %v749 = vld [vmem:[%s165 + $0xfbc] sm:$0xff]
        %v750 = vld [vmem:[%s165 + $0xfc4] sm:$0xff]
        %v751 = vld [vmem:[%s165 + $0xfcc] sm:$0xff]
        %v752 = vld [vmem:[%s165 + $0xfd4] sm:$0xff]
        %v753 = vld [vmem:[%s165 + $0xfdc] sm:$0xff]
        %v754 = vld [vmem:[%s165 + $0xfe4] sm:$0xff]
        %v755 = vld [vmem:[%s165 + $0xfec] sm:$0xff]
        %v756 = vld [vmem:[%s165 + $0xff4] sm:$0xff]
        %v757 = vld [vmem:[%s165 + $0xffc] sm:$0xff]
        %v758 = vld [vmem:[%s165 + $0x1004] sm:$0xf]
        %v759 = vld [vmem:[%s165 + $0x1008] sm:$0xff]
        %v760 = vld [vmem:[%s165 + $0x1010] sm:$0xff]
        %v761 = vld [vmem:[%s165 + $0x1018] sm:$0xff]
        %v762 = vld [vmem:[%s165 + $0x1020] sm:$0xff]
        %v763 = vld [vmem:[%s165 + $0x1028] sm:$0xff]
        %v764 = vld [vmem:[%s165 + $0x1030] sm:$0xff]
        %v765 = vld [vmem:[%s165 + $0x1038] sm:$0xff]
        %v766 = vld [vmem:[%s165 + $0x1040] sm:$0xff]
        %v767 = vld [vmem:[%s165 + $0x1048] sm:$0xff]
        %v768 = vld [vmem:[%s165 + $0x1050] sm:$0xf]
        %v769 = vld [vmem:[%s165 + $0x1054] sm:$0xff]
        %v770 = vld [vmem:[%s165 + $0x105c] sm:$0xff]
        %v771 = vld [vmem:[%s165 + $0x1064] sm:$0xff]
        %v772 = vld [vmem:[%s165 + $0x106c] sm:$0xff]
        %v773 = vld [vmem:[%s165 + $0x1074] sm:$0xff]
        %v774 = vld [vmem:[%s165 + $0x107c] sm:$0xff]
        %v775 = vld [vmem:[%s165 + $0x1084] sm:$0xff]
        %v776 = vld [vmem:[%s165 + $0x108c] sm:$0xff]
        %v777 = vld [vmem:[%s165 + $0x1094] sm:$0xff]
        %v778 = vld [vmem:[%s165 + $0x109c] sm:$0xf]
        %v779 = vld [vmem:[%s165 + $0x10a0] sm:$0xff]
        %v780 = vld [vmem:[%s165 + $0x10a8] sm:$0xff]
        %v781 = vld [vmem:[%s165 + $0x10b0] sm:$0xff]
        %v782 = vld [vmem:[%s165 + $0x10b8] sm:$0xff]
        %v783 = vld [vmem:[%s165 + $0x10c0] sm:$0xff]
        %v784 = vld [vmem:[%s165 + $0x10c8] sm:$0xff]
        %v785 = vld [vmem:[%s165 + $0x10d0] sm:$0xff]
        %v786 = vld [vmem:[%s165 + $0x10d8] sm:$0xff]
        %v787 = vld [vmem:[%s165 + $0x10e0] sm:$0xff]
        %v788 = vld [vmem:[%s165 + $0x10e8] sm:$0xf]
        %v789 = vld [vmem:[%s165 + $0x10ec] sm:$0xff]
        %v790 = vld [vmem:[%s165 + $0x10f4] sm:$0xff]
        %v791 = vld [vmem:[%s165 + $0x10fc] sm:$0xff]
        %v792 = vld [vmem:[%s165 + $0x1104] sm:$0xff]
        %v793 = vld [vmem:[%s165 + $0x110c] sm:$0xff]
        %v794 = vld [vmem:[%s165 + $0x1114] sm:$0xff]
        %v795 = vld [vmem:[%s165 + $0x111c] sm:$0xff]
        %v796 = vld [vmem:[%s165 + $0x1124] sm:$0xff]
        %v797 = vld [vmem:[%s165 + $0x112c] sm:$0xff]
        %v798 = vld [vmem:[%s165 + $0x1134] sm:$0xf]
        %v799 = vld [vmem:[%s165 + $0x1138] sm:$0xff]
        %v800 = vld [vmem:[%s165 + $0x1140] sm:$0xff]
        %v801 = vld [vmem:[%s165 + $0x1148] sm:$0xff]
        %v802 = vld [vmem:[%s165 + $0x1150] sm:$0xff]
        %v803 = vld [vmem:[%s165 + $0x1158] sm:$0xff]
        %v804 = vld [vmem:[%s165 + $0x1160] sm:$0xff]
        %v805 = vld [vmem:[%s165 + $0x1168] sm:$0xff]
        %v806 = vld [vmem:[%s165 + $0x1170] sm:$0xff]
        %v807 = vld [vmem:[%s165 + $0x1178] sm:$0xff]
        %v808 = vld [vmem:[%s165 + $0x1180] sm:$0xf]
        %v809 = vld [vmem:[%s165 + $0x1184] sm:$0xff]
        %v810 = vld [vmem:[%s165 + $0x118c] sm:$0xff]
        %v811 = vld [vmem:[%s165 + $0x1194] sm:$0xff]
        %v812 = vld [vmem:[%s165 + $0x119c] sm:$0xff]
        %v813 = vld [vmem:[%s165 + $0x11a4] sm:$0xff]
        %v814 = vld [vmem:[%s165 + $0x11ac] sm:$0xff]
        %v815 = vld [vmem:[%s165 + $0x11b4] sm:$0xff]
        %v816 = vld [vmem:[%s165 + $0x11bc] sm:$0xff]
        %v817 = vld [vmem:[%s165 + $0x11c4] sm:$0xff]
        %v818 = vld [vmem:[%s165 + $0x11cc] sm:$0xf]
        %v819 = vld [vmem:[%s165 + $0x11d0] sm:$0xff]
        %v820 = vld [vmem:[%s165 + $0x11d8] sm:$0xff]
        %v821 = vld [vmem:[%s165 + $0x11e0] sm:$0xff]
        %v822 = vld [vmem:[%s165 + $0x11e8] sm:$0xff]
        %v823 = vld [vmem:[%s165 + $0x11f0] sm:$0xff]
        %v824 = vld [vmem:[%s165 + $0x11f8] sm:$0xff]
        %v825 = vld [vmem:[%s165 + $0x1200] sm:$0xff]
        %v826 = vld [vmem:[%s165 + $0x1208] sm:$0xff]
        %v827 = vld [vmem:[%s165 + $0x1210] sm:$0xff]
        %v828 = vld [vmem:[%s165 + $0x1218] sm:$0xf]
        %v829 = vld [vmem:[%s165 + $0x121c] sm:$0xff]
        %v830 = vld [vmem:[%s165 + $0x1224] sm:$0xff]
        %v831 = vld [vmem:[%s165 + $0x122c] sm:$0xff]
        %v832 = vld [vmem:[%s165 + $0x1234] sm:$0xff]
        %v833 = vld [vmem:[%s165 + $0x123c] sm:$0xff]
        %v834 = vld [vmem:[%s165 + $0x1244] sm:$0xff]
        %v835 = vld [vmem:[%s165 + $0x124c] sm:$0xff]
        %v836 = vld [vmem:[%s165 + $0x1254] sm:$0xff]
        %v837 = vld [vmem:[%s165 + $0x125c] sm:$0xff]
        %v838 = vld [vmem:[%s165 + $0x1264] sm:$0xf]
        %v839 = vld [vmem:[%s165 + $0x1268] sm:$0xff]
        %v840 = vld [vmem:[%s165 + $0x1270] sm:$0xff]
        %v841 = vld [vmem:[%s165 + $0x1278] sm:$0xff]
        %v842 = vld [vmem:[%s165 + $0x1280] sm:$0xff]
        %v843 = vld [vmem:[%s165 + $0x1288] sm:$0xff]
        %v844 = vld [vmem:[%s165 + $0x1290] sm:$0xff]
        %v845 = vld [vmem:[%s165 + $0x1298] sm:$0xff]
        %v846 = vld [vmem:[%s165 + $0x12a0] sm:$0xff]
        %v847 = vld [vmem:[%s165 + $0x12a8] sm:$0xff]
        %v848 = vld [vmem:[%s165 + $0x12b0] sm:$0xf]
        %v849 = vld [vmem:[%s165 + $0x12b4] sm:$0xff]
        %v850 = vld [vmem:[%s165 + $0x12bc] sm:$0xff]
        %v851 = vld [vmem:[%s165 + $0x12c4] sm:$0xff]
        %v852 = vld [vmem:[%s165 + $0x12cc] sm:$0xff]
        %v853 = vld [vmem:[%s165 + $0x12d4] sm:$0xff]
        %v854 = vld [vmem:[%s165 + $0x12dc] sm:$0xff]
        %v855 = vld [vmem:[%s165 + $0x12e4] sm:$0xff]
        %v856 = vld [vmem:[%s165 + $0x12ec] sm:$0xff]
        %v857 = vld [vmem:[%s165 + $0x12f4] sm:$0xff]
        %v858 = vld [vmem:[%s165 + $0x12fc] sm:$0xf]
        %v859 = vld [vmem:[%s165 + $0x1300] sm:$0xff]
        %v860 = vld [vmem:[%s165 + $0x1308] sm:$0xff]
        %v861 = vld [vmem:[%s165 + $0x1310] sm:$0xff]
        %v862 = vld [vmem:[%s165 + $0x1318] sm:$0xff]
        %v863 = vld [vmem:[%s165 + $0x1320] sm:$0xff]
        %v864 = vld [vmem:[%s165 + $0x1328] sm:$0xff]
        %v865 = vld [vmem:[%s165 + $0x1330] sm:$0xff]
        %v866 = vld [vmem:[%s165 + $0x1338] sm:$0xff]
        %v867 = vld [vmem:[%s165 + $0x1340] sm:$0xff]
        %v868 = vld [vmem:[%s165 + $0x1348] sm:$0xf]
        %v869 = vld [vmem:[%s165 + $0x134c] sm:$0xff]
        %v870 = vld [vmem:[%s165 + $0x1354] sm:$0xff]
        %v871 = vld [vmem:[%s165 + $0x135c] sm:$0xff]
        %v872 = vld [vmem:[%s165 + $0x1364] sm:$0xff]
        %v873 = vld [vmem:[%s165 + $0x136c] sm:$0xff]
        %v874 = vld [vmem:[%s165 + $0x1374] sm:$0xff]
        %v875 = vld [vmem:[%s165 + $0x137c] sm:$0xff]
        %v876 = vld [vmem:[%s165 + $0x1384] sm:$0xff]
        %v877 = vld [vmem:[%s165 + $0x138c] sm:$0xff]
        %v878 = vld [vmem:[%s165 + $0x1394] sm:$0xf]
        %v879 = vld [vmem:[%s165 + $0x1398] sm:$0xff]
        %v880 = vld [vmem:[%s165 + $0x13a0] sm:$0xff]
        %v881 = vld [vmem:[%s165 + $0x13a8] sm:$0xff]
        %v882 = vld [vmem:[%s165 + $0x13b0] sm:$0xff]
        %v883 = vld [vmem:[%s165 + $0x13b8] sm:$0xff]
        %v884 = vld [vmem:[%s165 + $0x13c0] sm:$0xff]
        %v885 = vld [vmem:[%s165 + $0x13c8] sm:$0xff]
        %v886 = vld [vmem:[%s165 + $0x13d0] sm:$0xff]
        %v887 = vld [vmem:[%s165 + $0x13d8] sm:$0xff]
        %v888 = vld [vmem:[%s165 + $0x13e0] sm:$0xf]
        %v889 = vld [vmem:[%s165 + $0x13e4] sm:$0xff]
        %v890 = vld [vmem:[%s165 + $0x13ec] sm:$0xff]
        %v891 = vld [vmem:[%s165 + $0x13f4] sm:$0xff]
        %v892 = vld [vmem:[%s165 + $0x13fc] sm:$0xff]
        %v893 = vld [vmem:[%s165 + $0x1404] sm:$0xff]
        %v894 = vld [vmem:[%s165 + $0x140c] sm:$0xff]
        %v895 = vld [vmem:[%s165 + $0x1414] sm:$0xff]
        %v896 = vld [vmem:[%s165 + $0x141c] sm:$0xff]
        %v897 = vld [vmem:[%s165 + $0x1424] sm:$0xff]
        %v898 = vld [vmem:[%s165 + $0x142c] sm:$0xf]
        %v899 = vld [vmem:[%s165 + $0x1430] sm:$0xff]
        %v900 = vld [vmem:[%s165 + $0x1438] sm:$0xff]
        %v901 = vld [vmem:[%s165 + $0x1440] sm:$0xff]
        %v902 = vld [vmem:[%s165 + $0x1448] sm:$0xff]
        %v903 = vld [vmem:[%s165 + $0x1450] sm:$0xff]
        %v904 = vld [vmem:[%s165 + $0x1458] sm:$0xff]
        %v905 = vld [vmem:[%s165 + $0x1460] sm:$0xff]
        %v906 = vld [vmem:[%s165 + $0x1468] sm:$0xff]
        %v907 = vld [vmem:[%s165 + $0x1470] sm:$0xff]
        %v908 = vld [vmem:[%s165 + $0x1478] sm:$0xf]
        %v909 = vld [vmem:[%s165 + $0x147c] sm:$0xff]
        %v910 = vld [vmem:[%s165 + $0x1484] sm:$0xff]
        %v911 = vld [vmem:[%s165 + $0x148c] sm:$0xff]
        %v912 = vld [vmem:[%s165 + $0x1494] sm:$0xff]
        %v913 = vld [vmem:[%s165 + $0x149c] sm:$0xff]
        %v914 = vld [vmem:[%s165 + $0x14a4] sm:$0xff]
        %v915 = vld [vmem:[%s165 + $0x14ac] sm:$0xff]
        %v916 = vld [vmem:[%s165 + $0x14b4] sm:$0xff]
        %v917 = vld [vmem:[%s165 + $0x14bc] sm:$0xff]
        %v918 = vld [vmem:[%s165 + $0x14c4] sm:$0xf]
        %v919 = vld [vmem:[%s165 + $0x14c8] sm:$0xff]
        %v920 = vld [vmem:[%s165 + $0x14d0] sm:$0xff]
        %v921 = vld [vmem:[%s165 + $0x14d8] sm:$0xff]
        %v922 = vld [vmem:[%s165 + $0x14e0] sm:$0xff]
        %v923 = vld [vmem:[%s165 + $0x14e8] sm:$0xff]
        %v924 = vld [vmem:[%s165 + $0x14f0] sm:$0xff]
        %v925 = vld [vmem:[%s165 + $0x14f8] sm:$0xff]
        %v926 = vld [vmem:[%s165 + $0x1500] sm:$0xff]
        %v927 = vld [vmem:[%s165 + $0x1508] sm:$0xff]
        %v928 = vld [vmem:[%s165 + $0x1510] sm:$0xf]
        %v929 = vld [vmem:[%s165 + $0x1514] sm:$0xff]
        %v930 = vld [vmem:[%s165 + $0x151c] sm:$0xff]
        %v931 = vld [vmem:[%s165 + $0x1524] sm:$0xff]
        %v932 = vld [vmem:[%s165 + $0x152c] sm:$0xff]
        %v933 = vld [vmem:[%s165 + $0x1534] sm:$0xff]
        %v934 = vld [vmem:[%s165 + $0x153c] sm:$0xff]
        %v935 = vld [vmem:[%s165 + $0x1544] sm:$0xff]
        %v936 = vld [vmem:[%s165 + $0x154c] sm:$0xff]
        %v937 = vld [vmem:[%s165 + $0x1554] sm:$0xff]
        %v938 = vld [vmem:[%s165 + $0x155c] sm:$0xf]
        %v939 = vld [vmem:[%s165 + $0x1560] sm:$0xff]
        %v940 = vld [vmem:[%s165 + $0x1568] sm:$0xff]
        %v941 = vld [vmem:[%s165 + $0x1570] sm:$0xff]
        %v942 = vld [vmem:[%s165 + $0x1578] sm:$0xff]
        %v943 = vld [vmem:[%s165 + $0x1580] sm:$0xff]
        %v944 = vld [vmem:[%s165 + $0x1588] sm:$0xff]
        %v945 = vld [vmem:[%s165 + $0x1590] sm:$0xff]
        %v946 = vld [vmem:[%s165 + $0x1598] sm:$0xff]
        %v947 = vld [vmem:[%s165 + $0x15a0] sm:$0xff]
        %v948 = vld [vmem:[%s165 + $0x15a8] sm:$0xf]
        %v949 = vld [vmem:[%s165 + $0x15ac] sm:$0xff]
        %v950 = vld [vmem:[%s165 + $0x15b4] sm:$0xff]
        %v951 = vld [vmem:[%s165 + $0x15bc] sm:$0xff]
        %v952 = vld [vmem:[%s165 + $0x15c4] sm:$0xff]
        %v953 = vld [vmem:[%s165 + $0x15cc] sm:$0xff]
        %v954 = vld [vmem:[%s165 + $0x15d4] sm:$0xff]
        %v955 = vld [vmem:[%s165 + $0x15dc] sm:$0xff]
        %v956 = vld [vmem:[%s165 + $0x15e4] sm:$0xff]
        %v957 = vld [vmem:[%s165 + $0x15ec] sm:$0xff]
        %v958 = vld [vmem:[%s165 + $0x15f4] sm:$0xf]
        %v959 = vld [vmem:[%s165 + $0x15f8] sm:$0xff]
        %v960 = vld [vmem:[%s165 + $0x1600] sm:$0xff]
        %v961 = vld [vmem:[%s165 + $0x1608] sm:$0xff]
        %v962 = vld [vmem:[%s165 + $0x1610] sm:$0xff]
        %v963 = vld [vmem:[%s165 + $0x1618] sm:$0xff]
        %v964 = vld [vmem:[%s165 + $0x1620] sm:$0xff]
        %v965 = vld [vmem:[%s165 + $0x1628] sm:$0xff]
        %v966 = vld [vmem:[%s165 + $0x1630] sm:$0xff]
        %v967 = vld [vmem:[%s165 + $0x1638] sm:$0xff]
        %v968 = vld [vmem:[%s165 + $0x1640] sm:$0xf]
        %v969 = vld [vmem:[%s165 + $0x1644] sm:$0xff]
        %v970 = vld [vmem:[%s165 + $0x164c] sm:$0xff]
        %v971 = vld [vmem:[%s165 + $0x1654] sm:$0xff]
        %v972 = vld [vmem:[%s165 + $0x165c] sm:$0xff]
        %v973 = vld [vmem:[%s165 + $0x1664] sm:$0xff]
        %v974 = vld [vmem:[%s165 + $0x166c] sm:$0xff]
        %v975 = vld [vmem:[%s165 + $0x1674] sm:$0xff]
        %v976 = vld [vmem:[%s165 + $0x167c] sm:$0xff]
        %v977 = vld [vmem:[%s165 + $0x1684] sm:$0xff]
        %v978 = vld [vmem:[%s165 + $0x168c] sm:$0xf]
        %v979 = vld [vmem:[%s165 + $0x1690] sm:$0xff]
        %v980 = vld [vmem:[%s165 + $0x1698] sm:$0xff]
        %v981 = vld [vmem:[%s165 + $0x16a0] sm:$0xff]
        %v982 = vld [vmem:[%s165 + $0x16a8] sm:$0xff]
        %v983 = vld [vmem:[%s165 + $0x16b0] sm:$0xff]
        %v984 = vld [vmem:[%s165 + $0x16b8] sm:$0xff]
        %v985 = vld [vmem:[%s165 + $0x16c0] sm:$0xff]
        %v986 = vld [vmem:[%s165 + $0x16c8] sm:$0xff]
        %v987 = vld [vmem:[%s165 + $0x16d0] sm:$0xff]
        %v988 = vld [vmem:[%s165 + $0x16d8] sm:$0xf]
        %v989 = vld [vmem:[%s165 + $0x16dc] sm:$0xff]
        %v990 = vld [vmem:[%s165 + $0x16e4] sm:$0xff]
        %v991 = vld [vmem:[%s165 + $0x16ec] sm:$0xff]
        %v992 = vld [vmem:[%s165 + $0x16f4] sm:$0xff]
        %v993 = vld [vmem:[%s165 + $0x16fc] sm:$0xff]
        %v994 = vld [vmem:[%s165 + $0x1704] sm:$0xff]
        %v995 = vld [vmem:[%s165 + $0x170c] sm:$0xff]
        %v996 = vld [vmem:[%s165 + $0x1714] sm:$0xff]
        %v997 = vld [vmem:[%s165 + $0x171c] sm:$0xff]
        %v998 = vld [vmem:[%s165 + $0x1724] sm:$0xf]
        %v999 = vld [vmem:[%s165 + $0x1728] sm:$0xff]
        %v1000 = vld [vmem:[%s165 + $0x1730] sm:$0xff]
        %v1001 = vld [vmem:[%s165 + $0x1738] sm:$0xff]
        %v1002 = vld [vmem:[%s165 + $0x1740] sm:$0xff]
        %v1003 = vld [vmem:[%s165 + $0x1748] sm:$0xff]
        %v1004 = vld [vmem:[%s165 + $0x1750] sm:$0xff]
        %v1005 = vld [vmem:[%s165 + $0x1758] sm:$0xff]
        %v1006 = vld [vmem:[%s165 + $0x1760] sm:$0xff]
        %v1007 = vld [vmem:[%s165 + $0x1768] sm:$0xff]
        %v1008 = vld [vmem:[%s165 + $0x1770] sm:$0xf]
        %v1009 = vld [vmem:[%s165 + $0x1774] sm:$0xff]
        %v1010 = vld [vmem:[%s165 + $0x177c] sm:$0xff]
        %v1011 = vld [vmem:[%s165 + $0x1784] sm:$0xff]
        %v1012 = vld [vmem:[%s165 + $0x178c] sm:$0xff]
        %v1013 = vld [vmem:[%s165 + $0x1794] sm:$0xff]
        %v1014 = vld [vmem:[%s165 + $0x179c] sm:$0xff]
        %v1015 = vld [vmem:[%s165 + $0x17a4] sm:$0xff]
        %v1016 = vld [vmem:[%s165 + $0x17ac] sm:$0xff]
        %v1017 = vld [vmem:[%s165 + $0x17b4] sm:$0xff]
        %v1018 = vld [vmem:[%s165 + $0x17bc] sm:$0xf]
        %v1019 = vld [vmem:[%s165 + $0x17c0] sm:$0xff]
        %v1020 = vld [vmem:[%s165 + $0x17c8] sm:$0xff]
        %v1021 = vld [vmem:[%s165 + $0x17d0] sm:$0xff]
        %v1022 = vld [vmem:[%s165 + $0x17d8] sm:$0xff]
        %v1023 = vld [vmem:[%s165 + $0x17e0] sm:$0xff]
        %v1024 = vld [vmem:[%s165 + $0x17e8] sm:$0xff]
        %v1025 = vld [vmem:[%s165 + $0x17f0] sm:$0xff]
        %v1026 = vld [vmem:[%s165 + $0x17f8] sm:$0xff]
        %v1027 = vld [vmem:[%s165 + $0x1800] sm:$0xff]
        %v1028 = vld [vmem:[%s165 + $0x1808] sm:$0xf]
        %v1029 = vld [vmem:[%s165 + $0x180c] sm:$0xff]
        %v1030 = vld [vmem:[%s165 + $0x1814] sm:$0xff]
        %v1031 = vld [vmem:[%s165 + $0x181c] sm:$0xff]
        %v1032 = vld [vmem:[%s165 + $0x1824] sm:$0xff]
        %v1033 = vld [vmem:[%s165 + $0x182c] sm:$0xff]
        %v1034 = vld [vmem:[%s165 + $0x1834] sm:$0xff]
        %v1035 = vld [vmem:[%s165 + $0x183c] sm:$0xff]
        %v1036 = vld [vmem:[%s165 + $0x1844] sm:$0xff]
        %v1037 = vld [vmem:[%s165 + $0x184c] sm:$0xff]
        %v1038 = vld [vmem:[%s165 + $0x1854] sm:$0xf]
        %v1039 = vld [vmem:[%s165 + $0x1858] sm:$0xff]
        %v1040 = vld [vmem:[%s165 + $0x1860] sm:$0xff]
        %v1041 = vld [vmem:[%s165 + $0x1868] sm:$0xff]
        %v1042 = vld [vmem:[%s165 + $0x1870] sm:$0xff]
        %v1043 = vld [vmem:[%s165 + $0x1878] sm:$0xff]
        %v1044 = vld [vmem:[%s165 + $0x1880] sm:$0xff]
        %v1045 = vld [vmem:[%s165 + $0x1888] sm:$0xff]
        %v1046 = vld [vmem:[%s165 + $0x1890] sm:$0xff]
        %v1047 = vld [vmem:[%s165 + $0x1898] sm:$0xff]
        %v1048 = vld [vmem:[%s165 + $0x18a0] sm:$0xf]
        %v1049 = vld [vmem:[%s165 + $0x18a4] sm:$0xff]
        %v1050 = vld [vmem:[%s165 + $0x18ac] sm:$0xff]
        %v1051 = vld [vmem:[%s165 + $0x18b4] sm:$0xff]
        %v1052 = vld [vmem:[%s165 + $0x18bc] sm:$0xff]
        %v1053 = vld [vmem:[%s165 + $0x18c4] sm:$0xff]
        %v1054 = vld [vmem:[%s165 + $0x18cc] sm:$0xff]
        %v1055 = vld [vmem:[%s165 + $0x18d4] sm:$0xff]
        %v1056 = vld [vmem:[%s165 + $0x18dc] sm:$0xff]
        %v1057 = vld [vmem:[%s165 + $0x18e4] sm:$0xff]
        %v1058 = vld [vmem:[%s165 + $0x18ec] sm:$0xf]
        %v1059 = vld [vmem:[%s165 + $0x18f0] sm:$0xff]
        %v1060 = vld [vmem:[%s165 + $0x18f8] sm:$0xff]
        %v1061 = vld [vmem:[%s165 + $0x1900] sm:$0xff]
        %v1062 = vld [vmem:[%s165 + $0x1908] sm:$0xff]
        %v1063 = vld [vmem:[%s165 + $0x1910] sm:$0xff]
        %v1064 = vld [vmem:[%s165 + $0x1918] sm:$0xff]
        %v1065 = vld [vmem:[%s165 + $0x1920] sm:$0xff]
        %v1066 = vld [vmem:[%s165 + $0x1928] sm:$0xff]
        %v1067 = vld [vmem:[%s165 + $0x1930] sm:$0xff]
        %v1068 = vld [vmem:[%s165 + $0x1938] sm:$0xf]
        %v1069 = vld [vmem:[%s165 + $0x193c] sm:$0xff]
        %v1070 = vld [vmem:[%s165 + $0x1944] sm:$0xff]
        %v1071 = vld [vmem:[%s165 + $0x194c] sm:$0xff]
        %v1072 = vld [vmem:[%s165 + $0x1954] sm:$0xff]
        %v1073 = vld [vmem:[%s165 + $0x195c] sm:$0xff]
        %v1074 = vld [vmem:[%s165 + $0x1964] sm:$0xff]
        %v1075 = vld [vmem:[%s165 + $0x196c] sm:$0xff]
        %v1076 = vld [vmem:[%s165 + $0x1974] sm:$0xff]
        %v1077 = vld [vmem:[%s165 + $0x197c] sm:$0xff]
        %v1078 = vld [vmem:[%s165 + $0x1984] sm:$0xf]
        %v1079 = vld [vmem:[%s165 + $0x1988] sm:$0xff]
        %v1080 = vld [vmem:[%s165 + $0x1990] sm:$0xff]
        %v1081 = vld [vmem:[%s165 + $0x1998] sm:$0xff]
        %v1082 = vld [vmem:[%s165 + $0x19a0] sm:$0xff]
        %v1083 = vld [vmem:[%s165 + $0x19a8] sm:$0xff]
        %v1084 = vld [vmem:[%s165 + $0x19b0] sm:$0xff]
        %v1085 = vld [vmem:[%s165 + $0x19b8] sm:$0xff]
        %v1086 = vld [vmem:[%s165 + $0x19c0] sm:$0xff]
        %v1087 = vld [vmem:[%s165 + $0x19c8] sm:$0xff]
        %v1088 = vld [vmem:[%s165 + $0x19d0] sm:$0xf]
        %v1089 = vld [vmem:[%s165 + $0x19d4] sm:$0xff]
        %v1090 = vld [vmem:[%s165 + $0x19dc] sm:$0xff]
        %v1091 = vld [vmem:[%s165 + $0x19e4] sm:$0xff]
        %v1092 = vld [vmem:[%s165 + $0x19ec] sm:$0xff]
        %v1093 = vld [vmem:[%s165 + $0x19f4] sm:$0xff]
        %v1094 = vld [vmem:[%s165 + $0x19fc] sm:$0xff]
        %v1095 = vld [vmem:[%s165 + $0x1a04] sm:$0xff]
        %v1096 = vld [vmem:[%s165 + $0x1a0c] sm:$0xff]
        %v1097 = vld [vmem:[%s165 + $0x1a14] sm:$0xff]
        %v1098 = vld [vmem:[%s165 + $0x1a1c] sm:$0xf]
        %v1099 = vld [vmem:[%s165 + $0x1a20] sm:$0xff]
        %v1100 = vld [vmem:[%s165 + $0x1a28] sm:$0xff]
        %v1101 = vld [vmem:[%s165 + $0x1a30] sm:$0xff]
        %v1102 = vld [vmem:[%s165 + $0x1a38] sm:$0xff]
        %v1103 = vld [vmem:[%s165 + $0x1a40] sm:$0xff]
        %v1104 = vld [vmem:[%s165 + $0x1a48] sm:$0xff]
        %v1105 = vld [vmem:[%s165 + $0x1a50] sm:$0xff]
        %v1106 = vld [vmem:[%s165 + $0x1a58] sm:$0xff]
        %v1107 = vld [vmem:[%s165 + $0x1a60] sm:$0xff]
        %v1108 = vld [vmem:[%s165 + $0x1a68] sm:$0xf]
        %v1109 = vld [vmem:[%s165 + $0x1a6c] sm:$0xff]
        %v1110 = vld [vmem:[%s165 + $0x1a74] sm:$0xff]
        %v1111 = vld [vmem:[%s165 + $0x1a7c] sm:$0xff]
        %v1112 = vld [vmem:[%s165 + $0x1a84] sm:$0xff]
        %v1113 = vld [vmem:[%s165 + $0x1a8c] sm:$0xff]
        %v1114 = vld [vmem:[%s165 + $0x1a94] sm:$0xff]
        %v1115 = vld [vmem:[%s165 + $0x1a9c] sm:$0xff]
        %v1116 = vld [vmem:[%s165 + $0x1aa4] sm:$0xff]
        %v1117 = vld [vmem:[%s165 + $0x1aac] sm:$0xff]
        %v1118 = vld [vmem:[%s165 + $0x1ab4] sm:$0xf]
        %v1119 = vld [vmem:[%s165 + $0x1ab8] sm:$0xff]
        %v1120 = vld [vmem:[%s165 + $0x1ac0] sm:$0xff]
        %v1121 = vld [vmem:[%s165 + $0x1ac8] sm:$0xff]
        %v1122 = vld [vmem:[%s165 + $0x1ad0] sm:$0xff]
        %v1123 = vld [vmem:[%s165 + $0x1ad8] sm:$0xff]
        %v1124 = vld [vmem:[%s165 + $0x1ae0] sm:$0xff]
        %v1125 = vld [vmem:[%s165 + $0x1ae8] sm:$0xff]
        %v1126 = vld [vmem:[%s165 + $0x1af0] sm:$0xff]
        %v1127 = vld [vmem:[%s165 + $0x1af8] sm:$0xff]
        %v1128 = vld [vmem:[%s165 + $0x1b00] sm:$0xf]
        %v1129 = vld [vmem:[%s165 + $0x1b04] sm:$0xff]
        %v1130 = vld [vmem:[%s165 + $0x1b0c] sm:$0xff]
        %v1131 = vld [vmem:[%s165 + $0x1b14] sm:$0xff]
        %v1132 = vld [vmem:[%s165 + $0x1b1c] sm:$0xff]
        %v1133 = vld [vmem:[%s165 + $0x1b24] sm:$0xff]
        %v1134 = vld [vmem:[%s165 + $0x1b2c] sm:$0xff]
        %v1135 = vld [vmem:[%s165 + $0x1b34] sm:$0xff]
        %v1136 = vld [vmem:[%s165 + $0x1b3c] sm:$0xff]
        %v1137 = vld [vmem:[%s165 + $0x1b44] sm:$0xff]
        %v1138 = vld [vmem:[%s165 + $0x1b4c] sm:$0xf]
        %v1139 = vld [vmem:[%s165 + $0x1b50] sm:$0xff]
        %v1140 = vld [vmem:[%s165 + $0x1b58] sm:$0xff]
        %v1141 = vld [vmem:[%s165 + $0x1b60] sm:$0xff]
        %v1142 = vld [vmem:[%s165 + $0x1b68] sm:$0xff]
        %v1143 = vld [vmem:[%s165 + $0x1b70] sm:$0xff]
        %v1144 = vld [vmem:[%s165 + $0x1b78] sm:$0xff]
        %v1145 = vld [vmem:[%s165 + $0x1b80] sm:$0xff]
        %v1146 = vld [vmem:[%s165 + $0x1b88] sm:$0xff]
        %v1147 = vld [vmem:[%s165 + $0x1b90] sm:$0xff]
        %v1148 = vld [vmem:[%s165 + $0x1b98] sm:$0xf]
        %v1149 = vld [vmem:[%s165 + $0x1b9c] sm:$0xff]
        %v1150 = vld [vmem:[%s165 + $0x1ba4] sm:$0xff]
        %v1151 = vld [vmem:[%s165 + $0x1bac] sm:$0xff]
        %v1152 = vld [vmem:[%s165 + $0x1bb4] sm:$0xff]
        %v1153 = vld [vmem:[%s165 + $0x1bbc] sm:$0xff]
        %v1154 = vld [vmem:[%s165 + $0x1bc4] sm:$0xff]
        %v1155 = vld [vmem:[%s165 + $0x1bcc] sm:$0xff]
        %v1156 = vld [vmem:[%s165 + $0x1bd4] sm:$0xff]
        %v1157 = vld [vmem:[%s165 + $0x1bdc] sm:$0xff]
        %v1158 = vld [vmem:[%s165 + $0x1be4] sm:$0xf]
        %v1159 = vld [vmem:[%s165 + $0x1be8] sm:$0xff]
        %v1160 = vld [vmem:[%s165 + $0x1bf0] sm:$0xff]
        %v1161 = vld [vmem:[%s165 + $0x1bf8] sm:$0xff]
        %v1162 = vld [vmem:[%s165 + $0x1c00] sm:$0xff]
        %v1163 = vld [vmem:[%s165 + $0x1c08] sm:$0xff]
        %v1164 = vld [vmem:[%s165 + $0x1c10] sm:$0xff]
        %v1165 = vld [vmem:[%s165 + $0x1c18] sm:$0xff]
        %v1166 = vld [vmem:[%s165 + $0x1c20] sm:$0xff]
        %v1167 = vld [vmem:[%s165 + $0x1c28] sm:$0xff]
        %v1168 = vld [vmem:[%s165 + $0x1c30] sm:$0xf]
        %v1169 = vld [vmem:[%s165 + $0x1c34] sm:$0xff]
        %v1170 = vld [vmem:[%s165 + $0x1c3c] sm:$0xff]
        %v1171 = vld [vmem:[%s165 + $0x1c44] sm:$0xff]
        %v1172 = vld [vmem:[%s165 + $0x1c4c] sm:$0xff]
        %v1173 = vld [vmem:[%s165 + $0x1c54] sm:$0xff]
        %v1174 = vld [vmem:[%s165 + $0x1c5c] sm:$0xff]
        %v1175 = vld [vmem:[%s165 + $0x1c64] sm:$0xff]
        %v1176 = vld [vmem:[%s165 + $0x1c6c] sm:$0xff]
        %v1177 = vld [vmem:[%s165 + $0x1c74] sm:$0xff]
        %v1178 = vld [vmem:[%s165 + $0x1c7c] sm:$0xf]
        %v1179 = vld [vmem:[%s165 + $0x1c80] sm:$0xff]
        %v1180 = vld [vmem:[%s165 + $0x1c88] sm:$0xff]
        %v1181 = vld [vmem:[%s165 + $0x1c90] sm:$0xff]
        %v1182 = vld [vmem:[%s165 + $0x1c98] sm:$0xff]
        %v1183 = vld [vmem:[%s165 + $0x1ca0] sm:$0xff]
        %v1184 = vld [vmem:[%s165 + $0x1ca8] sm:$0xff]
        %v1185 = vld [vmem:[%s165 + $0x1cb0] sm:$0xff]
        %v1186 = vld [vmem:[%s165 + $0x1cb8] sm:$0xff]
        %v1187 = vld [vmem:[%s165 + $0x1cc0] sm:$0xff]
        %v1188 = vld [vmem:[%s165 + $0x1cc8] sm:$0xf]
        %v1189 = vld [vmem:[%s165 + $0x1ccc] sm:$0xff]
        %v1190 = vld [vmem:[%s165 + $0x1cd4] sm:$0xff]
        %v1191 = vld [vmem:[%s165 + $0x1cdc] sm:$0xff]
        %v1192 = vld [vmem:[%s165 + $0x1ce4] sm:$0xff]
        %v1193 = vld [vmem:[%s165 + $0x1cec] sm:$0xff]
        %v1194 = vld [vmem:[%s165 + $0x1cf4] sm:$0xff]
        %v1195 = vld [vmem:[%s165 + $0x1cfc] sm:$0xff]
        %v1196 = vld [vmem:[%s165 + $0x1d04] sm:$0xff]
        %v1197 = vld [vmem:[%s165 + $0x1d0c] sm:$0xff]
        %v1198 = vld [vmem:[%s165 + $0x1d14] sm:$0xf]
        %v1199 = vld [vmem:[%s165 + $0x1d18] sm:$0xff]
        %v1200 = vld [vmem:[%s165 + $0x1d20] sm:$0xff]
        %v1201 = vld [vmem:[%s165 + $0x1d28] sm:$0xff]
        %v1202 = vld [vmem:[%s165 + $0x1d30] sm:$0xff]
        %v1203 = vld [vmem:[%s165 + $0x1d38] sm:$0xff]
        %v1204 = vld [vmem:[%s165 + $0x1d40] sm:$0xff]
        %v1205 = vld [vmem:[%s165 + $0x1d48] sm:$0xff]
        %v1206 = vld [vmem:[%s165 + $0x1d50] sm:$0xff]
        %v1207 = vld [vmem:[%s165 + $0x1d58] sm:$0xff]
        %v1208 = vld [vmem:[%s165 + $0x1d60] sm:$0xf]
        %v1209 = vld [vmem:[%s165 + $0x1d64] sm:$0xff]
        %v1210 = vld [vmem:[%s165 + $0x1d6c] sm:$0xff]
        %v1211 = vld [vmem:[%s165 + $0x1d74] sm:$0xff]
        %v1212 = vld [vmem:[%s165 + $0x1d7c] sm:$0xff]
        %v1213 = vld [vmem:[%s165 + $0x1d84] sm:$0xff]
        %v1214 = vld [vmem:[%s165 + $0x1d8c] sm:$0xff]
        %v1215 = vld [vmem:[%s165 + $0x1d94] sm:$0xff]
        %v1216 = vld [vmem:[%s165 + $0x1d9c] sm:$0xff]
        %v1217 = vld [vmem:[%s165 + $0x1da4] sm:$0xff]
        %v1218 = vld [vmem:[%s165 + $0x1dac] sm:$0xf]
        %v1219 = vld [vmem:[%s165 + $0x1db0] sm:$0xff]
        %v1220 = vld [vmem:[%s165 + $0x1db8] sm:$0xff]
        %v1221 = vld [vmem:[%s165 + $0x1dc0] sm:$0xff]
        %v1222 = vld [vmem:[%s165 + $0x1dc8] sm:$0xff]
        %v1223 = vld [vmem:[%s165 + $0x1dd0] sm:$0xff]
        %v1224 = vld [vmem:[%s165 + $0x1dd8] sm:$0xff]
        %v1225 = vld [vmem:[%s165 + $0x1de0] sm:$0xff]
        %v1226 = vld [vmem:[%s165 + $0x1de8] sm:$0xff]
        %v1227 = vld [vmem:[%s165 + $0x1df0] sm:$0xff]
        %v1228 = vld [vmem:[%s165 + $0x1df8] sm:$0xf]
        %v1229 = vld [vmem:[%s165 + $0x1dfc] sm:$0xff]
        %v1230 = vld [vmem:[%s165 + $0x1e04] sm:$0xff]
        %v1231 = vld [vmem:[%s165 + $0x1e0c] sm:$0xff]
        %v1232 = vld [vmem:[%s165 + $0x1e14] sm:$0xff]
        %v1233 = vld [vmem:[%s165 + $0x1e1c] sm:$0xff]
        %v1234 = vld [vmem:[%s165 + $0x1e24] sm:$0xff]
        %v1235 = vld [vmem:[%s165 + $0x1e2c] sm:$0xff]
        %v1236 = vld [vmem:[%s165 + $0x1e34] sm:$0xff]
        %v1237 = vld [vmem:[%s165 + $0x1e3c] sm:$0xff]
        %v1238 = vld [vmem:[%s165 + $0x1e44] sm:$0xf]
        %v1239 = vld [vmem:[%s165 + $0x1e48] sm:$0xff]
        %v1240 = vld [vmem:[%s165 + $0x1e50] sm:$0xff]
        %v1241 = vld [vmem:[%s165 + $0x1e58] sm:$0xff]
        %v1242 = vld [vmem:[%s165 + $0x1e60] sm:$0xff]
        %v1243 = vld [vmem:[%s165 + $0x1e68] sm:$0xff]
        %v1244 = vld [vmem:[%s165 + $0x1e70] sm:$0xff]
        %v1245 = vld [vmem:[%s165 + $0x1e78] sm:$0xff]
        %v1246 = vld [vmem:[%s165 + $0x1e80] sm:$0xff]
        %v1247 = vld [vmem:[%s165 + $0x1e88] sm:$0xff]
        %v1248 = vld [vmem:[%s165 + $0x1e90] sm:$0xf]
        %v1249 = vld [vmem:[%s165 + $0x1e94] sm:$0xff]
        %v1250 = vld [vmem:[%s165 + $0x1e9c] sm:$0xff]
        %v1251 = vld [vmem:[%s165 + $0x1ea4] sm:$0xff]
        %v1252 = vld [vmem:[%s165 + $0x1eac] sm:$0xff]
        %v1253 = vld [vmem:[%s165 + $0x1eb4] sm:$0xff]
        %v1254 = vld [vmem:[%s165 + $0x1ebc] sm:$0xff]
        %v1255 = vld [vmem:[%s165 + $0x1ec4] sm:$0xff]
        %v1256 = vld [vmem:[%s165 + $0x1ecc] sm:$0xff]
        %v1257 = vld [vmem:[%s165 + $0x1ed4] sm:$0xff]
        %v1258 = vld [vmem:[%s165 + $0x1edc] sm:$0xf]
        %v1259 = vld [vmem:[%s165 + $0x1ee0] sm:$0xff]
        %v1260 = vld [vmem:[%s165 + $0x1ee8] sm:$0xff]
        %v1261 = vld [vmem:[%s165 + $0x1ef0] sm:$0xff]
        %v1262 = vld [vmem:[%s165 + $0x1ef8] sm:$0xff]
        %v1263 = vld [vmem:[%s165 + $0x1f00] sm:$0xff]
        %v1264 = vld [vmem:[%s165 + $0x1f08] sm:$0xff]
        %v1265 = vld [vmem:[%s165 + $0x1f10] sm:$0xff]
        %v1266 = vld [vmem:[%s165 + $0x1f18] sm:$0xff]
        %v1267 = vld [vmem:[%s165 + $0x1f20] sm:$0xff]
        %v1268 = vld [vmem:[%s165 + $0x1f28] sm:$0xf]
        %v1269 = vld [vmem:[%s165 + $0x1f2c] sm:$0xff]
        %v1270 = vld [vmem:[%s165 + $0x1f34] sm:$0xff]
        %v1271 = vld [vmem:[%s165 + $0x1f3c] sm:$0xff]
        %v1272 = vld [vmem:[%s165 + $0x1f44] sm:$0xff]
        %v1273 = vld [vmem:[%s165 + $0x1f4c] sm:$0xff]
        %v1274 = vld [vmem:[%s165 + $0x1f54] sm:$0xff]
        %v1275 = vld [vmem:[%s165 + $0x1f5c] sm:$0xff]
        %v1276 = vld [vmem:[%s165 + $0x1f64] sm:$0xff]
        %v1277 = vld [vmem:[%s165 + $0x1f6c] sm:$0xff]
        %v1278 = vld [vmem:[%s165 + $0x1f74] sm:$0xf]
        %v1279 = vld [vmem:[%s165 + $0x1f78] sm:$0xff]
        %v1280 = vld [vmem:[%s165 + $0x1f80] sm:$0xff]
        %v1281 = vld [vmem:[%s165 + $0x1f88] sm:$0xff]
        %v1282 = vld [vmem:[%s165 + $0x1f90] sm:$0xff]
        %v1283 = vld [vmem:[%s165 + $0x1f98] sm:$0xff]
        %v1284 = vld [vmem:[%s165 + $0x1fa0] sm:$0xff]
        %v1285 = vld [vmem:[%s165 + $0x1fa8] sm:$0xff]
        %v1286 = vld [vmem:[%s165 + $0x1fb0] sm:$0xff]
        %v1287 = vld [vmem:[%s165 + $0x1fb8] sm:$0xff]
        %v1288 = vld [vmem:[%s165 + $0x1fc0] sm:$0xf]
        %v1289 = vld [vmem:[%s165 + $0x1fc4] sm:$0xff]
        %v1290 = vld [vmem:[%s165 + $0x1fcc] sm:$0xff]
        %v1291 = vld [vmem:[%s165 + $0x1fd4] sm:$0xff]
        %v1292 = vld [vmem:[%s165 + $0x1fdc] sm:$0xff]
        %v1293 = vld [vmem:[%s165 + $0x1fe4] sm:$0xff]
        %v1294 = vld [vmem:[%s165 + $0x1fec] sm:$0xff]
        %v1295 = vld [vmem:[%s165 + $0x1ff4] sm:$0xff]
        %v1296 = vld [vmem:[%s165 + $0x1ffc] sm:$0xff]
        %v1297 = vld [vmem:[%s165 + $0x2004] sm:$0xff]
        %v1298 = vld [vmem:[%s165 + $0x200c] sm:$0xf]
        %v1299 = vld [vmem:[%s165 + $0x2010] sm:$0xff]
        %v1300 = vld [vmem:[%s165 + $0x2018] sm:$0xff]
        %v1301 = vld [vmem:[%s165 + $0x2020] sm:$0xff]
        %v1302 = vld [vmem:[%s165 + $0x2028] sm:$0xff]
        %v1303 = vld [vmem:[%s165 + $0x2030] sm:$0xff]
        %v1304 = vld [vmem:[%s165 + $0x2038] sm:$0xff]
        %v1305 = vld [vmem:[%s165 + $0x2040] sm:$0xff]
        %v1306 = vld [vmem:[%s165 + $0x2048] sm:$0xff]
        %v1307 = vld [vmem:[%s165 + $0x2050] sm:$0xff]
        %v1308 = vld [vmem:[%s165 + $0x2058] sm:$0xf]
        %v1309 = vld [vmem:[%s165 + $0x205c] sm:$0xff]
        %v1310 = vld [vmem:[%s165 + $0x2064] sm:$0xff]
        %v1311 = vld [vmem:[%s165 + $0x206c] sm:$0xff]
        %v1312 = vld [vmem:[%s165 + $0x2074] sm:$0xff]
        %v1313 = vld [vmem:[%s165 + $0x207c] sm:$0xff]
        %v1314 = vld [vmem:[%s165 + $0x2084] sm:$0xff]
        %v1315 = vld [vmem:[%s165 + $0x208c] sm:$0xff]
        %v1316 = vld [vmem:[%s165 + $0x2094] sm:$0xff]
        %v1317 = vld [vmem:[%s165 + $0x209c] sm:$0xff]
        %v1318 = vld [vmem:[%s165 + $0x20a4] sm:$0xf]
        %v1319 = vld [vmem:[%s165 + $0x20a8] sm:$0xff]
        %v1320 = vld [vmem:[%s165 + $0x20b0] sm:$0xff]
        %v1321 = vld [vmem:[%s165 + $0x20b8] sm:$0xff]
        %v1322 = vld [vmem:[%s165 + $0x20c0] sm:$0xff]
        %v1323 = vld [vmem:[%s165 + $0x20c8] sm:$0xff]
        %v1324 = vld [vmem:[%s165 + $0x20d0] sm:$0xff]
        %v1325 = vld [vmem:[%s165 + $0x20d8] sm:$0xff]
        %v1326 = vld [vmem:[%s165 + $0x20e0] sm:$0xff]
        %v1327 = vld [vmem:[%s165 + $0x20e8] sm:$0xff]
        %v1328 = vld [vmem:[%s165 + $0x20f0] sm:$0xf]
        %v1329 = vld [vmem:[%s165 + $0x20f4] sm:$0xff]
        %v1330 = vld [vmem:[%s165 + $0x20fc] sm:$0xff]
        %v1331 = vld [vmem:[%s165 + $0x2104] sm:$0xff]
        %v1332 = vld [vmem:[%s165 + $0x210c] sm:$0xff]
        %v1333 = vld [vmem:[%s165 + $0x2114] sm:$0xff]
        %v1334 = vld [vmem:[%s165 + $0x211c] sm:$0xff]
        %v1335 = vld [vmem:[%s165 + $0x2124] sm:$0xff]
        %v1336 = vld [vmem:[%s165 + $0x212c] sm:$0xff]
        %v1337 = vld [vmem:[%s165 + $0x2134] sm:$0xff]
        %v1338 = vld [vmem:[%s165 + $0x213c] sm:$0xf]
        %v1339 = vld [vmem:[%s165 + $0x2140] sm:$0xff]
        %v1340 = vld [vmem:[%s165 + $0x2148] sm:$0xff]
        %v1341 = vld [vmem:[%s165 + $0x2150] sm:$0xff]
        %v1342 = vld [vmem:[%s165 + $0x2158] sm:$0xff]
        %v1343 = vld [vmem:[%s165 + $0x2160] sm:$0xff]
        %v1344 = vld [vmem:[%s165 + $0x2168] sm:$0xff]
        %v1345 = vld [vmem:[%s165 + $0x2170] sm:$0xff]
        %v1346 = vld [vmem:[%s165 + $0x2178] sm:$0xff]
        %v1347 = vld [vmem:[%s165 + $0x2180] sm:$0xff]
        %v1348 = vld [vmem:[%s165 + $0x2188] sm:$0xf]
        %v1349 = vld [vmem:[%s165 + $0x218c] sm:$0xff]
        %v1350 = vld [vmem:[%s165 + $0x2194] sm:$0xff]
        %v1351 = vld [vmem:[%s165 + $0x219c] sm:$0xff]
        %v1352 = vld [vmem:[%s165 + $0x21a4] sm:$0xff]
        %v1353 = vld [vmem:[%s165 + $0x21ac] sm:$0xff]
        %v1354 = vld [vmem:[%s165 + $0x21b4] sm:$0xff]
        %v1355 = vld [vmem:[%s165 + $0x21bc] sm:$0xff]
        %v1356 = vld [vmem:[%s165 + $0x21c4] sm:$0xff]
        %v1357 = vld [vmem:[%s165 + $0x21cc] sm:$0xff]
        %v1358 = vld [vmem:[%s165 + $0x21d4] sm:$0xf]
        %v1359 = vld [vmem:[%s165 + $0x21d8] sm:$0xff]
        %v1360 = vld [vmem:[%s165 + $0x21e0] sm:$0xff]
        %v1361 = vld [vmem:[%s165 + $0x21e8] sm:$0xff]
        %v1362 = vld [vmem:[%s165 + $0x21f0] sm:$0xff]
        %v1363 = vld [vmem:[%s165 + $0x21f8] sm:$0xff]
        %v1364 = vld [vmem:[%s165 + $0x2200] sm:$0xff]
        %v1365 = vld [vmem:[%s165 + $0x2208] sm:$0xff]
        %v1366 = vld [vmem:[%s165 + $0x2210] sm:$0xff]
        %v1367 = vld [vmem:[%s165 + $0x2218] sm:$0xff]
        %v1368 = vld [vmem:[%s165 + $0x2220] sm:$0xf]
        %v1369 = vld [vmem:[%s165 + $0x2224] sm:$0xff]
        %v1370 = vld [vmem:[%s165 + $0x222c] sm:$0xff]
        %v1371 = vld [vmem:[%s165 + $0x2234] sm:$0xff]
        %v1372 = vld [vmem:[%s165 + $0x223c] sm:$0xff]
        %v1373 = vld [vmem:[%s165 + $0x2244] sm:$0xff]
        %v1374 = vld [vmem:[%s165 + $0x224c] sm:$0xff]
        %v1375 = vld [vmem:[%s165 + $0x2254] sm:$0xff]
        %v1376 = vld [vmem:[%s165 + $0x225c] sm:$0xff]
        %v1377 = vld [vmem:[%s165 + $0x2264] sm:$0xff]
        %v1378 = vld [vmem:[%s165 + $0x226c] sm:$0xf]
        %v1379 = vld [vmem:[%s165 + $0x2270] sm:$0xff]
        %v1380 = vld [vmem:[%s165 + $0x2278] sm:$0xff]
        %v1381 = vld [vmem:[%s165 + $0x2280] sm:$0xff]
        %v1382 = vld [vmem:[%s165 + $0x2288] sm:$0xff]
        %v1383 = vld [vmem:[%s165 + $0x2290] sm:$0xff]
        %v1384 = vld [vmem:[%s165 + $0x2298] sm:$0xff]
        %v1385 = vld [vmem:[%s165 + $0x22a0] sm:$0xff]
        %v1386 = vld [vmem:[%s165 + $0x22a8] sm:$0xff]
        %v1387 = vld [vmem:[%s165 + $0x22b0] sm:$0xff]
        %v1388 = vld [vmem:[%s165 + $0x22b8] sm:$0xf]
        %v1389 = vld [vmem:[%s165 + $0x22bc] sm:$0xff]
        %v1390 = vld [vmem:[%s165 + $0x22c4] sm:$0xff]
        %v1391 = vld [vmem:[%s165 + $0x22cc] sm:$0xff]
        %v1392 = vld [vmem:[%s165 + $0x22d4] sm:$0xff]
        %v1393 = vld [vmem:[%s165 + $0x22dc] sm:$0xff]
        %v1394 = vld [vmem:[%s165 + $0x22e4] sm:$0xff]
        %v1395 = vld [vmem:[%s165 + $0x22ec] sm:$0xff]
        %v1396 = vld [vmem:[%s165 + $0x22f4] sm:$0xff]
        %v1397 = vld [vmem:[%s165 + $0x22fc] sm:$0xff]
        %v1398 = vld [vmem:[%s165 + $0x2304] sm:$0xf]
        %v1399 = vld [vmem:[%s165 + $0x2308] sm:$0xff]
        %v1400 = vld [vmem:[%s165 + $0x2310] sm:$0xff]
        %v1401 = vld [vmem:[%s165 + $0x2318] sm:$0xff]
        %v1402 = vld [vmem:[%s165 + $0x2320] sm:$0xff]
        %v1403 = vld [vmem:[%s165 + $0x2328] sm:$0xff]
        %v1404 = vld [vmem:[%s165 + $0x2330] sm:$0xff]
        %v1405 = vld [vmem:[%s165 + $0x2338] sm:$0xff]
        %v1406 = vld [vmem:[%s165 + $0x2340] sm:$0xff]
        %v1407 = vld [vmem:[%s165 + $0x2348] sm:$0xff]
        %v1408 = vld [vmem:[%s165 + $0x2350] sm:$0xf]
        %v1409 = vld [vmem:[%s165 + $0x2354] sm:$0xff]
        %v1410 = vld [vmem:[%s165 + $0x235c] sm:$0xff]
        %v1411 = vld [vmem:[%s165 + $0x2364] sm:$0xff]
        %v1412 = vld [vmem:[%s165 + $0x236c] sm:$0xff]
        %v1413 = vld [vmem:[%s165 + $0x2374] sm:$0xff]
        %v1414 = vld [vmem:[%s165 + $0x237c] sm:$0xff]
        %v1415 = vld [vmem:[%s165 + $0x2384] sm:$0xff]
        %v1416 = vld [vmem:[%s165 + $0x238c] sm:$0xff]
        %v1417 = vld [vmem:[%s165 + $0x2394] sm:$0xff]
        %v1418 = vld [vmem:[%s165 + $0x239c] sm:$0xf]
        %v1419 = vld [vmem:[%s165 + $0x23a0] sm:$0xff]
        %v1420 = vld [vmem:[%s165 + $0x23a8] sm:$0xff]
        %v1421 = vld [vmem:[%s165 + $0x23b0] sm:$0xff]
        %v1422 = vld [vmem:[%s165 + $0x23b8] sm:$0xff]
        %v1423 = vld [vmem:[%s165 + $0x23c0] sm:$0xff]
        %v1424 = vld [vmem:[%s165 + $0x23c8] sm:$0xff]
        %v1425 = vld [vmem:[%s165 + $0x23d0] sm:$0xff]
        %v1426 = vld [vmem:[%s165 + $0x23d8] sm:$0xff]
        %v1427 = vld [vmem:[%s165 + $0x23e0] sm:$0xff]
        %v1428 = vld [vmem:[%s165 + $0x23e8] sm:$0xf]
        %v1429 = vld [vmem:[%s165 + $0x23ec] sm:$0xff]
        %v1430 = vld [vmem:[%s165 + $0x23f4] sm:$0xff]
        %v1431 = vld [vmem:[%s165 + $0x23fc] sm:$0xff]
        %v1432 = vld [vmem:[%s165 + $0x2404] sm:$0xff]
        %v1433 = vld [vmem:[%s165 + $0x240c] sm:$0xff]
        %v1434 = vld [vmem:[%s165 + $0x2414] sm:$0xff]
        %v1435 = vld [vmem:[%s165 + $0x241c] sm:$0xff]
        %v1436 = vld [vmem:[%s165 + $0x2424] sm:$0xff]
        %v1437 = vld [vmem:[%s165 + $0x242c] sm:$0xff]
        %v1438 = vld [vmem:[%s165 + $0x2434] sm:$0xf]
        %v1439 = vld [vmem:[%s165 + $0x2438] sm:$0xff]
        %v1440 = vld [vmem:[%s165 + $0x2440] sm:$0xff]
        %v1441 = vld [vmem:[%s165 + $0x2448] sm:$0xff]
        %v1442 = vld [vmem:[%s165 + $0x2450] sm:$0xff]
        %v1443 = vld [vmem:[%s165 + $0x2458] sm:$0xff]
        %v1444 = vld [vmem:[%s165 + $0x2460] sm:$0xff]
        %v1445 = vld [vmem:[%s165 + $0x2468] sm:$0xff]
        %v1446 = vld [vmem:[%s165 + $0x2470] sm:$0xff]
        %v1447 = vld [vmem:[%s165 + $0x2478] sm:$0xff]
        %v1448 = vld [vmem:[%s165 + $0x2480] sm:$0xf]
        %v1449 = vld [vmem:[%s165 + $0x2484] sm:$0xff]
        %v1450 = vld [vmem:[%s165 + $0x248c] sm:$0xff]
        %v1451 = vld [vmem:[%s165 + $0x2494] sm:$0xff]
        %v1452 = vld [vmem:[%s165 + $0x249c] sm:$0xff]
        %v1453 = vld [vmem:[%s165 + $0x24a4] sm:$0xff]
        %v1454 = vld [vmem:[%s165 + $0x24ac] sm:$0xff]
        %v1455 = vld [vmem:[%s165 + $0x24b4] sm:$0xff]
        %v1456 = vld [vmem:[%s165 + $0x24bc] sm:$0xff]
        %v1457 = vld [vmem:[%s165 + $0x24c4] sm:$0xff]
        %v1458 = vld [vmem:[%s165 + $0x24cc] sm:$0xf]
        %v1459 = vld [vmem:[%s165 + $0x24d0] sm:$0xff]
        %v1460 = vld [vmem:[%s165 + $0x24d8] sm:$0xff]
        %v1461 = vld [vmem:[%s165 + $0x24e0] sm:$0xff]
        %v1462 = vld [vmem:[%s165 + $0x24e8] sm:$0xff]
        %v1463 = vld [vmem:[%s165 + $0x24f0] sm:$0xff]
        %v1464 = vld [vmem:[%s165 + $0x24f8] sm:$0xff]
        %v1465 = vld [vmem:[%s165 + $0x2500] sm:$0xff]
        %v1466 = vld [vmem:[%s165 + $0x2508] sm:$0xff]
        %v1467 = vld [vmem:[%s165 + $0x2510] sm:$0xff]
        %v1468 = vld [vmem:[%s165 + $0x2518] sm:$0xf]
        %v1469 = vld [vmem:[%s165 + $0x251c] sm:$0xff]
        %v1470 = vld [vmem:[%s165 + $0x2524] sm:$0xff]
        %v1471 = vld [vmem:[%s165 + $0x252c] sm:$0xff]
        %v1472 = vld [vmem:[%s165 + $0x2534] sm:$0xff]
        %v1473 = vld [vmem:[%s165 + $0x253c] sm:$0xff]
        %v1474 = vld [vmem:[%s165 + $0x2544] sm:$0xff]
        %v1475 = vld [vmem:[%s165 + $0x254c] sm:$0xff]
        %v1476 = vld [vmem:[%s165 + $0x2554] sm:$0xff]
        %v1477 = vld [vmem:[%s165 + $0x255c] sm:$0xff]
        %v1478 = vld [vmem:[%s165 + $0x2564] sm:$0xf]
        %v1479 = vld [vmem:[%s165 + $0x2568] sm:$0xff]
        %v1480 = vld [vmem:[%s165 + $0x2570] sm:$0xff]
        %v1481 = vld [vmem:[%s165 + $0x2578] sm:$0xff]
        %v1482 = vld [vmem:[%s165 + $0x2580] sm:$0xff]
        %v1483 = vld [vmem:[%s165 + $0x2588] sm:$0xff]
        %v1484 = vld [vmem:[%s165 + $0x2590] sm:$0xff]
        %v1485 = vld [vmem:[%s165 + $0x2598] sm:$0xff]
        %v1486 = vld [vmem:[%s165 + $0x25a0] sm:$0xff]
        %v1487 = vld [vmem:[%s165 + $0x25a8] sm:$0xff]
        %v1488 = vld [vmem:[%s165 + $0x25b0] sm:$0xf]
        %v1489 = vld [vmem:[%s165 + $0x25b4] sm:$0xff]
        %v1490 = vld [vmem:[%s165 + $0x25bc] sm:$0xff]
        %v1491 = vld [vmem:[%s165 + $0x25c4] sm:$0xff]
        %v1492 = vld [vmem:[%s165 + $0x25cc] sm:$0xff]
        %v1493 = vld [vmem:[%s165 + $0x25d4] sm:$0xff]
        %v1494 = vld [vmem:[%s165 + $0x25dc] sm:$0xff]
        %v1495 = vld [vmem:[%s165 + $0x25e4] sm:$0xff]
        %v1496 = vld [vmem:[%s165 + $0x25ec] sm:$0xff]
        %v1497 = vld [vmem:[%s165 + $0x25f4] sm:$0xff]
        %v1498 = vld [vmem:[%s165 + $0x25fc] sm:$0xf]
        %v1500 = vcombine.high %v218, %v218
        %v1502 = vunpack.c.l.s4 1966171168
        %v1503 = vunpack.c.0.s8 %v1502
        %v1504 = vlaneseq
        %v1505 = vshrl.u32 %v1504, 7
        %v1506 = vsub.s32 %v1503, %v1505
        %v1507 = vrot.slane %v218, %v1506
        %v1509 = vunpack.c.l.s4 1966171168
        %v1510 = vunpack.c.0.s8 %v1509
        %v1511 = vlaneseq
        %v1512 = vshrl.u32 %v1511, 7
        %v1513 = vsub.s32 %v1510, %v1512
        %v1514 = vrot.slane %v1500, %v1513
        %v1515 = vcombine.high %v1507, %v1507
        %v1516 = vcombine.high %v1514, %v1514
        %v1518 = vunpack.c.l.s4 1966171168
        %v1519 = vunpack.c.0.s8 %v1518
        %v1520 = vlaneseq
        %v1521 = vshrl.u32 %v1520, 7
        %v1522 = vsub.s32 %v1519, %v1521
        %v1523 = vrot.slane %v1507, %v1522
        %v1525 = vunpack.c.l.s4 1966171168
        %v1526 = vunpack.c.0.s8 %v1525
        %v1527 = vlaneseq
        %v1528 = vshrl.u32 %v1527, 7
        %v1529 = vsub.s32 %v1526, %v1528
        %v1530 = vrot.slane %v1514, %v1529
        %v1532 = vunpack.c.l.s4 1966171168
        %v1533 = vunpack.c.0.s8 %v1532
        %v1534 = vlaneseq
        %v1535 = vshrl.u32 %v1534, 7
        %v1536 = vsub.s32 %v1533, %v1535
        %v1537 = vrot.slane %v1515, %v1536
        %v1539 = vunpack.c.l.s4 1966171168
        %v1540 = vunpack.c.0.s8 %v1539
        %v1541 = vlaneseq
        %v1542 = vshrl.u32 %v1541, 7
        %v1543 = vsub.s32 %v1540, %v1542
        %v1544 = vrot.slane %v1516, %v1543
        %v1545 = vcombine.high %v1523, %v1523
        %v1546 = vcombine.high %v1530, %v1530
        %v1547 = vcombine.high %v1537, %v1537
        %v1548 = vcombine.high %v1544, %v1544
        %v2837 = vunpack.c.l.b16 %v219
        %v2838 = vunpack.c.h.b16 %v219
        %v2839 = vunpack.c.l.b16 %v220
        %v2840 = vunpack.c.h.b16 %v220
        %v2841 = vunpack.c.l.b16 %v221
        %v2842 = vunpack.c.h.b16 %v221
        %v2843 = vunpack.c.l.b16 %v222
        %v2844 = vunpack.c.h.b16 %v222
        %v2845 = vunpack.c.l.b16 %v223
        %v2846 = vunpack.c.h.b16 %v223
        %v2847 = vunpack.c.l.b16 %v224
        %v2848 = vunpack.c.h.b16 %v224
        %v2849 = vunpack.c.l.b16 %v225
        %v2850 = vunpack.c.h.b16 %v225
        %v2851 = vunpack.c.l.b16 %v226
        %v2852 = vunpack.c.h.b16 %v226
        %v2853 = vunpack.c.l.b16 %v227
        %v2854 = vunpack.c.h.b16 %v227
        %v2855 = vunpack.c.l.b16 %v228
        %v2856 = vunpack.c.l.b16 %v229
        %v2857 = vunpack.c.h.b16 %v229
        %v2858 = vunpack.c.l.b16 %v230
        %v2859 = vunpack.c.h.b16 %v230
        %v2860 = vunpack.c.l.b16 %v231
        %v2861 = vunpack.c.h.b16 %v231
        %v2862 = vunpack.c.l.b16 %v232
        %v2863 = vunpack.c.h.b16 %v232
        %v2864 = vunpack.c.l.b16 %v233
        %v2865 = vunpack.c.h.b16 %v233
        %v2866 = vunpack.c.l.b16 %v234
        %v2867 = vunpack.c.h.b16 %v234
        %v2868 = vunpack.c.l.b16 %v235
        %v2869 = vunpack.c.h.b16 %v235
        %v2870 = vunpack.c.l.b16 %v236
        %v2871 = vunpack.c.h.b16 %v236
        %v2872 = vunpack.c.l.b16 %v237
        %v2873 = vunpack.c.h.b16 %v237
        %v2874 = vunpack.c.l.b16 %v238
        %v2875 = vunpack.c.l.b16 %v239
        %v2876 = vunpack.c.h.b16 %v239
        %v2877 = vunpack.c.l.b16 %v240
        %v2878 = vunpack.c.h.b16 %v240
        %v2879 = vunpack.c.l.b16 %v241
        %v2880 = vunpack.c.h.b16 %v241
        %v2881 = vunpack.c.l.b16 %v242
        %v2882 = vunpack.c.h.b16 %v242
        %v2883 = vunpack.c.l.b16 %v243
        %v2884 = vunpack.c.h.b16 %v243
        %v2885 = vunpack.c.l.b16 %v244
        %v2886 = vunpack.c.h.b16 %v244
        %v2887 = vunpack.c.l.b16 %v245
        %v2888 = vunpack.c.h.b16 %v245
        %v2889 = vunpack.c.l.b16 %v246
        %v2890 = vunpack.c.h.b16 %v246
        %v2891 = vunpack.c.l.b16 %v247
        %v2892 = vunpack.c.h.b16 %v247
        %v2893 = vunpack.c.l.b16 %v248
        %v2894 = vunpack.c.l.b16 %v249
        %v2895 = vunpack.c.h.b16 %v249
        %v2896 = vunpack.c.l.b16 %v250
        %v2897 = vunpack.c.h.b16 %v250
        %v2898 = vunpack.c.l.b16 %v251
        %v2899 = vunpack.c.h.b16 %v251
        %v2900 = vunpack.c.l.b16 %v252
        %v2901 = vunpack.c.h.b16 %v252
        %v2902 = vunpack.c.l.b16 %v253
        %v2903 = vunpack.c.h.b16 %v253
        %v2904 = vunpack.c.l.b16 %v254
        %v2905 = vunpack.c.h.b16 %v254
        %v2906 = vunpack.c.l.b16 %v255
        %v2907 = vunpack.c.h.b16 %v255
        %v2908 = vunpack.c.l.b16 %v256
        %v2909 = vunpack.c.h.b16 %v256
        %v2910 = vunpack.c.l.b16 %v257
        %v2911 = vunpack.c.h.b16 %v257
        %v2912 = vunpack.c.l.b16 %v258
        %v2913 = vunpack.c.l.b16 %v259
        %v2914 = vunpack.c.h.b16 %v259
        %v2915 = vunpack.c.l.b16 %v260
        %v2916 = vunpack.c.h.b16 %v260
        %v2917 = vunpack.c.l.b16 %v261
        %v2918 = vunpack.c.h.b16 %v261
        %v2919 = vunpack.c.l.b16 %v262
        %v2920 = vunpack.c.h.b16 %v262
        %v2921 = vunpack.c.l.b16 %v263
        %v2922 = vunpack.c.h.b16 %v263
        %v2923 = vunpack.c.l.b16 %v264
        %v2924 = vunpack.c.h.b16 %v264
        %v2925 = vunpack.c.l.b16 %v265
        %v2926 = vunpack.c.h.b16 %v265
        %v2927 = vunpack.c.l.b16 %v266
        %v2928 = vunpack.c.h.b16 %v266
        %v2929 = vunpack.c.l.b16 %v267
        %v2930 = vunpack.c.h.b16 %v267
        %v2931 = vunpack.c.l.b16 %v268
        %v2932 = vunpack.c.l.b16 %v269
        %v2933 = vunpack.c.h.b16 %v269
        %v2934 = vunpack.c.l.b16 %v270
        %v2935 = vunpack.c.h.b16 %v270
        %v2936 = vunpack.c.l.b16 %v271
        %v2937 = vunpack.c.h.b16 %v271
        %v2938 = vunpack.c.l.b16 %v272
        %v2939 = vunpack.c.h.b16 %v272
        %v2940 = vunpack.c.l.b16 %v273
        %v2941 = vunpack.c.h.b16 %v273
        %v2942 = vunpack.c.l.b16 %v274
        %v2943 = vunpack.c.h.b16 %v274
        %v2944 = vunpack.c.l.b16 %v275
        %v2945 = vunpack.c.h.b16 %v275
        %v2946 = vunpack.c.l.b16 %v276
        %v2947 = vunpack.c.h.b16 %v276
        %v2948 = vunpack.c.l.b16 %v277
        %v2949 = vunpack.c.h.b16 %v277
        %v2950 = vunpack.c.l.b16 %v278
        %v2951 = vunpack.c.l.b16 %v279
        %v2952 = vunpack.c.h.b16 %v279
        %v2953 = vunpack.c.l.b16 %v280
        %v2954 = vunpack.c.h.b16 %v280
        %v2955 = vunpack.c.l.b16 %v281
        %v2956 = vunpack.c.h.b16 %v281
        %v2957 = vunpack.c.l.b16 %v282
        %v2958 = vunpack.c.h.b16 %v282
        %v2959 = vunpack.c.l.b16 %v283
        %v2960 = vunpack.c.h.b16 %v283
        %v2961 = vunpack.c.l.b16 %v284
        %v2962 = vunpack.c.h.b16 %v284
        %v2963 = vunpack.c.l.b16 %v285
        %v2964 = vunpack.c.h.b16 %v285
        %v2965 = vunpack.c.l.b16 %v286
        %v2966 = vunpack.c.h.b16 %v286
        %v2967 = vunpack.c.l.b16 %v287
        %v2968 = vunpack.c.h.b16 %v287
        %v2969 = vunpack.c.l.b16 %v288
        %v2970 = vunpack.c.l.b16 %v289
        %v2971 = vunpack.c.h.b16 %v289
        %v2972 = vunpack.c.l.b16 %v290
        %v2973 = vunpack.c.h.b16 %v290
        %v2974 = vunpack.c.l.b16 %v291
        %v2975 = vunpack.c.h.b16 %v291
        %v2976 = vunpack.c.l.b16 %v292
        %v2977 = vunpack.c.h.b16 %v292
        %v2978 = vunpack.c.l.b16 %v293
        %v2979 = vunpack.c.h.b16 %v293
        %v2980 = vunpack.c.l.b16 %v294
        %v2981 = vunpack.c.h.b16 %v294
        %v2982 = vunpack.c.l.b16 %v295
        %v2983 = vunpack.c.h.b16 %v295
        %v2984 = vunpack.c.l.b16 %v296
        %v2985 = vunpack.c.h.b16 %v296
        %v2986 = vunpack.c.l.b16 %v297
        %v2987 = vunpack.c.h.b16 %v297
        %v2988 = vunpack.c.l.b16 %v298
        %v2989 = vunpack.c.l.b16 %v299
        %v2990 = vunpack.c.h.b16 %v299
        %v2991 = vunpack.c.l.b16 %v300
        %v2992 = vunpack.c.h.b16 %v300
        %v2993 = vunpack.c.l.b16 %v301
        %v2994 = vunpack.c.h.b16 %v301
        %v2995 = vunpack.c.l.b16 %v302
        %v2996 = vunpack.c.h.b16 %v302
        %v2997 = vunpack.c.l.b16 %v303
        %v2998 = vunpack.c.h.b16 %v303
        %v2999 = vunpack.c.l.b16 %v304
        %v3000 = vunpack.c.h.b16 %v304
        %v3001 = vunpack.c.l.b16 %v305
        %v3002 = vunpack.c.h.b16 %v305
        %v3003 = vunpack.c.l.b16 %v306
        %v3004 = vunpack.c.h.b16 %v306
        %v3005 = vunpack.c.l.b16 %v307
        %v3006 = vunpack.c.h.b16 %v307
        %v3007 = vunpack.c.l.b16 %v308
        %v3008 = vunpack.c.l.b16 %v309
        %v3009 = vunpack.c.h.b16 %v309
        %v3010 = vunpack.c.l.b16 %v310
        %v3011 = vunpack.c.h.b16 %v310
        %v3012 = vunpack.c.l.b16 %v311
        %v3013 = vunpack.c.h.b16 %v311
        %v3014 = vunpack.c.l.b16 %v312
        %v3015 = vunpack.c.h.b16 %v312
        %v3016 = vunpack.c.l.b16 %v313
        %v3017 = vunpack.c.h.b16 %v313
        %v3018 = vunpack.c.l.b16 %v314
        %v3019 = vunpack.c.h.b16 %v314
        %v3020 = vunpack.c.l.b16 %v315
        %v3021 = vunpack.c.h.b16 %v315
        %v3022 = vunpack.c.l.b16 %v316
        %v3023 = vunpack.c.h.b16 %v316
        %v3024 = vunpack.c.l.b16 %v317
        %v3025 = vunpack.c.h.b16 %v317
        %v3026 = vunpack.c.l.b16 %v318
        %v3027 = vunpack.c.l.b16 %v319
        %v3028 = vunpack.c.h.b16 %v319
        %v3029 = vunpack.c.l.b16 %v320
        %v3030 = vunpack.c.h.b16 %v320
        %v3031 = vunpack.c.l.b16 %v321
        %v3032 = vunpack.c.h.b16 %v321
        %v3033 = vunpack.c.l.b16 %v322
        %v3034 = vunpack.c.h.b16 %v322
        %v3035 = vunpack.c.l.b16 %v323
        %v3036 = vunpack.c.h.b16 %v323
        %v3037 = vunpack.c.l.b16 %v324
        %v3038 = vunpack.c.h.b16 %v324
        %v3039 = vunpack.c.l.b16 %v325
        %v3040 = vunpack.c.h.b16 %v325
        %v3041 = vunpack.c.l.b16 %v326
        %v3042 = vunpack.c.h.b16 %v326
        %v3043 = vunpack.c.l.b16 %v327
        %v3044 = vunpack.c.h.b16 %v327
        %v3045 = vunpack.c.l.b16 %v328
        %v3046 = vunpack.c.l.b16 %v329
        %v3047 = vunpack.c.h.b16 %v329
        %v3048 = vunpack.c.l.b16 %v330
        %v3049 = vunpack.c.h.b16 %v330
        %v3050 = vunpack.c.l.b16 %v331
        %v3051 = vunpack.c.h.b16 %v331
        %v3052 = vunpack.c.l.b16 %v332
        %v3053 = vunpack.c.h.b16 %v332
        %v3054 = vunpack.c.l.b16 %v333
        %v3055 = vunpack.c.h.b16 %v333
        %v3056 = vunpack.c.l.b16 %v334
        %v3057 = vunpack.c.h.b16 %v334
        %v3058 = vunpack.c.l.b16 %v335
        %v3059 = vunpack.c.h.b16 %v335
        %v3060 = vunpack.c.l.b16 %v336
        %v3061 = vunpack.c.h.b16 %v336
        %v3062 = vunpack.c.l.b16 %v337
        %v3063 = vunpack.c.h.b16 %v337
        %v3064 = vunpack.c.l.b16 %v338
        %v3065 = vunpack.c.l.b16 %v339
        %v3066 = vunpack.c.h.b16 %v339
        %v3067 = vunpack.c.l.b16 %v340
        %v3068 = vunpack.c.h.b16 %v340
        %v3069 = vunpack.c.l.b16 %v341
        %v3070 = vunpack.c.h.b16 %v341
        %v3071 = vunpack.c.l.b16 %v342
        %v3072 = vunpack.c.h.b16 %v342
        %v3073 = vunpack.c.l.b16 %v343
        %v3074 = vunpack.c.h.b16 %v343
        %v3075 = vunpack.c.l.b16 %v344
        %v3076 = vunpack.c.h.b16 %v344
        %v3077 = vunpack.c.l.b16 %v345
        %v3078 = vunpack.c.h.b16 %v345
        %v3079 = vunpack.c.l.b16 %v346
        %v3080 = vunpack.c.h.b16 %v346
        %v3081 = vunpack.c.l.b16 %v347
        %v3082 = vunpack.c.h.b16 %v347
        %v3083 = vunpack.c.l.b16 %v348
        %v3084 = vunpack.c.l.b16 %v349
        %v3085 = vunpack.c.h.b16 %v349
        %v3086 = vunpack.c.l.b16 %v350
        %v3087 = vunpack.c.h.b16 %v350
        %v3088 = vunpack.c.l.b16 %v351
        %v3089 = vunpack.c.h.b16 %v351
        %v3090 = vunpack.c.l.b16 %v352
        %v3091 = vunpack.c.h.b16 %v352
        %v3092 = vunpack.c.l.b16 %v353
        %v3093 = vunpack.c.h.b16 %v353
        %v3094 = vunpack.c.l.b16 %v354
        %v3095 = vunpack.c.h.b16 %v354
        %v3096 = vunpack.c.l.b16 %v355
        %v3097 = vunpack.c.h.b16 %v355
        %v3098 = vunpack.c.l.b16 %v356
        %v3099 = vunpack.c.h.b16 %v356
        %v3100 = vunpack.c.l.b16 %v357
        %v3101 = vunpack.c.h.b16 %v357
        %v3102 = vunpack.c.l.b16 %v358
        %v3103 = vunpack.c.l.b16 %v359
        %v3104 = vunpack.c.h.b16 %v359
        %v3105 = vunpack.c.l.b16 %v360
        %v3106 = vunpack.c.h.b16 %v360
        %v3107 = vunpack.c.l.b16 %v361
        %v3108 = vunpack.c.h.b16 %v361
        %v3109 = vunpack.c.l.b16 %v362
        %v3110 = vunpack.c.h.b16 %v362
        %v3111 = vunpack.c.l.b16 %v363
        %v3112 = vunpack.c.h.b16 %v363
        %v3113 = vunpack.c.l.b16 %v364
        %v3114 = vunpack.c.h.b16 %v364
        %v3115 = vunpack.c.l.b16 %v365
        %v3116 = vunpack.c.h.b16 %v365
        %v3117 = vunpack.c.l.b16 %v366
        %v3118 = vunpack.c.h.b16 %v366
        %v3119 = vunpack.c.l.b16 %v367
        %v3120 = vunpack.c.h.b16 %v367
        %v3121 = vunpack.c.l.b16 %v368
        %v3122 = vunpack.c.l.b16 %v369
        %v3123 = vunpack.c.h.b16 %v369
        %v3124 = vunpack.c.l.b16 %v370
        %v3125 = vunpack.c.h.b16 %v370
        %v3126 = vunpack.c.l.b16 %v371
        %v3127 = vunpack.c.h.b16 %v371
        %v3128 = vunpack.c.l.b16 %v372
        %v3129 = vunpack.c.h.b16 %v372
        %v3130 = vunpack.c.l.b16 %v373
        %v3131 = vunpack.c.h.b16 %v373
        %v3132 = vunpack.c.l.b16 %v374
        %v3133 = vunpack.c.h.b16 %v374
        %v3134 = vunpack.c.l.b16 %v375
        %v3135 = vunpack.c.h.b16 %v375
        %v3136 = vunpack.c.l.b16 %v376
        %v3137 = vunpack.c.h.b16 %v376
        %v3138 = vunpack.c.l.b16 %v377
        %v3139 = vunpack.c.h.b16 %v377
        %v3140 = vunpack.c.l.b16 %v378
        %v3141 = vunpack.c.l.b16 %v379
        %v3142 = vunpack.c.h.b16 %v379
        %v3143 = vunpack.c.l.b16 %v380
        %v3144 = vunpack.c.h.b16 %v380
        %v3145 = vunpack.c.l.b16 %v381
        %v3146 = vunpack.c.h.b16 %v381
        %v3147 = vunpack.c.l.b16 %v382
        %v3148 = vunpack.c.h.b16 %v382
        %v3149 = vunpack.c.l.b16 %v383
        %v3150 = vunpack.c.h.b16 %v383
        %v3151 = vunpack.c.l.b16 %v384
        %v3152 = vunpack.c.h.b16 %v384
        %v3153 = vunpack.c.l.b16 %v385
        %v3154 = vunpack.c.h.b16 %v385
        %v3155 = vunpack.c.l.b16 %v386
        %v3156 = vunpack.c.h.b16 %v386
        %v3157 = vunpack.c.l.b16 %v387
        %v3158 = vunpack.c.h.b16 %v387
        %v3159 = vunpack.c.l.b16 %v388
        %v3160 = vunpack.c.l.b16 %v389
        %v3161 = vunpack.c.h.b16 %v389
        %v3162 = vunpack.c.l.b16 %v390
        %v3163 = vunpack.c.h.b16 %v390
        %v3164 = vunpack.c.l.b16 %v391
        %v3165 = vunpack.c.h.b16 %v391
        %v3166 = vunpack.c.l.b16 %v392
        %v3167 = vunpack.c.h.b16 %v392
        %v3168 = vunpack.c.l.b16 %v393
        %v3169 = vunpack.c.h.b16 %v393
        %v3170 = vunpack.c.l.b16 %v394
        %v3171 = vunpack.c.h.b16 %v394
        %v3172 = vunpack.c.l.b16 %v395
        %v3173 = vunpack.c.h.b16 %v395
        %v3174 = vunpack.c.l.b16 %v396
        %v3175 = vunpack.c.h.b16 %v396
        %v3176 = vunpack.c.l.b16 %v397
        %v3177 = vunpack.c.h.b16 %v397
        %v3178 = vunpack.c.l.b16 %v398
        %v3179 = vunpack.c.l.b16 %v399
        %v3180 = vunpack.c.h.b16 %v399
        %v3181 = vunpack.c.l.b16 %v400
        %v3182 = vunpack.c.h.b16 %v400
        %v3183 = vunpack.c.l.b16 %v401
        %v3184 = vunpack.c.h.b16 %v401
        %v3185 = vunpack.c.l.b16 %v402
        %v3186 = vunpack.c.h.b16 %v402
        %v3187 = vunpack.c.l.b16 %v403
        %v3188 = vunpack.c.h.b16 %v403
        %v3189 = vunpack.c.l.b16 %v404
        %v3190 = vunpack.c.h.b16 %v404
        %v3191 = vunpack.c.l.b16 %v405
        %v3192 = vunpack.c.h.b16 %v405
        %v3193 = vunpack.c.l.b16 %v406
        %v3194 = vunpack.c.h.b16 %v406
        %v3195 = vunpack.c.l.b16 %v407
        %v3196 = vunpack.c.h.b16 %v407
        %v3197 = vunpack.c.l.b16 %v408
        %v3198 = vunpack.c.l.b16 %v409
        %v3199 = vunpack.c.h.b16 %v409
        %v3200 = vunpack.c.l.b16 %v410
        %v3201 = vunpack.c.h.b16 %v410
        %v3202 = vunpack.c.l.b16 %v411
        %v3203 = vunpack.c.h.b16 %v411
        %v3204 = vunpack.c.l.b16 %v412
        %v3205 = vunpack.c.h.b16 %v412
        %v3206 = vunpack.c.l.b16 %v413
        %v3207 = vunpack.c.h.b16 %v413
        %v3208 = vunpack.c.l.b16 %v414
        %v3209 = vunpack.c.h.b16 %v414
        %v3210 = vunpack.c.l.b16 %v415
        %v3211 = vunpack.c.h.b16 %v415
        %v3212 = vunpack.c.l.b16 %v416
        %v3213 = vunpack.c.h.b16 %v416
        %v3214 = vunpack.c.l.b16 %v417
        %v3215 = vunpack.c.h.b16 %v417
        %v3216 = vunpack.c.l.b16 %v418
        %v3217 = vunpack.c.l.b16 %v419
        %v3218 = vunpack.c.h.b16 %v419
        %v3219 = vunpack.c.l.b16 %v420
        %v3220 = vunpack.c.h.b16 %v420
        %v3221 = vunpack.c.l.b16 %v421
        %v3222 = vunpack.c.h.b16 %v421
        %v3223 = vunpack.c.l.b16 %v422
        %v3224 = vunpack.c.h.b16 %v422
        %v3225 = vunpack.c.l.b16 %v423
        %v3226 = vunpack.c.h.b16 %v423
        %v3227 = vunpack.c.l.b16 %v424
        %v3228 = vunpack.c.h.b16 %v424
        %v3229 = vunpack.c.l.b16 %v425
        %v3230 = vunpack.c.h.b16 %v425
        %v3231 = vunpack.c.l.b16 %v426
        %v3232 = vunpack.c.h.b16 %v426
        %v3233 = vunpack.c.l.b16 %v427
        %v3234 = vunpack.c.h.b16 %v427
        %v3235 = vunpack.c.l.b16 %v428
        %v3236 = vunpack.c.l.b16 %v429
        %v3237 = vunpack.c.h.b16 %v429
        %v3238 = vunpack.c.l.b16 %v430
        %v3239 = vunpack.c.h.b16 %v430
        %v3240 = vunpack.c.l.b16 %v431
        %v3241 = vunpack.c.h.b16 %v431
        %v3242 = vunpack.c.l.b16 %v432
        %v3243 = vunpack.c.h.b16 %v432
        %v3244 = vunpack.c.l.b16 %v433
        %v3245 = vunpack.c.h.b16 %v433
        %v3246 = vunpack.c.l.b16 %v434
        %v3247 = vunpack.c.h.b16 %v434
        %v3248 = vunpack.c.l.b16 %v435
        %v3249 = vunpack.c.h.b16 %v435
        %v3250 = vunpack.c.l.b16 %v436
        %v3251 = vunpack.c.h.b16 %v436
        %v3252 = vunpack.c.l.b16 %v437
        %v3253 = vunpack.c.h.b16 %v437
        %v3254 = vunpack.c.l.b16 %v438
        %v3255 = vunpack.c.l.b16 %v439
        %v3256 = vunpack.c.h.b16 %v439
        %v3257 = vunpack.c.l.b16 %v440
        %v3258 = vunpack.c.h.b16 %v440
        %v3259 = vunpack.c.l.b16 %v441
        %v3260 = vunpack.c.h.b16 %v441
        %v3261 = vunpack.c.l.b16 %v442
        %v3262 = vunpack.c.h.b16 %v442
        %v3263 = vunpack.c.l.b16 %v443
        %v3264 = vunpack.c.h.b16 %v443
        %v3265 = vunpack.c.l.b16 %v444
        %v3266 = vunpack.c.h.b16 %v444
        %v3267 = vunpack.c.l.b16 %v445
        %v3268 = vunpack.c.h.b16 %v445
        %v3269 = vunpack.c.l.b16 %v446
        %v3270 = vunpack.c.h.b16 %v446
        %v3271 = vunpack.c.l.b16 %v447
        %v3272 = vunpack.c.h.b16 %v447
        %v3273 = vunpack.c.l.b16 %v448
        %v3274 = vunpack.c.l.b16 %v449
        %v3275 = vunpack.c.h.b16 %v449
        %v3276 = vunpack.c.l.b16 %v450
        %v3277 = vunpack.c.h.b16 %v450
        %v3278 = vunpack.c.l.b16 %v451
        %v3279 = vunpack.c.h.b16 %v451
        %v3280 = vunpack.c.l.b16 %v452
        %v3281 = vunpack.c.h.b16 %v452
        %v3282 = vunpack.c.l.b16 %v453
        %v3283 = vunpack.c.h.b16 %v453
        %v3284 = vunpack.c.l.b16 %v454
        %v3285 = vunpack.c.h.b16 %v454
        %v3286 = vunpack.c.l.b16 %v455
        %v3287 = vunpack.c.h.b16 %v455
        %v3288 = vunpack.c.l.b16 %v456
        %v3289 = vunpack.c.h.b16 %v456
        %v3290 = vunpack.c.l.b16 %v457
        %v3291 = vunpack.c.h.b16 %v457
        %v3292 = vunpack.c.l.b16 %v458
        %v3293 = vunpack.c.l.b16 %v459
        %v3294 = vunpack.c.h.b16 %v459
        %v3295 = vunpack.c.l.b16 %v460
        %v3296 = vunpack.c.h.b16 %v460
        %v3297 = vunpack.c.l.b16 %v461
        %v3298 = vunpack.c.h.b16 %v461
        %v3299 = vunpack.c.l.b16 %v462
        %v3300 = vunpack.c.h.b16 %v462
        %v3301 = vunpack.c.l.b16 %v463
        %v3302 = vunpack.c.h.b16 %v463
        %v3303 = vunpack.c.l.b16 %v464
        %v3304 = vunpack.c.h.b16 %v464
        %v3305 = vunpack.c.l.b16 %v465
        %v3306 = vunpack.c.h.b16 %v465
        %v3307 = vunpack.c.l.b16 %v466
        %v3308 = vunpack.c.h.b16 %v466
        %v3309 = vunpack.c.l.b16 %v467
        %v3310 = vunpack.c.h.b16 %v467
        %v3311 = vunpack.c.l.b16 %v468
        %v3312 = vunpack.c.l.b16 %v469
        %v3313 = vunpack.c.h.b16 %v469
        %v3314 = vunpack.c.l.b16 %v470
        %v3315 = vunpack.c.h.b16 %v470
        %v3316 = vunpack.c.l.b16 %v471
        %v3317 = vunpack.c.h.b16 %v471
        %v3318 = vunpack.c.l.b16 %v472
        %v3319 = vunpack.c.h.b16 %v472
        %v3320 = vunpack.c.l.b16 %v473
        %v3321 = vunpack.c.h.b16 %v473
        %v3322 = vunpack.c.l.b16 %v474
        %v3323 = vunpack.c.h.b16 %v474
        %v3324 = vunpack.c.l.b16 %v475
        %v3325 = vunpack.c.h.b16 %v475
        %v3326 = vunpack.c.l.b16 %v476
        %v3327 = vunpack.c.h.b16 %v476
        %v3328 = vunpack.c.l.b16 %v477
        %v3329 = vunpack.c.h.b16 %v477
        %v3330 = vunpack.c.l.b16 %v478
        %v3331 = vunpack.c.l.b16 %v479
        %v3332 = vunpack.c.h.b16 %v479
        %v3333 = vunpack.c.l.b16 %v480
        %v3334 = vunpack.c.h.b16 %v480
        %v3335 = vunpack.c.l.b16 %v481
        %v3336 = vunpack.c.h.b16 %v481
        %v3337 = vunpack.c.l.b16 %v482
        %v3338 = vunpack.c.h.b16 %v482
        %v3339 = vunpack.c.l.b16 %v483
        %v3340 = vunpack.c.h.b16 %v483
        %v3341 = vunpack.c.l.b16 %v484
        %v3342 = vunpack.c.h.b16 %v484
        %v3343 = vunpack.c.l.b16 %v485
        %v3344 = vunpack.c.h.b16 %v485
        %v3345 = vunpack.c.l.b16 %v486
        %v3346 = vunpack.c.h.b16 %v486
        %v3347 = vunpack.c.l.b16 %v487
        %v3348 = vunpack.c.h.b16 %v487
        %v3349 = vunpack.c.l.b16 %v488
        %v3350 = vunpack.c.l.b16 %v489
        %v3351 = vunpack.c.h.b16 %v489
        %v3352 = vunpack.c.l.b16 %v490
        %v3353 = vunpack.c.h.b16 %v490
        %v3354 = vunpack.c.l.b16 %v491
        %v3355 = vunpack.c.h.b16 %v491
        %v3356 = vunpack.c.l.b16 %v492
        %v3357 = vunpack.c.h.b16 %v492
        %v3358 = vunpack.c.l.b16 %v493
        %v3359 = vunpack.c.h.b16 %v493
        %v3360 = vunpack.c.l.b16 %v494
        %v3361 = vunpack.c.h.b16 %v494
        %v3362 = vunpack.c.l.b16 %v495
        %v3363 = vunpack.c.h.b16 %v495
        %v3364 = vunpack.c.l.b16 %v496
        %v3365 = vunpack.c.h.b16 %v496
        %v3366 = vunpack.c.l.b16 %v497
        %v3367 = vunpack.c.h.b16 %v497
        %v3368 = vunpack.c.l.b16 %v498
        %v3369 = vunpack.c.l.b16 %v499
        %v3370 = vunpack.c.h.b16 %v499
        %v3371 = vunpack.c.l.b16 %v500
        %v3372 = vunpack.c.h.b16 %v500
        %v3373 = vunpack.c.l.b16 %v501
        %v3374 = vunpack.c.h.b16 %v501
        %v3375 = vunpack.c.l.b16 %v502
        %v3376 = vunpack.c.h.b16 %v502
        %v3377 = vunpack.c.l.b16 %v503
        %v3378 = vunpack.c.h.b16 %v503
        %v3379 = vunpack.c.l.b16 %v504
        %v3380 = vunpack.c.h.b16 %v504
        %v3381 = vunpack.c.l.b16 %v505
        %v3382 = vunpack.c.h.b16 %v505
        %v3383 = vunpack.c.l.b16 %v506
        %v3384 = vunpack.c.h.b16 %v506
        %v3385 = vunpack.c.l.b16 %v507
        %v3386 = vunpack.c.h.b16 %v507
        %v3387 = vunpack.c.l.b16 %v508
        %v3388 = vunpack.c.l.b16 %v509
        %v3389 = vunpack.c.h.b16 %v509
        %v3390 = vunpack.c.l.b16 %v510
        %v3391 = vunpack.c.h.b16 %v510
        %v3392 = vunpack.c.l.b16 %v511
        %v3393 = vunpack.c.h.b16 %v511
        %v3394 = vunpack.c.l.b16 %v512
        %v3395 = vunpack.c.h.b16 %v512
        %v3396 = vunpack.c.l.b16 %v513
        %v3397 = vunpack.c.h.b16 %v513
        %v3398 = vunpack.c.l.b16 %v514
        %v3399 = vunpack.c.h.b16 %v514
        %v3400 = vunpack.c.l.b16 %v515
        %v3401 = vunpack.c.h.b16 %v515
        %v3402 = vunpack.c.l.b16 %v516
        %v3403 = vunpack.c.h.b16 %v516
        %v3404 = vunpack.c.l.b16 %v517
        %v3405 = vunpack.c.h.b16 %v517
        %v3406 = vunpack.c.l.b16 %v518
        %v3407 = vunpack.c.l.b16 %v519
        %v3408 = vunpack.c.h.b16 %v519
        %v3409 = vunpack.c.l.b16 %v520
        %v3410 = vunpack.c.h.b16 %v520
        %v3411 = vunpack.c.l.b16 %v521
        %v3412 = vunpack.c.h.b16 %v521
        %v3413 = vunpack.c.l.b16 %v522
        %v3414 = vunpack.c.h.b16 %v522
        %v3415 = vunpack.c.l.b16 %v523
        %v3416 = vunpack.c.h.b16 %v523
        %v3417 = vunpack.c.l.b16 %v524
        %v3418 = vunpack.c.h.b16 %v524
        %v3419 = vunpack.c.l.b16 %v525
        %v3420 = vunpack.c.h.b16 %v525
        %v3421 = vunpack.c.l.b16 %v526
        %v3422 = vunpack.c.h.b16 %v526
        %v3423 = vunpack.c.l.b16 %v527
        %v3424 = vunpack.c.h.b16 %v527
        %v3425 = vunpack.c.l.b16 %v528
        %v3426 = vunpack.c.l.b16 %v529
        %v3427 = vunpack.c.h.b16 %v529
        %v3428 = vunpack.c.l.b16 %v530
        %v3429 = vunpack.c.h.b16 %v530
        %v3430 = vunpack.c.l.b16 %v531
        %v3431 = vunpack.c.h.b16 %v531
        %v3432 = vunpack.c.l.b16 %v532
        %v3433 = vunpack.c.h.b16 %v532
        %v3434 = vunpack.c.l.b16 %v533
        %v3435 = vunpack.c.h.b16 %v533
        %v3436 = vunpack.c.l.b16 %v534
        %v3437 = vunpack.c.h.b16 %v534
        %v3438 = vunpack.c.l.b16 %v535
        %v3439 = vunpack.c.h.b16 %v535
        %v3440 = vunpack.c.l.b16 %v536
        %v3441 = vunpack.c.h.b16 %v536
        %v3442 = vunpack.c.l.b16 %v537
        %v3443 = vunpack.c.h.b16 %v537
        %v3444 = vunpack.c.l.b16 %v538
        %v3445 = vunpack.c.l.b16 %v539
        %v3446 = vunpack.c.h.b16 %v539
        %v3447 = vunpack.c.l.b16 %v540
        %v3448 = vunpack.c.h.b16 %v540
        %v3449 = vunpack.c.l.b16 %v541
        %v3450 = vunpack.c.h.b16 %v541
        %v3451 = vunpack.c.l.b16 %v542
        %v3452 = vunpack.c.h.b16 %v542
        %v3453 = vunpack.c.l.b16 %v543
        %v3454 = vunpack.c.h.b16 %v543
        %v3455 = vunpack.c.l.b16 %v544
        %v3456 = vunpack.c.h.b16 %v544
        %v3457 = vunpack.c.l.b16 %v545
        %v3458 = vunpack.c.h.b16 %v545
        %v3459 = vunpack.c.l.b16 %v546
        %v3460 = vunpack.c.h.b16 %v546
        %v3461 = vunpack.c.l.b16 %v547
        %v3462 = vunpack.c.h.b16 %v547
        %v3463 = vunpack.c.l.b16 %v548
        %v3464 = vunpack.c.l.b16 %v549
        %v3465 = vunpack.c.h.b16 %v549
        %v3466 = vunpack.c.l.b16 %v550
        %v3467 = vunpack.c.h.b16 %v550
        %v3468 = vunpack.c.l.b16 %v551
        %v3469 = vunpack.c.h.b16 %v551
        %v3470 = vunpack.c.l.b16 %v552
        %v3471 = vunpack.c.h.b16 %v552
        %v3472 = vunpack.c.l.b16 %v553
        %v3473 = vunpack.c.h.b16 %v553
        %v3474 = vunpack.c.l.b16 %v554
        %v3475 = vunpack.c.h.b16 %v554
        %v3476 = vunpack.c.l.b16 %v555
        %v3477 = vunpack.c.h.b16 %v555
        %v3478 = vunpack.c.l.b16 %v556
        %v3479 = vunpack.c.h.b16 %v556
        %v3480 = vunpack.c.l.b16 %v557
        %v3481 = vunpack.c.h.b16 %v557
        %v3482 = vunpack.c.l.b16 %v558
        %v3483 = vunpack.c.l.b16 %v559
        %v3484 = vunpack.c.h.b16 %v559
        %v3485 = vunpack.c.l.b16 %v560
        %v3486 = vunpack.c.h.b16 %v560
        %v3487 = vunpack.c.l.b16 %v561
        %v3488 = vunpack.c.h.b16 %v561
        %v3489 = vunpack.c.l.b16 %v562
        %v3490 = vunpack.c.h.b16 %v562
        %v3491 = vunpack.c.l.b16 %v563
        %v3492 = vunpack.c.h.b16 %v563
        %v3493 = vunpack.c.l.b16 %v564
        %v3494 = vunpack.c.h.b16 %v564
        %v3495 = vunpack.c.l.b16 %v565
        %v3496 = vunpack.c.h.b16 %v565
        %v3497 = vunpack.c.l.b16 %v566
        %v3498 = vunpack.c.h.b16 %v566
        %v3499 = vunpack.c.l.b16 %v567
        %v3500 = vunpack.c.h.b16 %v567
        %v3501 = vunpack.c.l.b16 %v568
        %v3502 = vunpack.c.l.b16 %v569
        %v3503 = vunpack.c.h.b16 %v569
        %v3504 = vunpack.c.l.b16 %v570
        %v3505 = vunpack.c.h.b16 %v570
        %v3506 = vunpack.c.l.b16 %v571
        %v3507 = vunpack.c.h.b16 %v571
        %v3508 = vunpack.c.l.b16 %v572
        %v3509 = vunpack.c.h.b16 %v572
        %v3510 = vunpack.c.l.b16 %v573
        %v3511 = vunpack.c.h.b16 %v573
        %v3512 = vunpack.c.l.b16 %v574
        %v3513 = vunpack.c.h.b16 %v574
        %v3514 = vunpack.c.l.b16 %v575
        %v3515 = vunpack.c.h.b16 %v575
        %v3516 = vunpack.c.l.b16 %v576
        %v3517 = vunpack.c.h.b16 %v576
        %v3518 = vunpack.c.l.b16 %v577
        %v3519 = vunpack.c.h.b16 %v577
        %v3520 = vunpack.c.l.b16 %v578
        %v3521 = vunpack.c.l.b16 %v579
        %v3522 = vunpack.c.h.b16 %v579
        %v3523 = vunpack.c.l.b16 %v580
        %v3524 = vunpack.c.h.b16 %v580
        %v3525 = vunpack.c.l.b16 %v581
        %v3526 = vunpack.c.h.b16 %v581
        %v3527 = vunpack.c.l.b16 %v582
        %v3528 = vunpack.c.h.b16 %v582
        %v3529 = vunpack.c.l.b16 %v583
        %v3530 = vunpack.c.h.b16 %v583
        %v3531 = vunpack.c.l.b16 %v584
        %v3532 = vunpack.c.h.b16 %v584
        %v3533 = vunpack.c.l.b16 %v585
        %v3534 = vunpack.c.h.b16 %v585
        %v3535 = vunpack.c.l.b16 %v586
        %v3536 = vunpack.c.h.b16 %v586
        %v3537 = vunpack.c.l.b16 %v587
        %v3538 = vunpack.c.h.b16 %v587
        %v3539 = vunpack.c.l.b16 %v588
        %v3540 = vunpack.c.l.b16 %v589
        %v3541 = vunpack.c.h.b16 %v589
        %v3542 = vunpack.c.l.b16 %v590
        %v3543 = vunpack.c.h.b16 %v590
        %v3544 = vunpack.c.l.b16 %v591
        %v3545 = vunpack.c.h.b16 %v591
        %v3546 = vunpack.c.l.b16 %v592
        %v3547 = vunpack.c.h.b16 %v592
        %v3548 = vunpack.c.l.b16 %v593
        %v3549 = vunpack.c.h.b16 %v593
        %v3550 = vunpack.c.l.b16 %v594
        %v3551 = vunpack.c.h.b16 %v594
        %v3552 = vunpack.c.l.b16 %v595
        %v3553 = vunpack.c.h.b16 %v595
        %v3554 = vunpack.c.l.b16 %v596
        %v3555 = vunpack.c.h.b16 %v596
        %v3556 = vunpack.c.l.b16 %v597
        %v3557 = vunpack.c.h.b16 %v597
        %v3558 = vunpack.c.l.b16 %v598
        %v3559 = vunpack.c.l.b16 %v599
        %v3560 = vunpack.c.h.b16 %v599
        %v3561 = vunpack.c.l.b16 %v600
        %v3562 = vunpack.c.h.b16 %v600
        %v3563 = vunpack.c.l.b16 %v601
        %v3564 = vunpack.c.h.b16 %v601
        %v3565 = vunpack.c.l.b16 %v602
        %v3566 = vunpack.c.h.b16 %v602
        %v3567 = vunpack.c.l.b16 %v603
        %v3568 = vunpack.c.h.b16 %v603
        %v3569 = vunpack.c.l.b16 %v604
        %v3570 = vunpack.c.h.b16 %v604
        %v3571 = vunpack.c.l.b16 %v605
        %v3572 = vunpack.c.h.b16 %v605
        %v3573 = vunpack.c.l.b16 %v606
        %v3574 = vunpack.c.h.b16 %v606
        %v3575 = vunpack.c.l.b16 %v607
        %v3576 = vunpack.c.h.b16 %v607
        %v3577 = vunpack.c.l.b16 %v608
        %v3578 = vunpack.c.l.b16 %v609
        %v3579 = vunpack.c.h.b16 %v609
        %v3580 = vunpack.c.l.b16 %v610
        %v3581 = vunpack.c.h.b16 %v610
        %v3582 = vunpack.c.l.b16 %v611
        %v3583 = vunpack.c.h.b16 %v611
        %v3584 = vunpack.c.l.b16 %v612
        %v3585 = vunpack.c.h.b16 %v612
        %v3586 = vunpack.c.l.b16 %v613
        %v3587 = vunpack.c.h.b16 %v613
        %v3588 = vunpack.c.l.b16 %v614
        %v3589 = vunpack.c.h.b16 %v614
        %v3590 = vunpack.c.l.b16 %v615
        %v3591 = vunpack.c.h.b16 %v615
        %v3592 = vunpack.c.l.b16 %v616
        %v3593 = vunpack.c.h.b16 %v616
        %v3594 = vunpack.c.l.b16 %v617
        %v3595 = vunpack.c.h.b16 %v617
        %v3596 = vunpack.c.l.b16 %v618
        %v3597 = vunpack.c.l.b16 %v619
        %v3598 = vunpack.c.h.b16 %v619
        %v3599 = vunpack.c.l.b16 %v620
        %v3600 = vunpack.c.h.b16 %v620
        %v3601 = vunpack.c.l.b16 %v621
        %v3602 = vunpack.c.h.b16 %v621
        %v3603 = vunpack.c.l.b16 %v622
        %v3604 = vunpack.c.h.b16 %v622
        %v3605 = vunpack.c.l.b16 %v623
        %v3606 = vunpack.c.h.b16 %v623
        %v3607 = vunpack.c.l.b16 %v624
        %v3608 = vunpack.c.h.b16 %v624
        %v3609 = vunpack.c.l.b16 %v625
        %v3610 = vunpack.c.h.b16 %v625
        %v3611 = vunpack.c.l.b16 %v626
        %v3612 = vunpack.c.h.b16 %v626
        %v3613 = vunpack.c.l.b16 %v627
        %v3614 = vunpack.c.h.b16 %v627
        %v3615 = vunpack.c.l.b16 %v628
        %v3616 = vunpack.c.l.b16 %v629
        %v3617 = vunpack.c.h.b16 %v629
        %v3618 = vunpack.c.l.b16 %v630
        %v3619 = vunpack.c.h.b16 %v630
        %v3620 = vunpack.c.l.b16 %v631
        %v3621 = vunpack.c.h.b16 %v631
        %v3622 = vunpack.c.l.b16 %v632
        %v3623 = vunpack.c.h.b16 %v632
        %v3624 = vunpack.c.l.b16 %v633
        %v3625 = vunpack.c.h.b16 %v633
        %v3626 = vunpack.c.l.b16 %v634
        %v3627 = vunpack.c.h.b16 %v634
        %v3628 = vunpack.c.l.b16 %v635
        %v3629 = vunpack.c.h.b16 %v635
        %v3630 = vunpack.c.l.b16 %v636
        %v3631 = vunpack.c.h.b16 %v636
        %v3632 = vunpack.c.l.b16 %v637
        %v3633 = vunpack.c.h.b16 %v637
        %v3634 = vunpack.c.l.b16 %v638
        %v3635 = vunpack.c.l.b16 %v639
        %v3636 = vunpack.c.h.b16 %v639
        %v3637 = vunpack.c.l.b16 %v640
        %v3638 = vunpack.c.h.b16 %v640
        %v3639 = vunpack.c.l.b16 %v641
        %v3640 = vunpack.c.h.b16 %v641
        %v3641 = vunpack.c.l.b16 %v642
        %v3642 = vunpack.c.h.b16 %v642
        %v3643 = vunpack.c.l.b16 %v643
        %v3644 = vunpack.c.h.b16 %v643
        %v3645 = vunpack.c.l.b16 %v644
        %v3646 = vunpack.c.h.b16 %v644
        %v3647 = vunpack.c.l.b16 %v645
        %v3648 = vunpack.c.h.b16 %v645
        %v3649 = vunpack.c.l.b16 %v646
        %v3650 = vunpack.c.h.b16 %v646
        %v3651 = vunpack.c.l.b16 %v647
        %v3652 = vunpack.c.h.b16 %v647
        %v3653 = vunpack.c.l.b16 %v648
        %v3654 = vunpack.c.l.b16 %v649
        %v3655 = vunpack.c.h.b16 %v649
        %v3656 = vunpack.c.l.b16 %v650
        %v3657 = vunpack.c.h.b16 %v650
        %v3658 = vunpack.c.l.b16 %v651
        %v3659 = vunpack.c.h.b16 %v651
        %v3660 = vunpack.c.l.b16 %v652
        %v3661 = vunpack.c.h.b16 %v652
        %v3662 = vunpack.c.l.b16 %v653
        %v3663 = vunpack.c.h.b16 %v653
        %v3664 = vunpack.c.l.b16 %v654
        %v3665 = vunpack.c.h.b16 %v654
        %v3666 = vunpack.c.l.b16 %v655
        %v3667 = vunpack.c.h.b16 %v655
        %v3668 = vunpack.c.l.b16 %v656
        %v3669 = vunpack.c.h.b16 %v656
        %v3670 = vunpack.c.l.b16 %v657
        %v3671 = vunpack.c.h.b16 %v657
        %v3672 = vunpack.c.l.b16 %v658
        %v3673 = vunpack.c.l.b16 %v659
        %v3674 = vunpack.c.h.b16 %v659
        %v3675 = vunpack.c.l.b16 %v660
        %v3676 = vunpack.c.h.b16 %v660
        %v3677 = vunpack.c.l.b16 %v661
        %v3678 = vunpack.c.h.b16 %v661
        %v3679 = vunpack.c.l.b16 %v662
        %v3680 = vunpack.c.h.b16 %v662
        %v3681 = vunpack.c.l.b16 %v663
        %v3682 = vunpack.c.h.b16 %v663
        %v3683 = vunpack.c.l.b16 %v664
        %v3684 = vunpack.c.h.b16 %v664
        %v3685 = vunpack.c.l.b16 %v665
        %v3686 = vunpack.c.h.b16 %v665
        %v3687 = vunpack.c.l.b16 %v666
        %v3688 = vunpack.c.h.b16 %v666
        %v3689 = vunpack.c.l.b16 %v667
        %v3690 = vunpack.c.h.b16 %v667
        %v3691 = vunpack.c.l.b16 %v668
        %v3692 = vunpack.c.l.b16 %v669
        %v3693 = vunpack.c.h.b16 %v669
        %v3694 = vunpack.c.l.b16 %v670
        %v3695 = vunpack.c.h.b16 %v670
        %v3696 = vunpack.c.l.b16 %v671
        %v3697 = vunpack.c.h.b16 %v671
        %v3698 = vunpack.c.l.b16 %v672
        %v3699 = vunpack.c.h.b16 %v672
        %v3700 = vunpack.c.l.b16 %v673
        %v3701 = vunpack.c.h.b16 %v673
        %v3702 = vunpack.c.l.b16 %v674
        %v3703 = vunpack.c.h.b16 %v674
        %v3704 = vunpack.c.l.b16 %v675
        %v3705 = vunpack.c.h.b16 %v675
        %v3706 = vunpack.c.l.b16 %v676
        %v3707 = vunpack.c.h.b16 %v676
        %v3708 = vunpack.c.l.b16 %v677
        %v3709 = vunpack.c.h.b16 %v677
        %v3710 = vunpack.c.l.b16 %v678
        %v3711 = vunpack.c.l.b16 %v679
        %v3712 = vunpack.c.h.b16 %v679
        %v3713 = vunpack.c.l.b16 %v680
        %v3714 = vunpack.c.h.b16 %v680
        %v3715 = vunpack.c.l.b16 %v681
        %v3716 = vunpack.c.h.b16 %v681
        %v3717 = vunpack.c.l.b16 %v682
        %v3718 = vunpack.c.h.b16 %v682
        %v3719 = vunpack.c.l.b16 %v683
        %v3720 = vunpack.c.h.b16 %v683
        %v3721 = vunpack.c.l.b16 %v684
        %v3722 = vunpack.c.h.b16 %v684
        %v3723 = vunpack.c.l.b16 %v685
        %v3724 = vunpack.c.h.b16 %v685
        %v3725 = vunpack.c.l.b16 %v686
        %v3726 = vunpack.c.h.b16 %v686
        %v3727 = vunpack.c.l.b16 %v687
        %v3728 = vunpack.c.h.b16 %v687
        %v3729 = vunpack.c.l.b16 %v688
        %v3730 = vunpack.c.l.b16 %v689
        %v3731 = vunpack.c.h.b16 %v689
        %v3732 = vunpack.c.l.b16 %v690
        %v3733 = vunpack.c.h.b16 %v690
        %v3734 = vunpack.c.l.b16 %v691
        %v3735 = vunpack.c.h.b16 %v691
        %v3736 = vunpack.c.l.b16 %v692
        %v3737 = vunpack.c.h.b16 %v692
        %v3738 = vunpack.c.l.b16 %v693
        %v3739 = vunpack.c.h.b16 %v693
        %v3740 = vunpack.c.l.b16 %v694
        %v3741 = vunpack.c.h.b16 %v694
        %v3742 = vunpack.c.l.b16 %v695
        %v3743 = vunpack.c.h.b16 %v695
        %v3744 = vunpack.c.l.b16 %v696
        %v3745 = vunpack.c.h.b16 %v696
        %v3746 = vunpack.c.l.b16 %v697
        %v3747 = vunpack.c.h.b16 %v697
        %v3748 = vunpack.c.l.b16 %v698
        %v3749 = vunpack.c.l.b16 %v699
        %v3750 = vunpack.c.h.b16 %v699
        %v3751 = vunpack.c.l.b16 %v700
        %v3752 = vunpack.c.h.b16 %v700
        %v3753 = vunpack.c.l.b16 %v701
        %v3754 = vunpack.c.h.b16 %v701
        %v3755 = vunpack.c.l.b16 %v702
        %v3756 = vunpack.c.h.b16 %v702
        %v3757 = vunpack.c.l.b16 %v703
        %v3758 = vunpack.c.h.b16 %v703
        %v3759 = vunpack.c.l.b16 %v704
        %v3760 = vunpack.c.h.b16 %v704
        %v3761 = vunpack.c.l.b16 %v705
        %v3762 = vunpack.c.h.b16 %v705
        %v3763 = vunpack.c.l.b16 %v706
        %v3764 = vunpack.c.h.b16 %v706
        %v3765 = vunpack.c.l.b16 %v707
        %v3766 = vunpack.c.h.b16 %v707
        %v3767 = vunpack.c.l.b16 %v708
        %v3768 = vunpack.c.l.b16 %v709
        %v3769 = vunpack.c.h.b16 %v709
        %v3770 = vunpack.c.l.b16 %v710
        %v3771 = vunpack.c.h.b16 %v710
        %v3772 = vunpack.c.l.b16 %v711
        %v3773 = vunpack.c.h.b16 %v711
        %v3774 = vunpack.c.l.b16 %v712
        %v3775 = vunpack.c.h.b16 %v712
        %v3776 = vunpack.c.l.b16 %v713
        %v3777 = vunpack.c.h.b16 %v713
        %v3778 = vunpack.c.l.b16 %v714
        %v3779 = vunpack.c.h.b16 %v714
        %v3780 = vunpack.c.l.b16 %v715
        %v3781 = vunpack.c.h.b16 %v715
        %v3782 = vunpack.c.l.b16 %v716
        %v3783 = vunpack.c.h.b16 %v716
        %v3784 = vunpack.c.l.b16 %v717
        %v3785 = vunpack.c.h.b16 %v717
        %v3786 = vunpack.c.l.b16 %v718
        %v3787 = vunpack.c.l.b16 %v719
        %v3788 = vunpack.c.h.b16 %v719
        %v3789 = vunpack.c.l.b16 %v720
        %v3790 = vunpack.c.h.b16 %v720
        %v3791 = vunpack.c.l.b16 %v721
        %v3792 = vunpack.c.h.b16 %v721
        %v3793 = vunpack.c.l.b16 %v722
        %v3794 = vunpack.c.h.b16 %v722
        %v3795 = vunpack.c.l.b16 %v723
        %v3796 = vunpack.c.h.b16 %v723
        %v3797 = vunpack.c.l.b16 %v724
        %v3798 = vunpack.c.h.b16 %v724
        %v3799 = vunpack.c.l.b16 %v725
        %v3800 = vunpack.c.h.b16 %v725
        %v3801 = vunpack.c.l.b16 %v726
        %v3802 = vunpack.c.h.b16 %v726
        %v3803 = vunpack.c.l.b16 %v727
        %v3804 = vunpack.c.h.b16 %v727
        %v3805 = vunpack.c.l.b16 %v728
        %v3806 = vunpack.c.l.b16 %v729
        %v3807 = vunpack.c.h.b16 %v729
        %v3808 = vunpack.c.l.b16 %v730
        %v3809 = vunpack.c.h.b16 %v730
        %v3810 = vunpack.c.l.b16 %v731
        %v3811 = vunpack.c.h.b16 %v731
        %v3812 = vunpack.c.l.b16 %v732
        %v3813 = vunpack.c.h.b16 %v732
        %v3814 = vunpack.c.l.b16 %v733
        %v3815 = vunpack.c.h.b16 %v733
        %v3816 = vunpack.c.l.b16 %v734
        %v3817 = vunpack.c.h.b16 %v734
        %v3818 = vunpack.c.l.b16 %v735
        %v3819 = vunpack.c.h.b16 %v735
        %v3820 = vunpack.c.l.b16 %v736
        %v3821 = vunpack.c.h.b16 %v736
        %v3822 = vunpack.c.l.b16 %v737
        %v3823 = vunpack.c.h.b16 %v737
        %v3824 = vunpack.c.l.b16 %v738
        %v3825 = vunpack.c.l.b16 %v739
        %v3826 = vunpack.c.h.b16 %v739
        %v3827 = vunpack.c.l.b16 %v740
        %v3828 = vunpack.c.h.b16 %v740
        %v3829 = vunpack.c.l.b16 %v741
        %v3830 = vunpack.c.h.b16 %v741
        %v3831 = vunpack.c.l.b16 %v742
        %v3832 = vunpack.c.h.b16 %v742
        %v3833 = vunpack.c.l.b16 %v743
        %v3834 = vunpack.c.h.b16 %v743
        %v3835 = vunpack.c.l.b16 %v744
        %v3836 = vunpack.c.h.b16 %v744
        %v3837 = vunpack.c.l.b16 %v745
        %v3838 = vunpack.c.h.b16 %v745
        %v3839 = vunpack.c.l.b16 %v746
        %v3840 = vunpack.c.h.b16 %v746
        %v3841 = vunpack.c.l.b16 %v747
        %v3842 = vunpack.c.h.b16 %v747
        %v3843 = vunpack.c.l.b16 %v748
        %v3844 = vunpack.c.l.b16 %v749
        %v3845 = vunpack.c.h.b16 %v749
        %v3846 = vunpack.c.l.b16 %v750
        %v3847 = vunpack.c.h.b16 %v750
        %v3848 = vunpack.c.l.b16 %v751
        %v3849 = vunpack.c.h.b16 %v751
        %v3850 = vunpack.c.l.b16 %v752
        %v3851 = vunpack.c.h.b16 %v752
        %v3852 = vunpack.c.l.b16 %v753
        %v3853 = vunpack.c.h.b16 %v753
        %v3854 = vunpack.c.l.b16 %v754
        %v3855 = vunpack.c.h.b16 %v754
        %v3856 = vunpack.c.l.b16 %v755
        %v3857 = vunpack.c.h.b16 %v755
        %v3858 = vunpack.c.l.b16 %v756
        %v3859 = vunpack.c.h.b16 %v756
        %v3860 = vunpack.c.l.b16 %v757
        %v3861 = vunpack.c.h.b16 %v757
        %v3862 = vunpack.c.l.b16 %v758
        %v3863 = vunpack.c.l.b16 %v759
        %v3864 = vunpack.c.h.b16 %v759
        %v3865 = vunpack.c.l.b16 %v760
        %v3866 = vunpack.c.h.b16 %v760
        %v3867 = vunpack.c.l.b16 %v761
        %v3868 = vunpack.c.h.b16 %v761
        %v3869 = vunpack.c.l.b16 %v762
        %v3870 = vunpack.c.h.b16 %v762
        %v3871 = vunpack.c.l.b16 %v763
        %v3872 = vunpack.c.h.b16 %v763
        %v3873 = vunpack.c.l.b16 %v764
        %v3874 = vunpack.c.h.b16 %v764
        %v3875 = vunpack.c.l.b16 %v765
        %v3876 = vunpack.c.h.b16 %v765
        %v3877 = vunpack.c.l.b16 %v766
        %v3878 = vunpack.c.h.b16 %v766
        %v3879 = vunpack.c.l.b16 %v767
        %v3880 = vunpack.c.h.b16 %v767
        %v3881 = vunpack.c.l.b16 %v768
        %v3882 = vunpack.c.l.b16 %v769
        %v3883 = vunpack.c.h.b16 %v769
        %v3884 = vunpack.c.l.b16 %v770
        %v3885 = vunpack.c.h.b16 %v770
        %v3886 = vunpack.c.l.b16 %v771
        %v3887 = vunpack.c.h.b16 %v771
        %v3888 = vunpack.c.l.b16 %v772
        %v3889 = vunpack.c.h.b16 %v772
        %v3890 = vunpack.c.l.b16 %v773
        %v3891 = vunpack.c.h.b16 %v773
        %v3892 = vunpack.c.l.b16 %v774
        %v3893 = vunpack.c.h.b16 %v774
        %v3894 = vunpack.c.l.b16 %v775
        %v3895 = vunpack.c.h.b16 %v775
        %v3896 = vunpack.c.l.b16 %v776
        %v3897 = vunpack.c.h.b16 %v776
        %v3898 = vunpack.c.l.b16 %v777
        %v3899 = vunpack.c.h.b16 %v777
        %v3900 = vunpack.c.l.b16 %v778
        %v3901 = vunpack.c.l.b16 %v779
        %v3902 = vunpack.c.h.b16 %v779
        %v3903 = vunpack.c.l.b16 %v780
        %v3904 = vunpack.c.h.b16 %v780
        %v3905 = vunpack.c.l.b16 %v781
        %v3906 = vunpack.c.h.b16 %v781
        %v3907 = vunpack.c.l.b16 %v782
        %v3908 = vunpack.c.h.b16 %v782
        %v3909 = vunpack.c.l.b16 %v783
        %v3910 = vunpack.c.h.b16 %v783
        %v3911 = vunpack.c.l.b16 %v784
        %v3912 = vunpack.c.h.b16 %v784
        %v3913 = vunpack.c.l.b16 %v785
        %v3914 = vunpack.c.h.b16 %v785
        %v3915 = vunpack.c.l.b16 %v786
        %v3916 = vunpack.c.h.b16 %v786
        %v3917 = vunpack.c.l.b16 %v787
        %v3918 = vunpack.c.h.b16 %v787
        %v3919 = vunpack.c.l.b16 %v788
        %v3920 = vunpack.c.l.b16 %v789
        %v3921 = vunpack.c.h.b16 %v789
        %v3922 = vunpack.c.l.b16 %v790
        %v3923 = vunpack.c.h.b16 %v790
        %v3924 = vunpack.c.l.b16 %v791
        %v3925 = vunpack.c.h.b16 %v791
        %v3926 = vunpack.c.l.b16 %v792
        %v3927 = vunpack.c.h.b16 %v792
        %v3928 = vunpack.c.l.b16 %v793
        %v3929 = vunpack.c.h.b16 %v793
        %v3930 = vunpack.c.l.b16 %v794
        %v3931 = vunpack.c.h.b16 %v794
        %v3932 = vunpack.c.l.b16 %v795
        %v3933 = vunpack.c.h.b16 %v795
        %v3934 = vunpack.c.l.b16 %v796
        %v3935 = vunpack.c.h.b16 %v796
        %v3936 = vunpack.c.l.b16 %v797
        %v3937 = vunpack.c.h.b16 %v797
        %v3938 = vunpack.c.l.b16 %v798
        %v3939 = vunpack.c.l.b16 %v799
        %v3940 = vunpack.c.h.b16 %v799
        %v3941 = vunpack.c.l.b16 %v800
        %v3942 = vunpack.c.h.b16 %v800
        %v3943 = vunpack.c.l.b16 %v801
        %v3944 = vunpack.c.h.b16 %v801
        %v3945 = vunpack.c.l.b16 %v802
        %v3946 = vunpack.c.h.b16 %v802
        %v3947 = vunpack.c.l.b16 %v803
        %v3948 = vunpack.c.h.b16 %v803
        %v3949 = vunpack.c.l.b16 %v804
        %v3950 = vunpack.c.h.b16 %v804
        %v3951 = vunpack.c.l.b16 %v805
        %v3952 = vunpack.c.h.b16 %v805
        %v3953 = vunpack.c.l.b16 %v806
        %v3954 = vunpack.c.h.b16 %v806
        %v3955 = vunpack.c.l.b16 %v807
        %v3956 = vunpack.c.h.b16 %v807
        %v3957 = vunpack.c.l.b16 %v808
        %v3958 = vunpack.c.l.b16 %v809
        %v3959 = vunpack.c.h.b16 %v809
        %v3960 = vunpack.c.l.b16 %v810
        %v3961 = vunpack.c.h.b16 %v810
        %v3962 = vunpack.c.l.b16 %v811
        %v3963 = vunpack.c.h.b16 %v811
        %v3964 = vunpack.c.l.b16 %v812
        %v3965 = vunpack.c.h.b16 %v812
        %v3966 = vunpack.c.l.b16 %v813
        %v3967 = vunpack.c.h.b16 %v813
        %v3968 = vunpack.c.l.b16 %v814
        %v3969 = vunpack.c.h.b16 %v814
        %v3970 = vunpack.c.l.b16 %v815
        %v3971 = vunpack.c.h.b16 %v815
        %v3972 = vunpack.c.l.b16 %v816
        %v3973 = vunpack.c.h.b16 %v816
        %v3974 = vunpack.c.l.b16 %v817
        %v3975 = vunpack.c.h.b16 %v817
        %v3976 = vunpack.c.l.b16 %v818
        %v3977 = vunpack.c.l.b16 %v819
        %v3978 = vunpack.c.h.b16 %v819
        %v3979 = vunpack.c.l.b16 %v820
        %v3980 = vunpack.c.h.b16 %v820
        %v3981 = vunpack.c.l.b16 %v821
        %v3982 = vunpack.c.h.b16 %v821
        %v3983 = vunpack.c.l.b16 %v822
        %v3984 = vunpack.c.h.b16 %v822
        %v3985 = vunpack.c.l.b16 %v823
        %v3986 = vunpack.c.h.b16 %v823
        %v3987 = vunpack.c.l.b16 %v824
        %v3988 = vunpack.c.h.b16 %v824
        %v3989 = vunpack.c.l.b16 %v825
        %v3990 = vunpack.c.h.b16 %v825
        %v3991 = vunpack.c.l.b16 %v826
        %v3992 = vunpack.c.h.b16 %v826
        %v3993 = vunpack.c.l.b16 %v827
        %v3994 = vunpack.c.h.b16 %v827
        %v3995 = vunpack.c.l.b16 %v828
        %v3996 = vunpack.c.l.b16 %v829
        %v3997 = vunpack.c.h.b16 %v829
        %v3998 = vunpack.c.l.b16 %v830
        %v3999 = vunpack.c.h.b16 %v830
        %v4000 = vunpack.c.l.b16 %v831
        %v4001 = vunpack.c.h.b16 %v831
        %v4002 = vunpack.c.l.b16 %v832
        %v4003 = vunpack.c.h.b16 %v832
        %v4004 = vunpack.c.l.b16 %v833
        %v4005 = vunpack.c.h.b16 %v833
        %v4006 = vunpack.c.l.b16 %v834
        %v4007 = vunpack.c.h.b16 %v834
        %v4008 = vunpack.c.l.b16 %v835
        %v4009 = vunpack.c.h.b16 %v835
        %v4010 = vunpack.c.l.b16 %v836
        %v4011 = vunpack.c.h.b16 %v836
        %v4012 = vunpack.c.l.b16 %v837
        %v4013 = vunpack.c.h.b16 %v837
        %v4014 = vunpack.c.l.b16 %v838
        %v4015 = vunpack.c.l.b16 %v839
        %v4016 = vunpack.c.h.b16 %v839
        %v4017 = vunpack.c.l.b16 %v840
        %v4018 = vunpack.c.h.b16 %v840
        %v4019 = vunpack.c.l.b16 %v841
        %v4020 = vunpack.c.h.b16 %v841
        %v4021 = vunpack.c.l.b16 %v842
        %v4022 = vunpack.c.h.b16 %v842
        %v4023 = vunpack.c.l.b16 %v843
        %v4024 = vunpack.c.h.b16 %v843
        %v4025 = vunpack.c.l.b16 %v844
        %v4026 = vunpack.c.h.b16 %v844
        %v4027 = vunpack.c.l.b16 %v845
        %v4028 = vunpack.c.h.b16 %v845
        %v4029 = vunpack.c.l.b16 %v846
        %v4030 = vunpack.c.h.b16 %v846
        %v4031 = vunpack.c.l.b16 %v847
        %v4032 = vunpack.c.h.b16 %v847
        %v4033 = vunpack.c.l.b16 %v848
        %v4034 = vunpack.c.l.b16 %v849
        %v4035 = vunpack.c.h.b16 %v849
        %v4036 = vunpack.c.l.b16 %v850
        %v4037 = vunpack.c.h.b16 %v850
        %v4038 = vunpack.c.l.b16 %v851
        %v4039 = vunpack.c.h.b16 %v851
        %v4040 = vunpack.c.l.b16 %v852
        %v4041 = vunpack.c.h.b16 %v852
        %v4042 = vunpack.c.l.b16 %v853
        %v4043 = vunpack.c.h.b16 %v853
        %v4044 = vunpack.c.l.b16 %v854
        %v4045 = vunpack.c.h.b16 %v854
        %v4046 = vunpack.c.l.b16 %v855
        %v4047 = vunpack.c.h.b16 %v855
        %v4048 = vunpack.c.l.b16 %v856
        %v4049 = vunpack.c.h.b16 %v856
        %v4050 = vunpack.c.l.b16 %v857
        %v4051 = vunpack.c.h.b16 %v857
        %v4052 = vunpack.c.l.b16 %v858
        %v4053 = vunpack.c.l.b16 %v859
        %v4054 = vunpack.c.h.b16 %v859
        %v4055 = vunpack.c.l.b16 %v860
        %v4056 = vunpack.c.h.b16 %v860
        %v4057 = vunpack.c.l.b16 %v861
        %v4058 = vunpack.c.h.b16 %v861
        %v4059 = vunpack.c.l.b16 %v862
        %v4060 = vunpack.c.h.b16 %v862
        %v4061 = vunpack.c.l.b16 %v863
        %v4062 = vunpack.c.h.b16 %v863
        %v4063 = vunpack.c.l.b16 %v864
        %v4064 = vunpack.c.h.b16 %v864
        %v4065 = vunpack.c.l.b16 %v865
        %v4066 = vunpack.c.h.b16 %v865
        %v4067 = vunpack.c.l.b16 %v866
        %v4068 = vunpack.c.h.b16 %v866
        %v4069 = vunpack.c.l.b16 %v867
        %v4070 = vunpack.c.h.b16 %v867
        %v4071 = vunpack.c.l.b16 %v868
        %v4072 = vunpack.c.l.b16 %v869
        %v4073 = vunpack.c.h.b16 %v869
        %v4074 = vunpack.c.l.b16 %v870
        %v4075 = vunpack.c.h.b16 %v870
        %v4076 = vunpack.c.l.b16 %v871
        %v4077 = vunpack.c.h.b16 %v871
        %v4078 = vunpack.c.l.b16 %v872
        %v4079 = vunpack.c.h.b16 %v872
        %v4080 = vunpack.c.l.b16 %v873
        %v4081 = vunpack.c.h.b16 %v873
        %v4082 = vunpack.c.l.b16 %v874
        %v4083 = vunpack.c.h.b16 %v874
        %v4084 = vunpack.c.l.b16 %v875
        %v4085 = vunpack.c.h.b16 %v875
        %v4086 = vunpack.c.l.b16 %v876
        %v4087 = vunpack.c.h.b16 %v876
        %v4088 = vunpack.c.l.b16 %v877
        %v4089 = vunpack.c.h.b16 %v877
        %v4090 = vunpack.c.l.b16 %v878
        %v4091 = vunpack.c.l.b16 %v879
        %v4092 = vunpack.c.h.b16 %v879
        %v4093 = vunpack.c.l.b16 %v880
        %v4094 = vunpack.c.h.b16 %v880
        %v4095 = vunpack.c.l.b16 %v881
        %v4096 = vunpack.c.h.b16 %v881
        %v4097 = vunpack.c.l.b16 %v882
        %v4098 = vunpack.c.h.b16 %v882
        %v4099 = vunpack.c.l.b16 %v883
        %v4100 = vunpack.c.h.b16 %v883
        %v4101 = vunpack.c.l.b16 %v884
        %v4102 = vunpack.c.h.b16 %v884
        %v4103 = vunpack.c.l.b16 %v885
        %v4104 = vunpack.c.h.b16 %v885
        %v4105 = vunpack.c.l.b16 %v886
        %v4106 = vunpack.c.h.b16 %v886
        %v4107 = vunpack.c.l.b16 %v887
        %v4108 = vunpack.c.h.b16 %v887
        %v4109 = vunpack.c.l.b16 %v888
        %v4110 = vunpack.c.l.b16 %v889
        %v4111 = vunpack.c.h.b16 %v889
        %v4112 = vunpack.c.l.b16 %v890
        %v4113 = vunpack.c.h.b16 %v890
        %v4114 = vunpack.c.l.b16 %v891
        %v4115 = vunpack.c.h.b16 %v891
        %v4116 = vunpack.c.l.b16 %v892
        %v4117 = vunpack.c.h.b16 %v892
        %v4118 = vunpack.c.l.b16 %v893
        %v4119 = vunpack.c.h.b16 %v893
        %v4120 = vunpack.c.l.b16 %v894
        %v4121 = vunpack.c.h.b16 %v894
        %v4122 = vunpack.c.l.b16 %v895
        %v4123 = vunpack.c.h.b16 %v895
        %v4124 = vunpack.c.l.b16 %v896
        %v4125 = vunpack.c.h.b16 %v896
        %v4126 = vunpack.c.l.b16 %v897
        %v4127 = vunpack.c.h.b16 %v897
        %v4128 = vunpack.c.l.b16 %v898
        %v4129 = vunpack.c.l.b16 %v899
        %v4130 = vunpack.c.h.b16 %v899
        %v4131 = vunpack.c.l.b16 %v900
        %v4132 = vunpack.c.h.b16 %v900
        %v4133 = vunpack.c.l.b16 %v901
        %v4134 = vunpack.c.h.b16 %v901
        %v4135 = vunpack.c.l.b16 %v902
        %v4136 = vunpack.c.h.b16 %v902
        %v4137 = vunpack.c.l.b16 %v903
        %v4138 = vunpack.c.h.b16 %v903
        %v4139 = vunpack.c.l.b16 %v904
        %v4140 = vunpack.c.h.b16 %v904
        %v4141 = vunpack.c.l.b16 %v905
        %v4142 = vunpack.c.h.b16 %v905
        %v4143 = vunpack.c.l.b16 %v906
        %v4144 = vunpack.c.h.b16 %v906
        %v4145 = vunpack.c.l.b16 %v907
        %v4146 = vunpack.c.h.b16 %v907
        %v4147 = vunpack.c.l.b16 %v908
        %v4148 = vunpack.c.l.b16 %v909
        %v4149 = vunpack.c.h.b16 %v909
        %v4150 = vunpack.c.l.b16 %v910
        %v4151 = vunpack.c.h.b16 %v910
        %v4152 = vunpack.c.l.b16 %v911
        %v4153 = vunpack.c.h.b16 %v911
        %v4154 = vunpack.c.l.b16 %v912
        %v4155 = vunpack.c.h.b16 %v912
        %v4156 = vunpack.c.l.b16 %v913
        %v4157 = vunpack.c.h.b16 %v913
        %v4158 = vunpack.c.l.b16 %v914
        %v4159 = vunpack.c.h.b16 %v914
        %v4160 = vunpack.c.l.b16 %v915
        %v4161 = vunpack.c.h.b16 %v915
        %v4162 = vunpack.c.l.b16 %v916
        %v4163 = vunpack.c.h.b16 %v916
        %v4164 = vunpack.c.l.b16 %v917
        %v4165 = vunpack.c.h.b16 %v917
        %v4166 = vunpack.c.l.b16 %v918
        %v4167 = vunpack.c.l.b16 %v919
        %v4168 = vunpack.c.h.b16 %v919
        %v4169 = vunpack.c.l.b16 %v920
        %v4170 = vunpack.c.h.b16 %v920
        %v4171 = vunpack.c.l.b16 %v921
        %v4172 = vunpack.c.h.b16 %v921
        %v4173 = vunpack.c.l.b16 %v922
        %v4174 = vunpack.c.h.b16 %v922
        %v4175 = vunpack.c.l.b16 %v923
        %v4176 = vunpack.c.h.b16 %v923
        %v4177 = vunpack.c.l.b16 %v924
        %v4178 = vunpack.c.h.b16 %v924
        %v4179 = vunpack.c.l.b16 %v925
        %v4180 = vunpack.c.h.b16 %v925
        %v4181 = vunpack.c.l.b16 %v926
        %v4182 = vunpack.c.h.b16 %v926
        %v4183 = vunpack.c.l.b16 %v927
        %v4184 = vunpack.c.h.b16 %v927
        %v4185 = vunpack.c.l.b16 %v928
        %v4186 = vunpack.c.l.b16 %v929
        %v4187 = vunpack.c.h.b16 %v929
        %v4188 = vunpack.c.l.b16 %v930
        %v4189 = vunpack.c.h.b16 %v930
        %v4190 = vunpack.c.l.b16 %v931
        %v4191 = vunpack.c.h.b16 %v931
        %v4192 = vunpack.c.l.b16 %v932
        %v4193 = vunpack.c.h.b16 %v932
        %v4194 = vunpack.c.l.b16 %v933
        %v4195 = vunpack.c.h.b16 %v933
        %v4196 = vunpack.c.l.b16 %v934
        %v4197 = vunpack.c.h.b16 %v934
        %v4198 = vunpack.c.l.b16 %v935
        %v4199 = vunpack.c.h.b16 %v935
        %v4200 = vunpack.c.l.b16 %v936
        %v4201 = vunpack.c.h.b16 %v936
        %v4202 = vunpack.c.l.b16 %v937
        %v4203 = vunpack.c.h.b16 %v937
        %v4204 = vunpack.c.l.b16 %v938
        %v4205 = vunpack.c.l.b16 %v939
        %v4206 = vunpack.c.h.b16 %v939
        %v4207 = vunpack.c.l.b16 %v940
        %v4208 = vunpack.c.h.b16 %v940
        %v4209 = vunpack.c.l.b16 %v941
        %v4210 = vunpack.c.h.b16 %v941
        %v4211 = vunpack.c.l.b16 %v942
        %v4212 = vunpack.c.h.b16 %v942
        %v4213 = vunpack.c.l.b16 %v943
        %v4214 = vunpack.c.h.b16 %v943
        %v4215 = vunpack.c.l.b16 %v944
        %v4216 = vunpack.c.h.b16 %v944
        %v4217 = vunpack.c.l.b16 %v945
        %v4218 = vunpack.c.h.b16 %v945
        %v4219 = vunpack.c.l.b16 %v946
        %v4220 = vunpack.c.h.b16 %v946
        %v4221 = vunpack.c.l.b16 %v947
        %v4222 = vunpack.c.h.b16 %v947
        %v4223 = vunpack.c.l.b16 %v948
        %v4224 = vunpack.c.l.b16 %v949
        %v4225 = vunpack.c.h.b16 %v949
        %v4226 = vunpack.c.l.b16 %v950
        %v4227 = vunpack.c.h.b16 %v950
        %v4228 = vunpack.c.l.b16 %v951
        %v4229 = vunpack.c.h.b16 %v951
        %v4230 = vunpack.c.l.b16 %v952
        %v4231 = vunpack.c.h.b16 %v952
        %v4232 = vunpack.c.l.b16 %v953
        %v4233 = vunpack.c.h.b16 %v953
        %v4234 = vunpack.c.l.b16 %v954
        %v4235 = vunpack.c.h.b16 %v954
        %v4236 = vunpack.c.l.b16 %v955
        %v4237 = vunpack.c.h.b16 %v955
        %v4238 = vunpack.c.l.b16 %v956
        %v4239 = vunpack.c.h.b16 %v956
        %v4240 = vunpack.c.l.b16 %v957
        %v4241 = vunpack.c.h.b16 %v957
        %v4242 = vunpack.c.l.b16 %v958
        %v4243 = vunpack.c.l.b16 %v959
        %v4244 = vunpack.c.h.b16 %v959
        %v4245 = vunpack.c.l.b16 %v960
        %v4246 = vunpack.c.h.b16 %v960
        %v4247 = vunpack.c.l.b16 %v961
        %v4248 = vunpack.c.h.b16 %v961
        %v4249 = vunpack.c.l.b16 %v962
        %v4250 = vunpack.c.h.b16 %v962
        %v4251 = vunpack.c.l.b16 %v963
        %v4252 = vunpack.c.h.b16 %v963
        %v4253 = vunpack.c.l.b16 %v964
        %v4254 = vunpack.c.h.b16 %v964
        %v4255 = vunpack.c.l.b16 %v965
        %v4256 = vunpack.c.h.b16 %v965
        %v4257 = vunpack.c.l.b16 %v966
        %v4258 = vunpack.c.h.b16 %v966
        %v4259 = vunpack.c.l.b16 %v967
        %v4260 = vunpack.c.h.b16 %v967
        %v4261 = vunpack.c.l.b16 %v968
        %v4262 = vunpack.c.l.b16 %v969
        %v4263 = vunpack.c.h.b16 %v969
        %v4264 = vunpack.c.l.b16 %v970
        %v4265 = vunpack.c.h.b16 %v970
        %v4266 = vunpack.c.l.b16 %v971
        %v4267 = vunpack.c.h.b16 %v971
        %v4268 = vunpack.c.l.b16 %v972
        %v4269 = vunpack.c.h.b16 %v972
        %v4270 = vunpack.c.l.b16 %v973
        %v4271 = vunpack.c.h.b16 %v973
        %v4272 = vunpack.c.l.b16 %v974
        %v4273 = vunpack.c.h.b16 %v974
        %v4274 = vunpack.c.l.b16 %v975
        %v4275 = vunpack.c.h.b16 %v975
        %v4276 = vunpack.c.l.b16 %v976
        %v4277 = vunpack.c.h.b16 %v976
        %v4278 = vunpack.c.l.b16 %v977
        %v4279 = vunpack.c.h.b16 %v977
        %v4280 = vunpack.c.l.b16 %v978
        %v4281 = vunpack.c.l.b16 %v979
        %v4282 = vunpack.c.h.b16 %v979
        %v4283 = vunpack.c.l.b16 %v980
        %v4284 = vunpack.c.h.b16 %v980
        %v4285 = vunpack.c.l.b16 %v981
        %v4286 = vunpack.c.h.b16 %v981
        %v4287 = vunpack.c.l.b16 %v982
        %v4288 = vunpack.c.h.b16 %v982
        %v4289 = vunpack.c.l.b16 %v983
        %v4290 = vunpack.c.h.b16 %v983
        %v4291 = vunpack.c.l.b16 %v984
        %v4292 = vunpack.c.h.b16 %v984
        %v4293 = vunpack.c.l.b16 %v985
        %v4294 = vunpack.c.h.b16 %v985
        %v4295 = vunpack.c.l.b16 %v986
        %v4296 = vunpack.c.h.b16 %v986
        %v4297 = vunpack.c.l.b16 %v987
        %v4298 = vunpack.c.h.b16 %v987
        %v4299 = vunpack.c.l.b16 %v988
        %v4300 = vunpack.c.l.b16 %v989
        %v4301 = vunpack.c.h.b16 %v989
        %v4302 = vunpack.c.l.b16 %v990
        %v4303 = vunpack.c.h.b16 %v990
        %v4304 = vunpack.c.l.b16 %v991
        %v4305 = vunpack.c.h.b16 %v991
        %v4306 = vunpack.c.l.b16 %v992
        %v4307 = vunpack.c.h.b16 %v992
        %v4308 = vunpack.c.l.b16 %v993
        %v4309 = vunpack.c.h.b16 %v993
        %v4310 = vunpack.c.l.b16 %v994
        %v4311 = vunpack.c.h.b16 %v994
        %v4312 = vunpack.c.l.b16 %v995
        %v4313 = vunpack.c.h.b16 %v995
        %v4314 = vunpack.c.l.b16 %v996
        %v4315 = vunpack.c.h.b16 %v996
        %v4316 = vunpack.c.l.b16 %v997
        %v4317 = vunpack.c.h.b16 %v997
        %v4318 = vunpack.c.l.b16 %v998
        %v4319 = vunpack.c.l.b16 %v999
        %v4320 = vunpack.c.h.b16 %v999
        %v4321 = vunpack.c.l.b16 %v1000
        %v4322 = vunpack.c.h.b16 %v1000
        %v4323 = vunpack.c.l.b16 %v1001
        %v4324 = vunpack.c.h.b16 %v1001
        %v4325 = vunpack.c.l.b16 %v1002
        %v4326 = vunpack.c.h.b16 %v1002
        %v4327 = vunpack.c.l.b16 %v1003
        %v4328 = vunpack.c.h.b16 %v1003
        %v4329 = vunpack.c.l.b16 %v1004
        %v4330 = vunpack.c.h.b16 %v1004
        %v4331 = vunpack.c.l.b16 %v1005
        %v4332 = vunpack.c.h.b16 %v1005
        %v4333 = vunpack.c.l.b16 %v1006
        %v4334 = vunpack.c.h.b16 %v1006
        %v4335 = vunpack.c.l.b16 %v1007
        %v4336 = vunpack.c.h.b16 %v1007
        %v4337 = vunpack.c.l.b16 %v1008
        %v4338 = vunpack.c.l.b16 %v1009
        %v4339 = vunpack.c.h.b16 %v1009
        %v4340 = vunpack.c.l.b16 %v1010
        %v4341 = vunpack.c.h.b16 %v1010
        %v4342 = vunpack.c.l.b16 %v1011
        %v4343 = vunpack.c.h.b16 %v1011
        %v4344 = vunpack.c.l.b16 %v1012
        %v4345 = vunpack.c.h.b16 %v1012
        %v4346 = vunpack.c.l.b16 %v1013
        %v4347 = vunpack.c.h.b16 %v1013
        %v4348 = vunpack.c.l.b16 %v1014
        %v4349 = vunpack.c.h.b16 %v1014
        %v4350 = vunpack.c.l.b16 %v1015
        %v4351 = vunpack.c.h.b16 %v1015
        %v4352 = vunpack.c.l.b16 %v1016
        %v4353 = vunpack.c.h.b16 %v1016
        %v4354 = vunpack.c.l.b16 %v1017
        %v4355 = vunpack.c.h.b16 %v1017
        %v4356 = vunpack.c.l.b16 %v1018
        %v4357 = vunpack.c.l.b16 %v1019
        %v4358 = vunpack.c.h.b16 %v1019
        %v4359 = vunpack.c.l.b16 %v1020
        %v4360 = vunpack.c.h.b16 %v1020
        %v4361 = vunpack.c.l.b16 %v1021
        %v4362 = vunpack.c.h.b16 %v1021
        %v4363 = vunpack.c.l.b16 %v1022
        %v4364 = vunpack.c.h.b16 %v1022
        %v4365 = vunpack.c.l.b16 %v1023
        %v4366 = vunpack.c.h.b16 %v1023
        %v4367 = vunpack.c.l.b16 %v1024
        %v4368 = vunpack.c.h.b16 %v1024
        %v4369 = vunpack.c.l.b16 %v1025
        %v4370 = vunpack.c.h.b16 %v1025
        %v4371 = vunpack.c.l.b16 %v1026
        %v4372 = vunpack.c.h.b16 %v1026
        %v4373 = vunpack.c.l.b16 %v1027
        %v4374 = vunpack.c.h.b16 %v1027
        %v4375 = vunpack.c.l.b16 %v1028
        %v4376 = vunpack.c.l.b16 %v1029
        %v4377 = vunpack.c.h.b16 %v1029
        %v4378 = vunpack.c.l.b16 %v1030
        %v4379 = vunpack.c.h.b16 %v1030
        %v4380 = vunpack.c.l.b16 %v1031
        %v4381 = vunpack.c.h.b16 %v1031
        %v4382 = vunpack.c.l.b16 %v1032
        %v4383 = vunpack.c.h.b16 %v1032
        %v4384 = vunpack.c.l.b16 %v1033
        %v4385 = vunpack.c.h.b16 %v1033
        %v4386 = vunpack.c.l.b16 %v1034
        %v4387 = vunpack.c.h.b16 %v1034
        %v4388 = vunpack.c.l.b16 %v1035
        %v4389 = vunpack.c.h.b16 %v1035
        %v4390 = vunpack.c.l.b16 %v1036
        %v4391 = vunpack.c.h.b16 %v1036
        %v4392 = vunpack.c.l.b16 %v1037
        %v4393 = vunpack.c.h.b16 %v1037
        %v4394 = vunpack.c.l.b16 %v1038
        %v4395 = vunpack.c.l.b16 %v1039
        %v4396 = vunpack.c.h.b16 %v1039
        %v4397 = vunpack.c.l.b16 %v1040
        %v4398 = vunpack.c.h.b16 %v1040
        %v4399 = vunpack.c.l.b16 %v1041
        %v4400 = vunpack.c.h.b16 %v1041
        %v4401 = vunpack.c.l.b16 %v1042
        %v4402 = vunpack.c.h.b16 %v1042
        %v4403 = vunpack.c.l.b16 %v1043
        %v4404 = vunpack.c.h.b16 %v1043
        %v4405 = vunpack.c.l.b16 %v1044
        %v4406 = vunpack.c.h.b16 %v1044
        %v4407 = vunpack.c.l.b16 %v1045
        %v4408 = vunpack.c.h.b16 %v1045
        %v4409 = vunpack.c.l.b16 %v1046
        %v4410 = vunpack.c.h.b16 %v1046
        %v4411 = vunpack.c.l.b16 %v1047
        %v4412 = vunpack.c.h.b16 %v1047
        %v4413 = vunpack.c.l.b16 %v1048
        %v4414 = vunpack.c.l.b16 %v1049
        %v4415 = vunpack.c.h.b16 %v1049
        %v4416 = vunpack.c.l.b16 %v1050
        %v4417 = vunpack.c.h.b16 %v1050
        %v4418 = vunpack.c.l.b16 %v1051
        %v4419 = vunpack.c.h.b16 %v1051
        %v4420 = vunpack.c.l.b16 %v1052
        %v4421 = vunpack.c.h.b16 %v1052
        %v4422 = vunpack.c.l.b16 %v1053
        %v4423 = vunpack.c.h.b16 %v1053
        %v4424 = vunpack.c.l.b16 %v1054
        %v4425 = vunpack.c.h.b16 %v1054
        %v4426 = vunpack.c.l.b16 %v1055
        %v4427 = vunpack.c.h.b16 %v1055
        %v4428 = vunpack.c.l.b16 %v1056
        %v4429 = vunpack.c.h.b16 %v1056
        %v4430 = vunpack.c.l.b16 %v1057
        %v4431 = vunpack.c.h.b16 %v1057
        %v4432 = vunpack.c.l.b16 %v1058
        %v4433 = vunpack.c.l.b16 %v1059
        %v4434 = vunpack.c.h.b16 %v1059
        %v4435 = vunpack.c.l.b16 %v1060
        %v4436 = vunpack.c.h.b16 %v1060
        %v4437 = vunpack.c.l.b16 %v1061
        %v4438 = vunpack.c.h.b16 %v1061
        %v4439 = vunpack.c.l.b16 %v1062
        %v4440 = vunpack.c.h.b16 %v1062
        %v4441 = vunpack.c.l.b16 %v1063
        %v4442 = vunpack.c.h.b16 %v1063
        %v4443 = vunpack.c.l.b16 %v1064
        %v4444 = vunpack.c.h.b16 %v1064
        %v4445 = vunpack.c.l.b16 %v1065
        %v4446 = vunpack.c.h.b16 %v1065
        %v4447 = vunpack.c.l.b16 %v1066
        %v4448 = vunpack.c.h.b16 %v1066
        %v4449 = vunpack.c.l.b16 %v1067
        %v4450 = vunpack.c.h.b16 %v1067
        %v4451 = vunpack.c.l.b16 %v1068
        %v4452 = vunpack.c.l.b16 %v1069
        %v4453 = vunpack.c.h.b16 %v1069
        %v4454 = vunpack.c.l.b16 %v1070
        %v4455 = vunpack.c.h.b16 %v1070
        %v4456 = vunpack.c.l.b16 %v1071
        %v4457 = vunpack.c.h.b16 %v1071
        %v4458 = vunpack.c.l.b16 %v1072
        %v4459 = vunpack.c.h.b16 %v1072
        %v4460 = vunpack.c.l.b16 %v1073
        %v4461 = vunpack.c.h.b16 %v1073
        %v4462 = vunpack.c.l.b16 %v1074
        %v4463 = vunpack.c.h.b16 %v1074
        %v4464 = vunpack.c.l.b16 %v1075
        %v4465 = vunpack.c.h.b16 %v1075
        %v4466 = vunpack.c.l.b16 %v1076
        %v4467 = vunpack.c.h.b16 %v1076
        %v4468 = vunpack.c.l.b16 %v1077
        %v4469 = vunpack.c.h.b16 %v1077
        %v4470 = vunpack.c.l.b16 %v1078
        %v4471 = vunpack.c.l.b16 %v1079
        %v4472 = vunpack.c.h.b16 %v1079
        %v4473 = vunpack.c.l.b16 %v1080
        %v4474 = vunpack.c.h.b16 %v1080
        %v4475 = vunpack.c.l.b16 %v1081
        %v4476 = vunpack.c.h.b16 %v1081
        %v4477 = vunpack.c.l.b16 %v1082
        %v4478 = vunpack.c.h.b16 %v1082
        %v4479 = vunpack.c.l.b16 %v1083
        %v4480 = vunpack.c.h.b16 %v1083
        %v4481 = vunpack.c.l.b16 %v1084
        %v4482 = vunpack.c.h.b16 %v1084
        %v4483 = vunpack.c.l.b16 %v1085
        %v4484 = vunpack.c.h.b16 %v1085
        %v4485 = vunpack.c.l.b16 %v1086
        %v4486 = vunpack.c.h.b16 %v1086
        %v4487 = vunpack.c.l.b16 %v1087
        %v4488 = vunpack.c.h.b16 %v1087
        %v4489 = vunpack.c.l.b16 %v1088
        %v4490 = vunpack.c.l.b16 %v1089
        %v4491 = vunpack.c.h.b16 %v1089
        %v4492 = vunpack.c.l.b16 %v1090
        %v4493 = vunpack.c.h.b16 %v1090
        %v4494 = vunpack.c.l.b16 %v1091
        %v4495 = vunpack.c.h.b16 %v1091
        %v4496 = vunpack.c.l.b16 %v1092
        %v4497 = vunpack.c.h.b16 %v1092
        %v4498 = vunpack.c.l.b16 %v1093
        %v4499 = vunpack.c.h.b16 %v1093
        %v4500 = vunpack.c.l.b16 %v1094
        %v4501 = vunpack.c.h.b16 %v1094
        %v4502 = vunpack.c.l.b16 %v1095
        %v4503 = vunpack.c.h.b16 %v1095
        %v4504 = vunpack.c.l.b16 %v1096
        %v4505 = vunpack.c.h.b16 %v1096
        %v4506 = vunpack.c.l.b16 %v1097
        %v4507 = vunpack.c.h.b16 %v1097
        %v4508 = vunpack.c.l.b16 %v1098
        %v4509 = vunpack.c.l.b16 %v1099
        %v4510 = vunpack.c.h.b16 %v1099
        %v4511 = vunpack.c.l.b16 %v1100
        %v4512 = vunpack.c.h.b16 %v1100
        %v4513 = vunpack.c.l.b16 %v1101
        %v4514 = vunpack.c.h.b16 %v1101
        %v4515 = vunpack.c.l.b16 %v1102
        %v4516 = vunpack.c.h.b16 %v1102
        %v4517 = vunpack.c.l.b16 %v1103
        %v4518 = vunpack.c.h.b16 %v1103
        %v4519 = vunpack.c.l.b16 %v1104
        %v4520 = vunpack.c.h.b16 %v1104
        %v4521 = vunpack.c.l.b16 %v1105
        %v4522 = vunpack.c.h.b16 %v1105
        %v4523 = vunpack.c.l.b16 %v1106
        %v4524 = vunpack.c.h.b16 %v1106
        %v4525 = vunpack.c.l.b16 %v1107
        %v4526 = vunpack.c.h.b16 %v1107
        %v4527 = vunpack.c.l.b16 %v1108
        %v4528 = vunpack.c.l.b16 %v1109
        %v4529 = vunpack.c.h.b16 %v1109
        %v4530 = vunpack.c.l.b16 %v1110
        %v4531 = vunpack.c.h.b16 %v1110
        %v4532 = vunpack.c.l.b16 %v1111
        %v4533 = vunpack.c.h.b16 %v1111
        %v4534 = vunpack.c.l.b16 %v1112
        %v4535 = vunpack.c.h.b16 %v1112
        %v4536 = vunpack.c.l.b16 %v1113
        %v4537 = vunpack.c.h.b16 %v1113
        %v4538 = vunpack.c.l.b16 %v1114
        %v4539 = vunpack.c.h.b16 %v1114
        %v4540 = vunpack.c.l.b16 %v1115
        %v4541 = vunpack.c.h.b16 %v1115
        %v4542 = vunpack.c.l.b16 %v1116
        %v4543 = vunpack.c.h.b16 %v1116
        %v4544 = vunpack.c.l.b16 %v1117
        %v4545 = vunpack.c.h.b16 %v1117
        %v4546 = vunpack.c.l.b16 %v1118
        %v4547 = vunpack.c.l.b16 %v1119
        %v4548 = vunpack.c.h.b16 %v1119
        %v4549 = vunpack.c.l.b16 %v1120
        %v4550 = vunpack.c.h.b16 %v1120
        %v4551 = vunpack.c.l.b16 %v1121
        %v4552 = vunpack.c.h.b16 %v1121
        %v4553 = vunpack.c.l.b16 %v1122
        %v4554 = vunpack.c.h.b16 %v1122
        %v4555 = vunpack.c.l.b16 %v1123
        %v4556 = vunpack.c.h.b16 %v1123
        %v4557 = vunpack.c.l.b16 %v1124
        %v4558 = vunpack.c.h.b16 %v1124
        %v4559 = vunpack.c.l.b16 %v1125
        %v4560 = vunpack.c.h.b16 %v1125
        %v4561 = vunpack.c.l.b16 %v1126
        %v4562 = vunpack.c.h.b16 %v1126
        %v4563 = vunpack.c.l.b16 %v1127
        %v4564 = vunpack.c.h.b16 %v1127
        %v4565 = vunpack.c.l.b16 %v1128
        %v4566 = vunpack.c.l.b16 %v1129
        %v4567 = vunpack.c.h.b16 %v1129
        %v4568 = vunpack.c.l.b16 %v1130
        %v4569 = vunpack.c.h.b16 %v1130
        %v4570 = vunpack.c.l.b16 %v1131
        %v4571 = vunpack.c.h.b16 %v1131
        %v4572 = vunpack.c.l.b16 %v1132
        %v4573 = vunpack.c.h.b16 %v1132
        %v4574 = vunpack.c.l.b16 %v1133
        %v4575 = vunpack.c.h.b16 %v1133
        %v4576 = vunpack.c.l.b16 %v1134
        %v4577 = vunpack.c.h.b16 %v1134
        %v4578 = vunpack.c.l.b16 %v1135
        %v4579 = vunpack.c.h.b16 %v1135
        %v4580 = vunpack.c.l.b16 %v1136
        %v4581 = vunpack.c.h.b16 %v1136
        %v4582 = vunpack.c.l.b16 %v1137
        %v4583 = vunpack.c.h.b16 %v1137
        %v4584 = vunpack.c.l.b16 %v1138
        %v4585 = vunpack.c.l.b16 %v1139
        %v4586 = vunpack.c.h.b16 %v1139
        %v4587 = vunpack.c.l.b16 %v1140
        %v4588 = vunpack.c.h.b16 %v1140
        %v4589 = vunpack.c.l.b16 %v1141
        %v4590 = vunpack.c.h.b16 %v1141
        %v4591 = vunpack.c.l.b16 %v1142
        %v4592 = vunpack.c.h.b16 %v1142
        %v4593 = vunpack.c.l.b16 %v1143
        %v4594 = vunpack.c.h.b16 %v1143
        %v4595 = vunpack.c.l.b16 %v1144
        %v4596 = vunpack.c.h.b16 %v1144
        %v4597 = vunpack.c.l.b16 %v1145
        %v4598 = vunpack.c.h.b16 %v1145
        %v4599 = vunpack.c.l.b16 %v1146
        %v4600 = vunpack.c.h.b16 %v1146
        %v4601 = vunpack.c.l.b16 %v1147
        %v4602 = vunpack.c.h.b16 %v1147
        %v4603 = vunpack.c.l.b16 %v1148
        %v4604 = vunpack.c.l.b16 %v1149
        %v4605 = vunpack.c.h.b16 %v1149
        %v4606 = vunpack.c.l.b16 %v1150
        %v4607 = vunpack.c.h.b16 %v1150
        %v4608 = vunpack.c.l.b16 %v1151
        %v4609 = vunpack.c.h.b16 %v1151
        %v4610 = vunpack.c.l.b16 %v1152
        %v4611 = vunpack.c.h.b16 %v1152
        %v4612 = vunpack.c.l.b16 %v1153
        %v4613 = vunpack.c.h.b16 %v1153
        %v4614 = vunpack.c.l.b16 %v1154
        %v4615 = vunpack.c.h.b16 %v1154
        %v4616 = vunpack.c.l.b16 %v1155
        %v4617 = vunpack.c.h.b16 %v1155
        %v4618 = vunpack.c.l.b16 %v1156
        %v4619 = vunpack.c.h.b16 %v1156
        %v4620 = vunpack.c.l.b16 %v1157
        %v4621 = vunpack.c.h.b16 %v1157
        %v4622 = vunpack.c.l.b16 %v1158
        %v4623 = vunpack.c.l.b16 %v1159
        %v4624 = vunpack.c.h.b16 %v1159
        %v4625 = vunpack.c.l.b16 %v1160
        %v4626 = vunpack.c.h.b16 %v1160
        %v4627 = vunpack.c.l.b16 %v1161
        %v4628 = vunpack.c.h.b16 %v1161
        %v4629 = vunpack.c.l.b16 %v1162
        %v4630 = vunpack.c.h.b16 %v1162
        %v4631 = vunpack.c.l.b16 %v1163
        %v4632 = vunpack.c.h.b16 %v1163
        %v4633 = vunpack.c.l.b16 %v1164
        %v4634 = vunpack.c.h.b16 %v1164
        %v4635 = vunpack.c.l.b16 %v1165
        %v4636 = vunpack.c.h.b16 %v1165
        %v4637 = vunpack.c.l.b16 %v1166
        %v4638 = vunpack.c.h.b16 %v1166
        %v4639 = vunpack.c.l.b16 %v1167
        %v4640 = vunpack.c.h.b16 %v1167
        %v4641 = vunpack.c.l.b16 %v1168
        %v4642 = vunpack.c.l.b16 %v1169
        %v4643 = vunpack.c.h.b16 %v1169
        %v4644 = vunpack.c.l.b16 %v1170
        %v4645 = vunpack.c.h.b16 %v1170
        %v4646 = vunpack.c.l.b16 %v1171
        %v4647 = vunpack.c.h.b16 %v1171
        %v4648 = vunpack.c.l.b16 %v1172
        %v4649 = vunpack.c.h.b16 %v1172
        %v4650 = vunpack.c.l.b16 %v1173
        %v4651 = vunpack.c.h.b16 %v1173
        %v4652 = vunpack.c.l.b16 %v1174
        %v4653 = vunpack.c.h.b16 %v1174
        %v4654 = vunpack.c.l.b16 %v1175
        %v4655 = vunpack.c.h.b16 %v1175
        %v4656 = vunpack.c.l.b16 %v1176
        %v4657 = vunpack.c.h.b16 %v1176
        %v4658 = vunpack.c.l.b16 %v1177
        %v4659 = vunpack.c.h.b16 %v1177
        %v4660 = vunpack.c.l.b16 %v1178
        %v4661 = vunpack.c.l.b16 %v1179
        %v4662 = vunpack.c.h.b16 %v1179
        %v4663 = vunpack.c.l.b16 %v1180
        %v4664 = vunpack.c.h.b16 %v1180
        %v4665 = vunpack.c.l.b16 %v1181
        %v4666 = vunpack.c.h.b16 %v1181
        %v4667 = vunpack.c.l.b16 %v1182
        %v4668 = vunpack.c.h.b16 %v1182
        %v4669 = vunpack.c.l.b16 %v1183
        %v4670 = vunpack.c.h.b16 %v1183
        %v4671 = vunpack.c.l.b16 %v1184
        %v4672 = vunpack.c.h.b16 %v1184
        %v4673 = vunpack.c.l.b16 %v1185
        %v4674 = vunpack.c.h.b16 %v1185
        %v4675 = vunpack.c.l.b16 %v1186
        %v4676 = vunpack.c.h.b16 %v1186
        %v4677 = vunpack.c.l.b16 %v1187
        %v4678 = vunpack.c.h.b16 %v1187
        %v4679 = vunpack.c.l.b16 %v1188
        %v4680 = vunpack.c.l.b16 %v1189
        %v4681 = vunpack.c.h.b16 %v1189
        %v4682 = vunpack.c.l.b16 %v1190
        %v4683 = vunpack.c.h.b16 %v1190
        %v4684 = vunpack.c.l.b16 %v1191
        %v4685 = vunpack.c.h.b16 %v1191
        %v4686 = vunpack.c.l.b16 %v1192
        %v4687 = vunpack.c.h.b16 %v1192
        %v4688 = vunpack.c.l.b16 %v1193
        %v4689 = vunpack.c.h.b16 %v1193
        %v4690 = vunpack.c.l.b16 %v1194
        %v4691 = vunpack.c.h.b16 %v1194
        %v4692 = vunpack.c.l.b16 %v1195
        %v4693 = vunpack.c.h.b16 %v1195
        %v4694 = vunpack.c.l.b16 %v1196
        %v4695 = vunpack.c.h.b16 %v1196
        %v4696 = vunpack.c.l.b16 %v1197
        %v4697 = vunpack.c.h.b16 %v1197
        %v4698 = vunpack.c.l.b16 %v1198
        %v4699 = vunpack.c.l.b16 %v1199
        %v4700 = vunpack.c.h.b16 %v1199
        %v4701 = vunpack.c.l.b16 %v1200
        %v4702 = vunpack.c.h.b16 %v1200
        %v4703 = vunpack.c.l.b16 %v1201
        %v4704 = vunpack.c.h.b16 %v1201
        %v4705 = vunpack.c.l.b16 %v1202
        %v4706 = vunpack.c.h.b16 %v1202
        %v4707 = vunpack.c.l.b16 %v1203
        %v4708 = vunpack.c.h.b16 %v1203
        %v4709 = vunpack.c.l.b16 %v1204
        %v4710 = vunpack.c.h.b16 %v1204
        %v4711 = vunpack.c.l.b16 %v1205
        %v4712 = vunpack.c.h.b16 %v1205
        %v4713 = vunpack.c.l.b16 %v1206
        %v4714 = vunpack.c.h.b16 %v1206
        %v4715 = vunpack.c.l.b16 %v1207
        %v4716 = vunpack.c.h.b16 %v1207
        %v4717 = vunpack.c.l.b16 %v1208
        %v4718 = vunpack.c.l.b16 %v1209
        %v4719 = vunpack.c.h.b16 %v1209
        %v4720 = vunpack.c.l.b16 %v1210
        %v4721 = vunpack.c.h.b16 %v1210
        %v4722 = vunpack.c.l.b16 %v1211
        %v4723 = vunpack.c.h.b16 %v1211
        %v4724 = vunpack.c.l.b16 %v1212
        %v4725 = vunpack.c.h.b16 %v1212
        %v4726 = vunpack.c.l.b16 %v1213
        %v4727 = vunpack.c.h.b16 %v1213
        %v4728 = vunpack.c.l.b16 %v1214
        %v4729 = vunpack.c.h.b16 %v1214
        %v4730 = vunpack.c.l.b16 %v1215
        %v4731 = vunpack.c.h.b16 %v1215
        %v4732 = vunpack.c.l.b16 %v1216
        %v4733 = vunpack.c.h.b16 %v1216
        %v4734 = vunpack.c.l.b16 %v1217
        %v4735 = vunpack.c.h.b16 %v1217
        %v4736 = vunpack.c.l.b16 %v1218
        %v4737 = vunpack.c.l.b16 %v1219
        %v4738 = vunpack.c.h.b16 %v1219
        %v4739 = vunpack.c.l.b16 %v1220
        %v4740 = vunpack.c.h.b16 %v1220
        %v4741 = vunpack.c.l.b16 %v1221
        %v4742 = vunpack.c.h.b16 %v1221
        %v4743 = vunpack.c.l.b16 %v1222
        %v4744 = vunpack.c.h.b16 %v1222
        %v4745 = vunpack.c.l.b16 %v1223
        %v4746 = vunpack.c.h.b16 %v1223
        %v4747 = vunpack.c.l.b16 %v1224
        %v4748 = vunpack.c.h.b16 %v1224
        %v4749 = vunpack.c.l.b16 %v1225
        %v4750 = vunpack.c.h.b16 %v1225
        %v4751 = vunpack.c.l.b16 %v1226
        %v4752 = vunpack.c.h.b16 %v1226
        %v4753 = vunpack.c.l.b16 %v1227
        %v4754 = vunpack.c.h.b16 %v1227
        %v4755 = vunpack.c.l.b16 %v1228
        %v4756 = vunpack.c.l.b16 %v1229
        %v4757 = vunpack.c.h.b16 %v1229
        %v4758 = vunpack.c.l.b16 %v1230
        %v4759 = vunpack.c.h.b16 %v1230
        %v4760 = vunpack.c.l.b16 %v1231
        %v4761 = vunpack.c.h.b16 %v1231
        %v4762 = vunpack.c.l.b16 %v1232
        %v4763 = vunpack.c.h.b16 %v1232
        %v4764 = vunpack.c.l.b16 %v1233
        %v4765 = vunpack.c.h.b16 %v1233
        %v4766 = vunpack.c.l.b16 %v1234
        %v4767 = vunpack.c.h.b16 %v1234
        %v4768 = vunpack.c.l.b16 %v1235
        %v4769 = vunpack.c.h.b16 %v1235
        %v4770 = vunpack.c.l.b16 %v1236
        %v4771 = vunpack.c.h.b16 %v1236
        %v4772 = vunpack.c.l.b16 %v1237
        %v4773 = vunpack.c.h.b16 %v1237
        %v4774 = vunpack.c.l.b16 %v1238
        %v4775 = vunpack.c.l.b16 %v1239
        %v4776 = vunpack.c.h.b16 %v1239
        %v4777 = vunpack.c.l.b16 %v1240
        %v4778 = vunpack.c.h.b16 %v1240
        %v4779 = vunpack.c.l.b16 %v1241
        %v4780 = vunpack.c.h.b16 %v1241
        %v4781 = vunpack.c.l.b16 %v1242
        %v4782 = vunpack.c.h.b16 %v1242
        %v4783 = vunpack.c.l.b16 %v1243
        %v4784 = vunpack.c.h.b16 %v1243
        %v4785 = vunpack.c.l.b16 %v1244
        %v4786 = vunpack.c.h.b16 %v1244
        %v4787 = vunpack.c.l.b16 %v1245
        %v4788 = vunpack.c.h.b16 %v1245
        %v4789 = vunpack.c.l.b16 %v1246
        %v4790 = vunpack.c.h.b16 %v1246
        %v4791 = vunpack.c.l.b16 %v1247
        %v4792 = vunpack.c.h.b16 %v1247
        %v4793 = vunpack.c.l.b16 %v1248
        %v4794 = vunpack.c.l.b16 %v1249
        %v4795 = vunpack.c.h.b16 %v1249
        %v4796 = vunpack.c.l.b16 %v1250
        %v4797 = vunpack.c.h.b16 %v1250
        %v4798 = vunpack.c.l.b16 %v1251
        %v4799 = vunpack.c.h.b16 %v1251
        %v4800 = vunpack.c.l.b16 %v1252
        %v4801 = vunpack.c.h.b16 %v1252
        %v4802 = vunpack.c.l.b16 %v1253
        %v4803 = vunpack.c.h.b16 %v1253
        %v4804 = vunpack.c.l.b16 %v1254
        %v4805 = vunpack.c.h.b16 %v1254
        %v4806 = vunpack.c.l.b16 %v1255
        %v4807 = vunpack.c.h.b16 %v1255
        %v4808 = vunpack.c.l.b16 %v1256
        %v4809 = vunpack.c.h.b16 %v1256
        %v4810 = vunpack.c.l.b16 %v1257
        %v4811 = vunpack.c.h.b16 %v1257
        %v4812 = vunpack.c.l.b16 %v1258
        %v4813 = vunpack.c.l.b16 %v1259
        %v4814 = vunpack.c.h.b16 %v1259
        %v4815 = vunpack.c.l.b16 %v1260
        %v4816 = vunpack.c.h.b16 %v1260
        %v4817 = vunpack.c.l.b16 %v1261
        %v4818 = vunpack.c.h.b16 %v1261
        %v4819 = vunpack.c.l.b16 %v1262
        %v4820 = vunpack.c.h.b16 %v1262
        %v4821 = vunpack.c.l.b16 %v1263
        %v4822 = vunpack.c.h.b16 %v1263
        %v4823 = vunpack.c.l.b16 %v1264
        %v4824 = vunpack.c.h.b16 %v1264
        %v4825 = vunpack.c.l.b16 %v1265
        %v4826 = vunpack.c.h.b16 %v1265
        %v4827 = vunpack.c.l.b16 %v1266
        %v4828 = vunpack.c.h.b16 %v1266
        %v4829 = vunpack.c.l.b16 %v1267
        %v4830 = vunpack.c.h.b16 %v1267
        %v4831 = vunpack.c.l.b16 %v1268
        %v4832 = vunpack.c.l.b16 %v1269
        %v4833 = vunpack.c.h.b16 %v1269
        %v4834 = vunpack.c.l.b16 %v1270
        %v4835 = vunpack.c.h.b16 %v1270
        %v4836 = vunpack.c.l.b16 %v1271
        %v4837 = vunpack.c.h.b16 %v1271
        %v4838 = vunpack.c.l.b16 %v1272
        %v4839 = vunpack.c.h.b16 %v1272
        %v4840 = vunpack.c.l.b16 %v1273
        %v4841 = vunpack.c.h.b16 %v1273
        %v4842 = vunpack.c.l.b16 %v1274
        %v4843 = vunpack.c.h.b16 %v1274
        %v4844 = vunpack.c.l.b16 %v1275
        %v4845 = vunpack.c.h.b16 %v1275
        %v4846 = vunpack.c.l.b16 %v1276
        %v4847 = vunpack.c.h.b16 %v1276
        %v4848 = vunpack.c.l.b16 %v1277
        %v4849 = vunpack.c.h.b16 %v1277
        %v4850 = vunpack.c.l.b16 %v1278
        %v4851 = vunpack.c.l.b16 %v1279
        %v4852 = vunpack.c.h.b16 %v1279
        %v4853 = vunpack.c.l.b16 %v1280
        %v4854 = vunpack.c.h.b16 %v1280
        %v4855 = vunpack.c.l.b16 %v1281
        %v4856 = vunpack.c.h.b16 %v1281
        %v4857 = vunpack.c.l.b16 %v1282
        %v4858 = vunpack.c.h.b16 %v1282
        %v4859 = vunpack.c.l.b16 %v1283
        %v4860 = vunpack.c.h.b16 %v1283
        %v4861 = vunpack.c.l.b16 %v1284
        %v4862 = vunpack.c.h.b16 %v1284
        %v4863 = vunpack.c.l.b16 %v1285
        %v4864 = vunpack.c.h.b16 %v1285
        %v4865 = vunpack.c.l.b16 %v1286
        %v4866 = vunpack.c.h.b16 %v1286
        %v4867 = vunpack.c.l.b16 %v1287
        %v4868 = vunpack.c.h.b16 %v1287
        %v4869 = vunpack.c.l.b16 %v1288
        %v4870 = vunpack.c.l.b16 %v1289
        %v4871 = vunpack.c.h.b16 %v1289
        %v4872 = vunpack.c.l.b16 %v1290
        %v4873 = vunpack.c.h.b16 %v1290
        %v4874 = vunpack.c.l.b16 %v1291
        %v4875 = vunpack.c.h.b16 %v1291
        %v4876 = vunpack.c.l.b16 %v1292
        %v4877 = vunpack.c.h.b16 %v1292
        %v4878 = vunpack.c.l.b16 %v1293
        %v4879 = vunpack.c.h.b16 %v1293
        %v4880 = vunpack.c.l.b16 %v1294
        %v4881 = vunpack.c.h.b16 %v1294
        %v4882 = vunpack.c.l.b16 %v1295
        %v4883 = vunpack.c.h.b16 %v1295
        %v4884 = vunpack.c.l.b16 %v1296
        %v4885 = vunpack.c.h.b16 %v1296
        %v4886 = vunpack.c.l.b16 %v1297
        %v4887 = vunpack.c.h.b16 %v1297
        %v4888 = vunpack.c.l.b16 %v1298
        %v4889 = vunpack.c.l.b16 %v1299
        %v4890 = vunpack.c.h.b16 %v1299
        %v4891 = vunpack.c.l.b16 %v1300
        %v4892 = vunpack.c.h.b16 %v1300
        %v4893 = vunpack.c.l.b16 %v1301
        %v4894 = vunpack.c.h.b16 %v1301
        %v4895 = vunpack.c.l.b16 %v1302
        %v4896 = vunpack.c.h.b16 %v1302
        %v4897 = vunpack.c.l.b16 %v1303
        %v4898 = vunpack.c.h.b16 %v1303
        %v4899 = vunpack.c.l.b16 %v1304
        %v4900 = vunpack.c.h.b16 %v1304
        %v4901 = vunpack.c.l.b16 %v1305
        %v4902 = vunpack.c.h.b16 %v1305
        %v4903 = vunpack.c.l.b16 %v1306
        %v4904 = vunpack.c.h.b16 %v1306
        %v4905 = vunpack.c.l.b16 %v1307
        %v4906 = vunpack.c.h.b16 %v1307
        %v4907 = vunpack.c.l.b16 %v1308
        %v4908 = vunpack.c.l.b16 %v1309
        %v4909 = vunpack.c.h.b16 %v1309
        %v4910 = vunpack.c.l.b16 %v1310
        %v4911 = vunpack.c.h.b16 %v1310
        %v4912 = vunpack.c.l.b16 %v1311
        %v4913 = vunpack.c.h.b16 %v1311
        %v4914 = vunpack.c.l.b16 %v1312
        %v4915 = vunpack.c.h.b16 %v1312
        %v4916 = vunpack.c.l.b16 %v1313
        %v4917 = vunpack.c.h.b16 %v1313
        %v4918 = vunpack.c.l.b16 %v1314
        %v4919 = vunpack.c.h.b16 %v1314
        %v4920 = vunpack.c.l.b16 %v1315
        %v4921 = vunpack.c.h.b16 %v1315
        %v4922 = vunpack.c.l.b16 %v1316
        %v4923 = vunpack.c.h.b16 %v1316
        %v4924 = vunpack.c.l.b16 %v1317
        %v4925 = vunpack.c.h.b16 %v1317
        %v4926 = vunpack.c.l.b16 %v1318
        %v4927 = vunpack.c.l.b16 %v1319
        %v4928 = vunpack.c.h.b16 %v1319
        %v4929 = vunpack.c.l.b16 %v1320
        %v4930 = vunpack.c.h.b16 %v1320
        %v4931 = vunpack.c.l.b16 %v1321
        %v4932 = vunpack.c.h.b16 %v1321
        %v4933 = vunpack.c.l.b16 %v1322
        %v4934 = vunpack.c.h.b16 %v1322
        %v4935 = vunpack.c.l.b16 %v1323
        %v4936 = vunpack.c.h.b16 %v1323
        %v4937 = vunpack.c.l.b16 %v1324
        %v4938 = vunpack.c.h.b16 %v1324
        %v4939 = vunpack.c.l.b16 %v1325
        %v4940 = vunpack.c.h.b16 %v1325
        %v4941 = vunpack.c.l.b16 %v1326
        %v4942 = vunpack.c.h.b16 %v1326
        %v4943 = vunpack.c.l.b16 %v1327
        %v4944 = vunpack.c.h.b16 %v1327
        %v4945 = vunpack.c.l.b16 %v1328
        %v4946 = vunpack.c.l.b16 %v1329
        %v4947 = vunpack.c.h.b16 %v1329
        %v4948 = vunpack.c.l.b16 %v1330
        %v4949 = vunpack.c.h.b16 %v1330
        %v4950 = vunpack.c.l.b16 %v1331
        %v4951 = vunpack.c.h.b16 %v1331
        %v4952 = vunpack.c.l.b16 %v1332
        %v4953 = vunpack.c.h.b16 %v1332
        %v4954 = vunpack.c.l.b16 %v1333
        %v4955 = vunpack.c.h.b16 %v1333
        %v4956 = vunpack.c.l.b16 %v1334
        %v4957 = vunpack.c.h.b16 %v1334
        %v4958 = vunpack.c.l.b16 %v1335
        %v4959 = vunpack.c.h.b16 %v1335
        %v4960 = vunpack.c.l.b16 %v1336
        %v4961 = vunpack.c.h.b16 %v1336
        %v4962 = vunpack.c.l.b16 %v1337
        %v4963 = vunpack.c.h.b16 %v1337
        %v4964 = vunpack.c.l.b16 %v1338
        %v4965 = vunpack.c.l.b16 %v1339
        %v4966 = vunpack.c.h.b16 %v1339
        %v4967 = vunpack.c.l.b16 %v1340
        %v4968 = vunpack.c.h.b16 %v1340
        %v4969 = vunpack.c.l.b16 %v1341
        %v4970 = vunpack.c.h.b16 %v1341
        %v4971 = vunpack.c.l.b16 %v1342
        %v4972 = vunpack.c.h.b16 %v1342
        %v4973 = vunpack.c.l.b16 %v1343
        %v4974 = vunpack.c.h.b16 %v1343
        %v4975 = vunpack.c.l.b16 %v1344
        %v4976 = vunpack.c.h.b16 %v1344
        %v4977 = vunpack.c.l.b16 %v1345
        %v4978 = vunpack.c.h.b16 %v1345
        %v4979 = vunpack.c.l.b16 %v1346
        %v4980 = vunpack.c.h.b16 %v1346
        %v4981 = vunpack.c.l.b16 %v1347
        %v4982 = vunpack.c.h.b16 %v1347
        %v4983 = vunpack.c.l.b16 %v1348
        %v4984 = vunpack.c.l.b16 %v1349
        %v4985 = vunpack.c.h.b16 %v1349
        %v4986 = vunpack.c.l.b16 %v1350
        %v4987 = vunpack.c.h.b16 %v1350
        %v4988 = vunpack.c.l.b16 %v1351
        %v4989 = vunpack.c.h.b16 %v1351
        %v4990 = vunpack.c.l.b16 %v1352
        %v4991 = vunpack.c.h.b16 %v1352
        %v4992 = vunpack.c.l.b16 %v1353
        %v4993 = vunpack.c.h.b16 %v1353
        %v4994 = vunpack.c.l.b16 %v1354
        %v4995 = vunpack.c.h.b16 %v1354
        %v4996 = vunpack.c.l.b16 %v1355
        %v4997 = vunpack.c.h.b16 %v1355
        %v4998 = vunpack.c.l.b16 %v1356
        %v4999 = vunpack.c.h.b16 %v1356
        %v5000 = vunpack.c.l.b16 %v1357
        %v5001 = vunpack.c.h.b16 %v1357
        %v5002 = vunpack.c.l.b16 %v1358
        %v5003 = vunpack.c.l.b16 %v1359
        %v5004 = vunpack.c.h.b16 %v1359
        %v5005 = vunpack.c.l.b16 %v1360
        %v5006 = vunpack.c.h.b16 %v1360
        %v5007 = vunpack.c.l.b16 %v1361
        %v5008 = vunpack.c.h.b16 %v1361
        %v5009 = vunpack.c.l.b16 %v1362
        %v5010 = vunpack.c.h.b16 %v1362
        %v5011 = vunpack.c.l.b16 %v1363
        %v5012 = vunpack.c.h.b16 %v1363
        %v5013 = vunpack.c.l.b16 %v1364
        %v5014 = vunpack.c.h.b16 %v1364
        %v5015 = vunpack.c.l.b16 %v1365
        %v5016 = vunpack.c.h.b16 %v1365
        %v5017 = vunpack.c.l.b16 %v1366
        %v5018 = vunpack.c.h.b16 %v1366
        %v5019 = vunpack.c.l.b16 %v1367
        %v5020 = vunpack.c.h.b16 %v1367
        %v5021 = vunpack.c.l.b16 %v1368
        %v5022 = vunpack.c.l.b16 %v1369
        %v5023 = vunpack.c.h.b16 %v1369
        %v5024 = vunpack.c.l.b16 %v1370
        %v5025 = vunpack.c.h.b16 %v1370
        %v5026 = vunpack.c.l.b16 %v1371
        %v5027 = vunpack.c.h.b16 %v1371
        %v5028 = vunpack.c.l.b16 %v1372
        %v5029 = vunpack.c.h.b16 %v1372
        %v5030 = vunpack.c.l.b16 %v1373
        %v5031 = vunpack.c.h.b16 %v1373
        %v5032 = vunpack.c.l.b16 %v1374
        %v5033 = vunpack.c.h.b16 %v1374
        %v5034 = vunpack.c.l.b16 %v1375
        %v5035 = vunpack.c.h.b16 %v1375
        %v5036 = vunpack.c.l.b16 %v1376
        %v5037 = vunpack.c.h.b16 %v1376
        %v5038 = vunpack.c.l.b16 %v1377
        %v5039 = vunpack.c.h.b16 %v1377
        %v5040 = vunpack.c.l.b16 %v1378
        %v5041 = vunpack.c.l.b16 %v1379
        %v5042 = vunpack.c.h.b16 %v1379
        %v5043 = vunpack.c.l.b16 %v1380
        %v5044 = vunpack.c.h.b16 %v1380
        %v5045 = vunpack.c.l.b16 %v1381
        %v5046 = vunpack.c.h.b16 %v1381
        %v5047 = vunpack.c.l.b16 %v1382
        %v5048 = vunpack.c.h.b16 %v1382
        %v5049 = vunpack.c.l.b16 %v1383
        %v5050 = vunpack.c.h.b16 %v1383
        %v5051 = vunpack.c.l.b16 %v1384
        %v5052 = vunpack.c.h.b16 %v1384
        %v5053 = vunpack.c.l.b16 %v1385
        %v5054 = vunpack.c.h.b16 %v1385
        %v5055 = vunpack.c.l.b16 %v1386
        %v5056 = vunpack.c.h.b16 %v1386
        %v5057 = vunpack.c.l.b16 %v1387
        %v5058 = vunpack.c.h.b16 %v1387
        %v5059 = vunpack.c.l.b16 %v1388
        %v5060 = vunpack.c.l.b16 %v1389
        %v5061 = vunpack.c.h.b16 %v1389
        %v5062 = vunpack.c.l.b16 %v1390
        %v5063 = vunpack.c.h.b16 %v1390
        %v5064 = vunpack.c.l.b16 %v1391
        %v5065 = vunpack.c.h.b16 %v1391
        %v5066 = vunpack.c.l.b16 %v1392
        %v5067 = vunpack.c.h.b16 %v1392
        %v5068 = vunpack.c.l.b16 %v1393
        %v5069 = vunpack.c.h.b16 %v1393
        %v5070 = vunpack.c.l.b16 %v1394
        %v5071 = vunpack.c.h.b16 %v1394
        %v5072 = vunpack.c.l.b16 %v1395
        %v5073 = vunpack.c.h.b16 %v1395
        %v5074 = vunpack.c.l.b16 %v1396
        %v5075 = vunpack.c.h.b16 %v1396
        %v5076 = vunpack.c.l.b16 %v1397
        %v5077 = vunpack.c.h.b16 %v1397
        %v5078 = vunpack.c.l.b16 %v1398
        %v5079 = vunpack.c.l.b16 %v1399
        %v5080 = vunpack.c.h.b16 %v1399
        %v5081 = vunpack.c.l.b16 %v1400
        %v5082 = vunpack.c.h.b16 %v1400
        %v5083 = vunpack.c.l.b16 %v1401
        %v5084 = vunpack.c.h.b16 %v1401
        %v5085 = vunpack.c.l.b16 %v1402
        %v5086 = vunpack.c.h.b16 %v1402
        %v5087 = vunpack.c.l.b16 %v1403
        %v5088 = vunpack.c.h.b16 %v1403
        %v5089 = vunpack.c.l.b16 %v1404
        %v5090 = vunpack.c.h.b16 %v1404
        %v5091 = vunpack.c.l.b16 %v1405
        %v5092 = vunpack.c.h.b16 %v1405
        %v5093 = vunpack.c.l.b16 %v1406
        %v5094 = vunpack.c.h.b16 %v1406
        %v5095 = vunpack.c.l.b16 %v1407
        %v5096 = vunpack.c.h.b16 %v1407
        %v5097 = vunpack.c.l.b16 %v1408
        %v5098 = vunpack.c.l.b16 %v1409
        %v5099 = vunpack.c.h.b16 %v1409
        %v5100 = vunpack.c.l.b16 %v1410
        %v5101 = vunpack.c.h.b16 %v1410
        %v5102 = vunpack.c.l.b16 %v1411
        %v5103 = vunpack.c.h.b16 %v1411
        %v5104 = vunpack.c.l.b16 %v1412
        %v5105 = vunpack.c.h.b16 %v1412
        %v5106 = vunpack.c.l.b16 %v1413
        %v5107 = vunpack.c.h.b16 %v1413
        %v5108 = vunpack.c.l.b16 %v1414
        %v5109 = vunpack.c.h.b16 %v1414
        %v5110 = vunpack.c.l.b16 %v1415
        %v5111 = vunpack.c.h.b16 %v1415
        %v5112 = vunpack.c.l.b16 %v1416
        %v5113 = vunpack.c.h.b16 %v1416
        %v5114 = vunpack.c.l.b16 %v1417
        %v5115 = vunpack.c.h.b16 %v1417
        %v5116 = vunpack.c.l.b16 %v1418
        %v5117 = vunpack.c.l.b16 %v1419
        %v5118 = vunpack.c.h.b16 %v1419
        %v5119 = vunpack.c.l.b16 %v1420
        %v5120 = vunpack.c.h.b16 %v1420
        %v5121 = vunpack.c.l.b16 %v1421
        %v5122 = vunpack.c.h.b16 %v1421
        %v5123 = vunpack.c.l.b16 %v1422
        %v5124 = vunpack.c.h.b16 %v1422
        %v5125 = vunpack.c.l.b16 %v1423
        %v5126 = vunpack.c.h.b16 %v1423
        %v5127 = vunpack.c.l.b16 %v1424
        %v5128 = vunpack.c.h.b16 %v1424
        %v5129 = vunpack.c.l.b16 %v1425
        %v5130 = vunpack.c.h.b16 %v1425
        %v5131 = vunpack.c.l.b16 %v1426
        %v5132 = vunpack.c.h.b16 %v1426
        %v5133 = vunpack.c.l.b16 %v1427
        %v5134 = vunpack.c.h.b16 %v1427
        %v5135 = vunpack.c.l.b16 %v1428
        %v5136 = vunpack.c.l.b16 %v1429
        %v5137 = vunpack.c.h.b16 %v1429
        %v5138 = vunpack.c.l.b16 %v1430
        %v5139 = vunpack.c.h.b16 %v1430
        %v5140 = vunpack.c.l.b16 %v1431
        %v5141 = vunpack.c.h.b16 %v1431
        %v5142 = vunpack.c.l.b16 %v1432
        %v5143 = vunpack.c.h.b16 %v1432
        %v5144 = vunpack.c.l.b16 %v1433
        %v5145 = vunpack.c.h.b16 %v1433
        %v5146 = vunpack.c.l.b16 %v1434
        %v5147 = vunpack.c.h.b16 %v1434
        %v5148 = vunpack.c.l.b16 %v1435
        %v5149 = vunpack.c.h.b16 %v1435
        %v5150 = vunpack.c.l.b16 %v1436
        %v5151 = vunpack.c.h.b16 %v1436
        %v5152 = vunpack.c.l.b16 %v1437
        %v5153 = vunpack.c.h.b16 %v1437
        %v5154 = vunpack.c.l.b16 %v1438
        %v5155 = vunpack.c.l.b16 %v1439
        %v5156 = vunpack.c.h.b16 %v1439
        %v5157 = vunpack.c.l.b16 %v1440
        %v5158 = vunpack.c.h.b16 %v1440
        %v5159 = vunpack.c.l.b16 %v1441
        %v5160 = vunpack.c.h.b16 %v1441
        %v5161 = vunpack.c.l.b16 %v1442
        %v5162 = vunpack.c.h.b16 %v1442
        %v5163 = vunpack.c.l.b16 %v1443
        %v5164 = vunpack.c.h.b16 %v1443
        %v5165 = vunpack.c.l.b16 %v1444
        %v5166 = vunpack.c.h.b16 %v1444
        %v5167 = vunpack.c.l.b16 %v1445
        %v5168 = vunpack.c.h.b16 %v1445
        %v5169 = vunpack.c.l.b16 %v1446
        %v5170 = vunpack.c.h.b16 %v1446
        %v5171 = vunpack.c.l.b16 %v1447
        %v5172 = vunpack.c.h.b16 %v1447
        %v5173 = vunpack.c.l.b16 %v1448
        %v5174 = vunpack.c.l.b16 %v1449
        %v5175 = vunpack.c.h.b16 %v1449
        %v5176 = vunpack.c.l.b16 %v1450
        %v5177 = vunpack.c.h.b16 %v1450
        %v5178 = vunpack.c.l.b16 %v1451
        %v5179 = vunpack.c.h.b16 %v1451
        %v5180 = vunpack.c.l.b16 %v1452
        %v5181 = vunpack.c.h.b16 %v1452
        %v5182 = vunpack.c.l.b16 %v1453
        %v5183 = vunpack.c.h.b16 %v1453
        %v5184 = vunpack.c.l.b16 %v1454
        %v5185 = vunpack.c.h.b16 %v1454
        %v5186 = vunpack.c.l.b16 %v1455
        %v5187 = vunpack.c.h.b16 %v1455
        %v5188 = vunpack.c.l.b16 %v1456
        %v5189 = vunpack.c.h.b16 %v1456
        %v5190 = vunpack.c.l.b16 %v1457
        %v5191 = vunpack.c.h.b16 %v1457
        %v5192 = vunpack.c.l.b16 %v1458
        %v5193 = vunpack.c.l.b16 %v1459
        %v5194 = vunpack.c.h.b16 %v1459
        %v5195 = vunpack.c.l.b16 %v1460
        %v5196 = vunpack.c.h.b16 %v1460
        %v5197 = vunpack.c.l.b16 %v1461
        %v5198 = vunpack.c.h.b16 %v1461
        %v5199 = vunpack.c.l.b16 %v1462
        %v5200 = vunpack.c.h.b16 %v1462
        %v5201 = vunpack.c.l.b16 %v1463
        %v5202 = vunpack.c.h.b16 %v1463
        %v5203 = vunpack.c.l.b16 %v1464
        %v5204 = vunpack.c.h.b16 %v1464
        %v5205 = vunpack.c.l.b16 %v1465
        %v5206 = vunpack.c.h.b16 %v1465
        %v5207 = vunpack.c.l.b16 %v1466
        %v5208 = vunpack.c.h.b16 %v1466
        %v5209 = vunpack.c.l.b16 %v1467
        %v5210 = vunpack.c.h.b16 %v1467
        %v5211 = vunpack.c.l.b16 %v1468
        %v5212 = vunpack.c.l.b16 %v1469
        %v5213 = vunpack.c.h.b16 %v1469
        %v5214 = vunpack.c.l.b16 %v1470
        %v5215 = vunpack.c.h.b16 %v1470
        %v5216 = vunpack.c.l.b16 %v1471
        %v5217 = vunpack.c.h.b16 %v1471
        %v5218 = vunpack.c.l.b16 %v1472
        %v5219 = vunpack.c.h.b16 %v1472
        %v5220 = vunpack.c.l.b16 %v1473
        %v5221 = vunpack.c.h.b16 %v1473
        %v5222 = vunpack.c.l.b16 %v1474
        %v5223 = vunpack.c.h.b16 %v1474
        %v5224 = vunpack.c.l.b16 %v1475
        %v5225 = vunpack.c.h.b16 %v1475
        %v5226 = vunpack.c.l.b16 %v1476
        %v5227 = vunpack.c.h.b16 %v1476
        %v5228 = vunpack.c.l.b16 %v1477
        %v5229 = vunpack.c.h.b16 %v1477
        %v5230 = vunpack.c.l.b16 %v1478
        %v5231 = vunpack.c.l.b16 %v1479
        %v5232 = vunpack.c.h.b16 %v1479
        %v5233 = vunpack.c.l.b16 %v1480
        %v5234 = vunpack.c.h.b16 %v1480
        %v5235 = vunpack.c.l.b16 %v1481
        %v5236 = vunpack.c.h.b16 %v1481
        %v5237 = vunpack.c.l.b16 %v1482
        %v5238 = vunpack.c.h.b16 %v1482
        %v5239 = vunpack.c.l.b16 %v1483
        %v5240 = vunpack.c.h.b16 %v1483
        %v5241 = vunpack.c.l.b16 %v1484
        %v5242 = vunpack.c.h.b16 %v1484
        %v5243 = vunpack.c.l.b16 %v1485
        %v5244 = vunpack.c.h.b16 %v1485
        %v5245 = vunpack.c.l.b16 %v1486
        %v5246 = vunpack.c.h.b16 %v1486
        %v5247 = vunpack.c.l.b16 %v1487
        %v5248 = vunpack.c.h.b16 %v1487
        %v5249 = vunpack.c.l.b16 %v1488
        %v5250 = vunpack.c.l.b16 %v1489
        %v5251 = vunpack.c.h.b16 %v1489
        %v5252 = vunpack.c.l.b16 %v1490
        %v5253 = vunpack.c.h.b16 %v1490
        %v5254 = vunpack.c.l.b16 %v1491
        %v5255 = vunpack.c.h.b16 %v1491
        %v5256 = vunpack.c.l.b16 %v1492
        %v5257 = vunpack.c.h.b16 %v1492
        %v5258 = vunpack.c.l.b16 %v1493
        %v5259 = vunpack.c.h.b16 %v1493
        %v5260 = vunpack.c.l.b16 %v1494
        %v5261 = vunpack.c.h.b16 %v1494
        %v5262 = vunpack.c.l.b16 %v1495
        %v5263 = vunpack.c.h.b16 %v1495
        %v5264 = vunpack.c.l.b16 %v1496
        %v5265 = vunpack.c.h.b16 %v1496
        %v5266 = vunpack.c.l.b16 %v1497
        %v5267 = vunpack.c.h.b16 %v1497
        %v5268 = vunpack.c.l.b16 %v1498
        %v5269 = vpack.c.b16 %v2856, %v2837
        %v5270 = vpack.c.b16 %v2857, %v2838
        %v5271 = vpack.c.b16 %v2858, %v2839
        %v5272 = vpack.c.b16 %v2859, %v2840
        %v5273 = vpack.c.b16 %v2860, %v2841
        %v5274 = vpack.c.b16 %v2861, %v2842
        %v5275 = vpack.c.b16 %v2862, %v2843
        %v5276 = vpack.c.b16 %v2863, %v2844
        %v5277 = vpack.c.b16 %v2864, %v2845
        %v5278 = vpack.c.b16 %v2865, %v2846
        %v5279 = vpack.c.b16 %v2866, %v2847
        %v5280 = vpack.c.b16 %v2867, %v2848
        %v5281 = vpack.c.b16 %v2868, %v2849
        %v5282 = vpack.c.b16 %v2869, %v2850
        %v5283 = vpack.c.b16 %v2870, %v2851
        %v5284 = vpack.c.b16 %v2871, %v2852
        %v5285 = vpack.c.b16 %v2872, %v2853
        %v5286 = vpack.c.b16 %v2873, %v2854
        %v5287 = vpack.c.b16 %v2874, %v2855
        %v5288 = vpack.c.b16 %v2894, %v2875
        %v5289 = vpack.c.b16 %v2895, %v2876
        %v5290 = vpack.c.b16 %v2896, %v2877
        %v5291 = vpack.c.b16 %v2897, %v2878
        %v5292 = vpack.c.b16 %v2898, %v2879
        %v5293 = vpack.c.b16 %v2899, %v2880
        %v5294 = vpack.c.b16 %v2900, %v2881
        %v5295 = vpack.c.b16 %v2901, %v2882
        %v5296 = vpack.c.b16 %v2902, %v2883
        %v5297 = vpack.c.b16 %v2903, %v2884
        %v5298 = vpack.c.b16 %v2904, %v2885
        %v5299 = vpack.c.b16 %v2905, %v2886
        %v5300 = vpack.c.b16 %v2906, %v2887
        %v5301 = vpack.c.b16 %v2907, %v2888
        %v5302 = vpack.c.b16 %v2908, %v2889
        %v5303 = vpack.c.b16 %v2909, %v2890
        %v5304 = vpack.c.b16 %v2910, %v2891
        %v5305 = vpack.c.b16 %v2911, %v2892
        %v5306 = vpack.c.b16 %v2912, %v2893
        %v5307 = vpack.c.b16 %v2932, %v2913
        %v5308 = vpack.c.b16 %v2933, %v2914
        %v5309 = vpack.c.b16 %v2934, %v2915
        %v5310 = vpack.c.b16 %v2935, %v2916
        %v5311 = vpack.c.b16 %v2936, %v2917
        %v5312 = vpack.c.b16 %v2937, %v2918
        %v5313 = vpack.c.b16 %v2938, %v2919
        %v5314 = vpack.c.b16 %v2939, %v2920
        %v5315 = vpack.c.b16 %v2940, %v2921
        %v5316 = vpack.c.b16 %v2941, %v2922
        %v5317 = vpack.c.b16 %v2942, %v2923
        %v5318 = vpack.c.b16 %v2943, %v2924
        %v5319 = vpack.c.b16 %v2944, %v2925
        %v5320 = vpack.c.b16 %v2945, %v2926
        %v5321 = vpack.c.b16 %v2946, %v2927
        %v5322 = vpack.c.b16 %v2947, %v2928
        %v5323 = vpack.c.b16 %v2948, %v2929
        %v5324 = vpack.c.b16 %v2949, %v2930
        %v5325 = vpack.c.b16 %v2950, %v2931
        %v5326 = vpack.c.b16 %v2970, %v2951
        %v5327 = vpack.c.b16 %v2971, %v2952
        %v5328 = vpack.c.b16 %v2972, %v2953
        %v5329 = vpack.c.b16 %v2973, %v2954
        %v5330 = vpack.c.b16 %v2974, %v2955
        %v5331 = vpack.c.b16 %v2975, %v2956
        %v5332 = vpack.c.b16 %v2976, %v2957
        %v5333 = vpack.c.b16 %v2977, %v2958
        %v5334 = vpack.c.b16 %v2978, %v2959
        %v5335 = vpack.c.b16 %v2979, %v2960
        %v5336 = vpack.c.b16 %v2980, %v2961
        %v5337 = vpack.c.b16 %v2981, %v2962
        %v5338 = vpack.c.b16 %v2982, %v2963
        %v5339 = vpack.c.b16 %v2983, %v2964
        %v5340 = vpack.c.b16 %v2984, %v2965
        %v5341 = vpack.c.b16 %v2985, %v2966
        %v5342 = vpack.c.b16 %v2986, %v2967
        %v5343 = vpack.c.b16 %v2987, %v2968
        %v5344 = vpack.c.b16 %v2988, %v2969
        %v5345 = vpack.c.b16 %v3008, %v2989
        %v5346 = vpack.c.b16 %v3009, %v2990
        %v5347 = vpack.c.b16 %v3010, %v2991
        %v5348 = vpack.c.b16 %v3011, %v2992
        %v5349 = vpack.c.b16 %v3012, %v2993
        %v5350 = vpack.c.b16 %v3013, %v2994
        %v5351 = vpack.c.b16 %v3014, %v2995
        %v5352 = vpack.c.b16 %v3015, %v2996
        %v5353 = vpack.c.b16 %v3016, %v2997
        %v5354 = vpack.c.b16 %v3017, %v2998
        %v5355 = vpack.c.b16 %v3018, %v2999
        %v5356 = vpack.c.b16 %v3019, %v3000
        %v5357 = vpack.c.b16 %v3020, %v3001
        %v5358 = vpack.c.b16 %v3021, %v3002
        %v5359 = vpack.c.b16 %v3022, %v3003
        %v5360 = vpack.c.b16 %v3023, %v3004
        %v5361 = vpack.c.b16 %v3024, %v3005
        %v5362 = vpack.c.b16 %v3025, %v3006
        %v5363 = vpack.c.b16 %v3026, %v3007
        %v5364 = vpack.c.b16 %v3046, %v3027
        %v5365 = vpack.c.b16 %v3047, %v3028
        %v5366 = vpack.c.b16 %v3048, %v3029
        %v5367 = vpack.c.b16 %v3049, %v3030
        %v5368 = vpack.c.b16 %v3050, %v3031
        %v5369 = vpack.c.b16 %v3051, %v3032
        %v5370 = vpack.c.b16 %v3052, %v3033
        %v5371 = vpack.c.b16 %v3053, %v3034
        %v5372 = vpack.c.b16 %v3054, %v3035
        %v5373 = vpack.c.b16 %v3055, %v3036
        %v5374 = vpack.c.b16 %v3056, %v3037
        %v5375 = vpack.c.b16 %v3057, %v3038
        %v5376 = vpack.c.b16 %v3058, %v3039
        %v5377 = vpack.c.b16 %v3059, %v3040
        %v5378 = vpack.c.b16 %v3060, %v3041
        %v5379 = vpack.c.b16 %v3061, %v3042
        %v5380 = vpack.c.b16 %v3062, %v3043
        %v5381 = vpack.c.b16 %v3063, %v3044
        %v5382 = vpack.c.b16 %v3064, %v3045
        %v5383 = vpack.c.b16 %v3084, %v3065
        %v5384 = vpack.c.b16 %v3085, %v3066
        %v5385 = vpack.c.b16 %v3086, %v3067
        %v5386 = vpack.c.b16 %v3087, %v3068
        %v5387 = vpack.c.b16 %v3088, %v3069
        %v5388 = vpack.c.b16 %v3089, %v3070
        %v5389 = vpack.c.b16 %v3090, %v3071
        %v5390 = vpack.c.b16 %v3091, %v3072
        %v5391 = vpack.c.b16 %v3092, %v3073
        %v5392 = vpack.c.b16 %v3093, %v3074
        %v5393 = vpack.c.b16 %v3094, %v3075
        %v5394 = vpack.c.b16 %v3095, %v3076
        %v5395 = vpack.c.b16 %v3096, %v3077
        %v5396 = vpack.c.b16 %v3097, %v3078
        %v5397 = vpack.c.b16 %v3098, %v3079
        %v5398 = vpack.c.b16 %v3099, %v3080
        %v5399 = vpack.c.b16 %v3100, %v3081
        %v5400 = vpack.c.b16 %v3101, %v3082
        %v5401 = vpack.c.b16 %v3102, %v3083
        %v5402 = vpack.c.b16 %v3122, %v3103
        %v5403 = vpack.c.b16 %v3123, %v3104
        %v5404 = vpack.c.b16 %v3124, %v3105
        %v5405 = vpack.c.b16 %v3125, %v3106
        %v5406 = vpack.c.b16 %v3126, %v3107
        %v5407 = vpack.c.b16 %v3127, %v3108
        %v5408 = vpack.c.b16 %v3128, %v3109
        %v5409 = vpack.c.b16 %v3129, %v3110
        %v5410 = vpack.c.b16 %v3130, %v3111
        %v5411 = vpack.c.b16 %v3131, %v3112
        %v5412 = vpack.c.b16 %v3132, %v3113
        %v5413 = vpack.c.b16 %v3133, %v3114
        %v5414 = vpack.c.b16 %v3134, %v3115
        %v5415 = vpack.c.b16 %v3135, %v3116
        %v5416 = vpack.c.b16 %v3136, %v3117
        %v5417 = vpack.c.b16 %v3137, %v3118
        %v5418 = vpack.c.b16 %v3138, %v3119
        %v5419 = vpack.c.b16 %v3139, %v3120
        %v5420 = vpack.c.b16 %v3140, %v3121
        %v5421 = vpack.c.b16 %v3160, %v3141
        %v5422 = vpack.c.b16 %v3161, %v3142
        %v5423 = vpack.c.b16 %v3162, %v3143
        %v5424 = vpack.c.b16 %v3163, %v3144
        %v5425 = vpack.c.b16 %v3164, %v3145
        %v5426 = vpack.c.b16 %v3165, %v3146
        %v5427 = vpack.c.b16 %v3166, %v3147
        %v5428 = vpack.c.b16 %v3167, %v3148
        %v5429 = vpack.c.b16 %v3168, %v3149
        %v5430 = vpack.c.b16 %v3169, %v3150
        %v5431 = vpack.c.b16 %v3170, %v3151
        %v5432 = vpack.c.b16 %v3171, %v3152
        %v5433 = vpack.c.b16 %v3172, %v3153
        %v5434 = vpack.c.b16 %v3173, %v3154
        %v5435 = vpack.c.b16 %v3174, %v3155
        %v5436 = vpack.c.b16 %v3175, %v3156
        %v5437 = vpack.c.b16 %v3176, %v3157
        %v5438 = vpack.c.b16 %v3177, %v3158
        %v5439 = vpack.c.b16 %v3178, %v3159
        %v5440 = vpack.c.b16 %v3198, %v3179
        %v5441 = vpack.c.b16 %v3199, %v3180
        %v5442 = vpack.c.b16 %v3200, %v3181
        %v5443 = vpack.c.b16 %v3201, %v3182
        %v5444 = vpack.c.b16 %v3202, %v3183
        %v5445 = vpack.c.b16 %v3203, %v3184
        %v5446 = vpack.c.b16 %v3204, %v3185
        %v5447 = vpack.c.b16 %v3205, %v3186
        %v5448 = vpack.c.b16 %v3206, %v3187
        %v5449 = vpack.c.b16 %v3207, %v3188
        %v5450 = vpack.c.b16 %v3208, %v3189
        %v5451 = vpack.c.b16 %v3209, %v3190
        %v5452 = vpack.c.b16 %v3210, %v3191
        %v5453 = vpack.c.b16 %v3211, %v3192
        %v5454 = vpack.c.b16 %v3212, %v3193
        %v5455 = vpack.c.b16 %v3213, %v3194
        %v5456 = vpack.c.b16 %v3214, %v3195
        %v5457 = vpack.c.b16 %v3215, %v3196
        %v5458 = vpack.c.b16 %v3216, %v3197
        %v5459 = vpack.c.b16 %v3236, %v3217
        %v5460 = vpack.c.b16 %v3237, %v3218
        %v5461 = vpack.c.b16 %v3238, %v3219
        %v5462 = vpack.c.b16 %v3239, %v3220
        %v5463 = vpack.c.b16 %v3240, %v3221
        %v5464 = vpack.c.b16 %v3241, %v3222
        %v5465 = vpack.c.b16 %v3242, %v3223
        %v5466 = vpack.c.b16 %v3243, %v3224
        %v5467 = vpack.c.b16 %v3244, %v3225
        %v5468 = vpack.c.b16 %v3245, %v3226
        %v5469 = vpack.c.b16 %v3246, %v3227
        %v5470 = vpack.c.b16 %v3247, %v3228
        %v5471 = vpack.c.b16 %v3248, %v3229
        %v5472 = vpack.c.b16 %v3249, %v3230
        %v5473 = vpack.c.b16 %v3250, %v3231
        %v5474 = vpack.c.b16 %v3251, %v3232
        %v5475 = vpack.c.b16 %v3252, %v3233
        %v5476 = vpack.c.b16 %v3253, %v3234
        %v5477 = vpack.c.b16 %v3254, %v3235
        %v5478 = vpack.c.b16 %v3274, %v3255
        %v5479 = vpack.c.b16 %v3275, %v3256
        %v5480 = vpack.c.b16 %v3276, %v3257
        %v5481 = vpack.c.b16 %v3277, %v3258
        %v5482 = vpack.c.b16 %v3278, %v3259
        %v5483 = vpack.c.b16 %v3279, %v3260
        %v5484 = vpack.c.b16 %v3280, %v3261
        %v5485 = vpack.c.b16 %v3281, %v3262
        %v5486 = vpack.c.b16 %v3282, %v3263
        %v5487 = vpack.c.b16 %v3283, %v3264
        %v5488 = vpack.c.b16 %v3284, %v3265
        %v5489 = vpack.c.b16 %v3285, %v3266
        %v5490 = vpack.c.b16 %v3286, %v3267
        %v5491 = vpack.c.b16 %v3287, %v3268
        %v5492 = vpack.c.b16 %v3288, %v3269
        %v5493 = vpack.c.b16 %v3289, %v3270
        %v5494 = vpack.c.b16 %v3290, %v3271
        %v5495 = vpack.c.b16 %v3291, %v3272
        %v5496 = vpack.c.b16 %v3292, %v3273
        %v5497 = vpack.c.b16 %v3312, %v3293
        %v5498 = vpack.c.b16 %v3313, %v3294
        %v5499 = vpack.c.b16 %v3314, %v3295
        %v5500 = vpack.c.b16 %v3315, %v3296
        %v5501 = vpack.c.b16 %v3316, %v3297
        %v5502 = vpack.c.b16 %v3317, %v3298
        %v5503 = vpack.c.b16 %v3318, %v3299
        %v5504 = vpack.c.b16 %v3319, %v3300
        %v5505 = vpack.c.b16 %v3320, %v3301
        %v5506 = vpack.c.b16 %v3321, %v3302
        %v5507 = vpack.c.b16 %v3322, %v3303
        %v5508 = vpack.c.b16 %v3323, %v3304
        %v5509 = vpack.c.b16 %v3324, %v3305
        %v5510 = vpack.c.b16 %v3325, %v3306
        %v5511 = vpack.c.b16 %v3326, %v3307
        %v5512 = vpack.c.b16 %v3327, %v3308
        %v5513 = vpack.c.b16 %v3328, %v3309
        %v5514 = vpack.c.b16 %v3329, %v3310
        %v5515 = vpack.c.b16 %v3330, %v3311
        %v5516 = vpack.c.b16 %v3350, %v3331
        %v5517 = vpack.c.b16 %v3351, %v3332
        %v5518 = vpack.c.b16 %v3352, %v3333
        %v5519 = vpack.c.b16 %v3353, %v3334
        %v5520 = vpack.c.b16 %v3354, %v3335
        %v5521 = vpack.c.b16 %v3355, %v3336
        %v5522 = vpack.c.b16 %v3356, %v3337
        %v5523 = vpack.c.b16 %v3357, %v3338
        %v5524 = vpack.c.b16 %v3358, %v3339
        %v5525 = vpack.c.b16 %v3359, %v3340
        %v5526 = vpack.c.b16 %v3360, %v3341
        %v5527 = vpack.c.b16 %v3361, %v3342
        %v5528 = vpack.c.b16 %v3362, %v3343
        %v5529 = vpack.c.b16 %v3363, %v3344
        %v5530 = vpack.c.b16 %v3364, %v3345
        %v5531 = vpack.c.b16 %v3365, %v3346
        %v5532 = vpack.c.b16 %v3366, %v3347
        %v5533 = vpack.c.b16 %v3367, %v3348
        %v5534 = vpack.c.b16 %v3368, %v3349
        %v5535 = vpack.c.b16 %v3388, %v3369
        %v5536 = vpack.c.b16 %v3389, %v3370
        %v5537 = vpack.c.b16 %v3390, %v3371
        %v5538 = vpack.c.b16 %v3391, %v3372
        %v5539 = vpack.c.b16 %v3392, %v3373
        %v5540 = vpack.c.b16 %v3393, %v3374
        %v5541 = vpack.c.b16 %v3394, %v3375
        %v5542 = vpack.c.b16 %v3395, %v3376
        %v5543 = vpack.c.b16 %v3396, %v3377
        %v5544 = vpack.c.b16 %v3397, %v3378
        %v5545 = vpack.c.b16 %v3398, %v3379
        %v5546 = vpack.c.b16 %v3399, %v3380
        %v5547 = vpack.c.b16 %v3400, %v3381
        %v5548 = vpack.c.b16 %v3401, %v3382
        %v5549 = vpack.c.b16 %v3402, %v3383
        %v5550 = vpack.c.b16 %v3403, %v3384
        %v5551 = vpack.c.b16 %v3404, %v3385
        %v5552 = vpack.c.b16 %v3405, %v3386
        %v5553 = vpack.c.b16 %v3406, %v3387
        %v5554 = vpack.c.b16 %v3426, %v3407
        %v5555 = vpack.c.b16 %v3427, %v3408
        %v5556 = vpack.c.b16 %v3428, %v3409
        %v5557 = vpack.c.b16 %v3429, %v3410
        %v5558 = vpack.c.b16 %v3430, %v3411
        %v5559 = vpack.c.b16 %v3431, %v3412
        %v5560 = vpack.c.b16 %v3432, %v3413
        %v5561 = vpack.c.b16 %v3433, %v3414
        %v5562 = vpack.c.b16 %v3434, %v3415
        %v5563 = vpack.c.b16 %v3435, %v3416
        %v5564 = vpack.c.b16 %v3436, %v3417
        %v5565 = vpack.c.b16 %v3437, %v3418
        %v5566 = vpack.c.b16 %v3438, %v3419
        %v5567 = vpack.c.b16 %v3439, %v3420
        %v5568 = vpack.c.b16 %v3440, %v3421
        %v5569 = vpack.c.b16 %v3441, %v3422
        %v5570 = vpack.c.b16 %v3442, %v3423
        %v5571 = vpack.c.b16 %v3443, %v3424
        %v5572 = vpack.c.b16 %v3444, %v3425
        %v5573 = vpack.c.b16 %v3464, %v3445
        %v5574 = vpack.c.b16 %v3465, %v3446
        %v5575 = vpack.c.b16 %v3466, %v3447
        %v5576 = vpack.c.b16 %v3467, %v3448
        %v5577 = vpack.c.b16 %v3468, %v3449
        %v5578 = vpack.c.b16 %v3469, %v3450
        %v5579 = vpack.c.b16 %v3470, %v3451
        %v5580 = vpack.c.b16 %v3471, %v3452
        %v5581 = vpack.c.b16 %v3472, %v3453
        %v5582 = vpack.c.b16 %v3473, %v3454
        %v5583 = vpack.c.b16 %v3474, %v3455
        %v5584 = vpack.c.b16 %v3475, %v3456
        %v5585 = vpack.c.b16 %v3476, %v3457
        %v5586 = vpack.c.b16 %v3477, %v3458
        %v5587 = vpack.c.b16 %v3478, %v3459
        %v5588 = vpack.c.b16 %v3479, %v3460
        %v5589 = vpack.c.b16 %v3480, %v3461
        %v5590 = vpack.c.b16 %v3481, %v3462
        %v5591 = vpack.c.b16 %v3482, %v3463
        %v5592 = vpack.c.b16 %v3502, %v3483
        %v5593 = vpack.c.b16 %v3503, %v3484
        %v5594 = vpack.c.b16 %v3504, %v3485
        %v5595 = vpack.c.b16 %v3505, %v3486
        %v5596 = vpack.c.b16 %v3506, %v3487
        %v5597 = vpack.c.b16 %v3507, %v3488
        %v5598 = vpack.c.b16 %v3508, %v3489
        %v5599 = vpack.c.b16 %v3509, %v3490
        %v5600 = vpack.c.b16 %v3510, %v3491
        %v5601 = vpack.c.b16 %v3511, %v3492
        %v5602 = vpack.c.b16 %v3512, %v3493
        %v5603 = vpack.c.b16 %v3513, %v3494
        %v5604 = vpack.c.b16 %v3514, %v3495
        %v5605 = vpack.c.b16 %v3515, %v3496
        %v5606 = vpack.c.b16 %v3516, %v3497
        %v5607 = vpack.c.b16 %v3517, %v3498
        %v5608 = vpack.c.b16 %v3518, %v3499
        %v5609 = vpack.c.b16 %v3519, %v3500
        %v5610 = vpack.c.b16 %v3520, %v3501
        %v5611 = vpack.c.b16 %v3540, %v3521
        %v5612 = vpack.c.b16 %v3541, %v3522
        %v5613 = vpack.c.b16 %v3542, %v3523
        %v5614 = vpack.c.b16 %v3543, %v3524
        %v5615 = vpack.c.b16 %v3544, %v3525
        %v5616 = vpack.c.b16 %v3545, %v3526
        %v5617 = vpack.c.b16 %v3546, %v3527
        %v5618 = vpack.c.b16 %v3547, %v3528
        %v5619 = vpack.c.b16 %v3548, %v3529
        %v5620 = vpack.c.b16 %v3549, %v3530
        %v5621 = vpack.c.b16 %v3550, %v3531
        %v5622 = vpack.c.b16 %v3551, %v3532
        %v5623 = vpack.c.b16 %v3552, %v3533
        %v5624 = vpack.c.b16 %v3553, %v3534
        %v5625 = vpack.c.b16 %v3554, %v3535
        %v5626 = vpack.c.b16 %v3555, %v3536
        %v5627 = vpack.c.b16 %v3556, %v3537
        %v5628 = vpack.c.b16 %v3557, %v3538
        %v5629 = vpack.c.b16 %v3558, %v3539
        %v5630 = vpack.c.b16 %v3578, %v3559
        %v5631 = vpack.c.b16 %v3579, %v3560
        %v5632 = vpack.c.b16 %v3580, %v3561
        %v5633 = vpack.c.b16 %v3581, %v3562
        %v5634 = vpack.c.b16 %v3582, %v3563
        %v5635 = vpack.c.b16 %v3583, %v3564
        %v5636 = vpack.c.b16 %v3584, %v3565
        %v5637 = vpack.c.b16 %v3585, %v3566
        %v5638 = vpack.c.b16 %v3586, %v3567
        %v5639 = vpack.c.b16 %v3587, %v3568
        %v5640 = vpack.c.b16 %v3588, %v3569
        %v5641 = vpack.c.b16 %v3589, %v3570
        %v5642 = vpack.c.b16 %v3590, %v3571
        %v5643 = vpack.c.b16 %v3591, %v3572
        %v5644 = vpack.c.b16 %v3592, %v3573
        %v5645 = vpack.c.b16 %v3593, %v3574
        %v5646 = vpack.c.b16 %v3594, %v3575
        %v5647 = vpack.c.b16 %v3595, %v3576
        %v5648 = vpack.c.b16 %v3596, %v3577
        %v5649 = vpack.c.b16 %v3616, %v3597
        %v5650 = vpack.c.b16 %v3617, %v3598
        %v5651 = vpack.c.b16 %v3618, %v3599
        %v5652 = vpack.c.b16 %v3619, %v3600
        %v5653 = vpack.c.b16 %v3620, %v3601
        %v5654 = vpack.c.b16 %v3621, %v3602
        %v5655 = vpack.c.b16 %v3622, %v3603
        %v5656 = vpack.c.b16 %v3623, %v3604
        %v5657 = vpack.c.b16 %v3624, %v3605
        %v5658 = vpack.c.b16 %v3625, %v3606
        %v5659 = vpack.c.b16 %v3626, %v3607
        %v5660 = vpack.c.b16 %v3627, %v3608
        %v5661 = vpack.c.b16 %v3628, %v3609
        %v5662 = vpack.c.b16 %v3629, %v3610
        %v5663 = vpack.c.b16 %v3630, %v3611
        %v5664 = vpack.c.b16 %v3631, %v3612
        %v5665 = vpack.c.b16 %v3632, %v3613
        %v5666 = vpack.c.b16 %v3633, %v3614
        %v5667 = vpack.c.b16 %v3634, %v3615
        %v5668 = vpack.c.b16 %v3654, %v3635
        %v5669 = vpack.c.b16 %v3655, %v3636
        %v5670 = vpack.c.b16 %v3656, %v3637
        %v5671 = vpack.c.b16 %v3657, %v3638
        %v5672 = vpack.c.b16 %v3658, %v3639
        %v5673 = vpack.c.b16 %v3659, %v3640
        %v5674 = vpack.c.b16 %v3660, %v3641
        %v5675 = vpack.c.b16 %v3661, %v3642
        %v5676 = vpack.c.b16 %v3662, %v3643
        %v5677 = vpack.c.b16 %v3663, %v3644
        %v5678 = vpack.c.b16 %v3664, %v3645
        %v5679 = vpack.c.b16 %v3665, %v3646
        %v5680 = vpack.c.b16 %v3666, %v3647
        %v5681 = vpack.c.b16 %v3667, %v3648
        %v5682 = vpack.c.b16 %v3668, %v3649
        %v5683 = vpack.c.b16 %v3669, %v3650
        %v5684 = vpack.c.b16 %v3670, %v3651
        %v5685 = vpack.c.b16 %v3671, %v3652
        %v5686 = vpack.c.b16 %v3672, %v3653
        %v5687 = vpack.c.b16 %v3692, %v3673
        %v5688 = vpack.c.b16 %v3693, %v3674
        %v5689 = vpack.c.b16 %v3694, %v3675
        %v5690 = vpack.c.b16 %v3695, %v3676
        %v5691 = vpack.c.b16 %v3696, %v3677
        %v5692 = vpack.c.b16 %v3697, %v3678
        %v5693 = vpack.c.b16 %v3698, %v3679
        %v5694 = vpack.c.b16 %v3699, %v3680
        %v5695 = vpack.c.b16 %v3700, %v3681
        %v5696 = vpack.c.b16 %v3701, %v3682
        %v5697 = vpack.c.b16 %v3702, %v3683
        %v5698 = vpack.c.b16 %v3703, %v3684
        %v5699 = vpack.c.b16 %v3704, %v3685
        %v5700 = vpack.c.b16 %v3705, %v3686
        %v5701 = vpack.c.b16 %v3706, %v3687
        %v5702 = vpack.c.b16 %v3707, %v3688
        %v5703 = vpack.c.b16 %v3708, %v3689
        %v5704 = vpack.c.b16 %v3709, %v3690
        %v5705 = vpack.c.b16 %v3710, %v3691
        %v5706 = vpack.c.b16 %v3730, %v3711
        %v5707 = vpack.c.b16 %v3731, %v3712
        %v5708 = vpack.c.b16 %v3732, %v3713
        %v5709 = vpack.c.b16 %v3733, %v3714
        %v5710 = vpack.c.b16 %v3734, %v3715
        %v5711 = vpack.c.b16 %v3735, %v3716
        %v5712 = vpack.c.b16 %v3736, %v3717
        %v5713 = vpack.c.b16 %v3737, %v3718
        %v5714 = vpack.c.b16 %v3738, %v3719
        %v5715 = vpack.c.b16 %v3739, %v3720
        %v5716 = vpack.c.b16 %v3740, %v3721
        %v5717 = vpack.c.b16 %v3741, %v3722
        %v5718 = vpack.c.b16 %v3742, %v3723
        %v5719 = vpack.c.b16 %v3743, %v3724
        %v5720 = vpack.c.b16 %v3744, %v3725
        %v5721 = vpack.c.b16 %v3745, %v3726
        %v5722 = vpack.c.b16 %v3746, %v3727
        %v5723 = vpack.c.b16 %v3747, %v3728
        %v5724 = vpack.c.b16 %v3748, %v3729
        %v5725 = vpack.c.b16 %v3768, %v3749
        %v5726 = vpack.c.b16 %v3769, %v3750
        %v5727 = vpack.c.b16 %v3770, %v3751
        %v5728 = vpack.c.b16 %v3771, %v3752
        %v5729 = vpack.c.b16 %v3772, %v3753
        %v5730 = vpack.c.b16 %v3773, %v3754
        %v5731 = vpack.c.b16 %v3774, %v3755
        %v5732 = vpack.c.b16 %v3775, %v3756
        %v5733 = vpack.c.b16 %v3776, %v3757
        %v5734 = vpack.c.b16 %v3777, %v3758
        %v5735 = vpack.c.b16 %v3778, %v3759
        %v5736 = vpack.c.b16 %v3779, %v3760
        %v5737 = vpack.c.b16 %v3780, %v3761
        %v5738 = vpack.c.b16 %v3781, %v3762
        %v5739 = vpack.c.b16 %v3782, %v3763
        %v5740 = vpack.c.b16 %v3783, %v3764
        %v5741 = vpack.c.b16 %v3784, %v3765
        %v5742 = vpack.c.b16 %v3785, %v3766
        %v5743 = vpack.c.b16 %v3786, %v3767
        %v5744 = vpack.c.b16 %v3806, %v3787
        %v5745 = vpack.c.b16 %v3807, %v3788
        %v5746 = vpack.c.b16 %v3808, %v3789
        %v5747 = vpack.c.b16 %v3809, %v3790
        %v5748 = vpack.c.b16 %v3810, %v3791
        %v5749 = vpack.c.b16 %v3811, %v3792
        %v5750 = vpack.c.b16 %v3812, %v3793
        %v5751 = vpack.c.b16 %v3813, %v3794
        %v5752 = vpack.c.b16 %v3814, %v3795
        %v5753 = vpack.c.b16 %v3815, %v3796
        %v5754 = vpack.c.b16 %v3816, %v3797
        %v5755 = vpack.c.b16 %v3817, %v3798
        %v5756 = vpack.c.b16 %v3818, %v3799
        %v5757 = vpack.c.b16 %v3819, %v3800
        %v5758 = vpack.c.b16 %v3820, %v3801
        %v5759 = vpack.c.b16 %v3821, %v3802
        %v5760 = vpack.c.b16 %v3822, %v3803
        %v5761 = vpack.c.b16 %v3823, %v3804
        %v5762 = vpack.c.b16 %v3824, %v3805
        %v5763 = vpack.c.b16 %v3844, %v3825
        %v5764 = vpack.c.b16 %v3845, %v3826
        %v5765 = vpack.c.b16 %v3846, %v3827
        %v5766 = vpack.c.b16 %v3847, %v3828
        %v5767 = vpack.c.b16 %v3848, %v3829
        %v5768 = vpack.c.b16 %v3849, %v3830
        %v5769 = vpack.c.b16 %v3850, %v3831
        %v5770 = vpack.c.b16 %v3851, %v3832
        %v5771 = vpack.c.b16 %v3852, %v3833
        %v5772 = vpack.c.b16 %v3853, %v3834
        %v5773 = vpack.c.b16 %v3854, %v3835
        %v5774 = vpack.c.b16 %v3855, %v3836
        %v5775 = vpack.c.b16 %v3856, %v3837
        %v5776 = vpack.c.b16 %v3857, %v3838
        %v5777 = vpack.c.b16 %v3858, %v3839
        %v5778 = vpack.c.b16 %v3859, %v3840
        %v5779 = vpack.c.b16 %v3860, %v3841
        %v5780 = vpack.c.b16 %v3861, %v3842
        %v5781 = vpack.c.b16 %v3862, %v3843
        %v5782 = vpack.c.b16 %v3882, %v3863
        %v5783 = vpack.c.b16 %v3883, %v3864
        %v5784 = vpack.c.b16 %v3884, %v3865
        %v5785 = vpack.c.b16 %v3885, %v3866
        %v5786 = vpack.c.b16 %v3886, %v3867
        %v5787 = vpack.c.b16 %v3887, %v3868
        %v5788 = vpack.c.b16 %v3888, %v3869
        %v5789 = vpack.c.b16 %v3889, %v3870
        %v5790 = vpack.c.b16 %v3890, %v3871
        %v5791 = vpack.c.b16 %v3891, %v3872
        %v5792 = vpack.c.b16 %v3892, %v3873
        %v5793 = vpack.c.b16 %v3893, %v3874
        %v5794 = vpack.c.b16 %v3894, %v3875
        %v5795 = vpack.c.b16 %v3895, %v3876
        %v5796 = vpack.c.b16 %v3896, %v3877
        %v5797 = vpack.c.b16 %v3897, %v3878
        %v5798 = vpack.c.b16 %v3898, %v3879
        %v5799 = vpack.c.b16 %v3899, %v3880
        %v5800 = vpack.c.b16 %v3900, %v3881
        %v5801 = vpack.c.b16 %v3920, %v3901
        %v5802 = vpack.c.b16 %v3921, %v3902
        %v5803 = vpack.c.b16 %v3922, %v3903
        %v5804 = vpack.c.b16 %v3923, %v3904
        %v5805 = vpack.c.b16 %v3924, %v3905
        %v5806 = vpack.c.b16 %v3925, %v3906
        %v5807 = vpack.c.b16 %v3926, %v3907
        %v5808 = vpack.c.b16 %v3927, %v3908
        %v5809 = vpack.c.b16 %v3928, %v3909
        %v5810 = vpack.c.b16 %v3929, %v3910
        %v5811 = vpack.c.b16 %v3930, %v3911
        %v5812 = vpack.c.b16 %v3931, %v3912
        %v5813 = vpack.c.b16 %v3932, %v3913
        %v5814 = vpack.c.b16 %v3933, %v3914
        %v5815 = vpack.c.b16 %v3934, %v3915
        %v5816 = vpack.c.b16 %v3935, %v3916
        %v5817 = vpack.c.b16 %v3936, %v3917
        %v5818 = vpack.c.b16 %v3937, %v3918
        %v5819 = vpack.c.b16 %v3938, %v3919
        %v5820 = vpack.c.b16 %v3958, %v3939
        %v5821 = vpack.c.b16 %v3959, %v3940
        %v5822 = vpack.c.b16 %v3960, %v3941
        %v5823 = vpack.c.b16 %v3961, %v3942
        %v5824 = vpack.c.b16 %v3962, %v3943
        %v5825 = vpack.c.b16 %v3963, %v3944
        %v5826 = vpack.c.b16 %v3964, %v3945
        %v5827 = vpack.c.b16 %v3965, %v3946
        %v5828 = vpack.c.b16 %v3966, %v3947
        %v5829 = vpack.c.b16 %v3967, %v3948
        %v5830 = vpack.c.b16 %v3968, %v3949
        %v5831 = vpack.c.b16 %v3969, %v3950
        %v5832 = vpack.c.b16 %v3970, %v3951
        %v5833 = vpack.c.b16 %v3971, %v3952
        %v5834 = vpack.c.b16 %v3972, %v3953
        %v5835 = vpack.c.b16 %v3973, %v3954
        %v5836 = vpack.c.b16 %v3974, %v3955
        %v5837 = vpack.c.b16 %v3975, %v3956
        %v5838 = vpack.c.b16 %v3976, %v3957
        %v5839 = vpack.c.b16 %v3996, %v3977
        %v5840 = vpack.c.b16 %v3997, %v3978
        %v5841 = vpack.c.b16 %v3998, %v3979
        %v5842 = vpack.c.b16 %v3999, %v3980
        %v5843 = vpack.c.b16 %v4000, %v3981
        %v5844 = vpack.c.b16 %v4001, %v3982
        %v5845 = vpack.c.b16 %v4002, %v3983
        %v5846 = vpack.c.b16 %v4003, %v3984
        %v5847 = vpack.c.b16 %v4004, %v3985
        %v5848 = vpack.c.b16 %v4005, %v3986
        %v5849 = vpack.c.b16 %v4006, %v3987
        %v5850 = vpack.c.b16 %v4007, %v3988
        %v5851 = vpack.c.b16 %v4008, %v3989
        %v5852 = vpack.c.b16 %v4009, %v3990
        %v5853 = vpack.c.b16 %v4010, %v3991
        %v5854 = vpack.c.b16 %v4011, %v3992
        %v5855 = vpack.c.b16 %v4012, %v3993
        %v5856 = vpack.c.b16 %v4013, %v3994
        %v5857 = vpack.c.b16 %v4014, %v3995
        %v5858 = vpack.c.b16 %v4034, %v4015
        %v5859 = vpack.c.b16 %v4035, %v4016
        %v5860 = vpack.c.b16 %v4036, %v4017
        %v5861 = vpack.c.b16 %v4037, %v4018
        %v5862 = vpack.c.b16 %v4038, %v4019
        %v5863 = vpack.c.b16 %v4039, %v4020
        %v5864 = vpack.c.b16 %v4040, %v4021
        %v5865 = vpack.c.b16 %v4041, %v4022
        %v5866 = vpack.c.b16 %v4042, %v4023
        %v5867 = vpack.c.b16 %v4043, %v4024
        %v5868 = vpack.c.b16 %v4044, %v4025
        %v5869 = vpack.c.b16 %v4045, %v4026
        %v5870 = vpack.c.b16 %v4046, %v4027
        %v5871 = vpack.c.b16 %v4047, %v4028
        %v5872 = vpack.c.b16 %v4048, %v4029
        %v5873 = vpack.c.b16 %v4049, %v4030
        %v5874 = vpack.c.b16 %v4050, %v4031
        %v5875 = vpack.c.b16 %v4051, %v4032
        %v5876 = vpack.c.b16 %v4052, %v4033
        %v5877 = vpack.c.b16 %v4072, %v4053
        %v5878 = vpack.c.b16 %v4073, %v4054
        %v5879 = vpack.c.b16 %v4074, %v4055
        %v5880 = vpack.c.b16 %v4075, %v4056
        %v5881 = vpack.c.b16 %v4076, %v4057
        %v5882 = vpack.c.b16 %v4077, %v4058
        %v5883 = vpack.c.b16 %v4078, %v4059
        %v5884 = vpack.c.b16 %v4079, %v4060
        %v5885 = vpack.c.b16 %v4080, %v4061
        %v5886 = vpack.c.b16 %v4081, %v4062
        %v5887 = vpack.c.b16 %v4082, %v4063
        %v5888 = vpack.c.b16 %v4083, %v4064
        %v5889 = vpack.c.b16 %v4084, %v4065
        %v5890 = vpack.c.b16 %v4085, %v4066
        %v5891 = vpack.c.b16 %v4086, %v4067
        %v5892 = vpack.c.b16 %v4087, %v4068
        %v5893 = vpack.c.b16 %v4088, %v4069
        %v5894 = vpack.c.b16 %v4089, %v4070
        %v5895 = vpack.c.b16 %v4090, %v4071
        %v5896 = vpack.c.b16 %v4110, %v4091
        %v5897 = vpack.c.b16 %v4111, %v4092
        %v5898 = vpack.c.b16 %v4112, %v4093
        %v5899 = vpack.c.b16 %v4113, %v4094
        %v5900 = vpack.c.b16 %v4114, %v4095
        %v5901 = vpack.c.b16 %v4115, %v4096
        %v5902 = vpack.c.b16 %v4116, %v4097
        %v5903 = vpack.c.b16 %v4117, %v4098
        %v5904 = vpack.c.b16 %v4118, %v4099
        %v5905 = vpack.c.b16 %v4119, %v4100
        %v5906 = vpack.c.b16 %v4120, %v4101
        %v5907 = vpack.c.b16 %v4121, %v4102
        %v5908 = vpack.c.b16 %v4122, %v4103
        %v5909 = vpack.c.b16 %v4123, %v4104
        %v5910 = vpack.c.b16 %v4124, %v4105
        %v5911 = vpack.c.b16 %v4125, %v4106
        %v5912 = vpack.c.b16 %v4126, %v4107
        %v5913 = vpack.c.b16 %v4127, %v4108
        %v5914 = vpack.c.b16 %v4128, %v4109
        %v5915 = vpack.c.b16 %v4148, %v4129
        %v5916 = vpack.c.b16 %v4149, %v4130
        %v5917 = vpack.c.b16 %v4150, %v4131
        %v5918 = vpack.c.b16 %v4151, %v4132
        %v5919 = vpack.c.b16 %v4152, %v4133
        %v5920 = vpack.c.b16 %v4153, %v4134
        %v5921 = vpack.c.b16 %v4154, %v4135
        %v5922 = vpack.c.b16 %v4155, %v4136
        %v5923 = vpack.c.b16 %v4156, %v4137
        %v5924 = vpack.c.b16 %v4157, %v4138
        %v5925 = vpack.c.b16 %v4158, %v4139
        %v5926 = vpack.c.b16 %v4159, %v4140
        %v5927 = vpack.c.b16 %v4160, %v4141
        %v5928 = vpack.c.b16 %v4161, %v4142
        %v5929 = vpack.c.b16 %v4162, %v4143
        %v5930 = vpack.c.b16 %v4163, %v4144
        %v5931 = vpack.c.b16 %v4164, %v4145
        %v5932 = vpack.c.b16 %v4165, %v4146
        %v5933 = vpack.c.b16 %v4166, %v4147
        %v5934 = vpack.c.b16 %v4186, %v4167
        %v5935 = vpack.c.b16 %v4187, %v4168
        %v5936 = vpack.c.b16 %v4188, %v4169
        %v5937 = vpack.c.b16 %v4189, %v4170
        %v5938 = vpack.c.b16 %v4190, %v4171
        %v5939 = vpack.c.b16 %v4191, %v4172
        %v5940 = vpack.c.b16 %v4192, %v4173
        %v5941 = vpack.c.b16 %v4193, %v4174
        %v5942 = vpack.c.b16 %v4194, %v4175
        %v5943 = vpack.c.b16 %v4195, %v4176
        %v5944 = vpack.c.b16 %v4196, %v4177
        %v5945 = vpack.c.b16 %v4197, %v4178
        %v5946 = vpack.c.b16 %v4198, %v4179
        %v5947 = vpack.c.b16 %v4199, %v4180
        %v5948 = vpack.c.b16 %v4200, %v4181
        %v5949 = vpack.c.b16 %v4201, %v4182
        %v5950 = vpack.c.b16 %v4202, %v4183
        %v5951 = vpack.c.b16 %v4203, %v4184
        %v5952 = vpack.c.b16 %v4204, %v4185
        %v5953 = vpack.c.b16 %v4224, %v4205
        %v5954 = vpack.c.b16 %v4225, %v4206
        %v5955 = vpack.c.b16 %v4226, %v4207
        %v5956 = vpack.c.b16 %v4227, %v4208
        %v5957 = vpack.c.b16 %v4228, %v4209
        %v5958 = vpack.c.b16 %v4229, %v4210
        %v5959 = vpack.c.b16 %v4230, %v4211
        %v5960 = vpack.c.b16 %v4231, %v4212
        %v5961 = vpack.c.b16 %v4232, %v4213
        %v5962 = vpack.c.b16 %v4233, %v4214
        %v5963 = vpack.c.b16 %v4234, %v4215
        %v5964 = vpack.c.b16 %v4235, %v4216
        %v5965 = vpack.c.b16 %v4236, %v4217
        %v5966 = vpack.c.b16 %v4237, %v4218
        %v5967 = vpack.c.b16 %v4238, %v4219
        %v5968 = vpack.c.b16 %v4239, %v4220
        %v5969 = vpack.c.b16 %v4240, %v4221
        %v5970 = vpack.c.b16 %v4241, %v4222
        %v5971 = vpack.c.b16 %v4242, %v4223
        %v5972 = vpack.c.b16 %v4262, %v4243
        %v5973 = vpack.c.b16 %v4263, %v4244
        %v5974 = vpack.c.b16 %v4264, %v4245
        %v5975 = vpack.c.b16 %v4265, %v4246
        %v5976 = vpack.c.b16 %v4266, %v4247
        %v5977 = vpack.c.b16 %v4267, %v4248
        %v5978 = vpack.c.b16 %v4268, %v4249
        %v5979 = vpack.c.b16 %v4269, %v4250
        %v5980 = vpack.c.b16 %v4270, %v4251
        %v5981 = vpack.c.b16 %v4271, %v4252
        %v5982 = vpack.c.b16 %v4272, %v4253
        %v5983 = vpack.c.b16 %v4273, %v4254
        %v5984 = vpack.c.b16 %v4274, %v4255
        %v5985 = vpack.c.b16 %v4275, %v4256
        %v5986 = vpack.c.b16 %v4276, %v4257
        %v5987 = vpack.c.b16 %v4277, %v4258
        %v5988 = vpack.c.b16 %v4278, %v4259
        %v5989 = vpack.c.b16 %v4279, %v4260
        %v5990 = vpack.c.b16 %v4280, %v4261
        %v5991 = vpack.c.b16 %v4300, %v4281
        %v5992 = vpack.c.b16 %v4301, %v4282
        %v5993 = vpack.c.b16 %v4302, %v4283
        %v5994 = vpack.c.b16 %v4303, %v4284
        %v5995 = vpack.c.b16 %v4304, %v4285
        %v5996 = vpack.c.b16 %v4305, %v4286
        %v5997 = vpack.c.b16 %v4306, %v4287
        %v5998 = vpack.c.b16 %v4307, %v4288
        %v5999 = vpack.c.b16 %v4308, %v4289
        %v6000 = vpack.c.b16 %v4309, %v4290
        %v6001 = vpack.c.b16 %v4310, %v4291
        %v6002 = vpack.c.b16 %v4311, %v4292
        %v6003 = vpack.c.b16 %v4312, %v4293
        %v6004 = vpack.c.b16 %v4313, %v4294
        %v6005 = vpack.c.b16 %v4314, %v4295
        %v6006 = vpack.c.b16 %v4315, %v4296
        %v6007 = vpack.c.b16 %v4316, %v4297
        %v6008 = vpack.c.b16 %v4317, %v4298
        %v6009 = vpack.c.b16 %v4318, %v4299
        %v6010 = vpack.c.b16 %v4338, %v4319
        %v6011 = vpack.c.b16 %v4339, %v4320
        %v6012 = vpack.c.b16 %v4340, %v4321
        %v6013 = vpack.c.b16 %v4341, %v4322
        %v6014 = vpack.c.b16 %v4342, %v4323
        %v6015 = vpack.c.b16 %v4343, %v4324
        %v6016 = vpack.c.b16 %v4344, %v4325
        %v6017 = vpack.c.b16 %v4345, %v4326
        %v6018 = vpack.c.b16 %v4346, %v4327
        %v6019 = vpack.c.b16 %v4347, %v4328
        %v6020 = vpack.c.b16 %v4348, %v4329
        %v6021 = vpack.c.b16 %v4349, %v4330
        %v6022 = vpack.c.b16 %v4350, %v4331
        %v6023 = vpack.c.b16 %v4351, %v4332
        %v6024 = vpack.c.b16 %v4352, %v4333
        %v6025 = vpack.c.b16 %v4353, %v4334
        %v6026 = vpack.c.b16 %v4354, %v4335
        %v6027 = vpack.c.b16 %v4355, %v4336
        %v6028 = vpack.c.b16 %v4356, %v4337
        %v6029 = vpack.c.b16 %v4376, %v4357
        %v6030 = vpack.c.b16 %v4377, %v4358
        %v6031 = vpack.c.b16 %v4378, %v4359
        %v6032 = vpack.c.b16 %v4379, %v4360
        %v6033 = vpack.c.b16 %v4380, %v4361
        %v6034 = vpack.c.b16 %v4381, %v4362
        %v6035 = vpack.c.b16 %v4382, %v4363
        %v6036 = vpack.c.b16 %v4383, %v4364
        %v6037 = vpack.c.b16 %v4384, %v4365
        %v6038 = vpack.c.b16 %v4385, %v4366
        %v6039 = vpack.c.b16 %v4386, %v4367
        %v6040 = vpack.c.b16 %v4387, %v4368
        %v6041 = vpack.c.b16 %v4388, %v4369
        %v6042 = vpack.c.b16 %v4389, %v4370
        %v6043 = vpack.c.b16 %v4390, %v4371
        %v6044 = vpack.c.b16 %v4391, %v4372
        %v6045 = vpack.c.b16 %v4392, %v4373
        %v6046 = vpack.c.b16 %v4393, %v4374
        %v6047 = vpack.c.b16 %v4394, %v4375
        %v6048 = vpack.c.b16 %v4414, %v4395
        %v6049 = vpack.c.b16 %v4415, %v4396
        %v6050 = vpack.c.b16 %v4416, %v4397
        %v6051 = vpack.c.b16 %v4417, %v4398
        %v6052 = vpack.c.b16 %v4418, %v4399
        %v6053 = vpack.c.b16 %v4419, %v4400
        %v6054 = vpack.c.b16 %v4420, %v4401
        %v6055 = vpack.c.b16 %v4421, %v4402
        %v6056 = vpack.c.b16 %v4422, %v4403
        %v6057 = vpack.c.b16 %v4423, %v4404
        %v6058 = vpack.c.b16 %v4424, %v4405
        %v6059 = vpack.c.b16 %v4425, %v4406
        %v6060 = vpack.c.b16 %v4426, %v4407
        %v6061 = vpack.c.b16 %v4427, %v4408
        %v6062 = vpack.c.b16 %v4428, %v4409
        %v6063 = vpack.c.b16 %v4429, %v4410
        %v6064 = vpack.c.b16 %v4430, %v4411
        %v6065 = vpack.c.b16 %v4431, %v4412
        %v6066 = vpack.c.b16 %v4432, %v4413
        %v6067 = vpack.c.b16 %v4452, %v4433
        %v6068 = vpack.c.b16 %v4453, %v4434
        %v6069 = vpack.c.b16 %v4454, %v4435
        %v6070 = vpack.c.b16 %v4455, %v4436
        %v6071 = vpack.c.b16 %v4456, %v4437
        %v6072 = vpack.c.b16 %v4457, %v4438
        %v6073 = vpack.c.b16 %v4458, %v4439
        %v6074 = vpack.c.b16 %v4459, %v4440
        %v6075 = vpack.c.b16 %v4460, %v4441
        %v6076 = vpack.c.b16 %v4461, %v4442
        %v6077 = vpack.c.b16 %v4462, %v4443
        %v6078 = vpack.c.b16 %v4463, %v4444
        %v6079 = vpack.c.b16 %v4464, %v4445
        %v6080 = vpack.c.b16 %v4465, %v4446
        %v6081 = vpack.c.b16 %v4466, %v4447
        %v6082 = vpack.c.b16 %v4467, %v4448
        %v6083 = vpack.c.b16 %v4468, %v4449
        %v6084 = vpack.c.b16 %v4469, %v4450
        %v6085 = vpack.c.b16 %v4470, %v4451
        %v6086 = vpack.c.b16 %v4490, %v4471
        %v6087 = vpack.c.b16 %v4491, %v4472
        %v6088 = vpack.c.b16 %v4492, %v4473
        %v6089 = vpack.c.b16 %v4493, %v4474
        %v6090 = vpack.c.b16 %v4494, %v4475
        %v6091 = vpack.c.b16 %v4495, %v4476
        %v6092 = vpack.c.b16 %v4496, %v4477
        %v6093 = vpack.c.b16 %v4497, %v4478
        %v6094 = vpack.c.b16 %v4498, %v4479
        %v6095 = vpack.c.b16 %v4499, %v4480
        %v6096 = vpack.c.b16 %v4500, %v4481
        %v6097 = vpack.c.b16 %v4501, %v4482
        %v6098 = vpack.c.b16 %v4502, %v4483
        %v6099 = vpack.c.b16 %v4503, %v4484
        %v6100 = vpack.c.b16 %v4504, %v4485
        %v6101 = vpack.c.b16 %v4505, %v4486
        %v6102 = vpack.c.b16 %v4506, %v4487
        %v6103 = vpack.c.b16 %v4507, %v4488
        %v6104 = vpack.c.b16 %v4508, %v4489
        %v6105 = vpack.c.b16 %v4528, %v4509
        %v6106 = vpack.c.b16 %v4529, %v4510
        %v6107 = vpack.c.b16 %v4530, %v4511
        %v6108 = vpack.c.b16 %v4531, %v4512
        %v6109 = vpack.c.b16 %v4532, %v4513
        %v6110 = vpack.c.b16 %v4533, %v4514
        %v6111 = vpack.c.b16 %v4534, %v4515
        %v6112 = vpack.c.b16 %v4535, %v4516
        %v6113 = vpack.c.b16 %v4536, %v4517
        %v6114 = vpack.c.b16 %v4537, %v4518
        %v6115 = vpack.c.b16 %v4538, %v4519
        %v6116 = vpack.c.b16 %v4539, %v4520
        %v6117 = vpack.c.b16 %v4540, %v4521
        %v6118 = vpack.c.b16 %v4541, %v4522
        %v6119 = vpack.c.b16 %v4542, %v4523
        %v6120 = vpack.c.b16 %v4543, %v4524
        %v6121 = vpack.c.b16 %v4544, %v4525
        %v6122 = vpack.c.b16 %v4545, %v4526
        %v6123 = vpack.c.b16 %v4546, %v4527
        %v6124 = vpack.c.b16 %v4566, %v4547
        %v6125 = vpack.c.b16 %v4567, %v4548
        %v6126 = vpack.c.b16 %v4568, %v4549
        %v6127 = vpack.c.b16 %v4569, %v4550
        %v6128 = vpack.c.b16 %v4570, %v4551
        %v6129 = vpack.c.b16 %v4571, %v4552
        %v6130 = vpack.c.b16 %v4572, %v4553
        %v6131 = vpack.c.b16 %v4573, %v4554
        %v6132 = vpack.c.b16 %v4574, %v4555
        %v6133 = vpack.c.b16 %v4575, %v4556
        %v6134 = vpack.c.b16 %v4576, %v4557
        %v6135 = vpack.c.b16 %v4577, %v4558
        %v6136 = vpack.c.b16 %v4578, %v4559
        %v6137 = vpack.c.b16 %v4579, %v4560
        %v6138 = vpack.c.b16 %v4580, %v4561
        %v6139 = vpack.c.b16 %v4581, %v4562
        %v6140 = vpack.c.b16 %v4582, %v4563
        %v6141 = vpack.c.b16 %v4583, %v4564
        %v6142 = vpack.c.b16 %v4584, %v4565
        %v6143 = vpack.c.b16 %v4604, %v4585
        %v6144 = vpack.c.b16 %v4605, %v4586
        %v6145 = vpack.c.b16 %v4606, %v4587
        %v6146 = vpack.c.b16 %v4607, %v4588
        %v6147 = vpack.c.b16 %v4608, %v4589
        %v6148 = vpack.c.b16 %v4609, %v4590
        %v6149 = vpack.c.b16 %v4610, %v4591
        %v6150 = vpack.c.b16 %v4611, %v4592
        %v6151 = vpack.c.b16 %v4612, %v4593
        %v6152 = vpack.c.b16 %v4613, %v4594
        %v6153 = vpack.c.b16 %v4614, %v4595
        %v6154 = vpack.c.b16 %v4615, %v4596
        %v6155 = vpack.c.b16 %v4616, %v4597
        %v6156 = vpack.c.b16 %v4617, %v4598
        %v6157 = vpack.c.b16 %v4618, %v4599
        %v6158 = vpack.c.b16 %v4619, %v4600
        %v6159 = vpack.c.b16 %v4620, %v4601
        %v6160 = vpack.c.b16 %v4621, %v4602
        %v6161 = vpack.c.b16 %v4622, %v4603
        %v6162 = vpack.c.b16 %v4642, %v4623
        %v6163 = vpack.c.b16 %v4643, %v4624
        %v6164 = vpack.c.b16 %v4644, %v4625
        %v6165 = vpack.c.b16 %v4645, %v4626
        %v6166 = vpack.c.b16 %v4646, %v4627
        %v6167 = vpack.c.b16 %v4647, %v4628
        %v6168 = vpack.c.b16 %v4648, %v4629
        %v6169 = vpack.c.b16 %v4649, %v4630
        %v6170 = vpack.c.b16 %v4650, %v4631
        %v6171 = vpack.c.b16 %v4651, %v4632
        %v6172 = vpack.c.b16 %v4652, %v4633
        %v6173 = vpack.c.b16 %v4653, %v4634
        %v6174 = vpack.c.b16 %v4654, %v4635
        %v6175 = vpack.c.b16 %v4655, %v4636
        %v6176 = vpack.c.b16 %v4656, %v4637
        %v6177 = vpack.c.b16 %v4657, %v4638
        %v6178 = vpack.c.b16 %v4658, %v4639
        %v6179 = vpack.c.b16 %v4659, %v4640
        %v6180 = vpack.c.b16 %v4660, %v4641
        %v6181 = vpack.c.b16 %v4680, %v4661
        %v6182 = vpack.c.b16 %v4681, %v4662
        %v6183 = vpack.c.b16 %v4682, %v4663
        %v6184 = vpack.c.b16 %v4683, %v4664
        %v6185 = vpack.c.b16 %v4684, %v4665
        %v6186 = vpack.c.b16 %v4685, %v4666
        %v6187 = vpack.c.b16 %v4686, %v4667
        %v6188 = vpack.c.b16 %v4687, %v4668
        %v6189 = vpack.c.b16 %v4688, %v4669
        %v6190 = vpack.c.b16 %v4689, %v4670
        %v6191 = vpack.c.b16 %v4690, %v4671
        %v6192 = vpack.c.b16 %v4691, %v4672
        %v6193 = vpack.c.b16 %v4692, %v4673
        %v6194 = vpack.c.b16 %v4693, %v4674
        %v6195 = vpack.c.b16 %v4694, %v4675
        %v6196 = vpack.c.b16 %v4695, %v4676
        %v6197 = vpack.c.b16 %v4696, %v4677
        %v6198 = vpack.c.b16 %v4697, %v4678
        %v6199 = vpack.c.b16 %v4698, %v4679
        %v6200 = vpack.c.b16 %v4718, %v4699
        %v6201 = vpack.c.b16 %v4719, %v4700
        %v6202 = vpack.c.b16 %v4720, %v4701
        %v6203 = vpack.c.b16 %v4721, %v4702
        %v6204 = vpack.c.b16 %v4722, %v4703
        %v6205 = vpack.c.b16 %v4723, %v4704
        %v6206 = vpack.c.b16 %v4724, %v4705
        %v6207 = vpack.c.b16 %v4725, %v4706
        %v6208 = vpack.c.b16 %v4726, %v4707
        %v6209 = vpack.c.b16 %v4727, %v4708
        %v6210 = vpack.c.b16 %v4728, %v4709
        %v6211 = vpack.c.b16 %v4729, %v4710
        %v6212 = vpack.c.b16 %v4730, %v4711
        %v6213 = vpack.c.b16 %v4731, %v4712
        %v6214 = vpack.c.b16 %v4732, %v4713
        %v6215 = vpack.c.b16 %v4733, %v4714
        %v6216 = vpack.c.b16 %v4734, %v4715
        %v6217 = vpack.c.b16 %v4735, %v4716
        %v6218 = vpack.c.b16 %v4736, %v4717
        %v6219 = vpack.c.b16 %v4756, %v4737
        %v6220 = vpack.c.b16 %v4757, %v4738
        %v6221 = vpack.c.b16 %v4758, %v4739
        %v6222 = vpack.c.b16 %v4759, %v4740
        %v6223 = vpack.c.b16 %v4760, %v4741
        %v6224 = vpack.c.b16 %v4761, %v4742
        %v6225 = vpack.c.b16 %v4762, %v4743
        %v6226 = vpack.c.b16 %v4763, %v4744
        %v6227 = vpack.c.b16 %v4764, %v4745
        %v6228 = vpack.c.b16 %v4765, %v4746
        %v6229 = vpack.c.b16 %v4766, %v4747
        %v6230 = vpack.c.b16 %v4767, %v4748
        %v6231 = vpack.c.b16 %v4768, %v4749
        %v6232 = vpack.c.b16 %v4769, %v4750
        %v6233 = vpack.c.b16 %v4770, %v4751
        %v6234 = vpack.c.b16 %v4771, %v4752
        %v6235 = vpack.c.b16 %v4772, %v4753
        %v6236 = vpack.c.b16 %v4773, %v4754
        %v6237 = vpack.c.b16 %v4774, %v4755
        %v6238 = vpack.c.b16 %v4794, %v4775
        %v6239 = vpack.c.b16 %v4795, %v4776
        %v6240 = vpack.c.b16 %v4796, %v4777
        %v6241 = vpack.c.b16 %v4797, %v4778
        %v6242 = vpack.c.b16 %v4798, %v4779
        %v6243 = vpack.c.b16 %v4799, %v4780
        %v6244 = vpack.c.b16 %v4800, %v4781
        %v6245 = vpack.c.b16 %v4801, %v4782
        %v6246 = vpack.c.b16 %v4802, %v4783
        %v6247 = vpack.c.b16 %v4803, %v4784
        %v6248 = vpack.c.b16 %v4804, %v4785
        %v6249 = vpack.c.b16 %v4805, %v4786
        %v6250 = vpack.c.b16 %v4806, %v4787
        %v6251 = vpack.c.b16 %v4807, %v4788
        %v6252 = vpack.c.b16 %v4808, %v4789
        %v6253 = vpack.c.b16 %v4809, %v4790
        %v6254 = vpack.c.b16 %v4810, %v4791
        %v6255 = vpack.c.b16 %v4811, %v4792
        %v6256 = vpack.c.b16 %v4812, %v4793
        %v6257 = vpack.c.b16 %v4832, %v4813
        %v6258 = vpack.c.b16 %v4833, %v4814
        %v6259 = vpack.c.b16 %v4834, %v4815
        %v6260 = vpack.c.b16 %v4835, %v4816
        %v6261 = vpack.c.b16 %v4836, %v4817
        %v6262 = vpack.c.b16 %v4837, %v4818
        %v6263 = vpack.c.b16 %v4838, %v4819
        %v6264 = vpack.c.b16 %v4839, %v4820
        %v6265 = vpack.c.b16 %v4840, %v4821
        %v6266 = vpack.c.b16 %v4841, %v4822
        %v6267 = vpack.c.b16 %v4842, %v4823
        %v6268 = vpack.c.b16 %v4843, %v4824
        %v6269 = vpack.c.b16 %v4844, %v4825
        %v6270 = vpack.c.b16 %v4845, %v4826
        %v6271 = vpack.c.b16 %v4846, %v4827
        %v6272 = vpack.c.b16 %v4847, %v4828
        %v6273 = vpack.c.b16 %v4848, %v4829
        %v6274 = vpack.c.b16 %v4849, %v4830
        %v6275 = vpack.c.b16 %v4850, %v4831
        %v6276 = vpack.c.b16 %v4870, %v4851
        %v6277 = vpack.c.b16 %v4871, %v4852
        %v6278 = vpack.c.b16 %v4872, %v4853
        %v6279 = vpack.c.b16 %v4873, %v4854
        %v6280 = vpack.c.b16 %v4874, %v4855
        %v6281 = vpack.c.b16 %v4875, %v4856
        %v6282 = vpack.c.b16 %v4876, %v4857
        %v6283 = vpack.c.b16 %v4877, %v4858
        %v6284 = vpack.c.b16 %v4878, %v4859
        %v6285 = vpack.c.b16 %v4879, %v4860
        %v6286 = vpack.c.b16 %v4880, %v4861
        %v6287 = vpack.c.b16 %v4881, %v4862
        %v6288 = vpack.c.b16 %v4882, %v4863
        %v6289 = vpack.c.b16 %v4883, %v4864
        %v6290 = vpack.c.b16 %v4884, %v4865
        %v6291 = vpack.c.b16 %v4885, %v4866
        %v6292 = vpack.c.b16 %v4886, %v4867
        %v6293 = vpack.c.b16 %v4887, %v4868
        %v6294 = vpack.c.b16 %v4888, %v4869
        %v6295 = vpack.c.b16 %v4908, %v4889
        %v6296 = vpack.c.b16 %v4909, %v4890
        %v6297 = vpack.c.b16 %v4910, %v4891
        %v6298 = vpack.c.b16 %v4911, %v4892
        %v6299 = vpack.c.b16 %v4912, %v4893
        %v6300 = vpack.c.b16 %v4913, %v4894
        %v6301 = vpack.c.b16 %v4914, %v4895
        %v6302 = vpack.c.b16 %v4915, %v4896
        %v6303 = vpack.c.b16 %v4916, %v4897
        %v6304 = vpack.c.b16 %v4917, %v4898
        %v6305 = vpack.c.b16 %v4918, %v4899
        %v6306 = vpack.c.b16 %v4919, %v4900
        %v6307 = vpack.c.b16 %v4920, %v4901
        %v6308 = vpack.c.b16 %v4921, %v4902
        %v6309 = vpack.c.b16 %v4922, %v4903
        %v6310 = vpack.c.b16 %v4923, %v4904
        %v6311 = vpack.c.b16 %v4924, %v4905
        %v6312 = vpack.c.b16 %v4925, %v4906
        %v6313 = vpack.c.b16 %v4926, %v4907
        %v6314 = vpack.c.b16 %v4946, %v4927
        %v6315 = vpack.c.b16 %v4947, %v4928
        %v6316 = vpack.c.b16 %v4948, %v4929
        %v6317 = vpack.c.b16 %v4949, %v4930
        %v6318 = vpack.c.b16 %v4950, %v4931
        %v6319 = vpack.c.b16 %v4951, %v4932
        %v6320 = vpack.c.b16 %v4952, %v4933
        %v6321 = vpack.c.b16 %v4953, %v4934
        %v6322 = vpack.c.b16 %v4954, %v4935
        %v6323 = vpack.c.b16 %v4955, %v4936
        %v6324 = vpack.c.b16 %v4956, %v4937
        %v6325 = vpack.c.b16 %v4957, %v4938
        %v6326 = vpack.c.b16 %v4958, %v4939
        %v6327 = vpack.c.b16 %v4959, %v4940
        %v6328 = vpack.c.b16 %v4960, %v4941
        %v6329 = vpack.c.b16 %v4961, %v4942
        %v6330 = vpack.c.b16 %v4962, %v4943
        %v6331 = vpack.c.b16 %v4963, %v4944
        %v6332 = vpack.c.b16 %v4964, %v4945
        %v6333 = vpack.c.b16 %v4984, %v4965
        %v6334 = vpack.c.b16 %v4985, %v4966
        %v6335 = vpack.c.b16 %v4986, %v4967
        %v6336 = vpack.c.b16 %v4987, %v4968
        %v6337 = vpack.c.b16 %v4988, %v4969
        %v6338 = vpack.c.b16 %v4989, %v4970
        %v6339 = vpack.c.b16 %v4990, %v4971
        %v6340 = vpack.c.b16 %v4991, %v4972
        %v6341 = vpack.c.b16 %v4992, %v4973
        %v6342 = vpack.c.b16 %v4993, %v4974
        %v6343 = vpack.c.b16 %v4994, %v4975
        %v6344 = vpack.c.b16 %v4995, %v4976
        %v6345 = vpack.c.b16 %v4996, %v4977
        %v6346 = vpack.c.b16 %v4997, %v4978
        %v6347 = vpack.c.b16 %v4998, %v4979
        %v6348 = vpack.c.b16 %v4999, %v4980
        %v6349 = vpack.c.b16 %v5000, %v4981
        %v6350 = vpack.c.b16 %v5001, %v4982
        %v6351 = vpack.c.b16 %v5002, %v4983
        %v6352 = vpack.c.b16 %v5022, %v5003
        %v6353 = vpack.c.b16 %v5023, %v5004
        %v6354 = vpack.c.b16 %v5024, %v5005
        %v6355 = vpack.c.b16 %v5025, %v5006
        %v6356 = vpack.c.b16 %v5026, %v5007
        %v6357 = vpack.c.b16 %v5027, %v5008
        %v6358 = vpack.c.b16 %v5028, %v5009
        %v6359 = vpack.c.b16 %v5029, %v5010
        %v6360 = vpack.c.b16 %v5030, %v5011
        %v6361 = vpack.c.b16 %v5031, %v5012
        %v6362 = vpack.c.b16 %v5032, %v5013
        %v6363 = vpack.c.b16 %v5033, %v5014
        %v6364 = vpack.c.b16 %v5034, %v5015
        %v6365 = vpack.c.b16 %v5035, %v5016
        %v6366 = vpack.c.b16 %v5036, %v5017
        %v6367 = vpack.c.b16 %v5037, %v5018
        %v6368 = vpack.c.b16 %v5038, %v5019
        %v6369 = vpack.c.b16 %v5039, %v5020
        %v6370 = vpack.c.b16 %v5040, %v5021
        %v6371 = vpack.c.b16 %v5060, %v5041
        %v6372 = vpack.c.b16 %v5061, %v5042
        %v6373 = vpack.c.b16 %v5062, %v5043
        %v6374 = vpack.c.b16 %v5063, %v5044
        %v6375 = vpack.c.b16 %v5064, %v5045
        %v6376 = vpack.c.b16 %v5065, %v5046
        %v6377 = vpack.c.b16 %v5066, %v5047
        %v6378 = vpack.c.b16 %v5067, %v5048
        %v6379 = vpack.c.b16 %v5068, %v5049
        %v6380 = vpack.c.b16 %v5069, %v5050
        %v6381 = vpack.c.b16 %v5070, %v5051
        %v6382 = vpack.c.b16 %v5071, %v5052
        %v6383 = vpack.c.b16 %v5072, %v5053
        %v6384 = vpack.c.b16 %v5073, %v5054
        %v6385 = vpack.c.b16 %v5074, %v5055
        %v6386 = vpack.c.b16 %v5075, %v5056
        %v6387 = vpack.c.b16 %v5076, %v5057
        %v6388 = vpack.c.b16 %v5077, %v5058
        %v6389 = vpack.c.b16 %v5078, %v5059
        %v6390 = vpack.c.b16 %v5098, %v5079
        %v6391 = vpack.c.b16 %v5099, %v5080
        %v6392 = vpack.c.b16 %v5100, %v5081
        %v6393 = vpack.c.b16 %v5101, %v5082
        %v6394 = vpack.c.b16 %v5102, %v5083
        %v6395 = vpack.c.b16 %v5103, %v5084
        %v6396 = vpack.c.b16 %v5104, %v5085
        %v6397 = vpack.c.b16 %v5105, %v5086
        %v6398 = vpack.c.b16 %v5106, %v5087
        %v6399 = vpack.c.b16 %v5107, %v5088
        %v6400 = vpack.c.b16 %v5108, %v5089
        %v6401 = vpack.c.b16 %v5109, %v5090
        %v6402 = vpack.c.b16 %v5110, %v5091
        %v6403 = vpack.c.b16 %v5111, %v5092
        %v6404 = vpack.c.b16 %v5112, %v5093
        %v6405 = vpack.c.b16 %v5113, %v5094
        %v6406 = vpack.c.b16 %v5114, %v5095
        %v6407 = vpack.c.b16 %v5115, %v5096
        %v6408 = vpack.c.b16 %v5116, %v5097
        %v6409 = vpack.c.b16 %v5136, %v5117
        %v6410 = vpack.c.b16 %v5137, %v5118
        %v6411 = vpack.c.b16 %v5138, %v5119
        %v6412 = vpack.c.b16 %v5139, %v5120
        %v6413 = vpack.c.b16 %v5140, %v5121
        %v6414 = vpack.c.b16 %v5141, %v5122
        %v6415 = vpack.c.b16 %v5142, %v5123
        %v6416 = vpack.c.b16 %v5143, %v5124
        %v6417 = vpack.c.b16 %v5144, %v5125
        %v6418 = vpack.c.b16 %v5145, %v5126
        %v6419 = vpack.c.b16 %v5146, %v5127
        %v6420 = vpack.c.b16 %v5147, %v5128
        %v6421 = vpack.c.b16 %v5148, %v5129
        %v6422 = vpack.c.b16 %v5149, %v5130
        %v6423 = vpack.c.b16 %v5150, %v5131
        %v6424 = vpack.c.b16 %v5151, %v5132
        %v6425 = vpack.c.b16 %v5152, %v5133
        %v6426 = vpack.c.b16 %v5153, %v5134
        %v6427 = vpack.c.b16 %v5154, %v5135
        %v6428 = vpack.c.b16 %v5174, %v5155
        %v6429 = vpack.c.b16 %v5175, %v5156
        %v6430 = vpack.c.b16 %v5176, %v5157
        %v6431 = vpack.c.b16 %v5177, %v5158
        %v6432 = vpack.c.b16 %v5178, %v5159
        %v6433 = vpack.c.b16 %v5179, %v5160
        %v6434 = vpack.c.b16 %v5180, %v5161
        %v6435 = vpack.c.b16 %v5181, %v5162
        %v6436 = vpack.c.b16 %v5182, %v5163
        %v6437 = vpack.c.b16 %v5183, %v5164
        %v6438 = vpack.c.b16 %v5184, %v5165
        %v6439 = vpack.c.b16 %v5185, %v5166
        %v6440 = vpack.c.b16 %v5186, %v5167
        %v6441 = vpack.c.b16 %v5187, %v5168
        %v6442 = vpack.c.b16 %v5188, %v5169
        %v6443 = vpack.c.b16 %v5189, %v5170
        %v6444 = vpack.c.b16 %v5190, %v5171
        %v6445 = vpack.c.b16 %v5191, %v5172
        %v6446 = vpack.c.b16 %v5192, %v5173
        %v6447 = vpack.c.b16 %v5212, %v5193
        %v6448 = vpack.c.b16 %v5213, %v5194
        %v6449 = vpack.c.b16 %v5214, %v5195
        %v6450 = vpack.c.b16 %v5215, %v5196
        %v6451 = vpack.c.b16 %v5216, %v5197
        %v6452 = vpack.c.b16 %v5217, %v5198
        %v6453 = vpack.c.b16 %v5218, %v5199
        %v6454 = vpack.c.b16 %v5219, %v5200
        %v6455 = vpack.c.b16 %v5220, %v5201
        %v6456 = vpack.c.b16 %v5221, %v5202
        %v6457 = vpack.c.b16 %v5222, %v5203
        %v6458 = vpack.c.b16 %v5223, %v5204
        %v6459 = vpack.c.b16 %v5224, %v5205
        %v6460 = vpack.c.b16 %v5225, %v5206
        %v6461 = vpack.c.b16 %v5226, %v5207
        %v6462 = vpack.c.b16 %v5227, %v5208
        %v6463 = vpack.c.b16 %v5228, %v5209
        %v6464 = vpack.c.b16 %v5229, %v5210
        %v6465 = vpack.c.b16 %v5230, %v5211
        %v6466 = vpack.c.b16 %v5250, %v5231
        %v6467 = vpack.c.b16 %v5251, %v5232
        %v6468 = vpack.c.b16 %v5252, %v5233
        %v6469 = vpack.c.b16 %v5253, %v5234
        %v6470 = vpack.c.b16 %v5254, %v5235
        %v6471 = vpack.c.b16 %v5255, %v5236
        %v6472 = vpack.c.b16 %v5256, %v5237
        %v6473 = vpack.c.b16 %v5257, %v5238
        %v6474 = vpack.c.b16 %v5258, %v5239
        %v6475 = vpack.c.b16 %v5259, %v5240
        %v6476 = vpack.c.b16 %v5260, %v5241
        %v6477 = vpack.c.b16 %v5261, %v5242
        %v6478 = vpack.c.b16 %v5262, %v5243
        %v6479 = vpack.c.b16 %v5263, %v5244
        %v6480 = vpack.c.b16 %v5264, %v5245
        %v6481 = vpack.c.b16 %v5265, %v5246
        %v6482 = vpack.c.b16 %v5266, %v5247
        %v6483 = vpack.c.b16 %v5267, %v5248
        %v6484 = vpack.c.b16 %v5268, %v5249
        %7701 = vmatprep.subr.bf16.mxu0 %v5270
        %7702 = vmatpush1.bf16.msra.mxu0 %v5269
        %7703 = vmatprep.subr.bf16.mxu0 %v5289
        %7704 = vmatpush1.bf16.msra.mxu0 %v5288
        %7705 = vmatprep.subr.bf16.mxu0 %v5308
        %7706 = vmatpush1.bf16.msra.mxu0 %v5307
        %7707 = vmatprep.subr.bf16.mxu0 %v5327
        %7708 = vmatpush1.bf16.msra.mxu0 %v5326
        %7709 = vmatprep.subr.bf16.mxu0 %v5346
        %7710 = vmatpush1.bf16.msra.mxu0 %v5345
        %7711 = vmatprep.subr.bf16.mxu0 %v5365
        %7712 = vmatpush1.bf16.msra.mxu0 %v5364
        %7713 = vmatprep.subr.bf16.mxu0 %v5384
        %7714 = vmatpush1.bf16.msra.mxu0 %v5383
        %7715 = vmatprep.subr.bf16.mxu0 %v5403
        %7716 = vmatpush1.bf16.msra.mxu0 %v5402
        %7717 = vmatprep.subr.bf16.mxu0 %v5422
        %7718 = vmatpush1.bf16.msra.mxu0 %v5421
        %7719 = vmatprep.subr.bf16.mxu0 %v5441
        %7720 = vmatpush1.bf16.msra.mxu0 %v5440
        %7721 = vmatprep.subr.bf16.mxu0 %v5460
        %7722 = vmatpush1.bf16.msra.mxu0 %v5459
        %7723 = vmatprep.subr.bf16.mxu0 %v5479
        %7724 = vmatpush1.bf16.msra.mxu0 %v5478
        %7725 = vmatprep.subr.bf16.mxu0 %v5498
        %7726 = vmatpush1.bf16.msra.mxu0 %v5497
        %7727 = vmatprep.subr.bf16.mxu0 %v5517
        %7728 = vmatpush1.bf16.msra.mxu0 %v5516
        %7729 = vmatprep.subr.bf16.mxu0 %v5536
        %7730 = vmatpush1.bf16.msra.mxu0 %v5535
        %7731 = vmatprep.subr.bf16.mxu0 %v5555
        %7732 = vmatpush1.bf16.msra.mxu0 %v5554
        %7733 = vmatprep.mubr.bf16.mxu0 %v1537
        %7734 = vmatmul.mubr.bf16.gmra.mrb[0].mxu0 %v1523
        %v7735 = vpop.f32.mrb[0].mxu0
        %v7736 = vadd.f32 0.0, %v7735
        %v7737 = vpop.f32.mrb[0].mxu0
        %v7738 = vadd.f32 0.0, %v7737
        %v7739 = vpop.f32.mrb[0].mxu0
        %v7740 = vpop.f32.mrb[0].mxu0
        %7741 = vdwg.mxu0
        %7742 = vmatprep.subr.bf16.mxu0 %v5574
        %7743 = vmatpush1.bf16.msra.mxu0 %v5573
        %7744 = vmatprep.subr.bf16.mxu0 %v5593
        %7745 = vmatpush1.bf16.msra.mxu0 %v5592
        %7746 = vmatprep.subr.bf16.mxu0 %v5612
        %7747 = vmatpush1.bf16.msra.mxu0 %v5611
        %7748 = vmatprep.subr.bf16.mxu0 %v5631
        %7749 = vmatpush1.bf16.msra.mxu0 %v5630
        %7750 = vmatprep.subr.bf16.mxu0 %v5650
        %7751 = vmatpush1.bf16.msra.mxu0 %v5649
        %7752 = vmatprep.subr.bf16.mxu0 %v5669
        %7753 = vmatpush1.bf16.msra.mxu0 %v5668
        %7754 = vmatprep.subr.bf16.mxu0 %v5688
        %7755 = vmatpush1.bf16.msra.mxu0 %v5687
        %7756 = vmatprep.subr.bf16.mxu0 %v5707
        %7757 = vmatpush1.bf16.msra.mxu0 %v5706
        %7758 = vmatprep.subr.bf16.mxu0 %v5726
        %7759 = vmatpush1.bf16.msra.mxu0 %v5725
        %7760 = vmatprep.subr.bf16.mxu0 %v5745
        %7761 = vmatpush1.bf16.msra.mxu0 %v5744
        %7762 = vmatprep.subr.bf16.mxu0 %v5764
        %7763 = vmatpush1.bf16.msra.mxu0 %v5763
        %7764 = vmatprep.subr.bf16.mxu0 %v5783
        %7765 = vmatpush1.bf16.msra.mxu0 %v5782
        %7766 = vmatprep.subr.bf16.mxu0 %v5802
        %7767 = vmatpush1.bf16.msra.mxu0 %v5801
        %7768 = vmatprep.subr.bf16.mxu0 %v5821
        %7769 = vmatpush1.bf16.msra.mxu0 %v5820
        %7770 = vmatprep.subr.bf16.mxu0 %v5840
        %7771 = vmatpush1.bf16.msra.mxu0 %v5839
        %7772 = vmatprep.subr.bf16.mxu0 %v5859
        %7773 = vmatpush1.bf16.msra.mxu0 %v5858
        %7774 = vmatprep.mubr.bf16.mxu0 %v1547
        %7775 = vmatmul.mubr.bf16.gmra.mrb[0].mxu0 %v1545
        %v7776 = vpop.f32.mrb[0].mxu0
        %v7777 = vadd.f32 %v7736, %v7776
        %v7778 = vpop.f32.mrb[0].mxu0
        %v7779 = vadd.f32 %v7738, %v7778
        %v7780 = vpop.f32.mrb[0].mxu0
        %v7781 = vpop.f32.mrb[0].mxu0
        %7782 = vdwg.mxu0
        %7783 = vmatprep.subr.bf16.mxu0 %v5878
        %7784 = vmatpush1.bf16.msra.mxu0 %v5877
        %7785 = vmatprep.subr.bf16.mxu0 %v5897
        %7786 = vmatpush1.bf16.msra.mxu0 %v5896
        %7787 = vmatprep.subr.bf16.mxu0 %v5916
        %7788 = vmatpush1.bf16.msra.mxu0 %v5915
        %7789 = vmatprep.subr.bf16.mxu0 %v5935
        %7790 = vmatpush1.bf16.msra.mxu0 %v5934
        %7791 = vmatprep.subr.bf16.mxu0 %v5954
        %7792 = vmatpush1.bf16.msra.mxu0 %v5953
        %7793 = vmatprep.subr.bf16.mxu0 %v5973
        %7794 = vmatpush1.bf16.msra.mxu0 %v5972
        %7795 = vmatprep.subr.bf16.mxu0 %v5992
        %7796 = vmatpush1.bf16.msra.mxu0 %v5991
        %7797 = vmatprep.subr.bf16.mxu0 %v6011
        %7798 = vmatpush1.bf16.msra.mxu0 %v6010
        %7799 = vmatprep.subr.bf16.mxu0 %v6030
        %7800 = vmatpush1.bf16.msra.mxu0 %v6029
        %7801 = vmatprep.subr.bf16.mxu0 %v6049
        %7802 = vmatpush1.bf16.msra.mxu0 %v6048
        %7803 = vmatprep.subr.bf16.mxu0 %v6068
        %7804 = vmatpush1.bf16.msra.mxu0 %v6067
        %7805 = vmatprep.subr.bf16.mxu0 %v6087
        %7806 = vmatpush1.bf16.msra.mxu0 %v6086
        %7807 = vmatprep.subr.bf16.mxu0 %v6106
        %7808 = vmatpush1.bf16.msra.mxu0 %v6105
        %7809 = vmatprep.subr.bf16.mxu0 %v6125
        %7810 = vmatpush1.bf16.msra.mxu0 %v6124
        %7811 = vmatprep.subr.bf16.mxu0 %v6144
        %7812 = vmatpush1.bf16.msra.mxu0 %v6143
        %7813 = vmatprep.subr.bf16.mxu0 %v6163
        %7814 = vmatpush1.bf16.msra.mxu0 %v6162
        %7815 = vmatprep.mubr.bf16.mxu0 %v1544
        %7816 = vmatmul.mubr.bf16.gmra.mrb[0].mxu0 %v1530
        %v7817 = vpop.f32.mrb[0].mxu0
        %v7818 = vadd.f32 %v7777, %v7817
        %v7819 = vpop.f32.mrb[0].mxu0
        %v7820 = vadd.f32 %v7779, %v7819
        %v7821 = vpop.f32.mrb[0].mxu0
        %v7822 = vpop.f32.mrb[0].mxu0
        %7823 = vdwg.mxu0
        %7824 = vmatprep.subr.bf16.mxu0 %v6182
        %7825 = vmatpush1.bf16.msra.mxu0 %v6181
        %7826 = vmatprep.subr.bf16.mxu0 %v6201
        %7827 = vmatpush1.bf16.msra.mxu0 %v6200
        %7828 = vmatprep.subr.bf16.mxu0 %v6220
        %7829 = vmatpush1.bf16.msra.mxu0 %v6219
        %7830 = vmatprep.subr.bf16.mxu0 %v6239
        %7831 = vmatpush1.bf16.msra.mxu0 %v6238
        %7832 = vmatprep.subr.bf16.mxu0 %v6258
        %7833 = vmatpush1.bf16.msra.mxu0 %v6257
        %7834 = vmatprep.subr.bf16.mxu0 %v6277
        %7835 = vmatpush1.bf16.msra.mxu0 %v6276
        %7836 = vmatprep.subr.bf16.mxu0 %v6296
        %7837 = vmatpush1.bf16.msra.mxu0 %v6295
        %7838 = vmatprep.subr.bf16.mxu0 %v6315
        %7839 = vmatpush1.bf16.msra.mxu0 %v6314
        %7840 = vmatprep.subr.bf16.mxu0 %v6334
        %7841 = vmatpush1.bf16.msra.mxu0 %v6333
        %7842 = vmatprep.subr.bf16.mxu0 %v6353
        %7843 = vmatpush1.bf16.msra.mxu0 %v6352
        %7844 = vmatprep.subr.bf16.mxu0 %v6372
        %7845 = vmatpush1.bf16.msra.mxu0 %v6371
        %7846 = vmatprep.subr.bf16.mxu0 %v6391
        %7847 = vmatpush1.bf16.msra.mxu0 %v6390
        %7848 = vmatprep.subr.bf16.mxu0 %v6410
        %7849 = vmatpush1.bf16.msra.mxu0 %v6409
        %7850 = vmatprep.subr.bf16.mxu0 %v6429
        %7851 = vmatpush1.bf16.msra.mxu0 %v6428
        %7852 = vmatprep.subr.bf16.mxu0 %v6448
        %7853 = vmatpush1.bf16.msra.mxu0 %v6447
        %7854 = vmatprep.subr.bf16.mxu0 %v6467
        %7855 = vmatpush1.bf16.msra.mxu0 %v6466
        %7856 = vmatprep.mubr.bf16.mxu0 %v1548
        %7857 = vmatmul.mubr.bf16.gmra.mrb[0].mxu0 %v1546
        %v7858 = vpop.f32.mrb[0].mxu0
        %v7859 = vadd.f32 %v7818, %v7858
        %v7860 = vpop.f32.mrb[0].mxu0
        %v7861 = vadd.f32 %v7820, %v7860
        %v7862 = vpop.f32.mrb[0].mxu0
        %v7863 = vpop.f32.mrb[0].mxu0
        %7864 = vdwg.mxu0
        %7865 = vmatprep.subr.bf16.mxu0 %v5272
        %7866 = vmatpush1.bf16.msra.mxu0 %v5271
        %7867 = vmatprep.subr.bf16.mxu0 %v5291
        %7868 = vmatpush1.bf16.msra.mxu0 %v5290
        %7869 = vmatprep.subr.bf16.mxu0 %v5310
        %7870 = vmatpush1.bf16.msra.mxu0 %v5309
        %7871 = vmatprep.subr.bf16.mxu0 %v5329
        %7872 = vmatpush1.bf16.msra.mxu0 %v5328
        %7873 = vmatprep.subr.bf16.mxu0 %v5348
        %7874 = vmatpush1.bf16.msra.mxu0 %v5347
        %7875 = vmatprep.subr.bf16.mxu0 %v5367
        %7876 = vmatpush1.bf16.msra.mxu0 %v5366
        %7877 = vmatprep.subr.bf16.mxu0 %v5386
        %7878 = vmatpush1.bf16.msra.mxu0 %v5385
        %7879 = vmatprep.subr.bf16.mxu0 %v5405
        %7880 = vmatpush1.bf16.msra.mxu0 %v5404
        %7881 = vmatprep.subr.bf16.mxu0 %v5424
        %7882 = vmatpush1.bf16.msra.mxu0 %v5423
        %7883 = vmatprep.subr.bf16.mxu0 %v5443
        %7884 = vmatpush1.bf16.msra.mxu0 %v5442
        %7885 = vmatprep.subr.bf16.mxu0 %v5462
        %7886 = vmatpush1.bf16.msra.mxu0 %v5461
        %7887 = vmatprep.subr.bf16.mxu0 %v5481
        %7888 = vmatpush1.bf16.msra.mxu0 %v5480
        %7889 = vmatprep.subr.bf16.mxu0 %v5500
        %7890 = vmatpush1.bf16.msra.mxu0 %v5499
        %7891 = vmatprep.subr.bf16.mxu0 %v5519
        %7892 = vmatpush1.bf16.msra.mxu0 %v5518
        %7893 = vmatprep.subr.bf16.mxu0 %v5538
        %7894 = vmatpush1.bf16.msra.mxu0 %v5537
        %7895 = vmatprep.subr.bf16.mxu0 %v5557
        %7896 = vmatpush1.bf16.msra.mxu0 %v5556
        %7897 = vmatprep.mubr.bf16.mxu0 %v1537
        %7898 = vmatmul.mubr.bf16.gmra.mrb[0].mxu0 %v1523
        %v7899 = vpop.f32.mrb[0].mxu0
        %v7900 = vadd.f32 0.0, %v7899
        %v7901 = vpop.f32.mrb[0].mxu0
        %v7902 = vadd.f32 0.0, %v7901
        %v7903 = vpop.f32.mrb[0].mxu0
        %v7904 = vpop.f32.mrb[0].mxu0
        %7905 = vdwg.mxu0
        %7906 = vmatprep.subr.bf16.mxu0 %v5576
        %7907 = vmatpush1.bf16.msra.mxu0 %v5575
        %7908 = vmatprep.subr.bf16.mxu0 %v5595
        %7909 = vmatpush1.bf16.msra.mxu0 %v5594
        %7910 = vmatprep.subr.bf16.mxu0 %v5614
        %7911 = vmatpush1.bf16.msra.mxu0 %v5613
        %7912 = vmatprep.subr.bf16.mxu0 %v5633
        %7913 = vmatpush1.bf16.msra.mxu0 %v5632
        %7914 = vmatprep.subr.bf16.mxu0 %v5652
        %7915 = vmatpush1.bf16.msra.mxu0 %v5651
        %7916 = vmatprep.subr.bf16.mxu0 %v5671
        %7917 = vmatpush1.bf16.msra.mxu0 %v5670
        %7918 = vmatprep.subr.bf16.mxu0 %v5690
        %7919 = vmatpush1.bf16.msra.mxu0 %v5689
        %7920 = vmatprep.subr.bf16.mxu0 %v5709
        %7921 = vmatpush1.bf16.msra.mxu0 %v5708
        %7922 = vmatprep.subr.bf16.mxu0 %v5728
        %7923 = vmatpush1.bf16.msra.mxu0 %v5727
        %7924 = vmatprep.subr.bf16.mxu0 %v5747
        %7925 = vmatpush1.bf16.msra.mxu0 %v5746
        %7926 = vmatprep.subr.bf16.mxu0 %v5766
        %7927 = vmatpush1.bf16.msra.mxu0 %v5765
        %7928 = vmatprep.subr.bf16.mxu0 %v5785
        %7929 = vmatpush1.bf16.msra.mxu0 %v5784
        %7930 = vmatprep.subr.bf16.mxu0 %v5804
        %7931 = vmatpush1.bf16.msra.mxu0 %v5803
        %7932 = vmatprep.subr.bf16.mxu0 %v5823
        %7933 = vmatpush1.bf16.msra.mxu0 %v5822
        %7934 = vmatprep.subr.bf16.mxu0 %v5842
        %7935 = vmatpush1.bf16.msra.mxu0 %v5841
        %7936 = vmatprep.subr.bf16.mxu0 %v5861
        %7937 = vmatpush1.bf16.msra.mxu0 %v5860
        %7938 = vmatprep.mubr.bf16.mxu0 %v1547
        %7939 = vmatmul.mubr.bf16.gmra.mrb[0].mxu0 %v1545
        %v7940 = vpop.f32.mrb[0].mxu0
        %v7941 = vadd.f32 %v7900, %v7940
        %v7942 = vpop.f32.mrb[0].mxu0
        %v7943 = vadd.f32 %v7902, %v7942
        %v7944 = vpop.f32.mrb[0].mxu0
        %v7945 = vpop.f32.mrb[0].mxu0
        %7946 = vdwg.mxu0
        %7947 = vmatprep.subr.bf16.mxu0 %v5880
        %7948 = vmatpush1.bf16.msra.mxu0 %v5879
        %7949 = vmatprep.subr.bf16.mxu0 %v5899
        %7950 = vmatpush1.bf16.msra.mxu0 %v5898
        %7951 = vmatprep.subr.bf16.mxu0 %v5918
        %7952 = vmatpush1.bf16.msra.mxu0 %v5917
        %7953 = vmatprep.subr.bf16.mxu0 %v5937
        %7954 = vmatpush1.bf16.msra.mxu0 %v5936
        %7955 = vmatprep.subr.bf16.mxu0 %v5956
        %7956 = vmatpush1.bf16.msra.mxu0 %v5955
        %7957 = vmatprep.subr.bf16.mxu0 %v5975
        %7958 = vmatpush1.bf16.msra.mxu0 %v5974
        %7959 = vmatprep.subr.bf16.mxu0 %v5994
        %7960 = vmatpush1.bf16.msra.mxu0 %v5993
        %7961 = vmatprep.subr.bf16.mxu0 %v6013
        %7962 = vmatpush1.bf16.msra.mxu0 %v6012
        %7963 = vmatprep.subr.bf16.mxu0 %v6032
        %7964 = vmatpush1.bf16.msra.mxu0 %v6031
        %7965 = vmatprep.subr.bf16.mxu0 %v6051
        %7966 = vmatpush1.bf16.msra.mxu0 %v6050
        %7967 = vmatprep.subr.bf16.mxu0 %v6070
        %7968 = vmatpush1.bf16.msra.mxu0 %v6069
        %7969 = vmatprep.subr.bf16.mxu0 %v6089
        %7970 = vmatpush1.bf16.msra.mxu0 %v6088
        %7971 = vmatprep.subr.bf16.mxu0 %v6108
        %7972 = vmatpush1.bf16.msra.mxu0 %v6107
        %7973 = vmatprep.subr.bf16.mxu0 %v6127
        %7974 = vmatpush1.bf16.msra.mxu0 %v6126
        %7975 = vmatprep.subr.bf16.mxu0 %v6146
        %7976 = vmatpush1.bf16.msra.mxu0 %v6145
        %7977 = vmatprep.subr.bf16.mxu0 %v6165
        %7978 = vmatpush1.bf16.msra.mxu0 %v6164
        %7979 = vmatprep.mubr.bf16.mxu0 %v1544
        %7980 = vmatmul.mubr.bf16.gmra.mrb[0].mxu0 %v1530
        %v7981 = vpop.f32.mrb[0].mxu0
        %v7982 = vadd.f32 %v7941, %v7981
        %v7983 = vpop.f32.mrb[0].mxu0
        %v7984 = vadd.f32 %v7943, %v7983
        %v7985 = vpop.f32.mrb[0].mxu0
        %v7986 = vpop.f32.mrb[0].mxu0
        %7987 = vdwg.mxu0
        %7988 = vmatprep.subr.bf16.mxu0 %v6184
        %7989 = vmatpush1.bf16.msra.mxu0 %v6183
        %7990 = vmatprep.subr.bf16.mxu0 %v6203
        %7991 = vmatpush1.bf16.msra.mxu0 %v6202
        %7992 = vmatprep.subr.bf16.mxu0 %v6222
        %7993 = vmatpush1.bf16.msra.mxu0 %v6221
        %7994 = vmatprep.subr.bf16.mxu0 %v6241
        %7995 = vmatpush1.bf16.msra.mxu0 %v6240
        %7996 = vmatprep.subr.bf16.mxu0 %v6260
        %7997 = vmatpush1.bf16.msra.mxu0 %v6259
        %7998 = vmatprep.subr.bf16.mxu0 %v6279
        %7999 = vmatpush1.bf16.msra.mxu0 %v6278
        %8000 = vmatprep.subr.bf16.mxu0 %v6298
        %8001 = vmatpush1.bf16.msra.mxu0 %v6297
        %8002 = vmatprep.subr.bf16.mxu0 %v6317
        %8003 = vmatpush1.bf16.msra.mxu0 %v6316
        %8004 = vmatprep.subr.bf16.mxu0 %v6336
        %8005 = vmatpush1.bf16.msra.mxu0 %v6335
        %8006 = vmatprep.subr.bf16.mxu0 %v6355
        %8007 = vmatpush1.bf16.msra.mxu0 %v6354
        %8008 = vmatprep.subr.bf16.mxu0 %v6374
        %8009 = vmatpush1.bf16.msra.mxu0 %v6373
        %8010 = vmatprep.subr.bf16.mxu0 %v6393
        %8011 = vmatpush1.bf16.msra.mxu0 %v6392
        %8012 = vmatprep.subr.bf16.mxu0 %v6412
        %8013 = vmatpush1.bf16.msra.mxu0 %v6411
        %8014 = vmatprep.subr.bf16.mxu0 %v6431
        %8015 = vmatpush1.bf16.msra.mxu0 %v6430
        %8016 = vmatprep.subr.bf16.mxu0 %v6450
        %8017 = vmatpush1.bf16.msra.mxu0 %v6449
        %8018 = vmatprep.subr.bf16.mxu0 %v6469
        %8019 = vmatpush1.bf16.msra.mxu0 %v6468
        %8020 = vmatprep.mubr.bf16.mxu0 %v1548
        %8021 = vmatmul.mubr.bf16.gmra.mrb[0].mxu0 %v1546
        %v8022 = vpop.f32.mrb[0].mxu0
        %v8023 = vadd.f32 %v7982, %v8022
        %v8024 = vpop.f32.mrb[0].mxu0
        %v8025 = vadd.f32 %v7984, %v8024
        %v8026 = vpop.f32.mrb[0].mxu0
        %v8027 = vpop.f32.mrb[0].mxu0
        %8028 = vdwg.mxu0
        %8029 = vmatprep.subr.bf16.mxu0 %v5274
        %8030 = vmatpush1.bf16.msra.mxu0 %v5273
        %8031 = vmatprep.subr.bf16.mxu0 %v5293
        %8032 = vmatpush1.bf16.msra.mxu0 %v5292
        %8033 = vmatprep.subr.bf16.mxu0 %v5312
        %8034 = vmatpush1.bf16.msra.mxu0 %v5311
        %8035 = vmatprep.subr.bf16.mxu0 %v5331
        %8036 = vmatpush1.bf16.msra.mxu0 %v5330
        %8037 = vmatprep.subr.bf16.mxu0 %v5350
        %8038 = vmatpush1.bf16.msra.mxu0 %v5349
        %8039 = vmatprep.subr.bf16.mxu0 %v5369
        %8040 = vmatpush1.bf16.msra.mxu0 %v5368
        %8041 = vmatprep.subr.bf16.mxu0 %v5388
        %8042 = vmatpush1.bf16.msra.mxu0 %v5387
        %8043 = vmatprep.subr.bf16.mxu0 %v5407
        %8044 = vmatpush1.bf16.msra.mxu0 %v5406
        %8045 = vmatprep.subr.bf16.mxu0 %v5426
        %8046 = vmatpush1.bf16.msra.mxu0 %v5425
        %8047 = vmatprep.subr.bf16.mxu0 %v5445
        %8048 = vmatpush1.bf16.msra.mxu0 %v5444
        %8049 = vmatprep.subr.bf16.mxu0 %v5464
        %8050 = vmatpush1.bf16.msra.mxu0 %v5463
        %8051 = vmatprep.subr.bf16.mxu0 %v5483
        %8052 = vmatpush1.bf16.msra.mxu0 %v5482
        %8053 = vmatprep.subr.bf16.mxu0 %v5502
        %8054 = vmatpush1.bf16.msra.mxu0 %v5501
        %8055 = vmatprep.subr.bf16.mxu0 %v5521
        %8056 = vmatpush1.bf16.msra.mxu0 %v5520
        %8057 = vmatprep.subr.bf16.mxu0 %v5540
        %8058 = vmatpush1.bf16.msra.mxu0 %v5539
        %8059 = vmatprep.subr.bf16.mxu0 %v5559
        %8060 = vmatpush1.bf16.msra.mxu0 %v5558
        %8061 = vmatprep.mubr.bf16.mxu0 %v1537
        %8062 = vmatmul.mubr.bf16.gmra.mrb[0].mxu0 %v1523
        %v8063 = vpop.f32.mrb[0].mxu0
        %v8064 = vadd.f32 0.0, %v8063
        %v8065 = vpop.f32.mrb[0].mxu0
        %v8066 = vadd.f32 0.0, %v8065
        %v8067 = vpop.f32.mrb[0].mxu0
        %v8068 = vpop.f32.mrb[0].mxu0
        %8069 = vdwg.mxu0
        %8070 = vmatprep.subr.bf16.mxu0 %v5578
        %8071 = vmatpush1.bf16.msra.mxu0 %v5577
        %8072 = vmatprep.subr.bf16.mxu0 %v5597
        %8073 = vmatpush1.bf16.msra.mxu0 %v5596
        %8074 = vmatprep.subr.bf16.mxu0 %v5616
        %8075 = vmatpush1.bf16.msra.mxu0 %v5615
        %8076 = vmatprep.subr.bf16.mxu0 %v5635
        %8077 = vmatpush1.bf16.msra.mxu0 %v5634
        %8078 = vmatprep.subr.bf16.mxu0 %v5654
        %8079 = vmatpush1.bf16.msra.mxu0 %v5653
        %8080 = vmatprep.subr.bf16.mxu0 %v5673
        %8081 = vmatpush1.bf16.msra.mxu0 %v5672
        %8082 = vmatprep.subr.bf16.mxu0 %v5692
        %8083 = vmatpush1.bf16.msra.mxu0 %v5691
        %8084 = vmatprep.subr.bf16.mxu0 %v5711
        %8085 = vmatpush1.bf16.msra.mxu0 %v5710
        %8086 = vmatprep.subr.bf16.mxu0 %v5730
        %8087 = vmatpush1.bf16.msra.mxu0 %v5729
        %8088 = vmatprep.subr.bf16.mxu0 %v5749
        %8089 = vmatpush1.bf16.msra.mxu0 %v5748
        %8090 = vmatprep.subr.bf16.mxu0 %v5768
        %8091 = vmatpush1.bf16.msra.mxu0 %v5767
        %8092 = vmatprep.subr.bf16.mxu0 %v5787
        %8093 = vmatpush1.bf16.msra.mxu0 %v5786
        %8094 = vmatprep.subr.bf16.mxu0 %v5806
        %8095 = vmatpush1.bf16.msra.mxu0 %v5805
        %8096 = vmatprep.subr.bf16.mxu0 %v5825
        %8097 = vmatpush1.bf16.msra.mxu0 %v5824
        %8098 = vmatprep.subr.bf16.mxu0 %v5844
        %8099 = vmatpush1.bf16.msra.mxu0 %v5843
        %8100 = vmatprep.subr.bf16.mxu0 %v5863
        %8101 = vmatpush1.bf16.msra.mxu0 %v5862
        %8102 = vmatprep.mubr.bf16.mxu0 %v1547
        %8103 = vmatmul.mubr.bf16.gmra.mrb[0].mxu0 %v1545
        %v8104 = vpop.f32.mrb[0].mxu0
        %v8105 = vadd.f32 %v8064, %v8104
        %v8106 = vpop.f32.mrb[0].mxu0
        %v8107 = vadd.f32 %v8066, %v8106
        %v8108 = vpop.f32.mrb[0].mxu0
        %v8109 = vpop.f32.mrb[0].mxu0
        %8110 = vdwg.mxu0
        %8111 = vmatprep.subr.bf16.mxu0 %v5882
        %8112 = vmatpush1.bf16.msra.mxu0 %v5881
        %8113 = vmatprep.subr.bf16.mxu0 %v5901
        %8114 = vmatpush1.bf16.msra.mxu0 %v5900
        %8115 = vmatprep.subr.bf16.mxu0 %v5920
        %8116 = vmatpush1.bf16.msra.mxu0 %v5919
        %8117 = vmatprep.subr.bf16.mxu0 %v5939
        %8118 = vmatpush1.bf16.msra.mxu0 %v5938
        %8119 = vmatprep.subr.bf16.mxu0 %v5958
        %8120 = vmatpush1.bf16.msra.mxu0 %v5957
        %8121 = vmatprep.subr.bf16.mxu0 %v5977
        %8122 = vmatpush1.bf16.msra.mxu0 %v5976
        %8123 = vmatprep.subr.bf16.mxu0 %v5996
        %8124 = vmatpush1.bf16.msra.mxu0 %v5995
        %8125 = vmatprep.subr.bf16.mxu0 %v6015
        %8126 = vmatpush1.bf16.msra.mxu0 %v6014
        %8127 = vmatprep.subr.bf16.mxu0 %v6034
        %8128 = vmatpush1.bf16.msra.mxu0 %v6033
        %8129 = vmatprep.subr.bf16.mxu0 %v6053
        %8130 = vmatpush1.bf16.msra.mxu0 %v6052
        %8131 = vmatprep.subr.bf16.mxu0 %v6072
        %8132 = vmatpush1.bf16.msra.mxu0 %v6071
        %8133 = vmatprep.subr.bf16.mxu0 %v6091
        %8134 = vmatpush1.bf16.msra.mxu0 %v6090
        %8135 = vmatprep.subr.bf16.mxu0 %v6110
        %8136 = vmatpush1.bf16.msra.mxu0 %v6109
        %8137 = vmatprep.subr.bf16.mxu0 %v6129
        %8138 = vmatpush1.bf16.msra.mxu0 %v6128
        %8139 = vmatprep.subr.bf16.mxu0 %v6148
        %8140 = vmatpush1.bf16.msra.mxu0 %v6147
        %8141 = vmatprep.subr.bf16.mxu0 %v6167
        %8142 = vmatpush1.bf16.msra.mxu0 %v6166
        %8143 = vmatprep.mubr.bf16.mxu0 %v1544
        %8144 = vmatmul.mubr.bf16.gmra.mrb[0].mxu0 %v1530
        %v8145 = vpop.f32.mrb[0].mxu0
        %v8146 = vadd.f32 %v8105, %v8145
        %v8147 = vpop.f32.mrb[0].mxu0
        %v8148 = vadd.f32 %v8107, %v8147
        %v8149 = vpop.f32.mrb[0].mxu0
        %v8150 = vpop.f32.mrb[0].mxu0
        %8151 = vdwg.mxu0
        %8152 = vmatprep.subr.bf16.mxu0 %v6186
        %8153 = vmatpush1.bf16.msra.mxu0 %v6185
        %8154 = vmatprep.subr.bf16.mxu0 %v6205
        %8155 = vmatpush1.bf16.msra.mxu0 %v6204
        %8156 = vmatprep.subr.bf16.mxu0 %v6224
        %8157 = vmatpush1.bf16.msra.mxu0 %v6223
        %8158 = vmatprep.subr.bf16.mxu0 %v6243
        %8159 = vmatpush1.bf16.msra.mxu0 %v6242
        %8160 = vmatprep.subr.bf16.mxu0 %v6262
        %8161 = vmatpush1.bf16.msra.mxu0 %v6261
        %8162 = vmatprep.subr.bf16.mxu0 %v6281
        %8163 = vmatpush1.bf16.msra.mxu0 %v6280
        %8164 = vmatprep.subr.bf16.mxu0 %v6300
        %8165 = vmatpush1.bf16.msra.mxu0 %v6299
        %8166 = vmatprep.subr.bf16.mxu0 %v6319
        %8167 = vmatpush1.bf16.msra.mxu0 %v6318
        %8168 = vmatprep.subr.bf16.mxu0 %v6338
        %8169 = vmatpush1.bf16.msra.mxu0 %v6337
        %8170 = vmatprep.subr.bf16.mxu0 %v6357
        %8171 = vmatpush1.bf16.msra.mxu0 %v6356
        %8172 = vmatprep.subr.bf16.mxu0 %v6376
        %8173 = vmatpush1.bf16.msra.mxu0 %v6375
        %8174 = vmatprep.subr.bf16.mxu0 %v6395
        %8175 = vmatpush1.bf16.msra.mxu0 %v6394
        %8176 = vmatprep.subr.bf16.mxu0 %v6414
        %8177 = vmatpush1.bf16.msra.mxu0 %v6413
        %8178 = vmatprep.subr.bf16.mxu0 %v6433
        %8179 = vmatpush1.bf16.msra.mxu0 %v6432
        %8180 = vmatprep.subr.bf16.mxu0 %v6452
        %8181 = vmatpush1.bf16.msra.mxu0 %v6451
        %8182 = vmatprep.subr.bf16.mxu0 %v6471
        %8183 = vmatpush1.bf16.msra.mxu0 %v6470
        %8184 = vmatprep.mubr.bf16.mxu0 %v1548
        %8185 = vmatmul.mubr.bf16.gmra.mrb[0].mxu0 %v1546
        %v8186 = vpop.f32.mrb[0].mxu0
        %v8187 = vadd.f32 %v8146, %v8186
        %v8188 = vpop.f32.mrb[0].mxu0
        %v8189 = vadd.f32 %v8148, %v8188
        %v8190 = vpop.f32.mrb[0].mxu0
        %v8191 = vpop.f32.mrb[0].mxu0
        %8192 = vdwg.mxu0
        %8193 = vmatprep.subr.bf16.mxu0 %v5276
        %8194 = vmatpush1.bf16.msra.mxu0 %v5275
        %8195 = vmatprep.subr.bf16.mxu0 %v5295
        %8196 = vmatpush1.bf16.msra.mxu0 %v5294
        %8197 = vmatprep.subr.bf16.mxu0 %v5314
        %8198 = vmatpush1.bf16.msra.mxu0 %v5313
        %8199 = vmatprep.subr.bf16.mxu0 %v5333
        %8200 = vmatpush1.bf16.msra.mxu0 %v5332
        %8201 = vmatprep.subr.bf16.mxu0 %v5352
        %8202 = vmatpush1.bf16.msra.mxu0 %v5351
        %8203 = vmatprep.subr.bf16.mxu0 %v5371
        %8204 = vmatpush1.bf16.msra.mxu0 %v5370
        %8205 = vmatprep.subr.bf16.mxu0 %v5390
        %8206 = vmatpush1.bf16.msra.mxu0 %v5389
        %8207 = vmatprep.subr.bf16.mxu0 %v5409
        %8208 = vmatpush1.bf16.msra.mxu0 %v5408
        %8209 = vmatprep.subr.bf16.mxu0 %v5428
        %8210 = vmatpush1.bf16.msra.mxu0 %v5427
        %8211 = vmatprep.subr.bf16.mxu0 %v5447
        %8212 = vmatpush1.bf16.msra.mxu0 %v5446
        %8213 = vmatprep.subr.bf16.mxu0 %v5466
        %8214 = vmatpush1.bf16.msra.mxu0 %v5465
        %8215 = vmatprep.subr.bf16.mxu0 %v5485
        %8216 = vmatpush1.bf16.msra.mxu0 %v5484
        %8217 = vmatprep.subr.bf16.mxu0 %v5504
        %8218 = vmatpush1.bf16.msra.mxu0 %v5503
        %8219 = vmatprep.subr.bf16.mxu0 %v5523
        %8220 = vmatpush1.bf16.msra.mxu0 %v5522
        %8221 = vmatprep.subr.bf16.mxu0 %v5542
        %8222 = vmatpush1.bf16.msra.mxu0 %v5541
        %8223 = vmatprep.subr.bf16.mxu0 %v5561
        %8224 = vmatpush1.bf16.msra.mxu0 %v5560
        %8225 = vmatprep.mubr.bf16.mxu0 %v1537
        %8226 = vmatmul.mubr.bf16.gmra.mrb[0].mxu0 %v1523
        %v8227 = vpop.f32.mrb[0].mxu0
        %v8228 = vadd.f32 0.0, %v8227
        %v8229 = vpop.f32.mrb[0].mxu0
        %v8230 = vadd.f32 0.0, %v8229
        %v8231 = vpop.f32.mrb[0].mxu0
        %v8232 = vpop.f32.mrb[0].mxu0
        %8233 = vdwg.mxu0
        %8234 = vmatprep.subr.bf16.mxu0 %v5580
        %8235 = vmatpush1.bf16.msra.mxu0 %v5579
        %8236 = vmatprep.subr.bf16.mxu0 %v5599
        %8237 = vmatpush1.bf16.msra.mxu0 %v5598
        %8238 = vmatprep.subr.bf16.mxu0 %v5618
        %8239 = vmatpush1.bf16.msra.mxu0 %v5617
        %8240 = vmatprep.subr.bf16.mxu0 %v5637
        %8241 = vmatpush1.bf16.msra.mxu0 %v5636
        %8242 = vmatprep.subr.bf16.mxu0 %v5656
        %8243 = vmatpush1.bf16.msra.mxu0 %v5655
        %8244 = vmatprep.subr.bf16.mxu0 %v5675
        %8245 = vmatpush1.bf16.msra.mxu0 %v5674
        %8246 = vmatprep.subr.bf16.mxu0 %v5694
        %8247 = vmatpush1.bf16.msra.mxu0 %v5693
        %8248 = vmatprep.subr.bf16.mxu0 %v5713
        %8249 = vmatpush1.bf16.msra.mxu0 %v5712
        %8250 = vmatprep.subr.bf16.mxu0 %v5732
        %8251 = vmatpush1.bf16.msra.mxu0 %v5731
        %8252 = vmatprep.subr.bf16.mxu0 %v5751
        %8253 = vmatpush1.bf16.msra.mxu0 %v5750
        %8254 = vmatprep.subr.bf16.mxu0 %v5770
        %8255 = vmatpush1.bf16.msra.mxu0 %v5769
        %8256 = vmatprep.subr.bf16.mxu0 %v5789
        %8257 = vmatpush1.bf16.msra.mxu0 %v5788
        %8258 = vmatprep.subr.bf16.mxu0 %v5808
        %8259 = vmatpush1.bf16.msra.mxu0 %v5807
        %8260 = vmatprep.subr.bf16.mxu0 %v5827
        %8261 = vmatpush1.bf16.msra.mxu0 %v5826
        %8262 = vmatprep.subr.bf16.mxu0 %v5846
        %8263 = vmatpush1.bf16.msra.mxu0 %v5845
        %8264 = vmatprep.subr.bf16.mxu0 %v5865
        %8265 = vmatpush1.bf16.msra.mxu0 %v5864
        %8266 = vmatprep.mubr.bf16.mxu0 %v1547
        %8267 = vmatmul.mubr.bf16.gmra.mrb[0].mxu0 %v1545
        %v8268 = vpop.f32.mrb[0].mxu0
        %v8269 = vadd.f32 %v8228, %v8268
        %v8270 = vpop.f32.mrb[0].mxu0
        %v8271 = vadd.f32 %v8230, %v8270
        %v8272 = vpop.f32.mrb[0].mxu0
        %v8273 = vpop.f32.mrb[0].mxu0
        %8274 = vdwg.mxu0
        %8275 = vmatprep.subr.bf16.mxu0 %v5884
        %8276 = vmatpush1.bf16.msra.mxu0 %v5883
        %8277 = vmatprep.subr.bf16.mxu0 %v5903
        %8278 = vmatpush1.bf16.msra.mxu0 %v5902
        %8279 = vmatprep.subr.bf16.mxu0 %v5922
        %8280 = vmatpush1.bf16.msra.mxu0 %v5921
        %8281 = vmatprep.subr.bf16.mxu0 %v5941
        %8282 = vmatpush1.bf16.msra.mxu0 %v5940
        %8283 = vmatprep.subr.bf16.mxu0 %v5960
        %8284 = vmatpush1.bf16.msra.mxu0 %v5959
        %8285 = vmatprep.subr.bf16.mxu0 %v5979
        %8286 = vmatpush1.bf16.msra.mxu0 %v5978
        %8287 = vmatprep.subr.bf16.mxu0 %v5998
        %8288 = vmatpush1.bf16.msra.mxu0 %v5997
        %8289 = vmatprep.subr.bf16.mxu0 %v6017
        %8290 = vmatpush1.bf16.msra.mxu0 %v6016
        %8291 = vmatprep.subr.bf16.mxu0 %v6036
        %8292 = vmatpush1.bf16.msra.mxu0 %v6035
        %8293 = vmatprep.subr.bf16.mxu0 %v6055
        %8294 = vmatpush1.bf16.msra.mxu0 %v6054
        %8295 = vmatprep.subr.bf16.mxu0 %v6074
        %8296 = vmatpush1.bf16.msra.mxu0 %v6073
        %8297 = vmatprep.subr.bf16.mxu0 %v6093
        %8298 = vmatpush1.bf16.msra.mxu0 %v6092
        %8299 = vmatprep.subr.bf16.mxu0 %v6112
        %8300 = vmatpush1.bf16.msra.mxu0 %v6111
        %8301 = vmatprep.subr.bf16.mxu0 %v6131
        %8302 = vmatpush1.bf16.msra.mxu0 %v6130
        %8303 = vmatprep.subr.bf16.mxu0 %v6150
        %8304 = vmatpush1.bf16.msra.mxu0 %v6149
        %8305 = vmatprep.subr.bf16.mxu0 %v6169
        %8306 = vmatpush1.bf16.msra.mxu0 %v6168
        %8307 = vmatprep.mubr.bf16.mxu0 %v1544
        %8308 = vmatmul.mubr.bf16.gmra.mrb[0].mxu0 %v1530
        %v8309 = vpop.f32.mrb[0].mxu0
        %v8310 = vadd.f32 %v8269, %v8309
        %v8311 = vpop.f32.mrb[0].mxu0
        %v8312 = vadd.f32 %v8271, %v8311
        %v8313 = vpop.f32.mrb[0].mxu0
        %v8314 = vpop.f32.mrb[0].mxu0
        %8315 = vdwg.mxu0
        %8316 = vmatprep.subr.bf16.mxu0 %v6188
        %8317 = vmatpush1.bf16.msra.mxu0 %v6187
        %8318 = vmatprep.subr.bf16.mxu0 %v6207
        %8319 = vmatpush1.bf16.msra.mxu0 %v6206
        %8320 = vmatprep.subr.bf16.mxu0 %v6226
        %8321 = vmatpush1.bf16.msra.mxu0 %v6225
        %8322 = vmatprep.subr.bf16.mxu0 %v6245
        %8323 = vmatpush1.bf16.msra.mxu0 %v6244
        %8324 = vmatprep.subr.bf16.mxu0 %v6264
        %8325 = vmatpush1.bf16.msra.mxu0 %v6263
        %8326 = vmatprep.subr.bf16.mxu0 %v6283
        %8327 = vmatpush1.bf16.msra.mxu0 %v6282
        %8328 = vmatprep.subr.bf16.mxu0 %v6302
        %8329 = vmatpush1.bf16.msra.mxu0 %v6301
        %8330 = vmatprep.subr.bf16.mxu0 %v6321
        %8331 = vmatpush1.bf16.msra.mxu0 %v6320
        %8332 = vmatprep.subr.bf16.mxu0 %v6340
        %8333 = vmatpush1.bf16.msra.mxu0 %v6339
        %8334 = vmatprep.subr.bf16.mxu0 %v6359
        %8335 = vmatpush1.bf16.msra.mxu0 %v6358
        %8336 = vmatprep.subr.bf16.mxu0 %v6378
        %8337 = vmatpush1.bf16.msra.mxu0 %v6377
        %8338 = vmatprep.subr.bf16.mxu0 %v6397
        %8339 = vmatpush1.bf16.msra.mxu0 %v6396
        %8340 = vmatprep.subr.bf16.mxu0 %v6416
        %8341 = vmatpush1.bf16.msra.mxu0 %v6415
        %8342 = vmatprep.subr.bf16.mxu0 %v6435
        %8343 = vmatpush1.bf16.msra.mxu0 %v6434
        %8344 = vmatprep.subr.bf16.mxu0 %v6454
        %8345 = vmatpush1.bf16.msra.mxu0 %v6453
        %8346 = vmatprep.subr.bf16.mxu0 %v6473
        %8347 = vmatpush1.bf16.msra.mxu0 %v6472
        %8348 = vmatprep.mubr.bf16.mxu0 %v1548
        %8349 = vmatmul.mubr.bf16.gmra.mrb[0].mxu0 %v1546
        %v8350 = vpop.f32.mrb[0].mxu0
        %v8351 = vadd.f32 %v8310, %v8350
        %v8352 = vpop.f32.mrb[0].mxu0
        %v8353 = vadd.f32 %v8312, %v8352
        %v8354 = vpop.f32.mrb[0].mxu0
        %v8355 = vpop.f32.mrb[0].mxu0
        %8356 = vdwg.mxu0
        %8357 = vmatprep.subr.bf16.mxu0 %v5278
        %8358 = vmatpush1.bf16.msra.mxu0 %v5277
        %8359 = vmatprep.subr.bf16.mxu0 %v5297
        %8360 = vmatpush1.bf16.msra.mxu0 %v5296
        %8361 = vmatprep.subr.bf16.mxu0 %v5316
        %8362 = vmatpush1.bf16.msra.mxu0 %v5315
        %8363 = vmatprep.subr.bf16.mxu0 %v5335
        %8364 = vmatpush1.bf16.msra.mxu0 %v5334
        %8365 = vmatprep.subr.bf16.mxu0 %v5354
        %8366 = vmatpush1.bf16.msra.mxu0 %v5353
        %8367 = vmatprep.subr.bf16.mxu0 %v5373
        %8368 = vmatpush1.bf16.msra.mxu0 %v5372
        %8369 = vmatprep.subr.bf16.mxu0 %v5392
        %8370 = vmatpush1.bf16.msra.mxu0 %v5391
        %8371 = vmatprep.subr.bf16.mxu0 %v5411
        %8372 = vmatpush1.bf16.msra.mxu0 %v5410
        %8373 = vmatprep.subr.bf16.mxu0 %v5430
        %8374 = vmatpush1.bf16.msra.mxu0 %v5429
        %8375 = vmatprep.subr.bf16.mxu0 %v5449
        %8376 = vmatpush1.bf16.msra.mxu0 %v5448
        %8377 = vmatprep.subr.bf16.mxu0 %v5468
        %8378 = vmatpush1.bf16.msra.mxu0 %v5467
        %8379 = vmatprep.subr.bf16.mxu0 %v5487
        %8380 = vmatpush1.bf16.msra.mxu0 %v5486
        %8381 = vmatprep.subr.bf16.mxu0 %v5506
        %8382 = vmatpush1.bf16.msra.mxu0 %v5505
        %8383 = vmatprep.subr.bf16.mxu0 %v5525
        %8384 = vmatpush1.bf16.msra.mxu0 %v5524
        %8385 = vmatprep.subr.bf16.mxu0 %v5544
        %8386 = vmatpush1.bf16.msra.mxu0 %v5543
        %8387 = vmatprep.subr.bf16.mxu0 %v5563
        %8388 = vmatpush1.bf16.msra.mxu0 %v5562
        %8389 = vmatprep.mubr.bf16.mxu0 %v1537
        %8390 = vmatmul.mubr.bf16.gmra.mrb[0].mxu0 %v1523
        %v8391 = vpop.f32.mrb[0].mxu0
        %v8392 = vadd.f32 0.0, %v8391
        %v8393 = vpop.f32.mrb[0].mxu0
        %v8394 = vadd.f32 0.0, %v8393
        %v8395 = vpop.f32.mrb[0].mxu0
        %v8396 = vpop.f32.mrb[0].mxu0
        %8397 = vdwg.mxu0
        %8398 = vmatprep.subr.bf16.mxu0 %v5582
        %8399 = vmatpush1.bf16.msra.mxu0 %v5581
        %8400 = vmatprep.subr.bf16.mxu0 %v5601
        %8401 = vmatpush1.bf16.msra.mxu0 %v5600
        %8402 = vmatprep.subr.bf16.mxu0 %v5620
        %8403 = vmatpush1.bf16.msra.mxu0 %v5619
        %8404 = vmatprep.subr.bf16.mxu0 %v5639
        %8405 = vmatpush1.bf16.msra.mxu0 %v5638
        %8406 = vmatprep.subr.bf16.mxu0 %v5658
        %8407 = vmatpush1.bf16.msra.mxu0 %v5657
        %8408 = vmatprep.subr.bf16.mxu0 %v5677
        %8409 = vmatpush1.bf16.msra.mxu0 %v5676
        %8410 = vmatprep.subr.bf16.mxu0 %v5696
        %8411 = vmatpush1.bf16.msra.mxu0 %v5695
        %8412 = vmatprep.subr.bf16.mxu0 %v5715
        %8413 = vmatpush1.bf16.msra.mxu0 %v5714
        %8414 = vmatprep.subr.bf16.mxu0 %v5734
        %8415 = vmatpush1.bf16.msra.mxu0 %v5733
        %8416 = vmatprep.subr.bf16.mxu0 %v5753
        %8417 = vmatpush1.bf16.msra.mxu0 %v5752
        %8418 = vmatprep.subr.bf16.mxu0 %v5772
        %8419 = vmatpush1.bf16.msra.mxu0 %v5771
        %8420 = vmatprep.subr.bf16.mxu0 %v5791
        %8421 = vmatpush1.bf16.msra.mxu0 %v5790
        %8422 = vmatprep.subr.bf16.mxu0 %v5810
        %8423 = vmatpush1.bf16.msra.mxu0 %v5809
        %8424 = vmatprep.subr.bf16.mxu0 %v5829
        %8425 = vmatpush1.bf16.msra.mxu0 %v5828
        %8426 = vmatprep.subr.bf16.mxu0 %v5848
        %8427 = vmatpush1.bf16.msra.mxu0 %v5847
        %8428 = vmatprep.subr.bf16.mxu0 %v5867
        %8429 = vmatpush1.bf16.msra.mxu0 %v5866
        %8430 = vmatprep.mubr.bf16.mxu0 %v1547
        %8431 = vmatmul.mubr.bf16.gmra.mrb[0].mxu0 %v1545
        %v8432 = vpop.f32.mrb[0].mxu0
        %v8433 = vadd.f32 %v8392, %v8432
        %v8434 = vpop.f32.mrb[0].mxu0
        %v8435 = vadd.f32 %v8394, %v8434
        %v8436 = vpop.f32.mrb[0].mxu0
        %v8437 = vpop.f32.mrb[0].mxu0
        %8438 = vdwg.mxu0
        %8439 = vmatprep.subr.bf16.mxu0 %v5886
        %8440 = vmatpush1.bf16.msra.mxu0 %v5885
        %8441 = vmatprep.subr.bf16.mxu0 %v5905
        %8442 = vmatpush1.bf16.msra.mxu0 %v5904
        %8443 = vmatprep.subr.bf16.mxu0 %v5924
        %8444 = vmatpush1.bf16.msra.mxu0 %v5923
        %8445 = vmatprep.subr.bf16.mxu0 %v5943
        %8446 = vmatpush1.bf16.msra.mxu0 %v5942
        %8447 = vmatprep.subr.bf16.mxu0 %v5962
        %8448 = vmatpush1.bf16.msra.mxu0 %v5961
        %8449 = vmatprep.subr.bf16.mxu0 %v5981
        %8450 = vmatpush1.bf16.msra.mxu0 %v5980
        %8451 = vmatprep.subr.bf16.mxu0 %v6000
        %8452 = vmatpush1.bf16.msra.mxu0 %v5999
        %8453 = vmatprep.subr.bf16.mxu0 %v6019
        %8454 = vmatpush1.bf16.msra.mxu0 %v6018
        %8455 = vmatprep.subr.bf16.mxu0 %v6038
        %8456 = vmatpush1.bf16.msra.mxu0 %v6037
        %8457 = vmatprep.subr.bf16.mxu0 %v6057
        %8458 = vmatpush1.bf16.msra.mxu0 %v6056
        %8459 = vmatprep.subr.bf16.mxu0 %v6076
        %8460 = vmatpush1.bf16.msra.mxu0 %v6075
        %8461 = vmatprep.subr.bf16.mxu0 %v6095
        %8462 = vmatpush1.bf16.msra.mxu0 %v6094
        %8463 = vmatprep.subr.bf16.mxu0 %v6114
        %8464 = vmatpush1.bf16.msra.mxu0 %v6113
        %8465 = vmatprep.subr.bf16.mxu0 %v6133
        %8466 = vmatpush1.bf16.msra.mxu0 %v6132
        %8467 = vmatprep.subr.bf16.mxu0 %v6152
        %8468 = vmatpush1.bf16.msra.mxu0 %v6151
        %8469 = vmatprep.subr.bf16.mxu0 %v6171
        %8470 = vmatpush1.bf16.msra.mxu0 %v6170
        %8471 = vmatprep.mubr.bf16.mxu0 %v1544
        %8472 = vmatmul.mubr.bf16.gmra.mrb[0].mxu0 %v1530
        %v8473 = vpop.f32.mrb[0].mxu0
        %v8474 = vadd.f32 %v8433, %v8473
        %v8475 = vpop.f32.mrb[0].mxu0
        %v8476 = vadd.f32 %v8435, %v8475
        %v8477 = vpop.f32.mrb[0].mxu0
        %v8478 = vpop.f32.mrb[0].mxu0
        %8479 = vdwg.mxu0
        %8480 = vmatprep.subr.bf16.mxu0 %v6190
        %8481 = vmatpush1.bf16.msra.mxu0 %v6189
        %8482 = vmatprep.subr.bf16.mxu0 %v6209
        %8483 = vmatpush1.bf16.msra.mxu0 %v6208
        %8484 = vmatprep.subr.bf16.mxu0 %v6228
        %8485 = vmatpush1.bf16.msra.mxu0 %v6227
        %8486 = vmatprep.subr.bf16.mxu0 %v6247
        %8487 = vmatpush1.bf16.msra.mxu0 %v6246
        %8488 = vmatprep.subr.bf16.mxu0 %v6266
        %8489 = vmatpush1.bf16.msra.mxu0 %v6265
        %8490 = vmatprep.subr.bf16.mxu0 %v6285
        %8491 = vmatpush1.bf16.msra.mxu0 %v6284
        %8492 = vmatprep.subr.bf16.mxu0 %v6304
        %8493 = vmatpush1.bf16.msra.mxu0 %v6303
        %8494 = vmatprep.subr.bf16.mxu0 %v6323
        %8495 = vmatpush1.bf16.msra.mxu0 %v6322
        %8496 = vmatprep.subr.bf16.mxu0 %v6342
        %8497 = vmatpush1.bf16.msra.mxu0 %v6341
        %8498 = vmatprep.subr.bf16.mxu0 %v6361
        %8499 = vmatpush1.bf16.msra.mxu0 %v6360
        %8500 = vmatprep.subr.bf16.mxu0 %v6380
        %8501 = vmatpush1.bf16.msra.mxu0 %v6379
        %8502 = vmatprep.subr.bf16.mxu0 %v6399
        %8503 = vmatpush1.bf16.msra.mxu0 %v6398
        %8504 = vmatprep.subr.bf16.mxu0 %v6418
        %8505 = vmatpush1.bf16.msra.mxu0 %v6417
        %8506 = vmatprep.subr.bf16.mxu0 %v6437
        %8507 = vmatpush1.bf16.msra.mxu0 %v6436
        %8508 = vmatprep.subr.bf16.mxu0 %v6456
        %8509 = vmatpush1.bf16.msra.mxu0 %v6455
        %8510 = vmatprep.subr.bf16.mxu0 %v6475
        %8511 = vmatpush1.bf16.msra.mxu0 %v6474
        %8512 = vmatprep.mubr.bf16.mxu0 %v1548
        %8513 = vmatmul.mubr.bf16.gmra.mrb[0].mxu0 %v1546
        %v8514 = vpop.f32.mrb[0].mxu0
        %v8515 = vadd.f32 %v8474, %v8514
        %v8516 = vpop.f32.mrb[0].mxu0
        %v8517 = vadd.f32 %v8476, %v8516
        %v8518 = vpop.f32.mrb[0].mxu0
        %v8519 = vpop.f32.mrb[0].mxu0
        %8520 = vdwg.mxu0
        %8521 = vmatprep.subr.bf16.mxu0 %v5280
        %8522 = vmatpush1.bf16.msra.mxu0 %v5279
        %8523 = vmatprep.subr.bf16.mxu0 %v5299
        %8524 = vmatpush1.bf16.msra.mxu0 %v5298
        %8525 = vmatprep.subr.bf16.mxu0 %v5318
        %8526 = vmatpush1.bf16.msra.mxu0 %v5317
        %8527 = vmatprep.subr.bf16.mxu0 %v5337
        %8528 = vmatpush1.bf16.msra.mxu0 %v5336
        %8529 = vmatprep.subr.bf16.mxu0 %v5356
        %8530 = vmatpush1.bf16.msra.mxu0 %v5355
        %8531 = vmatprep.subr.bf16.mxu0 %v5375
        %8532 = vmatpush1.bf16.msra.mxu0 %v5374
        %8533 = vmatprep.subr.bf16.mxu0 %v5394
        %8534 = vmatpush1.bf16.msra.mxu0 %v5393
        %8535 = vmatprep.subr.bf16.mxu0 %v5413
        %8536 = vmatpush1.bf16.msra.mxu0 %v5412
        %8537 = vmatprep.subr.bf16.mxu0 %v5432
        %8538 = vmatpush1.bf16.msra.mxu0 %v5431
        %8539 = vmatprep.subr.bf16.mxu0 %v5451
        %8540 = vmatpush1.bf16.msra.mxu0 %v5450
        %8541 = vmatprep.subr.bf16.mxu0 %v5470
        %8542 = vmatpush1.bf16.msra.mxu0 %v5469
        %8543 = vmatprep.subr.bf16.mxu0 %v5489
        %8544 = vmatpush1.bf16.msra.mxu0 %v5488
        %8545 = vmatprep.subr.bf16.mxu0 %v5508
        %8546 = vmatpush1.bf16.msra.mxu0 %v5507
        %8547 = vmatprep.subr.bf16.mxu0 %v5527
        %8548 = vmatpush1.bf16.msra.mxu0 %v5526
        %8549 = vmatprep.subr.bf16.mxu0 %v5546
        %8550 = vmatpush1.bf16.msra.mxu0 %v5545
        %8551 = vmatprep.subr.bf16.mxu0 %v5565
        %8552 = vmatpush1.bf16.msra.mxu0 %v5564
        %8553 = vmatprep.mubr.bf16.mxu0 %v1537
        %8554 = vmatmul.mubr.bf16.gmra.mrb[0].mxu0 %v1523
        %v8555 = vpop.f32.mrb[0].mxu0
        %v8556 = vadd.f32 0.0, %v8555
        %v8557 = vpop.f32.mrb[0].mxu0
        %v8558 = vadd.f32 0.0, %v8557
        %v8559 = vpop.f32.mrb[0].mxu0
        %v8560 = vpop.f32.mrb[0].mxu0
        %8561 = vdwg.mxu0
        %8562 = vmatprep.subr.bf16.mxu0 %v5584
        %8563 = vmatpush1.bf16.msra.mxu0 %v5583
        %8564 = vmatprep.subr.bf16.mxu0 %v5603
        %8565 = vmatpush1.bf16.msra.mxu0 %v5602
        %8566 = vmatprep.subr.bf16.mxu0 %v5622
        %8567 = vmatpush1.bf16.msra.mxu0 %v5621
        %8568 = vmatprep.subr.bf16.mxu0 %v5641
        %8569 = vmatpush1.bf16.msra.mxu0 %v5640
        %8570 = vmatprep.subr.bf16.mxu0 %v5660
        %8571 = vmatpush1.bf16.msra.mxu0 %v5659
        %8572 = vmatprep.subr.bf16.mxu0 %v5679
        %8573 = vmatpush1.bf16.msra.mxu0 %v5678
        %8574 = vmatprep.subr.bf16.mxu0 %v5698
        %8575 = vmatpush1.bf16.msra.mxu0 %v5697
        %8576 = vmatprep.subr.bf16.mxu0 %v5717
        %8577 = vmatpush1.bf16.msra.mxu0 %v5716
        %8578 = vmatprep.subr.bf16.mxu0 %v5736
        %8579 = vmatpush1.bf16.msra.mxu0 %v5735
        %8580 = vmatprep.subr.bf16.mxu0 %v5755
        %8581 = vmatpush1.bf16.msra.mxu0 %v5754
        %8582 = vmatprep.subr.bf16.mxu0 %v5774
        %8583 = vmatpush1.bf16.msra.mxu0 %v5773
        %8584 = vmatprep.subr.bf16.mxu0 %v5793
        %8585 = vmatpush1.bf16.msra.mxu0 %v5792
        %8586 = vmatprep.subr.bf16.mxu0 %v5812
        %8587 = vmatpush1.bf16.msra.mxu0 %v5811
        %8588 = vmatprep.subr.bf16.mxu0 %v5831
        %8589 = vmatpush1.bf16.msra.mxu0 %v5830
        %8590 = vmatprep.subr.bf16.mxu0 %v5850
        %8591 = vmatpush1.bf16.msra.mxu0 %v5849
        %8592 = vmatprep.subr.bf16.mxu0 %v5869
        %8593 = vmatpush1.bf16.msra.mxu0 %v5868
        %8594 = vmatprep.mubr.bf16.mxu0 %v1547
        %8595 = vmatmul.mubr.bf16.gmra.mrb[0].mxu0 %v1545
        %v8596 = vpop.f32.mrb[0].mxu0
        %v8597 = vadd.f32 %v8556, %v8596
        %v8598 = vpop.f32.mrb[0].mxu0
        %v8599 = vadd.f32 %v8558, %v8598
        %v8600 = vpop.f32.mrb[0].mxu0
        %v8601 = vpop.f32.mrb[0].mxu0
        %8602 = vdwg.mxu0
        %8603 = vmatprep.subr.bf16.mxu0 %v5888
        %8604 = vmatpush1.bf16.msra.mxu0 %v5887
        %8605 = vmatprep.subr.bf16.mxu0 %v5907
        %8606 = vmatpush1.bf16.msra.mxu0 %v5906
        %8607 = vmatprep.subr.bf16.mxu0 %v5926
        %8608 = vmatpush1.bf16.msra.mxu0 %v5925
        %8609 = vmatprep.subr.bf16.mxu0 %v5945
        %8610 = vmatpush1.bf16.msra.mxu0 %v5944
        %8611 = vmatprep.subr.bf16.mxu0 %v5964
        %8612 = vmatpush1.bf16.msra.mxu0 %v5963
        %8613 = vmatprep.subr.bf16.mxu0 %v5983
        %8614 = vmatpush1.bf16.msra.mxu0 %v5982
        %8615 = vmatprep.subr.bf16.mxu0 %v6002
        %8616 = vmatpush1.bf16.msra.mxu0 %v6001
        %8617 = vmatprep.subr.bf16.mxu0 %v6021
        %8618 = vmatpush1.bf16.msra.mxu0 %v6020
        %8619 = vmatprep.subr.bf16.mxu0 %v6040
        %8620 = vmatpush1.bf16.msra.mxu0 %v6039
        %8621 = vmatprep.subr.bf16.mxu0 %v6059
        %8622 = vmatpush1.bf16.msra.mxu0 %v6058
        %8623 = vmatprep.subr.bf16.mxu0 %v6078
        %8624 = vmatpush1.bf16.msra.mxu0 %v6077
        %8625 = vmatprep.subr.bf16.mxu0 %v6097
        %8626 = vmatpush1.bf16.msra.mxu0 %v6096
        %8627 = vmatprep.subr.bf16.mxu0 %v6116
        %8628 = vmatpush1.bf16.msra.mxu0 %v6115
        %8629 = vmatprep.subr.bf16.mxu0 %v6135
        %8630 = vmatpush1.bf16.msra.mxu0 %v6134
        %8631 = vmatprep.subr.bf16.mxu0 %v6154
        %8632 = vmatpush1.bf16.msra.mxu0 %v6153
        %8633 = vmatprep.subr.bf16.mxu0 %v6173
        %8634 = vmatpush1.bf16.msra.mxu0 %v6172
        %8635 = vmatprep.mubr.bf16.mxu0 %v1544
        %8636 = vmatmul.mubr.bf16.gmra.mrb[0].mxu0 %v1530
        %v8637 = vpop.f32.mrb[0].mxu0
        %v8638 = vadd.f32 %v8597, %v8637
        %v8639 = vpop.f32.mrb[0].mxu0
        %v8640 = vadd.f32 %v8599, %v8639
        %v8641 = vpop.f32.mrb[0].mxu0
        %v8642 = vpop.f32.mrb[0].mxu0
        %8643 = vdwg.mxu0
        %8644 = vmatprep.subr.bf16.mxu0 %v6192
        %8645 = vmatpush1.bf16.msra.mxu0 %v6191
        %8646 = vmatprep.subr.bf16.mxu0 %v6211
        %8647 = vmatpush1.bf16.msra.mxu0 %v6210
        %8648 = vmatprep.subr.bf16.mxu0 %v6230
        %8649 = vmatpush1.bf16.msra.mxu0 %v6229
        %8650 = vmatprep.subr.bf16.mxu0 %v6249
        %8651 = vmatpush1.bf16.msra.mxu0 %v6248
        %8652 = vmatprep.subr.bf16.mxu0 %v6268
        %8653 = vmatpush1.bf16.msra.mxu0 %v6267
        %8654 = vmatprep.subr.bf16.mxu0 %v6287
        %8655 = vmatpush1.bf16.msra.mxu0 %v6286
        %8656 = vmatprep.subr.bf16.mxu0 %v6306
        %8657 = vmatpush1.bf16.msra.mxu0 %v6305
        %8658 = vmatprep.subr.bf16.mxu0 %v6325
        %8659 = vmatpush1.bf16.msra.mxu0 %v6324
        %8660 = vmatprep.subr.bf16.mxu0 %v6344
        %8661 = vmatpush1.bf16.msra.mxu0 %v6343
        %8662 = vmatprep.subr.bf16.mxu0 %v6363
        %8663 = vmatpush1.bf16.msra.mxu0 %v6362
        %8664 = vmatprep.subr.bf16.mxu0 %v6382
        %8665 = vmatpush1.bf16.msra.mxu0 %v6381
        %8666 = vmatprep.subr.bf16.mxu0 %v6401
        %8667 = vmatpush1.bf16.msra.mxu0 %v6400
        %8668 = vmatprep.subr.bf16.mxu0 %v6420
        %8669 = vmatpush1.bf16.msra.mxu0 %v6419
        %8670 = vmatprep.subr.bf16.mxu0 %v6439
        %8671 = vmatpush1.bf16.msra.mxu0 %v6438
        %8672 = vmatprep.subr.bf16.mxu0 %v6458
        %8673 = vmatpush1.bf16.msra.mxu0 %v6457
        %8674 = vmatprep.subr.bf16.mxu0 %v6477
        %8675 = vmatpush1.bf16.msra.mxu0 %v6476
        %8676 = vmatprep.mubr.bf16.mxu0 %v1548
        %8677 = vmatmul.mubr.bf16.gmra.mrb[0].mxu0 %v1546
        %v8678 = vpop.f32.mrb[0].mxu0
        %v8679 = vadd.f32 %v8638, %v8678
        %v8680 = vpop.f32.mrb[0].mxu0
        %v8681 = vadd.f32 %v8640, %v8680
        %v8682 = vpop.f32.mrb[0].mxu0
        %v8683 = vpop.f32.mrb[0].mxu0
        %8684 = vdwg.mxu0
        %8685 = vmatprep.subr.bf16.mxu0 %v5282
        %8686 = vmatpush1.bf16.msra.mxu0 %v5281
        %8687 = vmatprep.subr.bf16.mxu0 %v5301
        %8688 = vmatpush1.bf16.msra.mxu0 %v5300
        %8689 = vmatprep.subr.bf16.mxu0 %v5320
        %8690 = vmatpush1.bf16.msra.mxu0 %v5319
        %8691 = vmatprep.subr.bf16.mxu0 %v5339
        %8692 = vmatpush1.bf16.msra.mxu0 %v5338
        %8693 = vmatprep.subr.bf16.mxu0 %v5358
        %8694 = vmatpush1.bf16.msra.mxu0 %v5357
        %8695 = vmatprep.subr.bf16.mxu0 %v5377
        %8696 = vmatpush1.bf16.msra.mxu0 %v5376
        %8697 = vmatprep.subr.bf16.mxu0 %v5396
        %8698 = vmatpush1.bf16.msra.mxu0 %v5395
        %8699 = vmatprep.subr.bf16.mxu0 %v5415
        %8700 = vmatpush1.bf16.msra.mxu0 %v5414
        %8701 = vmatprep.subr.bf16.mxu0 %v5434
        %8702 = vmatpush1.bf16.msra.mxu0 %v5433
        %8703 = vmatprep.subr.bf16.mxu0 %v5453
        %8704 = vmatpush1.bf16.msra.mxu0 %v5452
        %8705 = vmatprep.subr.bf16.mxu0 %v5472
        %8706 = vmatpush1.bf16.msra.mxu0 %v5471
        %8707 = vmatprep.subr.bf16.mxu0 %v5491
        %8708 = vmatpush1.bf16.msra.mxu0 %v5490
        %8709 = vmatprep.subr.bf16.mxu0 %v5510
        %8710 = vmatpush1.bf16.msra.mxu0 %v5509
        %8711 = vmatprep.subr.bf16.mxu0 %v5529
        %8712 = vmatpush1.bf16.msra.mxu0 %v5528
        %8713 = vmatprep.subr.bf16.mxu0 %v5548
        %8714 = vmatpush1.bf16.msra.mxu0 %v5547
        %8715 = vmatprep.subr.bf16.mxu0 %v5567
        %8716 = vmatpush1.bf16.msra.mxu0 %v5566
        %8717 = vmatprep.mubr.bf16.mxu0 %v1537
        %8718 = vmatmul.mubr.bf16.gmra.mrb[0].mxu0 %v1523
        %v8719 = vpop.f32.mrb[0].mxu0
        %v8720 = vadd.f32 0.0, %v8719
        %v8721 = vpop.f32.mrb[0].mxu0
        %v8722 = vadd.f32 0.0, %v8721
        %v8723 = vpop.f32.mrb[0].mxu0
        %v8724 = vpop.f32.mrb[0].mxu0
        %8725 = vdwg.mxu0
        %8726 = vmatprep.subr.bf16.mxu0 %v5586
        %8727 = vmatpush1.bf16.msra.mxu0 %v5585
        %8728 = vmatprep.subr.bf16.mxu0 %v5605
        %8729 = vmatpush1.bf16.msra.mxu0 %v5604
        %8730 = vmatprep.subr.bf16.mxu0 %v5624
        %8731 = vmatpush1.bf16.msra.mxu0 %v5623
        %8732 = vmatprep.subr.bf16.mxu0 %v5643
        %8733 = vmatpush1.bf16.msra.mxu0 %v5642
        %8734 = vmatprep.subr.bf16.mxu0 %v5662
        %8735 = vmatpush1.bf16.msra.mxu0 %v5661
        %8736 = vmatprep.subr.bf16.mxu0 %v5681
        %8737 = vmatpush1.bf16.msra.mxu0 %v5680
        %8738 = vmatprep.subr.bf16.mxu0 %v5700
        %8739 = vmatpush1.bf16.msra.mxu0 %v5699
        %8740 = vmatprep.subr.bf16.mxu0 %v5719
        %8741 = vmatpush1.bf16.msra.mxu0 %v5718
        %8742 = vmatprep.subr.bf16.mxu0 %v5738
        %8743 = vmatpush1.bf16.msra.mxu0 %v5737
        %8744 = vmatprep.subr.bf16.mxu0 %v5757
        %8745 = vmatpush1.bf16.msra.mxu0 %v5756
        %8746 = vmatprep.subr.bf16.mxu0 %v5776
        %8747 = vmatpush1.bf16.msra.mxu0 %v5775
        %8748 = vmatprep.subr.bf16.mxu0 %v5795
        %8749 = vmatpush1.bf16.msra.mxu0 %v5794
        %8750 = vmatprep.subr.bf16.mxu0 %v5814
        %8751 = vmatpush1.bf16.msra.mxu0 %v5813
        %8752 = vmatprep.subr.bf16.mxu0 %v5833
        %8753 = vmatpush1.bf16.msra.mxu0 %v5832
        %8754 = vmatprep.subr.bf16.mxu0 %v5852
        %8755 = vmatpush1.bf16.msra.mxu0 %v5851
        %8756 = vmatprep.subr.bf16.mxu0 %v5871
        %8757 = vmatpush1.bf16.msra.mxu0 %v5870
        %8758 = vmatprep.mubr.bf16.mxu0 %v1547
        %8759 = vmatmul.mubr.bf16.gmra.mrb[0].mxu0 %v1545
        %v8760 = vpop.f32.mrb[0].mxu0
        %v8761 = vadd.f32 %v8720, %v8760
        %v8762 = vpop.f32.mrb[0].mxu0
        %v8763 = vadd.f32 %v8722, %v8762
        %v8764 = vpop.f32.mrb[0].mxu0
        %v8765 = vpop.f32.mrb[0].mxu0
        %8766 = vdwg.mxu0
        %8767 = vmatprep.subr.bf16.mxu0 %v5890
        %8768 = vmatpush1.bf16.msra.mxu0 %v5889
        %8769 = vmatprep.subr.bf16.mxu0 %v5909
        %8770 = vmatpush1.bf16.msra.mxu0 %v5908
        %8771 = vmatprep.subr.bf16.mxu0 %v5928
        %8772 = vmatpush1.bf16.msra.mxu0 %v5927
        %8773 = vmatprep.subr.bf16.mxu0 %v5947
        %8774 = vmatpush1.bf16.msra.mxu0 %v5946
        %8775 = vmatprep.subr.bf16.mxu0 %v5966
        %8776 = vmatpush1.bf16.msra.mxu0 %v5965
        %8777 = vmatprep.subr.bf16.mxu0 %v5985
        %8778 = vmatpush1.bf16.msra.mxu0 %v5984
        %8779 = vmatprep.subr.bf16.mxu0 %v6004
        %8780 = vmatpush1.bf16.msra.mxu0 %v6003
        %8781 = vmatprep.subr.bf16.mxu0 %v6023
        %8782 = vmatpush1.bf16.msra.mxu0 %v6022
        %8783 = vmatprep.subr.bf16.mxu0 %v6042
        %8784 = vmatpush1.bf16.msra.mxu0 %v6041
        %8785 = vmatprep.subr.bf16.mxu0 %v6061
        %8786 = vmatpush1.bf16.msra.mxu0 %v6060
        %8787 = vmatprep.subr.bf16.mxu0 %v6080
        %8788 = vmatpush1.bf16.msra.mxu0 %v6079
        %8789 = vmatprep.subr.bf16.mxu0 %v6099
        %8790 = vmatpush1.bf16.msra.mxu0 %v6098
        %8791 = vmatprep.subr.bf16.mxu0 %v6118
        %8792 = vmatpush1.bf16.msra.mxu0 %v6117
        %8793 = vmatprep.subr.bf16.mxu0 %v6137
        %8794 = vmatpush1.bf16.msra.mxu0 %v6136
        %8795 = vmatprep.subr.bf16.mxu0 %v6156
        %8796 = vmatpush1.bf16.msra.mxu0 %v6155
        %8797 = vmatprep.subr.bf16.mxu0 %v6175
        %8798 = vmatpush1.bf16.msra.mxu0 %v6174
        %8799 = vmatprep.mubr.bf16.mxu0 %v1544
        %8800 = vmatmul.mubr.bf16.gmra.mrb[0].mxu0 %v1530
        %v8801 = vpop.f32.mrb[0].mxu0
        %v8802 = vadd.f32 %v8761, %v8801
        %v8803 = vpop.f32.mrb[0].mxu0
        %v8804 = vadd.f32 %v8763, %v8803
        %v8805 = vpop.f32.mrb[0].mxu0
        %v8806 = vpop.f32.mrb[0].mxu0
        %8807 = vdwg.mxu0
        %8808 = vmatprep.subr.bf16.mxu0 %v6194
        %8809 = vmatpush1.bf16.msra.mxu0 %v6193
        %8810 = vmatprep.subr.bf16.mxu0 %v6213
        %8811 = vmatpush1.bf16.msra.mxu0 %v6212
        %8812 = vmatprep.subr.bf16.mxu0 %v6232
        %8813 = vmatpush1.bf16.msra.mxu0 %v6231
        %8814 = vmatprep.subr.bf16.mxu0 %v6251
        %8815 = vmatpush1.bf16.msra.mxu0 %v6250
        %8816 = vmatprep.subr.bf16.mxu0 %v6270
        %8817 = vmatpush1.bf16.msra.mxu0 %v6269
        %8818 = vmatprep.subr.bf16.mxu0 %v6289
        %8819 = vmatpush1.bf16.msra.mxu0 %v6288
        %8820 = vmatprep.subr.bf16.mxu0 %v6308
        %8821 = vmatpush1.bf16.msra.mxu0 %v6307
        %8822 = vmatprep.subr.bf16.mxu0 %v6327
        %8823 = vmatpush1.bf16.msra.mxu0 %v6326
        %8824 = vmatprep.subr.bf16.mxu0 %v6346
        %8825 = vmatpush1.bf16.msra.mxu0 %v6345
        %8826 = vmatprep.subr.bf16.mxu0 %v6365
        %8827 = vmatpush1.bf16.msra.mxu0 %v6364
        %8828 = vmatprep.subr.bf16.mxu0 %v6384
        %8829 = vmatpush1.bf16.msra.mxu0 %v6383
        %8830 = vmatprep.subr.bf16.mxu0 %v6403
        %8831 = vmatpush1.bf16.msra.mxu0 %v6402
        %8832 = vmatprep.subr.bf16.mxu0 %v6422
        %8833 = vmatpush1.bf16.msra.mxu0 %v6421
        %8834 = vmatprep.subr.bf16.mxu0 %v6441
        %8835 = vmatpush1.bf16.msra.mxu0 %v6440
        %8836 = vmatprep.subr.bf16.mxu0 %v6460
        %8837 = vmatpush1.bf16.msra.mxu0 %v6459
        %8838 = vmatprep.subr.bf16.mxu0 %v6479
        %8839 = vmatpush1.bf16.msra.mxu0 %v6478
        %8840 = vmatprep.mubr.bf16.mxu0 %v1548
        %8841 = vmatmul.mubr.bf16.gmra.mrb[0].mxu0 %v1546
        %v8842 = vpop.f32.mrb[0].mxu0
        %v8843 = vadd.f32 %v8802, %v8842
        %v8844 = vpop.f32.mrb[0].mxu0
        %v8845 = vadd.f32 %v8804, %v8844
        %v8846 = vpop.f32.mrb[0].mxu0
        %v8847 = vpop.f32.mrb[0].mxu0
        %8848 = vdwg.mxu0
        %8849 = vmatprep.subr.bf16.mxu0 %v5284
        %8850 = vmatpush1.bf16.msra.mxu0 %v5283
        %8851 = vmatprep.subr.bf16.mxu0 %v5303
        %8852 = vmatpush1.bf16.msra.mxu0 %v5302
        %8853 = vmatprep.subr.bf16.mxu0 %v5322
        %8854 = vmatpush1.bf16.msra.mxu0 %v5321
        %8855 = vmatprep.subr.bf16.mxu0 %v5341
        %8856 = vmatpush1.bf16.msra.mxu0 %v5340
        %8857 = vmatprep.subr.bf16.mxu0 %v5360
        %8858 = vmatpush1.bf16.msra.mxu0 %v5359
        %8859 = vmatprep.subr.bf16.mxu0 %v5379
        %8860 = vmatpush1.bf16.msra.mxu0 %v5378
        %8861 = vmatprep.subr.bf16.mxu0 %v5398
        %8862 = vmatpush1.bf16.msra.mxu0 %v5397
        %8863 = vmatprep.subr.bf16.mxu0 %v5417
        %8864 = vmatpush1.bf16.msra.mxu0 %v5416
        %8865 = vmatprep.subr.bf16.mxu0 %v5436
        %8866 = vmatpush1.bf16.msra.mxu0 %v5435
        %8867 = vmatprep.subr.bf16.mxu0 %v5455
        %8868 = vmatpush1.bf16.msra.mxu0 %v5454
        %8869 = vmatprep.subr.bf16.mxu0 %v5474
        %8870 = vmatpush1.bf16.msra.mxu0 %v5473
        %8871 = vmatprep.subr.bf16.mxu0 %v5493
        %8872 = vmatpush1.bf16.msra.mxu0 %v5492
        %8873 = vmatprep.subr.bf16.mxu0 %v5512
        %8874 = vmatpush1.bf16.msra.mxu0 %v5511
        %8875 = vmatprep.subr.bf16.mxu0 %v5531
        %8876 = vmatpush1.bf16.msra.mxu0 %v5530
        %8877 = vmatprep.subr.bf16.mxu0 %v5550
        %8878 = vmatpush1.bf16.msra.mxu0 %v5549
        %8879 = vmatprep.subr.bf16.mxu0 %v5569
        %8880 = vmatpush1.bf16.msra.mxu0 %v5568
        %8881 = vmatprep.mubr.bf16.mxu0 %v1537
        %8882 = vmatmul.mubr.bf16.gmra.mrb[0].mxu0 %v1523
        %v8883 = vpop.f32.mrb[0].mxu0
        %v8884 = vadd.f32 0.0, %v8883
        %v8885 = vpop.f32.mrb[0].mxu0
        %v8886 = vadd.f32 0.0, %v8885
        %v8887 = vpop.f32.mrb[0].mxu0
        %v8888 = vpop.f32.mrb[0].mxu0
        %8889 = vdwg.mxu0
        %8890 = vmatprep.subr.bf16.mxu0 %v5588
        %8891 = vmatpush1.bf16.msra.mxu0 %v5587
        %8892 = vmatprep.subr.bf16.mxu0 %v5607
        %8893 = vmatpush1.bf16.msra.mxu0 %v5606
        %8894 = vmatprep.subr.bf16.mxu0 %v5626
        %8895 = vmatpush1.bf16.msra.mxu0 %v5625
        %8896 = vmatprep.subr.bf16.mxu0 %v5645
        %8897 = vmatpush1.bf16.msra.mxu0 %v5644
        %8898 = vmatprep.subr.bf16.mxu0 %v5664
        %8899 = vmatpush1.bf16.msra.mxu0 %v5663
        %8900 = vmatprep.subr.bf16.mxu0 %v5683
        %8901 = vmatpush1.bf16.msra.mxu0 %v5682
        %8902 = vmatprep.subr.bf16.mxu0 %v5702
        %8903 = vmatpush1.bf16.msra.mxu0 %v5701
        %8904 = vmatprep.subr.bf16.mxu0 %v5721
        %8905 = vmatpush1.bf16.msra.mxu0 %v5720
        %8906 = vmatprep.subr.bf16.mxu0 %v5740
        %8907 = vmatpush1.bf16.msra.mxu0 %v5739
        %8908 = vmatprep.subr.bf16.mxu0 %v5759
        %8909 = vmatpush1.bf16.msra.mxu0 %v5758
        %8910 = vmatprep.subr.bf16.mxu0 %v5778
        %8911 = vmatpush1.bf16.msra.mxu0 %v5777
        %8912 = vmatprep.subr.bf16.mxu0 %v5797
        %8913 = vmatpush1.bf16.msra.mxu0 %v5796
        %8914 = vmatprep.subr.bf16.mxu0 %v5816
        %8915 = vmatpush1.bf16.msra.mxu0 %v5815
        %8916 = vmatprep.subr.bf16.mxu0 %v5835
        %8917 = vmatpush1.bf16.msra.mxu0 %v5834
        %8918 = vmatprep.subr.bf16.mxu0 %v5854
        %8919 = vmatpush1.bf16.msra.mxu0 %v5853
        %8920 = vmatprep.subr.bf16.mxu0 %v5873
        %8921 = vmatpush1.bf16.msra.mxu0 %v5872
        %8922 = vmatprep.mubr.bf16.mxu0 %v1547
        %8923 = vmatmul.mubr.bf16.gmra.mrb[0].mxu0 %v1545
        %v8924 = vpop.f32.mrb[0].mxu0
        %v8925 = vadd.f32 %v8884, %v8924
        %v8926 = vpop.f32.mrb[0].mxu0
        %v8927 = vadd.f32 %v8886, %v8926
        %v8928 = vpop.f32.mrb[0].mxu0
        %v8929 = vpop.f32.mrb[0].mxu0
        %8930 = vdwg.mxu0
        %8931 = vmatprep.subr.bf16.mxu0 %v5892
        %8932 = vmatpush1.bf16.msra.mxu0 %v5891
        %8933 = vmatprep.subr.bf16.mxu0 %v5911
        %8934 = vmatpush1.bf16.msra.mxu0 %v5910
        %8935 = vmatprep.subr.bf16.mxu0 %v5930
        %8936 = vmatpush1.bf16.msra.mxu0 %v5929
        %8937 = vmatprep.subr.bf16.mxu0 %v5949
        %8938 = vmatpush1.bf16.msra.mxu0 %v5948
        %8939 = vmatprep.subr.bf16.mxu0 %v5968
        %8940 = vmatpush1.bf16.msra.mxu0 %v5967
        %8941 = vmatprep.subr.bf16.mxu0 %v5987
        %8942 = vmatpush1.bf16.msra.mxu0 %v5986
        %8943 = vmatprep.subr.bf16.mxu0 %v6006
        %8944 = vmatpush1.bf16.msra.mxu0 %v6005
        %8945 = vmatprep.subr.bf16.mxu0 %v6025
        %8946 = vmatpush1.bf16.msra.mxu0 %v6024
        %8947 = vmatprep.subr.bf16.mxu0 %v6044
        %8948 = vmatpush1.bf16.msra.mxu0 %v6043
        %8949 = vmatprep.subr.bf16.mxu0 %v6063
        %8950 = vmatpush1.bf16.msra.mxu0 %v6062
        %8951 = vmatprep.subr.bf16.mxu0 %v6082
        %8952 = vmatpush1.bf16.msra.mxu0 %v6081
        %8953 = vmatprep.subr.bf16.mxu0 %v6101
        %8954 = vmatpush1.bf16.msra.mxu0 %v6100
        %8955 = vmatprep.subr.bf16.mxu0 %v6120
        %8956 = vmatpush1.bf16.msra.mxu0 %v6119
        %8957 = vmatprep.subr.bf16.mxu0 %v6139
        %8958 = vmatpush1.bf16.msra.mxu0 %v6138
        %8959 = vmatprep.subr.bf16.mxu0 %v6158
        %8960 = vmatpush1.bf16.msra.mxu0 %v6157
        %8961 = vmatprep.subr.bf16.mxu0 %v6177
        %8962 = vmatpush1.bf16.msra.mxu0 %v6176
        %8963 = vmatprep.mubr.bf16.mxu0 %v1544
        %8964 = vmatmul.mubr.bf16.gmra.mrb[0].mxu0 %v1530
        %v8965 = vpop.f32.mrb[0].mxu0
        %v8966 = vadd.f32 %v8925, %v8965
        %v8967 = vpop.f32.mrb[0].mxu0
        %v8968 = vadd.f32 %v8927, %v8967
        %v8969 = vpop.f32.mrb[0].mxu0
        %v8970 = vpop.f32.mrb[0].mxu0
        %8971 = vdwg.mxu0
        %8972 = vmatprep.subr.bf16.mxu0 %v6196
        %8973 = vmatpush1.bf16.msra.mxu0 %v6195
        %8974 = vmatprep.subr.bf16.mxu0 %v6215
        %8975 = vmatpush1.bf16.msra.mxu0 %v6214
        %8976 = vmatprep.subr.bf16.mxu0 %v6234
        %8977 = vmatpush1.bf16.msra.mxu0 %v6233
        %8978 = vmatprep.subr.bf16.mxu0 %v6253
        %8979 = vmatpush1.bf16.msra.mxu0 %v6252
        %8980 = vmatprep.subr.bf16.mxu0 %v6272
        %8981 = vmatpush1.bf16.msra.mxu0 %v6271
        %8982 = vmatprep.subr.bf16.mxu0 %v6291
        %8983 = vmatpush1.bf16.msra.mxu0 %v6290
        %8984 = vmatprep.subr.bf16.mxu0 %v6310
        %8985 = vmatpush1.bf16.msra.mxu0 %v6309
        %8986 = vmatprep.subr.bf16.mxu0 %v6329
        %8987 = vmatpush1.bf16.msra.mxu0 %v6328
        %8988 = vmatprep.subr.bf16.mxu0 %v6348
        %8989 = vmatpush1.bf16.msra.mxu0 %v6347
        %8990 = vmatprep.subr.bf16.mxu0 %v6367
        %8991 = vmatpush1.bf16.msra.mxu0 %v6366
        %8992 = vmatprep.subr.bf16.mxu0 %v6386
        %8993 = vmatpush1.bf16.msra.mxu0 %v6385
        %8994 = vmatprep.subr.bf16.mxu0 %v6405
        %8995 = vmatpush1.bf16.msra.mxu0 %v6404
        %8996 = vmatprep.subr.bf16.mxu0 %v6424
        %8997 = vmatpush1.bf16.msra.mxu0 %v6423
        %8998 = vmatprep.subr.bf16.mxu0 %v6443
        %8999 = vmatpush1.bf16.msra.mxu0 %v6442
        %9000 = vmatprep.subr.bf16.mxu0 %v6462
        %9001 = vmatpush1.bf16.msra.mxu0 %v6461
        %9002 = vmatprep.subr.bf16.mxu0 %v6481
        %9003 = vmatpush1.bf16.msra.mxu0 %v6480
        %9004 = vmatprep.mubr.bf16.mxu0 %v1548
        %9005 = vmatmul.mubr.bf16.gmra.mrb[0].mxu0 %v1546
        %v9006 = vpop.f32.mrb[0].mxu0
        %v9007 = vadd.f32 %v8966, %v9006
        %v9008 = vpop.f32.mrb[0].mxu0
        %v9009 = vadd.f32 %v8968, %v9008
        %v9010 = vpop.f32.mrb[0].mxu0
        %v9011 = vpop.f32.mrb[0].mxu0
        %9012 = vdwg.mxu0
        %9013 = vmatprep.subr.bf16.mxu0 %v5286
        %9014 = vmatpush1.bf16.msra.mxu0 %v5285
        %9015 = vmatprep.subr.bf16.mxu0 %v5305
        %9016 = vmatpush1.bf16.msra.mxu0 %v5304
        %9017 = vmatprep.subr.bf16.mxu0 %v5324
        %9018 = vmatpush1.bf16.msra.mxu0 %v5323
        %9019 = vmatprep.subr.bf16.mxu0 %v5343
        %9020 = vmatpush1.bf16.msra.mxu0 %v5342
        %9021 = vmatprep.subr.bf16.mxu0 %v5362
        %9022 = vmatpush1.bf16.msra.mxu0 %v5361
        %9023 = vmatprep.subr.bf16.mxu0 %v5381
        %9024 = vmatpush1.bf16.msra.mxu0 %v5380
        %9025 = vmatprep.subr.bf16.mxu0 %v5400
        %9026 = vmatpush1.bf16.msra.mxu0 %v5399
        %9027 = vmatprep.subr.bf16.mxu0 %v5419
        %9028 = vmatpush1.bf16.msra.mxu0 %v5418
        %9029 = vmatprep.subr.bf16.mxu0 %v5438
        %9030 = vmatpush1.bf16.msra.mxu0 %v5437
        %9031 = vmatprep.subr.bf16.mxu0 %v5457
        %9032 = vmatpush1.bf16.msra.mxu0 %v5456
        %9033 = vmatprep.subr.bf16.mxu0 %v5476
        %9034 = vmatpush1.bf16.msra.mxu0 %v5475
        %9035 = vmatprep.subr.bf16.mxu0 %v5495
        %9036 = vmatpush1.bf16.msra.mxu0 %v5494
        %9037 = vmatprep.subr.bf16.mxu0 %v5514
        %9038 = vmatpush1.bf16.msra.mxu0 %v5513
        %9039 = vmatprep.subr.bf16.mxu0 %v5533
        %9040 = vmatpush1.bf16.msra.mxu0 %v5532
        %9041 = vmatprep.subr.bf16.mxu0 %v5552
        %9042 = vmatpush1.bf16.msra.mxu0 %v5551
        %9043 = vmatprep.subr.bf16.mxu0 %v5571
        %9044 = vmatpush1.bf16.msra.mxu0 %v5570
        %9045 = vmatprep.mubr.bf16.mxu0 %v1537
        %9046 = vmatmul.mubr.bf16.gmra.mrb[0].mxu0 %v1523
        %v9047 = vpop.f32.mrb[0].mxu0
        %v9048 = vadd.f32 0.0, %v9047
        %v9049 = vpop.f32.mrb[0].mxu0
        %v9050 = vadd.f32 0.0, %v9049
        %v9051 = vpop.f32.mrb[0].mxu0
        %v9052 = vpop.f32.mrb[0].mxu0
        %9053 = vdwg.mxu0
        %9054 = vmatprep.subr.bf16.mxu0 %v5590
        %9055 = vmatpush1.bf16.msra.mxu0 %v5589
        %9056 = vmatprep.subr.bf16.mxu0 %v5609
        %9057 = vmatpush1.bf16.msra.mxu0 %v5608
        %9058 = vmatprep.subr.bf16.mxu0 %v5628
        %9059 = vmatpush1.bf16.msra.mxu0 %v5627
        %9060 = vmatprep.subr.bf16.mxu0 %v5647
        %9061 = vmatpush1.bf16.msra.mxu0 %v5646
        %9062 = vmatprep.subr.bf16.mxu0 %v5666
        %9063 = vmatpush1.bf16.msra.mxu0 %v5665
        %9064 = vmatprep.subr.bf16.mxu0 %v5685
        %9065 = vmatpush1.bf16.msra.mxu0 %v5684
        %9066 = vmatprep.subr.bf16.mxu0 %v5704
        %9067 = vmatpush1.bf16.msra.mxu0 %v5703
        %9068 = vmatprep.subr.bf16.mxu0 %v5723
        %9069 = vmatpush1.bf16.msra.mxu0 %v5722
        %9070 = vmatprep.subr.bf16.mxu0 %v5742
        %9071 = vmatpush1.bf16.msra.mxu0 %v5741
        %9072 = vmatprep.subr.bf16.mxu0 %v5761
        %9073 = vmatpush1.bf16.msra.mxu0 %v5760
        %9074 = vmatprep.subr.bf16.mxu0 %v5780
        %9075 = vmatpush1.bf16.msra.mxu0 %v5779
        %9076 = vmatprep.subr.bf16.mxu0 %v5799
        %9077 = vmatpush1.bf16.msra.mxu0 %v5798
        %9078 = vmatprep.subr.bf16.mxu0 %v5818
        %9079 = vmatpush1.bf16.msra.mxu0 %v5817
        %9080 = vmatprep.subr.bf16.mxu0 %v5837
        %9081 = vmatpush1.bf16.msra.mxu0 %v5836
        %9082 = vmatprep.subr.bf16.mxu0 %v5856
        %9083 = vmatpush1.bf16.msra.mxu0 %v5855
        %9084 = vmatprep.subr.bf16.mxu0 %v5875
        %9085 = vmatpush1.bf16.msra.mxu0 %v5874
        %9086 = vmatprep.mubr.bf16.mxu0 %v1547
        %9087 = vmatmul.mubr.bf16.gmra.mrb[0].mxu0 %v1545
        %v9088 = vpop.f32.mrb[0].mxu0
        %v9089 = vadd.f32 %v9048, %v9088
        %v9090 = vpop.f32.mrb[0].mxu0
        %v9091 = vadd.f32 %v9050, %v9090
        %v9092 = vpop.f32.mrb[0].mxu0
        %v9093 = vpop.f32.mrb[0].mxu0
        %9094 = vdwg.mxu0
        %9095 = vmatprep.subr.bf16.mxu0 %v5894
        %9096 = vmatpush1.bf16.msra.mxu0 %v5893
        %9097 = vmatprep.subr.bf16.mxu0 %v5913
        %9098 = vmatpush1.bf16.msra.mxu0 %v5912
        %9099 = vmatprep.subr.bf16.mxu0 %v5932
        %9100 = vmatpush1.bf16.msra.mxu0 %v5931
        %9101 = vmatprep.subr.bf16.mxu0 %v5951
        %9102 = vmatpush1.bf16.msra.mxu0 %v5950
        %9103 = vmatprep.subr.bf16.mxu0 %v5970
        %9104 = vmatpush1.bf16.msra.mxu0 %v5969
        %9105 = vmatprep.subr.bf16.mxu0 %v5989
        %9106 = vmatpush1.bf16.msra.mxu0 %v5988
        %9107 = vmatprep.subr.bf16.mxu0 %v6008
        %9108 = vmatpush1.bf16.msra.mxu0 %v6007
        %9109 = vmatprep.subr.bf16.mxu0 %v6027
        %9110 = vmatpush1.bf16.msra.mxu0 %v6026
        %9111 = vmatprep.subr.bf16.mxu0 %v6046
        %9112 = vmatpush1.bf16.msra.mxu0 %v6045
        %9113 = vmatprep.subr.bf16.mxu0 %v6065
        %9114 = vmatpush1.bf16.msra.mxu0 %v6064
        %9115 = vmatprep.subr.bf16.mxu0 %v6084
        %9116 = vmatpush1.bf16.msra.mxu0 %v6083
        %9117 = vmatprep.subr.bf16.mxu0 %v6103
        %9118 = vmatpush1.bf16.msra.mxu0 %v6102
        %9119 = vmatprep.subr.bf16.mxu0 %v6122
        %9120 = vmatpush1.bf16.msra.mxu0 %v6121
        %9121 = vmatprep.subr.bf16.mxu0 %v6141
        %9122 = vmatpush1.bf16.msra.mxu0 %v6140
        %9123 = vmatprep.subr.bf16.mxu0 %v6160
        %9124 = vmatpush1.bf16.msra.mxu0 %v6159
        %9125 = vmatprep.subr.bf16.mxu0 %v6179
        %9126 = vmatpush1.bf16.msra.mxu0 %v6178
        %9127 = vmatprep.mubr.bf16.mxu0 %v1544
        %9128 = vmatmul.mubr.bf16.gmra.mrb[0].mxu0 %v1530
        %v9129 = vpop.f32.mrb[0].mxu0
        %v9130 = vadd.f32 %v9089, %v9129
        %v9131 = vpop.f32.mrb[0].mxu0
        %v9132 = vadd.f32 %v9091, %v9131
        %v9133 = vpop.f32.mrb[0].mxu0
        %v9134 = vpop.f32.mrb[0].mxu0
        %9135 = vdwg.mxu0
        %9136 = vmatprep.subr.bf16.mxu0 %v6198
        %9137 = vmatpush1.bf16.msra.mxu0 %v6197
        %9138 = vmatprep.subr.bf16.mxu0 %v6217
        %9139 = vmatpush1.bf16.msra.mxu0 %v6216
        %9140 = vmatprep.subr.bf16.mxu0 %v6236
        %9141 = vmatpush1.bf16.msra.mxu0 %v6235
        %9142 = vmatprep.subr.bf16.mxu0 %v6255
        %9143 = vmatpush1.bf16.msra.mxu0 %v6254
        %9144 = vmatprep.subr.bf16.mxu0 %v6274
        %9145 = vmatpush1.bf16.msra.mxu0 %v6273
        %9146 = vmatprep.subr.bf16.mxu0 %v6293
        %9147 = vmatpush1.bf16.msra.mxu0 %v6292
        %9148 = vmatprep.subr.bf16.mxu0 %v6312
        %9149 = vmatpush1.bf16.msra.mxu0 %v6311
        %9150 = vmatprep.subr.bf16.mxu0 %v6331
        %9151 = vmatpush1.bf16.msra.mxu0 %v6330
        %9152 = vmatprep.subr.bf16.mxu0 %v6350
        %9153 = vmatpush1.bf16.msra.mxu0 %v6349
        %9154 = vmatprep.subr.bf16.mxu0 %v6369
        %9155 = vmatpush1.bf16.msra.mxu0 %v6368
        %9156 = vmatprep.subr.bf16.mxu0 %v6388
        %9157 = vmatpush1.bf16.msra.mxu0 %v6387
        %9158 = vmatprep.subr.bf16.mxu0 %v6407
        %9159 = vmatpush1.bf16.msra.mxu0 %v6406
        %9160 = vmatprep.subr.bf16.mxu0 %v6426
        %9161 = vmatpush1.bf16.msra.mxu0 %v6425
        %9162 = vmatprep.subr.bf16.mxu0 %v6445
        %9163 = vmatpush1.bf16.msra.mxu0 %v6444
        %9164 = vmatprep.subr.bf16.mxu0 %v6464
        %9165 = vmatpush1.bf16.msra.mxu0 %v6463
        %9166 = vmatprep.subr.bf16.mxu0 %v6483
        %9167 = vmatpush1.bf16.msra.mxu0 %v6482
        %9168 = vmatprep.mubr.bf16.mxu0 %v1548
        %9169 = vmatmul.mubr.bf16.gmra.mrb[0].mxu0 %v1546
        %v9170 = vpop.f32.mrb[0].mxu0
        %v9171 = vadd.f32 %v9130, %v9170
        %v9172 = vpop.f32.mrb[0].mxu0
        %v9173 = vadd.f32 %v9132, %v9172
        %v9174 = vpop.f32.mrb[0].mxu0
        %v9175 = vpop.f32.mrb[0].mxu0
        %9176 = vdwg.mxu0
        %9177 = vmatprep.subr.bf16.mxu0 0
        %9178 = vmatpush1.bf16.msra.mxu0 %v5287
        %9179 = vmatprep.subr.bf16.mxu0 0
        %9180 = vmatpush1.bf16.msra.mxu0 %v5306
        %9181 = vmatprep.subr.bf16.mxu0 0
        %9182 = vmatpush1.bf16.msra.mxu0 %v5325
        %9183 = vmatprep.subr.bf16.mxu0 0
        %9184 = vmatpush1.bf16.msra.mxu0 %v5344
        %9185 = vmatprep.subr.bf16.mxu0 0
        %9186 = vmatpush1.bf16.msra.mxu0 %v5363
        %9187 = vmatprep.subr.bf16.mxu0 0
        %9188 = vmatpush1.bf16.msra.mxu0 %v5382
        %9189 = vmatprep.subr.bf16.mxu0 0
        %9190 = vmatpush1.bf16.msra.mxu0 %v5401
        %9191 = vmatprep.subr.bf16.mxu0 0
        %9192 = vmatpush1.bf16.msra.mxu0 %v5420
        %9193 = vmatprep.subr.bf16.mxu0 0
        %9194 = vmatpush1.bf16.msra.mxu0 %v5439
        %9195 = vmatprep.subr.bf16.mxu0 0
        %9196 = vmatpush1.bf16.msra.mxu0 %v5458
        %9197 = vmatprep.subr.bf16.mxu0 0
        %9198 = vmatpush1.bf16.msra.mxu0 %v5477
        %9199 = vmatprep.subr.bf16.mxu0 0
        %9200 = vmatpush1.bf16.msra.mxu0 %v5496
        %9201 = vmatprep.subr.bf16.mxu0 0
        %9202 = vmatpush1.bf16.msra.mxu0 %v5515
        %9203 = vmatprep.subr.bf16.mxu0 0
        %9204 = vmatpush1.bf16.msra.mxu0 %v5534
        %9205 = vmatprep.subr.bf16.mxu0 0
        %9206 = vmatpush1.bf16.msra.mxu0 %v5553
        %9207 = vmatprep.subr.bf16.mxu0 0
        %9208 = vmatpush1.bf16.msra.mxu0 %v5572
        %9209 = vmatprep.mubr.bf16.mxu0 %v1537
        %9210 = vmatmul.mubr.bf16.gmra.mrb[0].mxu0 %v1523
        %v9211 = vpop.f32.mrb[0].mxu0
        %v9212 = vadd.f32 0.0, %v9211
        %v9213 = vpop.f32.mrb[0].mxu0
        %v9214 = vpop.f32.mrb[0].mxu0
        %v9215 = vpop.f32.mrb[0].mxu0
        %9216 = vdwg.mxu0
        %9217 = vmatprep.subr.bf16.mxu0 0
        %9218 = vmatpush1.bf16.msra.mxu0 %v5591
        %9219 = vmatprep.subr.bf16.mxu0 0
        %9220 = vmatpush1.bf16.msra.mxu0 %v5610
        %9221 = vmatprep.subr.bf16.mxu0 0
        %9222 = vmatpush1.bf16.msra.mxu0 %v5629
        %9223 = vmatprep.subr.bf16.mxu0 0
        %9224 = vmatpush1.bf16.msra.mxu0 %v5648
        %9225 = vmatprep.subr.bf16.mxu0 0
        %9226 = vmatpush1.bf16.msra.mxu0 %v5667
        %9227 = vmatprep.subr.bf16.mxu0 0
        %9228 = vmatpush1.bf16.msra.mxu0 %v5686
        %9229 = vmatprep.subr.bf16.mxu0 0
        %9230 = vmatpush1.bf16.msra.mxu0 %v5705
        %9231 = vmatprep.subr.bf16.mxu0 0
        %9232 = vmatpush1.bf16.msra.mxu0 %v5724
        %9233 = vmatprep.subr.bf16.mxu0 0
        %9234 = vmatpush1.bf16.msra.mxu0 %v5743
        %9235 = vmatprep.subr.bf16.mxu0 0
        %9236 = vmatpush1.bf16.msra.mxu0 %v5762
        %9237 = vmatprep.subr.bf16.mxu0 0
        %9238 = vmatpush1.bf16.msra.mxu0 %v5781
        %9239 = vmatprep.subr.bf16.mxu0 0
        %9240 = vmatpush1.bf16.msra.mxu0 %v5800
        %9241 = vmatprep.subr.bf16.mxu0 0
        %9242 = vmatpush1.bf16.msra.mxu0 %v5819
        %9243 = vmatprep.subr.bf16.mxu0 0
        %9244 = vmatpush1.bf16.msra.mxu0 %v5838
        %9245 = vmatprep.subr.bf16.mxu0 0
        %9246 = vmatpush1.bf16.msra.mxu0 %v5857
        %9247 = vmatprep.subr.bf16.mxu0 0
        %9248 = vmatpush1.bf16.msra.mxu0 %v5876
        %9249 = vmatprep.mubr.bf16.mxu0 %v1547
        %9250 = vmatmul.mubr.bf16.gmra.mrb[0].mxu0 %v1545
        %v9251 = vpop.f32.mrb[0].mxu0
        %v9252 = vadd.f32 %v9212, %v9251
        %v9253 = vpop.f32.mrb[0].mxu0
        %v9254 = vpop.f32.mrb[0].mxu0
        %v9255 = vpop.f32.mrb[0].mxu0
        %9256 = vdwg.mxu0
        %9257 = vmatprep.subr.bf16.mxu0 0
        %9258 = vmatpush1.bf16.msra.mxu0 %v5895
        %9259 = vmatprep.subr.bf16.mxu0 0
        %9260 = vmatpush1.bf16.msra.mxu0 %v5914
        %9261 = vmatprep.subr.bf16.mxu0 0
        %9262 = vmatpush1.bf16.msra.mxu0 %v5933
        %9263 = vmatprep.subr.bf16.mxu0 0
        %9264 = vmatpush1.bf16.msra.mxu0 %v5952
        %9265 = vmatprep.subr.bf16.mxu0 0
        %9266 = vmatpush1.bf16.msra.mxu0 %v5971
        %9267 = vmatprep.subr.bf16.mxu0 0
        %9268 = vmatpush1.bf16.msra.mxu0 %v5990
        %9269 = vmatprep.subr.bf16.mxu0 0
        %9270 = vmatpush1.bf16.msra.mxu0 %v6009
        %9271 = vmatprep.subr.bf16.mxu0 0
        %9272 = vmatpush1.bf16.msra.mxu0 %v6028
        %9273 = vmatprep.subr.bf16.mxu0 0
        %9274 = vmatpush1.bf16.msra.mxu0 %v6047
        %9275 = vmatprep.subr.bf16.mxu0 0
        %9276 = vmatpush1.bf16.msra.mxu0 %v6066
        %9277 = vmatprep.subr.bf16.mxu0 0
        %9278 = vmatpush1.bf16.msra.mxu0 %v6085
        %9279 = vmatprep.subr.bf16.mxu0 0
        %9280 = vmatpush1.bf16.msra.mxu0 %v6104
        %9281 = vmatprep.subr.bf16.mxu0 0
        %9282 = vmatpush1.bf16.msra.mxu0 %v6123
        %9283 = vmatprep.subr.bf16.mxu0 0
        %9284 = vmatpush1.bf16.msra.mxu0 %v6142
        %9285 = vmatprep.subr.bf16.mxu0 0
        %9286 = vmatpush1.bf16.msra.mxu0 %v6161
        %9287 = vmatprep.subr.bf16.mxu0 0
        %9288 = vmatpush1.bf16.msra.mxu0 %v6180
        %9289 = vmatprep.mubr.bf16.mxu0 %v1544
        %9290 = vmatmul.mubr.bf16.gmra.mrb[0].mxu0 %v1530
        %v9291 = vpop.f32.mrb[0].mxu0
        %v9292 = vadd.f32 %v9252, %v9291
        %v9293 = vpop.f32.mrb[0].mxu0
        %v9294 = vpop.f32.mrb[0].mxu0
        %v9295 = vpop.f32.mrb[0].mxu0
        %9296 = vdwg.mxu0
        %9297 = vmatprep.subr.bf16.mxu0 0
        %9298 = vmatpush1.bf16.msra.mxu0 %v6199
        %9299 = vmatprep.subr.bf16.mxu0 0
        %9300 = vmatpush1.bf16.msra.mxu0 %v6218
        %9301 = vmatprep.subr.bf16.mxu0 0
        %9302 = vmatpush1.bf16.msra.mxu0 %v6237
        %9303 = vmatprep.subr.bf16.mxu0 0
        %9304 = vmatpush1.bf16.msra.mxu0 %v6256
        %9305 = vmatprep.subr.bf16.mxu0 0
        %9306 = vmatpush1.bf16.msra.mxu0 %v6275
        %9307 = vmatprep.subr.bf16.mxu0 0
        %9308 = vmatpush1.bf16.msra.mxu0 %v6294
        %9309 = vmatprep.subr.bf16.mxu0 0
        %9310 = vmatpush1.bf16.msra.mxu0 %v6313
        %9311 = vmatprep.subr.bf16.mxu0 0
        %9312 = vmatpush1.bf16.msra.mxu0 %v6332
        %9313 = vmatprep.subr.bf16.mxu0 0
        %9314 = vmatpush1.bf16.msra.mxu0 %v6351
        %9315 = vmatprep.subr.bf16.mxu0 0
        %9316 = vmatpush1.bf16.msra.mxu0 %v6370
        %9317 = vmatprep.subr.bf16.mxu0 0
        %9318 = vmatpush1.bf16.msra.mxu0 %v6389
        %9319 = vmatprep.subr.bf16.mxu0 0
        %9320 = vmatpush1.bf16.msra.mxu0 %v6408
        %9321 = vmatprep.subr.bf16.mxu0 0
        %9322 = vmatpush1.bf16.msra.mxu0 %v6427
        %9323 = vmatprep.subr.bf16.mxu0 0
        %9324 = vmatpush1.bf16.msra.mxu0 %v6446
        %9325 = vmatprep.subr.bf16.mxu0 0
        %9326 = vmatpush1.bf16.msra.mxu0 %v6465
        %9327 = vmatprep.subr.bf16.mxu0 0
        %9328 = vmatpush1.bf16.msra.mxu0 %v6484
        %9329 = vmatprep.mubr.bf16.mxu0 %v1548
        %9330 = vmatmul.mubr.bf16.gmra.mrb[0].mxu0 %v1546
        %v9331 = vpop.f32.mrb[0].mxu0
        %v9332 = vadd.f32 %v9292, %v9331
        %v9333 = vpop.f32.mrb[0].mxu0
        %v9334 = vpop.f32.mrb[0].mxu0
        %v9335 = vpop.f32.mrb[0].mxu0
        %9336 = vdwg.mxu0
        %v9356 = vcombine.low %v7859, %v7861
        %v9357 = vcombine.low %v8023, %v8025
        %v9359 = vunpack.c.l.s4 1983009808
        %v9360 = vunpack.c.0.s8 %v9359
        %v9361 = vlaneseq
        %v9362 = vshrl.u32 %v9361, 7
        %v9363 = vsub.s32 %v9360, %v9362
        %v9364 = vrot.slane %v9356, %v9363
        %v9366 = vunpack.c.l.s4 1983009808
        %v9367 = vunpack.c.0.s8 %v9366
        %v9368 = vlaneseq
        %v9369 = vshrl.u32 %v9368, 7
        %v9370 = vsub.s32 %v9367, %v9369
        %v9371 = vrot.slane %v9357, %v9370
        %v9372 = vcombine.low %v9364, %v9371
        %v9373 = vcombine.low %v8187, %v8189
        %v9374 = vcombine.low %v8351, %v8353
        %v9376 = vunpack.c.l.s4 1983009808
        %v9377 = vunpack.c.0.s8 %v9376
        %v9378 = vlaneseq
        %v9379 = vshrl.u32 %v9378, 7
        %v9380 = vsub.s32 %v9377, %v9379
        %v9381 = vrot.slane %v9373, %v9380
        %v9383 = vunpack.c.l.s4 1983009808
        %v9384 = vunpack.c.0.s8 %v9383
        %v9385 = vlaneseq
        %v9386 = vshrl.u32 %v9385, 7
        %v9387 = vsub.s32 %v9384, %v9386
        %v9388 = vrot.slane %v9374, %v9387
        %v9389 = vcombine.low %v9381, %v9388
        %v9390 = vcombine.low %v8515, %v8517
        %v9391 = vcombine.low %v8679, %v8681
        %v9393 = vunpack.c.l.s4 1983009808
        %v9394 = vunpack.c.0.s8 %v9393
        %v9395 = vlaneseq
        %v9396 = vshrl.u32 %v9395, 7
        %v9397 = vsub.s32 %v9394, %v9396
        %v9398 = vrot.slane %v9390, %v9397
        %v9400 = vunpack.c.l.s4 1983009808
        %v9401 = vunpack.c.0.s8 %v9400
        %v9402 = vlaneseq
        %v9403 = vshrl.u32 %v9402, 7
        %v9404 = vsub.s32 %v9401, %v9403
        %v9405 = vrot.slane %v9391, %v9404
        %v9406 = vcombine.low %v9398, %v9405
        %v9407 = vcombine.low %v8843, %v8845
        %v9408 = vcombine.low %v9007, %v9009
        %v9410 = vunpack.c.l.s4 1983009808
        %v9411 = vunpack.c.0.s8 %v9410
        %v9412 = vlaneseq
        %v9413 = vshrl.u32 %v9412, 7
        %v9414 = vsub.s32 %v9411, %v9413
        %v9415 = vrot.slane %v9407, %v9414
        %v9417 = vunpack.c.l.s4 1983009808
        %v9418 = vunpack.c.0.s8 %v9417
        %v9419 = vlaneseq
        %v9420 = vshrl.u32 %v9419, 7
        %v9421 = vsub.s32 %v9418, %v9420
        %v9422 = vrot.slane %v9408, %v9421
        %v9423 = vcombine.low %v9415, %v9422
        %v9424 = vcombine.low %v9171, %v9173
        %v9426 = vunpack.c.l.s4 1983009808
        %v9427 = vunpack.c.0.s8 %v9426
        %v9428 = vlaneseq
        %v9429 = vshrl.u32 %v9428, 7
        %v9430 = vsub.s32 %v9427, %v9429
        %v9431 = vrot.slane %v9424, %v9430
        %v9433 = vunpack.c.l.s4 1983009808
        %v9434 = vunpack.c.0.s8 %v9433
        %v9435 = vlaneseq
        %v9436 = vshrl.u32 %v9435, 7
        %v9437 = vsub.s32 %v9434, %v9436
        %v9438 = vrot.slane %v9332, %v9437
        %v9439 = vcombine.low %v9431, %v9438
        %v9445 = vadd.f32 %v213, %v9372
        %v9446 = vadd.f32 %v214, %v9389
        %v9447 = vadd.f32 %v215, %v9406
        %v9448 = vadd.f32 %v216, %v9423
        %v9449 = vadd.f32 %v217, %v9439
        %9450 = vst [vmem:[%s201] sm:$0xff] %v9445
        %9451 = vst [vmem:[%s201 + $0x8] sm:$0xff] %v9446
        %9452 = vst [vmem:[%s201 + $0x10] sm:$0xff] %v9447
        %9453 = vst [vmem:[%s201 + $0x18] sm:$0xff] %v9448
        %9454 = vst [vmem:[%s201 + $0x20] sm:$0x3f] %v9449
        %s9455 = smul.u32 19, %s20
        %p9456 = scmp.lt.s32.totalorder %s9455, 37
        %s9457 = scalar_select %p9456, %s9455, 37
        %s9458 = smul.addr %s9457, 2
        %s9459 = scalar_lea.vmem %s2, %s9458
        // Predicated region
        $region37: #{outblock_forward.4} parent=27 // pred_check
          %p9460 = pneg %p100
        $region38: #{outblock_forward.4} parent=27 // pred_check_branch
          %9462 = sbr.rel (%p9460) target = $region40
        $region39: #{outblock_forward.4} parent=27 // pred_region
          %s9463 = smul.u32 19, %s20
        $region40: #{outblock_forward.4} parent=27 // pred_fallthru
          _
      $region28: #{outblock_forward.4} parent=5 // pred_fallthru
        _
      %p9464 = scmp.le.s32.totalorder 2, %s11
      // Predicated region
      $region41: #{outblock_forward.4} parent=5 // pred_check
        %p9465 = pneg %p9464
      $region42: #{outblock_forward.4} parent=5 // pred_check_branch
        %9467 = sbr.rel (%p9465) target = $region44
      $region43: #{outblock_forward.4} parent=5 // pred_region
        %s9468 = ssub.s32 %s11, 2
        // Predicated region
        $region45: #{outblock_forward.4} parent=43 // pred_check
          %p9469 = pneg %p106
        $region46: #{outblock_forward.4} parent=43 // pred_check_branch
          %9471 = sbr.rel (%p9469) target = $region48
        $region47: #{outblock_forward.4} parent=43 // pred_region
          %s9472 = smul.u32 19, %s22
          %p9473 = scmp.lt.s32.totalorder %s9472, 37
          %s9474 = scalar_select %p9473, %s9472, 37
          %s9475 = smul.addr %s9474, 2
          %s9476 = scalar_lea.vmem %s2, %s9475
        $region48: #{outblock_forward.4} parent=43 // pred_fallthru
          _
      $region44: #{outblock_forward.4} parent=5 // pred_fallthru
        _
    $region6: #{outblock_forward.4} parent=1 // loop_footer
      %s15 = sadd.s32 1, %s11
    $region7: #{outblock_forward.4} parent=1 // loop_footer_branch
      %10 = sbr.rel target = $region3
    $region8: #{outblock_forward.4} parent=1 // loop_exit
      _
    %9477 = vsyncpa [#allocation3], 1
    %s9478 = scalar_lea.sflag [#allocation3], 1
    %9479 = vsyncpa %s9478, 1

</llo_original>
